<compile_context>
chip_gen: v6e
topology: v6e:2x2x1
jax: 0.10.0
libtpu: 0.0.40
codegen_flags: <defaults>
</compile_context>

<pallas_src>
import functools

import jax
import jax.numpy as jnp
from jax import lax
from jax.experimental import pallas as pl
from jax.experimental.pallas import tpu as pltpu


def _round_up(x, m):
    return ((x + m - 1) // m) * m


def _resnet_block_kernel(x_ref, w1_ref, w2_ref, o_ref, pad_ref, *, H, W):
    # x_ref  : (1, H, W, Cp)   f32   one batch element, NHWC, C padded to Cp
    # w*_ref : (9*Cp, Cp)      bf16  weights, row blocks ordered k = 3*ky + kx
    # o_ref  : (1, H, W, Cp)   f32
    # pad_ref: (H+2, Wp, Cp)   bf16  reflect-padded activation scratch
    _, _, _, Cp = x_ref.shape
    Hp, Wp, _ = pad_ref.shape
    inv_hw = jnp.float32(1.0 / (H * W))
    pdt = pad_ref.dtype

    # Zero the unused width-padding columns once.  Their matmul results only
    # land in partial-sum columns >= W+2, which are never read.
    if Wp > W + 2:
        pad_ref[:, W + 2:Wp, :] = jnp.zeros((Hp, Wp - (W + 2), Cp), pdt)

    def fill_reflect_pad(img):
        # img: (H, W, Cp) value already cast to the pad dtype (one cast/fill).
        # ReflectionPad2d(1): rows first, then columns from the filled buffer,
        # so corners come out doubly reflected (matches torch).
        pad_ref[1:H + 1, 1:W + 1, :] = img
        pad_ref[0:1, 1:W + 1, :] = img[1:2, :, :]                   # top
        pad_ref[H + 1:H + 2, 1:W + 1, :] = img[H - 2:H - 1, :, :]   # bottom
        pad_ref[:, 0:1, :] = pad_ref[:, 2:3, :]                     # left
        pad_ref[:, W + 1:W + 2, :] = pad_ref[:, W - 1:W, :]         # right

    def conv3x3(w_ref):
        # 3x3 conv = 9 accumulated MXU matmuls on row-shifted, sublane-aligned
        # flattens of the padded image (no im2col slab).  kx shifts are value
        # slices of the f32 partials, grouped per kx.
        P = pad_ref[...]                                            # (Hp, Wp, Cp) bf16
        bands = [P[ky:ky + H].reshape(H * Wp, Cp) for ky in range(3)]
        acc = None
        for kx in range(3):
            part = None
            for ky in range(3):
                k = ky * 3 + kx
                d = jnp.dot(bands[ky], w_ref[k * Cp:(k + 1) * Cp, :],
                            preferred_element_type=jnp.float32)     # (H*Wp, Cp)
                part = d if part is None else part + d
            tap = part.reshape(H, Wp, Cp)[:, kx:kx + W, :]          # (H, W, Cp) f32
            acc = tap if acc is None else acc + tap
        return acc                                                  # (H, W, Cp) f32

    def instance_norm(y, relu):
        # Single-pass stats (f32 sum + sum of squares), biased var, eps=1e-5.
        # The conv bias is exactly cancelled by the mean subtraction
        # (affine=False), so it is never applied.
        mean = jnp.sum(y, axis=(0, 1), keepdims=True) * inv_hw       # (1,1,Cp)
        ex2 = jnp.sum(y * y, axis=(0, 1), keepdims=True) * inv_hw
        scale = lax.rsqrt(ex2 - mean * mean + 1e-5)
        shift = -mean * scale
        out = y * scale + shift                                      # fused norm
        return jnp.maximum(out, 0.0) if relu else out                # fused ReLU

    fill_reflect_pad(x_ref[0].astype(pdt))                           # cast once
    h1 = instance_norm(conv3x3(w1_ref), relu=True)                   # (H, W, Cp) f32
    # TODO(synk): Dropout(0.5) would go here when use_dropout=True (omitted).

    # Norm1 output goes straight into the second pad fill as bf16 (no f32
    # intermediate image between the two convs).
    fill_reflect_pad(h1.astype(pdt))
    h2 = instance_norm(conv3x3(w2_ref), relu=False)

    o_ref[0] = x_ref[0] + h2                                         # residual (f32)


def resnet_block_pallas(x_nchw, w1, b1, w2, b2, *, compute_dtype=jnp.bfloat16):
    """ResnetBlock forward.  x_nchw: (N,C,H,W) f32; w*: (C,C,3,3); b*: (C,).

    b1/b2 are accepted for interface fidelity but never sent to the kernel:
    with InstanceNorm2d(affine=False) a per-channel bias shifts the per-channel
    spatial mean by the same constant and cancels exactly.
    """
    N, C, H, W = x_nchw.shape
    assert H >= 2 and W >= 2, "ReflectionPad2d(1) needs H, W >= 2"
    Cp = max(128, _round_up(C, 128))                 # lane-dense channels
    sub = 16 if jnp.dtype(compute_dtype).itemsize == 2 else 8
    Wp = _round_up(W + 2, sub)                       # sublane-aligned pad width

    x = jnp.transpose(x_nchw, (0, 2, 3, 1)).astype(jnp.float32)      # NHWC
    if Cp != C:
        x = jnp.pad(x, ((0, 0), (0, 0), (0, 0), (0, Cp - C)))

    def pack_weight(w):
        # (Cout, Cin, 3, 3) -> (ky, kx, Cin, Cout) -> zero-pad -> (9*Cp, Cp)
        wk = jnp.transpose(w, (2, 3, 1, 0)).astype(jnp.float32)
        wk = jnp.pad(wk, ((0, 0), (0, 0), (0, Cp - C), (0, Cp - C)))
        return wk.reshape(9 * Cp, Cp).astype(compute_dtype)

    w1k = pack_weight(w1)
    w2k = pack_weight(w2)

    # VMEM budget from actual buffer math (I/O double-buffered by BlockSpec,
    # bf16 pad scratch, two weights, f32 value temporaries), clamped to stay
    # comfortably under v7x's 64 MiB physical VMEM.
    blk_io = H * W * Cp * 4
    pad_b = (H + 2) * Wp * Cp * 2
    wts = 9 * Cp * Cp * 2
    tmps = (H + 2) * Wp * Cp * 2 + 2 * H * Wp * Cp * 4 + 3 * H * W * Cp * 4
    est = 4 * blk_io + pad_b + 4 * wts + tmps
    vmem_limit = int(min(max(est * 3 // 2 + (8 << 20), 32 << 20), 48 << 20))

    kernel = functools.partial(_resnet_block_kernel, H=H, W=W)
    out = pl.pallas_call(
        kernel,
        out_shape=jax.ShapeDtypeStruct((N, H, W, Cp), jnp.float32),
        grid=(N,),
        in_specs=[
            pl.BlockSpec((1, H, W, Cp), lambda n: (n, 0, 0, 0)),
            pl.BlockSpec((9 * Cp, Cp), lambda n: (0, 0)),
            pl.BlockSpec((9 * Cp, Cp), lambda n: (0, 0)),
        ],
        out_specs=pl.BlockSpec((1, H, W, Cp), lambda n: (n, 0, 0, 0)),
        scratch_shapes=[
            pltpu.VMEM((H + 2, Wp, Cp), compute_dtype),   # reflect-pad buffer
        ],
        compiler_params=pltpu.CompilerParams(
            dimension_semantics=("parallel",),
            vmem_limit_bytes=vmem_limit,
        ),
    )(x, w1k, w2k)

    return jnp.transpose(out[..., :C], (0, 3, 1, 2))      # back to NCHW


# ---------------- pure-JAX reference (for correctness check) ----------------
def _reference(x_nchw, w1, b1, w2, b2, compute_dtype=jnp.float32):
    x = jnp.transpose(x_nchw, (0, 2, 3, 1))   # NHWC

    def conv(t, w, b):
        tp = jnp.pad(t, ((0, 0), (1, 1), (1, 1), (0, 0)), mode="reflect")
        wk = jnp.transpose(w, (2, 3, 1, 0))   # HWIO
        y = jax.lax.conv_general_dilated(
            tp.astype(compute_dtype), wk.astype(compute_dtype), (1, 1), "VALID",
            dimension_numbers=("NHWC", "HWIO", "NHWC"),
            preferred_element_type=jnp.float32)
        return y + b.reshape(1, 1, 1, -1)

    def inorm(y):
        mean = jnp.mean(y, axis=(1, 2), keepdims=True)
        var = jnp.mean((y - mean) ** 2, axis=(1, 2), keepdims=True)
        return (y - mean) * jax.lax.rsqrt(var + 1e-5)

    h = jnp.maximum(inorm(conv(x, w1, b1)), 0.0)
    h = inorm(conv(h, w2, b2))
    return jnp.transpose(x + h, (0, 3, 1, 2))


if __name__ == "__main__":
    N, C, H, W = 2, 4, 16, 16
    key = jax.random.PRNGKey(0)
    kx, kw1, kb1, kw2, kb2 = jax.random.split(key, 5)

    x = jax.random.normal(kx, (N, C, H, W), dtype=jnp.float32)
    w1 = 0.02 * jax.random.normal(kw1, (C, C, 3, 3), dtype=jnp.float32)
    b1 = 0.01 * jax.random.normal(kb1, (C,), dtype=jnp.float32)
    w2 = 0.02 * jax.random.normal(kw2, (C, C, 3, 3), dtype=jnp.float32)
    b2 = 0.01 * jax.random.normal(kb2, (C,), dtype=jnp.float32)

    out = jax.block_until_ready(resnet_block_pallas(x, w1, b1, w2, b2))
    assert out.shape == (N, C, H, W)

    # Precision-matched reference (bf16 conv inputs, f32 accumulation) -> tight.
    ref_bf16 = jax.block_until_ready(
        _reference(x, w1, b1, w2, b2, compute_dtype=jnp.bfloat16))
    err_matched = float(jnp.max(jnp.abs(out - ref_bf16)))
    assert err_matched < 1e-2, err_matched

    # Full-f32 module semantics -> looser bound (bf16 MXU rounding only).
    ref_f32 = jax.block_until_ready(
        _reference(x, w1, b1, w2, b2, compute_dtype=jnp.float32))
    err_f32 = float(jnp.max(jnp.abs(out - ref_f32)))
    assert err_f32 < 1e-1, err_f32

    print("KERNEL_OK")
</pallas_src>

<mosaic_0001>
module attributes {stable_mosaic.version = 11 : i64} {
  func.func @_resnet_block_kernel(%arg0: i32, %arg1: memref<1x16x16x128xf32, #tpu.memory_space<vmem>>, %arg2: memref<1152x128xbf16, #tpu.memory_space<vmem>>, %arg3: memref<1152x128xbf16, #tpu.memory_space<vmem>>, %arg4: memref<1x16x16x128xf32, #tpu.memory_space<vmem>>, %arg5: memref<18x32x128xbf16, #tpu.memory_space<vmem>>) attributes {dimension_semantics = [#tpu.dimension_semantics<parallel>], iteration_bounds = array<i64: 2>, scalar_prefetch = 0 : i64, scratch_operands = 1 : i64, tpu.core_type = #tpu.core_type<tc>, window_params = [{transform_indices = @transform_0, window_bounds = array<i64: 1, 16, 16, 128>}, {pipeline_mode = #tpu.pipeline_mode<synchronous>, transform_indices = @transform_1, window_bounds = array<i64: 1152, 128>}, {pipeline_mode = #tpu.pipeline_mode<synchronous>, transform_indices = @transform_2, window_bounds = array<i64: 1152, 128>}, {transform_indices = @transform_3, window_bounds = array<i64: 1, 16, 16, 128>}]} {
    %cst = arith.constant 0.000000e+00 : bf16
    %0 = vector.broadcast %cst : bf16 to vector<18x14x128xbf16>
    %c0 = arith.constant 0 : index
    %c18 = arith.constant 18 : index
    %c0_0 = arith.constant 0 : index
    %1 = vector.load %arg5[%c0, %c18, %c0_0] : memref<18x32x128xbf16, #tpu.memory_space<vmem>>, vector<18x14x128xbf16>
    tpu.vector_store %arg5[%c0, %c18, %c0_0], %0 {strides = array<i32>} : memref<18x32x128xbf16, #tpu.memory_space<vmem>>, vector<18x14x128xbf16>,
    %c0_1 = arith.constant 0 : index
    %c0_2 = arith.constant 0 : index
    %c0_3 = arith.constant 0 : index
    %c0_4 = arith.constant 0 : index
    %2 = vector.load %arg1[%c0_1, %c0_2, %c0_3, %c0_4] : memref<1x16x16x128xf32, #tpu.memory_space<vmem>>, vector<1x16x16x128xf32>
    %3 = vector.shape_cast %2 : vector<1x16x16x128xf32> to vector<16x16x128xf32>
    %4 = arith.truncf %3 : vector<16x16x128xf32> to vector<16x16x128xbf16>
    %c1 = arith.constant 1 : index
    %c1_5 = arith.constant 1 : index
    %c0_6 = arith.constant 0 : index
    %5 = vector.load %arg5[%c1, %c1_5, %c0_6] : memref<18x32x128xbf16, #tpu.memory_space<vmem>>, vector<16x16x128xbf16>
    tpu.vector_store %arg5[%c1, %c1_5, %c0_6], %4 {strides = array<i32>} : memref<18x32x128xbf16, #tpu.memory_space<vmem>>, vector<16x16x128xbf16>,
    %6 = vector.extract_strided_slice %4 {offsets = [1, 0, 0], sizes = [1, 16, 128], strides = [1, 1, 1]} : vector<16x16x128xbf16> to vector<1x16x128xbf16>
    %c0_7 = arith.constant 0 : index
    %c1_8 = arith.constant 1 : index
    %c0_9 = arith.constant 0 : index
    %7 = vector.load %arg5[%c0_7, %c1_8, %c0_9] : memref<18x32x128xbf16, #tpu.memory_space<vmem>>, vector<1x16x128xbf16>
    tpu.vector_store %arg5[%c0_7, %c1_8, %c0_9], %6 {strides = array<i32>} : memref<18x32x128xbf16, #tpu.memory_space<vmem>>, vector<1x16x128xbf16>,
    %8 = vector.extract_strided_slice %4 {offsets = [14, 0, 0], sizes = [1, 16, 128], strides = [1, 1, 1]} : vector<16x16x128xbf16> to vector<1x16x128xbf16>
    %c17 = arith.constant 17 : index
    %c1_10 = arith.constant 1 : index
    %c0_11 = arith.constant 0 : index
    %9 = vector.load %arg5[%c17, %c1_10, %c0_11] : memref<18x32x128xbf16, #tpu.memory_space<vmem>>, vector<1x16x128xbf16>
    tpu.vector_store %arg5[%c17, %c1_10, %c0_11], %8 {strides = array<i32>} : memref<18x32x128xbf16, #tpu.memory_space<vmem>>, vector<1x16x128xbf16>,
    %c0_12 = arith.constant 0 : index
    %c2 = arith.constant 2 : index
    %c0_13 = arith.constant 0 : index
    %10 = vector.load %arg5[%c0_12, %c2, %c0_13] : memref<18x32x128xbf16, #tpu.memory_space<vmem>>, vector<18x1x128xbf16>
    %c0_14 = arith.constant 0 : index
    %c0_15 = arith.constant 0 : index
    %c0_16 = arith.constant 0 : index
    %11 = vector.load %arg5[%c0_14, %c0_15, %c0_16] : memref<18x32x128xbf16, #tpu.memory_space<vmem>>, vector<18x1x128xbf16>
    tpu.vector_store %arg5[%c0_14, %c0_15, %c0_16], %10 {strides = array<i32>} : memref<18x32x128xbf16, #tpu.memory_space<vmem>>, vector<18x1x128xbf16>,
    %c0_17 = arith.constant 0 : index
    %c15 = arith.constant 15 : index
    %c0_18 = arith.constant 0 : index
    %12 = vector.load %arg5[%c0_17, %c15, %c0_18] : memref<18x32x128xbf16, #tpu.memory_space<vmem>>, vector<18x1x128xbf16>
    %c0_19 = arith.constant 0 : index
    %c17_20 = arith.constant 17 : index
    %c0_21 = arith.constant 0 : index
    %13 = vector.load %arg5[%c0_19, %c17_20, %c0_21] : memref<18x32x128xbf16, #tpu.memory_space<vmem>>, vector<18x1x128xbf16>
    tpu.vector_store %arg5[%c0_19, %c17_20, %c0_21], %12 {strides = array<i32>} : memref<18x32x128xbf16, #tpu.memory_space<vmem>>, vector<18x1x128xbf16>,
    %c0_22 = arith.constant 0 : index
    %c0_23 = arith.constant 0 : index
    %c0_24 = arith.constant 0 : index
    %14 = vector.load %arg5[%c0_22, %c0_23, %c0_24] : memref<18x32x128xbf16, #tpu.memory_space<vmem>>, vector<18x32x128xbf16>
    %15 = vector.extract_strided_slice %14 {offsets = [0, 0, 0], sizes = [16, 32, 128], strides = [1, 1, 1]} : vector<18x32x128xbf16> to vector<16x32x128xbf16>
    %16 = vector.shape_cast %15 : vector<16x32x128xbf16> to vector<512x128xbf16>
    %17 = vector.extract_strided_slice %14 {offsets = [1, 0, 0], sizes = [16, 32, 128], strides = [1, 1, 1]} : vector<18x32x128xbf16> to vector<16x32x128xbf16>
    %18 = vector.shape_cast %17 : vector<16x32x128xbf16> to vector<512x128xbf16>
    %19 = vector.extract_strided_slice %14 {offsets = [2, 0, 0], sizes = [16, 32, 128], strides = [1, 1, 1]} : vector<18x32x128xbf16> to vector<16x32x128xbf16>
    %20 = vector.shape_cast %19 : vector<16x32x128xbf16> to vector<512x128xbf16>
    %c0_25 = arith.constant 0 : index
    %c0_26 = arith.constant 0 : index
    %21 = vector.load %arg2[%c0_25, %c0_26] : memref<1152x128xbf16, #tpu.memory_space<vmem>>, vector<128x128xbf16>
    %cst_27 = arith.constant dense<0.000000e+00> : vector<512x128xf32>
    %22 = tpu.matmul %16, %21, %cst_27 {dimension_numbers = #tpu.dot_dimension_numbers<[1], [0], [0], [1], [0, 0, 1, 1], [], []>} : vector<512x128xbf16>, vector<128x128xbf16>, vector<512x128xf32> -> vector<512x128xf32>
    %c384 = arith.constant 384 : index
    %c0_28 = arith.constant 0 : index
    %23 = vector.load %arg2[%c384, %c0_28] : memref<1152x128xbf16, #tpu.memory_space<vmem>>, vector<128x128xbf16>
    %cst_29 = arith.constant dense<0.000000e+00> : vector<512x128xf32>
    %24 = tpu.matmul %18, %23, %cst_29 {dimension_numbers = #tpu.dot_dimension_numbers<[1], [0], [0], [1], [0, 0, 1, 1], [], []>} : vector<512x128xbf16>, vector<128x128xbf16>, vector<512x128xf32> -> vector<512x128xf32>
    %25 = arith.addf %22, %24 : vector<512x128xf32>
    %c768 = arith.constant 768 : index
    %c0_30 = arith.constant 0 : index
    %26 = vector.load %arg2[%c768, %c0_30] : memref<1152x128xbf16, #tpu.memory_space<vmem>>, vector<128x128xbf16>
    %cst_31 = arith.constant dense<0.000000e+00> : vector<512x128xf32>
    %27 = tpu.matmul %20, %26, %cst_31 {dimension_numbers = #tpu.dot_dimension_numbers<[1], [0], [0], [1], [0, 0, 1, 1], [], []>} : vector<512x128xbf16>, vector<128x128xbf16>, vector<512x128xf32> -> vector<512x128xf32>
    %28 = arith.addf %25, %27 : vector<512x128xf32>
    %29 = vector.shape_cast %28 : vector<512x128xf32> to vector<16x32x128xf32>
    %30 = vector.extract_strided_slice %29 {offsets = [0, 0, 0], sizes = [16, 16, 128], strides = [1, 1, 1]} : vector<16x32x128xf32> to vector<16x16x128xf32>
    %c128 = arith.constant 128 : index
    %c0_32 = arith.constant 0 : index
    %31 = vector.load %arg2[%c128, %c0_32] : memref<1152x128xbf16, #tpu.memory_space<vmem>>, vector<128x128xbf16>
    %cst_33 = arith.constant dense<0.000000e+00> : vector<512x128xf32>
    %32 = tpu.matmul %16, %31, %cst_33 {dimension_numbers = #tpu.dot_dimension_numbers<[1], [0], [0], [1], [0, 0, 1, 1], [], []>} : vector<512x128xbf16>, vector<128x128xbf16>, vector<512x128xf32> -> vector<512x128xf32>
    %c512 = arith.constant 512 : index
    %c0_34 = arith.constant 0 : index
    %33 = vector.load %arg2[%c512, %c0_34] : memref<1152x128xbf16, #tpu.memory_space<vmem>>, vector<128x128xbf16>
    %cst_35 = arith.constant dense<0.000000e+00> : vector<512x128xf32>
    %34 = tpu.matmul %18, %33, %cst_35 {dimension_numbers = #tpu.dot_dimension_numbers<[1], [0], [0], [1], [0, 0, 1, 1], [], []>} : vector<512x128xbf16>, vector<128x128xbf16>, vector<512x128xf32> -> vector<512x128xf32>
    %35 = arith.addf %32, %34 : vector<512x128xf32>
    %c896 = arith.constant 896 : index
    %c0_36 = arith.constant 0 : index
    %36 = vector.load %arg2[%c896, %c0_36] : memref<1152x128xbf16, #tpu.memory_space<vmem>>, vector<128x128xbf16>
    %cst_37 = arith.constant dense<0.000000e+00> : vector<512x128xf32>
    %37 = tpu.matmul %20, %36, %cst_37 {dimension_numbers = #tpu.dot_dimension_numbers<[1], [0], [0], [1], [0, 0, 1, 1], [], []>} : vector<512x128xbf16>, vector<128x128xbf16>, vector<512x128xf32> -> vector<512x128xf32>
    %38 = arith.addf %35, %37 : vector<512x128xf32>
    %39 = vector.shape_cast %38 : vector<512x128xf32> to vector<16x32x128xf32>
    %40 = vector.extract_strided_slice %39 {offsets = [0, 1, 0], sizes = [16, 16, 128], strides = [1, 1, 1]} : vector<16x32x128xf32> to vector<16x16x128xf32>
    %41 = arith.addf %30, %40 : vector<16x16x128xf32>
    %c256 = arith.constant 256 : index
    %c0_38 = arith.constant 0 : index
    %42 = vector.load %arg2[%c256, %c0_38] : memref<1152x128xbf16, #tpu.memory_space<vmem>>, vector<128x128xbf16>
    %cst_39 = arith.constant dense<0.000000e+00> : vector<512x128xf32>
    %43 = tpu.matmul %16, %42, %cst_39 {dimension_numbers = #tpu.dot_dimension_numbers<[1], [0], [0], [1], [0, 0, 1, 1], [], []>} : vector<512x128xbf16>, vector<128x128xbf16>, vector<512x128xf32> -> vector<512x128xf32>
    %c640 = arith.constant 640 : index
    %c0_40 = arith.constant 0 : index
    %44 = vector.load %arg2[%c640, %c0_40] : memref<1152x128xbf16, #tpu.memory_space<vmem>>, vector<128x128xbf16>
    %cst_41 = arith.constant dense<0.000000e+00> : vector<512x128xf32>
    %45 = tpu.matmul %18, %44, %cst_41 {dimension_numbers = #tpu.dot_dimension_numbers<[1], [0], [0], [1], [0, 0, 1, 1], [], []>} : vector<512x128xbf16>, vector<128x128xbf16>, vector<512x128xf32> -> vector<512x128xf32>
    %46 = arith.addf %43, %45 : vector<512x128xf32>
    %c1024 = arith.constant 1024 : index
    %c0_42 = arith.constant 0 : index
    %47 = vector.load %arg2[%c1024, %c0_42] : memref<1152x128xbf16, #tpu.memory_space<vmem>>, vector<128x128xbf16>
    %cst_43 = arith.constant dense<0.000000e+00> : vector<512x128xf32>
    %48 = tpu.matmul %20, %47, %cst_43 {dimension_numbers = #tpu.dot_dimension_numbers<[1], [0], [0], [1], [0, 0, 1, 1], [], []>} : vector<512x128xbf16>, vector<128x128xbf16>, vector<512x128xf32> -> vector<512x128xf32>
    %49 = arith.addf %46, %48 : vector<512x128xf32>
    %50 = vector.shape_cast %49 : vector<512x128xf32> to vector<16x32x128xf32>
    %51 = vector.extract_strided_slice %50 {offsets = [0, 2, 0], sizes = [16, 16, 128], strides = [1, 1, 1]} : vector<16x32x128xf32> to vector<16x16x128xf32>
    %52 = arith.addf %41, %51 : vector<16x16x128xf32>
    %cst_44 = arith.constant dense<0.000000e+00> : vector<128xf32>
    %53 = vector.multi_reduction <add>, %52, %cst_44 [0, 1] : vector<16x16x128xf32> to vector<128xf32>
    %54 = vector.shape_cast %53 : vector<128xf32> to vector<1x1x128xf32>
    %cst_45 = arith.constant 3.906250e-03 : f32
    %55 = vector.broadcast %cst_45 : f32 to vector<1x1x128xf32>
    %56 = arith.mulf %54, %55 : vector<1x1x128xf32>
    %57 = arith.mulf %52, %52 : vector<16x16x128xf32>
    %cst_46 = arith.constant dense<0.000000e+00> : vector<128xf32>
    %58 = vector.multi_reduction <add>, %57, %cst_46 [0, 1] : vector<16x16x128xf32> to vector<128xf32>
    %59 = vector.shape_cast %58 : vector<128xf32> to vector<1x1x128xf32>
    %cst_47 = arith.constant 3.906250e-03 : f32
    %60 = vector.broadcast %cst_47 : f32 to vector<1x1x128xf32>
    %61 = arith.mulf %59, %60 : vector<1x1x128xf32>
    %62 = arith.mulf %56, %56 : vector<1x1x128xf32>
    %63 = arith.subf %61, %62 : vector<1x1x128xf32>
    %cst_48 = arith.constant 9.99999974E-6 : f32
    %64 = vector.broadcast %cst_48 : f32 to vector<1x1x128xf32>
    %65 = arith.addf %63, %64 : vector<1x1x128xf32>
    %66 = math.rsqrt %65 : vector<1x1x128xf32>
    %cst_49 = arith.constant 0.000000e+00 : f32
    %67 = vector.broadcast %cst_49 : f32 to vector<1x1x128xf32>
    %68 = arith.subf %67, %56 : vector<1x1x128xf32>
    %69 = arith.mulf %68, %66 : vector<1x1x128xf32>
    %70 = vector.broadcast %66 : vector<1x1x128xf32> to vector<16x16x128xf32>
    %71 = arith.mulf %52, %70 : vector<16x16x128xf32>
    %72 = vector.broadcast %69 : vector<1x1x128xf32> to vector<16x16x128xf32>
    %73 = arith.addf %71, %72 : vector<16x16x128xf32>
    %cst_50 = arith.constant 0.000000e+00 : f32
    %74 = vector.broadcast %cst_50 : f32 to vector<16x16x128xf32>
    %75 = arith.maximumf %73, %74 : vector<16x16x128xf32>
    %76 = arith.truncf %75 : vector<16x16x128xf32> to vector<16x16x128xbf16>
    %c1_51 = arith.constant 1 : index
    %c1_52 = arith.constant 1 : index
    %c0_53 = arith.constant 0 : index
    %77 = vector.load %arg5[%c1_51, %c1_52, %c0_53] : memref<18x32x128xbf16, #tpu.memory_space<vmem>>, vector<16x16x128xbf16>
    tpu.vector_store %arg5[%c1_51, %c1_52, %c0_53], %76 {strides = array<i32>} : memref<18x32x128xbf16, #tpu.memory_space<vmem>>, vector<16x16x128xbf16>,
    %78 = vector.extract_strided_slice %76 {offsets = [1, 0, 0], sizes = [1, 16, 128], strides = [1, 1, 1]} : vector<16x16x128xbf16> to vector<1x16x128xbf16>
    %c0_54 = arith.constant 0 : index
    %c1_55 = arith.constant 1 : index
    %c0_56 = arith.constant 0 : index
    %79 = vector.load %arg5[%c0_54, %c1_55, %c0_56] : memref<18x32x128xbf16, #tpu.memory_space<vmem>>, vector<1x16x128xbf16>
    tpu.vector_store %arg5[%c0_54, %c1_55, %c0_56], %78 {strides = array<i32>} : memref<18x32x128xbf16, #tpu.memory_space<vmem>>, vector<1x16x128xbf16>,
    %80 = vector.extract_strided_slice %76 {offsets = [14, 0, 0], sizes = [1, 16, 128], strides = [1, 1, 1]} : vector<16x16x128xbf16> to vector<1x16x128xbf16>
    %c17_57 = arith.constant 17 : index
    %c1_58 = arith.constant 1 : index
    %c0_59 = arith.constant 0 : index
    %81 = vector.load %arg5[%c17_57, %c1_58, %c0_59] : memref<18x32x128xbf16, #tpu.memory_space<vmem>>, vector<1x16x128xbf16>
    tpu.vector_store %arg5[%c17_57, %c1_58, %c0_59], %80 {strides = array<i32>} : memref<18x32x128xbf16, #tpu.memory_space<vmem>>, vector<1x16x128xbf16>,
    %c0_60 = arith.constant 0 : index
    %c2_61 = arith.constant 2 : index
    %c0_62 = arith.constant 0 : index
    %82 = vector.load %arg5[%c0_60, %c2_61, %c0_62] : memref<18x32x128xbf16, #tpu.memory_space<vmem>>, vector<18x1x128xbf16>
    %c0_63 = arith.constant 0 : index
    %c0_64 = arith.constant 0 : index
    %c0_65 = arith.constant 0 : index
    %83 = vector.load %arg5[%c0_63, %c0_64, %c0_65] : memref<18x32x128xbf16, #tpu.memory_space<vmem>>, vector<18x1x128xbf16>
    tpu.vector_store %arg5[%c0_63, %c0_64, %c0_65], %82 {strides = array<i32>} : memref<18x32x128xbf16, #tpu.memory_space<vmem>>, vector<18x1x128xbf16>,
    %c0_66 = arith.constant 0 : index
    %c15_67 = arith.constant 15 : index
    %c0_68 = arith.constant 0 : index
    %84 = vector.load %arg5[%c0_66, %c15_67, %c0_68] : memref<18x32x128xbf16, #tpu.memory_space<vmem>>, vector<18x1x128xbf16>
    %c0_69 = arith.constant 0 : index
    %c17_70 = arith.constant 17 : index
    %c0_71 = arith.constant 0 : index
    %85 = vector.load %arg5[%c0_69, %c17_70, %c0_71] : memref<18x32x128xbf16, #tpu.memory_space<vmem>>, vector<18x1x128xbf16>
    tpu.vector_store %arg5[%c0_69, %c17_70, %c0_71], %84 {strides = array<i32>} : memref<18x32x128xbf16, #tpu.memory_space<vmem>>, vector<18x1x128xbf16>,
    %c0_72 = arith.constant 0 : index
    %c0_73 = arith.constant 0 : index
    %c0_74 = arith.constant 0 : index
    %86 = vector.load %arg5[%c0_72, %c0_73, %c0_74] : memref<18x32x128xbf16, #tpu.memory_space<vmem>>, vector<18x32x128xbf16>
    %87 = vector.extract_strided_slice %86 {offsets = [0, 0, 0], sizes = [16, 32, 128], strides = [1, 1, 1]} : vector<18x32x128xbf16> to vector<16x32x128xbf16>
    %88 = vector.shape_cast %87 : vector<16x32x128xbf16> to vector<512x128xbf16>
    %89 = vector.extract_strided_slice %86 {offsets = [1, 0, 0], sizes = [16, 32, 128], strides = [1, 1, 1]} : vector<18x32x128xbf16> to vector<16x32x128xbf16>
    %90 = vector.shape_cast %89 : vector<16x32x128xbf16> to vector<512x128xbf16>
    %91 = vector.extract_strided_slice %86 {offsets = [2, 0, 0], sizes = [16, 32, 128], strides = [1, 1, 1]} : vector<18x32x128xbf16> to vector<16x32x128xbf16>
    %92 = vector.shape_cast %91 : vector<16x32x128xbf16> to vector<512x128xbf16>
    %c0_75 = arith.constant 0 : index
    %c0_76 = arith.constant 0 : index
    %93 = vector.load %arg3[%c0_75, %c0_76] : memref<1152x128xbf16, #tpu.memory_space<vmem>>, vector<128x128xbf16>
    %cst_77 = arith.constant dense<0.000000e+00> : vector<512x128xf32>
    %94 = tpu.matmul %88, %93, %cst_77 {dimension_numbers = #tpu.dot_dimension_numbers<[1], [0], [0], [1], [0, 0, 1, 1], [], []>} : vector<512x128xbf16>, vector<128x128xbf16>, vector<512x128xf32> -> vector<512x128xf32>
    %c384_78 = arith.constant 384 : index
    %c0_79 = arith.constant 0 : index
    %95 = vector.load %arg3[%c384_78, %c0_79] : memref<1152x128xbf16, #tpu.memory_space<vmem>>, vector<128x128xbf16>
    %cst_80 = arith.constant dense<0.000000e+00> : vector<512x128xf32>
    %96 = tpu.matmul %90, %95, %cst_80 {dimension_numbers = #tpu.dot_dimension_numbers<[1], [0], [0], [1], [0, 0, 1, 1], [], []>} : vector<512x128xbf16>, vector<128x128xbf16>, vector<512x128xf32> -> vector<512x128xf32>
    %97 = arith.addf %94, %96 : vector<512x128xf32>
    %c768_81 = arith.constant 768 : index
    %c0_82 = arith.constant 0 : index
    %98 = vector.load %arg3[%c768_81, %c0_82] : memref<1152x128xbf16, #tpu.memory_space<vmem>>, vector<128x128xbf16>
    %cst_83 = arith.constant dense<0.000000e+00> : vector<512x128xf32>
    %99 = tpu.matmul %92, %98, %cst_83 {dimension_numbers = #tpu.dot_dimension_numbers<[1], [0], [0], [1], [0, 0, 1, 1], [], []>} : vector<512x128xbf16>, vector<128x128xbf16>, vector<512x128xf32> -> vector<512x128xf32>
    %100 = arith.addf %97, %99 : vector<512x128xf32>
    %101 = vector.shape_cast %100 : vector<512x128xf32> to vector<16x32x128xf32>
    %102 = vector.extract_strided_slice %101 {offsets = [0, 0, 0], sizes = [16, 16, 128], strides = [1, 1, 1]} : vector<16x32x128xf32> to vector<16x16x128xf32>
    %c128_84 = arith.constant 128 : index
    %c0_85 = arith.constant 0 : index
    %103 = vector.load %arg3[%c128_84, %c0_85] : memref<1152x128xbf16, #tpu.memory_space<vmem>>, vector<128x128xbf16>
    %cst_86 = arith.constant dense<0.000000e+00> : vector<512x128xf32>
    %104 = tpu.matmul %88, %103, %cst_86 {dimension_numbers = #tpu.dot_dimension_numbers<[1], [0], [0], [1], [0, 0, 1, 1], [], []>} : vector<512x128xbf16>, vector<128x128xbf16>, vector<512x128xf32> -> vector<512x128xf32>
    %c512_87 = arith.constant 512 : index
    %c0_88 = arith.constant 0 : index
    %105 = vector.load %arg3[%c512_87, %c0_88] : memref<1152x128xbf16, #tpu.memory_space<vmem>>, vector<128x128xbf16>
    %cst_89 = arith.constant dense<0.000000e+00> : vector<512x128xf32>
    %106 = tpu.matmul %90, %105, %cst_89 {dimension_numbers = #tpu.dot_dimension_numbers<[1], [0], [0], [1], [0, 0, 1, 1], [], []>} : vector<512x128xbf16>, vector<128x128xbf16>, vector<512x128xf32> -> vector<512x128xf32>
    %107 = arith.addf %104, %106 : vector<512x128xf32>
    %c896_90 = arith.constant 896 : index
    %c0_91 = arith.constant 0 : index
    %108 = vector.load %arg3[%c896_90, %c0_91] : memref<1152x128xbf16, #tpu.memory_space<vmem>>, vector<128x128xbf16>
    %cst_92 = arith.constant dense<0.000000e+00> : vector<512x128xf32>
    %109 = tpu.matmul %92, %108, %cst_92 {dimension_numbers = #tpu.dot_dimension_numbers<[1], [0], [0], [1], [0, 0, 1, 1], [], []>} : vector<512x128xbf16>, vector<128x128xbf16>, vector<512x128xf32> -> vector<512x128xf32>
    %110 = arith.addf %107, %109 : vector<512x128xf32>
    %111 = vector.shape_cast %110 : vector<512x128xf32> to vector<16x32x128xf32>
    %112 = vector.extract_strided_slice %111 {offsets = [0, 1, 0], sizes = [16, 16, 128], strides = [1, 1, 1]} : vector<16x32x128xf32> to vector<16x16x128xf32>
    %113 = arith.addf %102, %112 : vector<16x16x128xf32>
    %c256_93 = arith.constant 256 : index
    %c0_94 = arith.constant 0 : index
    %114 = vector.load %arg3[%c256_93, %c0_94] : memref<1152x128xbf16, #tpu.memory_space<vmem>>, vector<128x128xbf16>
    %cst_95 = arith.constant dense<0.000000e+00> : vector<512x128xf32>
    %115 = tpu.matmul %88, %114, %cst_95 {dimension_numbers = #tpu.dot_dimension_numbers<[1], [0], [0], [1], [0, 0, 1, 1], [], []>} : vector<512x128xbf16>, vector<128x128xbf16>, vector<512x128xf32> -> vector<512x128xf32>
    %c640_96 = arith.constant 640 : index
    %c0_97 = arith.constant 0 : index
    %116 = vector.load %arg3[%c640_96, %c0_97] : memref<1152x128xbf16, #tpu.memory_space<vmem>>, vector<128x128xbf16>
    %cst_98 = arith.constant dense<0.000000e+00> : vector<512x128xf32>
    %117 = tpu.matmul %90, %116, %cst_98 {dimension_numbers = #tpu.dot_dimension_numbers<[1], [0], [0], [1], [0, 0, 1, 1], [], []>} : vector<512x128xbf16>, vector<128x128xbf16>, vector<512x128xf32> -> vector<512x128xf32>
    %118 = arith.addf %115, %117 : vector<512x128xf32>
    %c1024_99 = arith.constant 1024 : index
    %c0_100 = arith.constant 0 : index
    %119 = vector.load %arg3[%c1024_99, %c0_100] : memref<1152x128xbf16, #tpu.memory_space<vmem>>, vector<128x128xbf16>
    %cst_101 = arith.constant dense<0.000000e+00> : vector<512x128xf32>
    %120 = tpu.matmul %92, %119, %cst_101 {dimension_numbers = #tpu.dot_dimension_numbers<[1], [0], [0], [1], [0, 0, 1, 1], [], []>} : vector<512x128xbf16>, vector<128x128xbf16>, vector<512x128xf32> -> vector<512x128xf32>
    %121 = arith.addf %118, %120 : vector<512x128xf32>
    %122 = vector.shape_cast %121 : vector<512x128xf32> to vector<16x32x128xf32>
    %123 = vector.extract_strided_slice %122 {offsets = [0, 2, 0], sizes = [16, 16, 128], strides = [1, 1, 1]} : vector<16x32x128xf32> to vector<16x16x128xf32>
    %124 = arith.addf %113, %123 : vector<16x16x128xf32>
    %cst_102 = arith.constant dense<0.000000e+00> : vector<128xf32>
    %125 = vector.multi_reduction <add>, %124, %cst_102 [0, 1] : vector<16x16x128xf32> to vector<128xf32>
    %126 = vector.shape_cast %125 : vector<128xf32> to vector<1x1x128xf32>
    %cst_103 = arith.constant 3.906250e-03 : f32
    %127 = vector.broadcast %cst_103 : f32 to vector<1x1x128xf32>
    %128 = arith.mulf %126, %127 : vector<1x1x128xf32>
    %129 = arith.mulf %124, %124 : vector<16x16x128xf32>
    %cst_104 = arith.constant dense<0.000000e+00> : vector<128xf32>
    %130 = vector.multi_reduction <add>, %129, %cst_104 [0, 1] : vector<16x16x128xf32> to vector<128xf32>
    %131 = vector.shape_cast %130 : vector<128xf32> to vector<1x1x128xf32>
    %cst_105 = arith.constant 3.906250e-03 : f32
    %132 = vector.broadcast %cst_105 : f32 to vector<1x1x128xf32>
    %133 = arith.mulf %131, %132 : vector<1x1x128xf32>
    %134 = arith.mulf %128, %128 : vector<1x1x128xf32>
    %135 = arith.subf %133, %134 : vector<1x1x128xf32>
    %cst_106 = arith.constant 9.99999974E-6 : f32
    %136 = vector.broadcast %cst_106 : f32 to vector<1x1x128xf32>
    %137 = arith.addf %135, %136 : vector<1x1x128xf32>
    %138 = math.rsqrt %137 : vector<1x1x128xf32>
    %cst_107 = arith.constant 0.000000e+00 : f32
    %139 = vector.broadcast %cst_107 : f32 to vector<1x1x128xf32>
    %140 = arith.subf %139, %128 : vector<1x1x128xf32>
    %141 = arith.mulf %140, %138 : vector<1x1x128xf32>
    %142 = vector.broadcast %138 : vector<1x1x128xf32> to vector<16x16x128xf32>
    %143 = arith.mulf %124, %142 : vector<16x16x128xf32>
    %144 = vector.broadcast %141 : vector<1x1x128xf32> to vector<16x16x128xf32>
    %145 = arith.addf %143, %144 : vector<16x16x128xf32>
    %c0_108 = arith.constant 0 : index
    %c0_109 = arith.constant 0 : index
    %c0_110 = arith.constant 0 : index
    %c0_111 = arith.constant 0 : index
    %146 = vector.load %arg1[%c0_108, %c0_109, %c0_110, %c0_111] : memref<1x16x16x128xf32, #tpu.memory_space<vmem>>, vector<1x16x16x128xf32>
    %147 = vector.shape_cast %146 : vector<1x16x16x128xf32> to vector<16x16x128xf32>
    %148 = arith.addf %147, %145 : vector<16x16x128xf32>
    %c0_112 = arith.constant 0 : index
    %c0_113 = arith.constant 0 : index
    %c0_114 = arith.constant 0 : index
    %c0_115 = arith.constant 0 : index
    %149 = vector.load %arg4[%c0_112, %c0_113, %c0_114, %c0_115] : memref<1x16x16x128xf32, #tpu.memory_space<vmem>>, vector<1x16x16x128xf32>
    %150 = vector.shape_cast %149 : vector<1x16x16x128xf32> to vector<16x16x128xf32>
    %151 = vector.shape_cast %148 : vector<16x16x128xf32> to vector<1x16x16x128xf32>
    tpu.vector_store %arg4[%c0_112, %c0_113, %c0_114, %c0_115], %151 {strides = array<i32>} : memref<1x16x16x128xf32, #tpu.memory_space<vmem>>, vector<1x16x16x128xf32>,
    return
  }
  func.func @transform_0(%arg0: i32) -> (i32, i32, i32, i32) {
    %c0_i32 = arith.constant 0 : i32
    %c0_i32_0 = arith.constant 0 : i32
    %c0_i32_1 = arith.constant 0 : i32
    %c0_i32_2 = arith.constant 0 : i32
    return %arg0, %c0_i32, %c0_i32_0, %c0_i32_1 : i32, i32, i32, i32
  }
  func.func @transform_1(%arg0: i32) -> (i32, i32) {
    %c0_i32 = arith.constant 0 : i32
    %c0_i32_0 = arith.constant 0 : i32
    %c0_i32_1 = arith.constant 0 : i32
    return %c0_i32, %c0_i32_0 : i32, i32
  }
  func.func @transform_2(%arg0: i32) -> (i32, i32) {
    %c0_i32 = arith.constant 0 : i32
    %c0_i32_0 = arith.constant 0 : i32
    %c0_i32_1 = arith.constant 0 : i32
    return %c0_i32, %c0_i32_0 : i32, i32
  }
  func.func @transform_3(%arg0: i32) -> (i32, i32, i32, i32) {
    %c0_i32 = arith.constant 0 : i32
    %c0_i32_0 = arith.constant 0 : i32
    %c0_i32_1 = arith.constant 0 : i32
    %c0_i32_2 = arith.constant 0 : i32
    return %arg0, %c0_i32, %c0_i32_0, %c0_i32_1 : i32, i32, i32, i32
  }
}

</mosaic_0001>

<llo_original>
// kernel: tpu_custom_call.1
$region0: #{tpu_custom_call.1}
  #allocation0 [shape = 'u32[]', space=smem, size = 0x4, offset = 0x4, fixed_abs, tag = 'smem constant byte address 0x4 - core index']
  #allocation1 [shape = 'u32[144,128]{1,0:T(1,128)}', space=vmem, size = 0x12000, scoped, tag = 'internal scratch']
  #allocation2 [shape = 'bf16[18,32,128]{2,1,0:T(8,128)(2,1)}', space=vmem, size = 0x24000, scoped, tag = 'scratch operand']
  %s0 = inlined_call_operand.hbm [shape: f32[2,16,16,128], index: 0, kind: input, shape index: {}]
  %s1 = inlined_call_operand.hbm [shape: bf16[1152,128], index: 1, kind: input, shape index: {}]
  %s2 = inlined_call_operand.hbm [shape: bf16[1152,128], index: 2, kind: input, shape index: {}]
  %s3 = inlined_call_operand.hbm [shape: f32[2,16,16,128], index: 3, kind: output, shape index: {}]
  %s4 = sld [smem:[#allocation0]]
  $region57: #{tpu_custom_call.1} parent=0
    _
  %s6 = ssub.s32 1, %s4
  %s7 = scalar_select 0, %s6, %s4
  $region1: #{tpu_custom_call.1} parent=0
    #allocation3 [shape = 'u8[262144]{0}', space=vmem, size = 0x40000, scoped, tag = 'input window, operand 0']
    #allocation4 [shape = 's32[2]{0}', space=sflag, size = 0x8, scoped, tag = 'scoped memory for tpu_custom_call.1']
    #allocation5 [shape = 's32[2]{0}', space=sflag, size = 0x8, scoped, tag = 'scoped memory for tpu_custom_call.1']
    #allocation6 [shape = 'u8[294912]{0}', space=vmem, size = 0x48000, scoped, tag = 'input window, operand 1, single buffered']
    #allocation7 [shape = 's32[1]{0}', space=sflag, size = 0x4, scoped, tag = 'scoped memory for tpu_custom_call.1']
    #allocation8 [shape = 'u8[294912]{0}', space=vmem, size = 0x48000, scoped, tag = 'input window, operand 2, single buffered']
    #allocation9 [shape = 'u8[262144]{0}', space=vmem, size = 0x40000, scoped, tag = 'output window, operand 0']
    %8 = vsyncpa [#allocation4], 0
    %s9 = scalar_lea.sflag [#allocation4], 1
    %10 = vsyncpa %s9, 0
    %11 = vsyncpa [#allocation7], 0
    %12 = vsyncpa [#allocation5], 0
    %s13 = scalar_lea.sflag [#allocation5], 1
    %14 = vsyncpa %s13, 0
    loop: start=0, step=1, limit=4
    $region2: #{tpu_custom_call.1} parent=1 // loop_pre_header
      _
    $region3: #{tpu_custom_call.1} parent=1 // loop_header
      %s16 = sphi 0, %s20
      %p17 = scmp.ge.s32.totalorder %s16, 4
      %s26 = sphi 0, %s28
      %s29 = sphi 0, %s26
      %s30 = sphi 0, %s29
      %s46 = sphi 0, %s30
      %s50 = sphi 0, %s50
      %s52 = sphi 0, %s50
      %s53 = sphi 0, %s52
      %s67 = sphi 0, %s53
      %s71 = sphi 0, %s71
      %s73 = sphi 0, %s71
      %s74 = sphi 0, %s73
      %s88 = sphi 0, %s74
      %s94 = sphi 0, %s96
      %s97 = sphi 0, %s94
      %s98 = sphi 0, %s97
      %s114 = sphi 0, %s98
    $region4: #{tpu_custom_call.1} parent=1 // loop_header_branch
      %19 = sbr.rel (%p17) target = $region8
    $region5: #{tpu_custom_call.1} parent=1 // loop_body
      %s21 = ssub.s32 %s16, 1
      %s22 = ssub.s32 %s16, 2
      %s23 = sadd.s32 %s16, 1
      %s24 = ssub.s32 %s16, %s23
      %p25 = scmp.eq.s32.totalorder %s24, 0
      %s27 = sadd.s32 %s26, 1
      %s28 = scalar_select %p25, %s26, %s27
      %p31 = pneg %p25
      %p32 = scmp.eq.s32.totalorder %s16, 1
      %p33 = por %p31, %p32
      %p34 = scmp.ne.s32.totalorder %s26, %s29
      %p35 = scmp.eq.s32.totalorder %s16, 0
      %p36 = por %p34, %p35
      %p37 = scmp.ne.s32.totalorder %s26, %s29
      %p38 = scmp.eq.s32.totalorder %s21, 1
      %p39 = por %p37, %p38
      %p40 = scmp.ne.s32.totalorder %s29, %s30
      %p41 = scmp.eq.s32.totalorder %s21, 0
      %p42 = por %p40, %p41
      %p43 = scmp.ne.s32.totalorder %s29, %s30
      %p44 = scmp.eq.s32.totalorder %s22, 1
      %p45 = por %p43, %p44
      %p47 = scmp.ne.s32.totalorder %s30, %s46
      %p48 = scmp.eq.s32.totalorder %s22, 0
      %p49 = por %p47, %p48
      %s51 = sadd.s32 %s50, 1
      %p54 = scmp.eq.s32.totalorder %s16, 1
      %p55 = scmp.ne.s32.totalorder %s50, %s52
      %p56 = scmp.eq.s32.totalorder %s16, 0
      %p57 = por %p55, %p56
      %p58 = scmp.ne.s32.totalorder %s50, %s52
      %p59 = scmp.eq.s32.totalorder %s21, 1
      %p60 = por %p58, %p59
      %p61 = scmp.ne.s32.totalorder %s52, %s53
      %p62 = scmp.eq.s32.totalorder %s21, 0
      %p63 = por %p61, %p62
      %p64 = scmp.ne.s32.totalorder %s52, %s53
      %p65 = scmp.eq.s32.totalorder %s22, 1
      %p66 = por %p64, %p65
      %p68 = scmp.ne.s32.totalorder %s53, %s67
      %p69 = scmp.eq.s32.totalorder %s22, 0
      %p70 = por %p68, %p69
      %s72 = sadd.s32 %s71, 1
      %p75 = scmp.eq.s32.totalorder %s16, 1
      %p76 = scmp.ne.s32.totalorder %s71, %s73
      %p77 = scmp.eq.s32.totalorder %s16, 0
      %p78 = por %p76, %p77
      %p79 = scmp.ne.s32.totalorder %s71, %s73
      %p80 = scmp.eq.s32.totalorder %s21, 1
      %p81 = por %p79, %p80
      %p82 = scmp.ne.s32.totalorder %s73, %s74
      %p83 = scmp.eq.s32.totalorder %s21, 0
      %p84 = por %p82, %p83
      %p85 = scmp.ne.s32.totalorder %s73, %s74
      %p86 = scmp.eq.s32.totalorder %s22, 1
      %p87 = por %p85, %p86
      %p89 = scmp.ne.s32.totalorder %s74, %s88
      %p90 = scmp.eq.s32.totalorder %s22, 0
      %p91 = por %p89, %p90
      %s92 = ssub.s32 %s16, %s23
      %p93 = scmp.eq.s32.totalorder %s92, 0
      %s95 = sadd.s32 %s94, 1
      %s96 = scalar_select %p93, %s94, %s95
      %p99 = pneg %p93
      %p100 = scmp.eq.s32.totalorder %s16, 1
      %p101 = por %p99, %p100
      %p102 = scmp.ne.s32.totalorder %s94, %s97
      %p103 = scmp.eq.s32.totalorder %s16, 0
      %p104 = por %p102, %p103
      %p105 = scmp.ne.s32.totalorder %s94, %s97
      %p106 = scmp.eq.s32.totalorder %s21, 1
      %p107 = por %p105, %p106
      %p108 = scmp.ne.s32.totalorder %s97, %s98
      %p109 = scmp.eq.s32.totalorder %s21, 0
      %p110 = por %p108, %p109
      %p111 = scmp.ne.s32.totalorder %s97, %s98
      %p112 = scmp.eq.s32.totalorder %s22, 1
      %p113 = por %p111, %p112
      %p115 = scmp.ne.s32.totalorder %s98, %s114
      %p116 = scmp.eq.s32.totalorder %s22, 0
      %p117 = por %p115, %p116
      %p118 = scmp.le.s32.totalorder 1, %s16
      %p119 = scmp.lt.s32.totalorder %s16, 3
      %p120 = pnand %p118, %p119
      %p121 = pneg %p120
      // Predicated region
      $region9: #{tpu_custom_call.1} parent=5 // pred_check
        _
      $region10: #{tpu_custom_call.1} parent=5 // pred_check_branch
        %123 = sbr.rel (%p120) target = $region12
      $region11: #{tpu_custom_call.1} parent=5 // pred_region
        %s124 = ssub.s32 %s16, 1
        // Predicated region
        $region13: #{tpu_custom_call.1} parent=11 // pred_check
          %p125 = pneg %p63
        $region14: #{tpu_custom_call.1} parent=11 // pred_check_branch
          %127 = sbr.rel (%p125) target = $region16
        $region15: #{tpu_custom_call.1} parent=11 // pred_region
          %s129 = ssub.s32 9216, 9216
          %130 = vsyncadd [#allocation7], %s129
          %s131 = sshll.u32 [#allocation6], 4
          %s132 = int_to_ptr.vmem [resolvable:$true] %s131
          %137 = dma.hbm_to_vmem [thread:$0]  %s1, 9216, %s132, [#allocation7], 64, 64, 4
        $region16: #{tpu_custom_call.1} parent=11 // pred_fallthru
          _
        // Predicated region
        $region17: #{tpu_custom_call.1} parent=11 // pred_check
          %p138 = pneg %p84
        $region18: #{tpu_custom_call.1} parent=11 // pred_check_branch
          %140 = sbr.rel (%p138) target = $region20
        $region19: #{tpu_custom_call.1} parent=11 // pred_region
          %s142 = ssub.s32 9216, 9216
          %143 = vsyncadd [#allocation7], %s142
          %s144 = sshll.u32 [#allocation8], 4
          %s145 = int_to_ptr.vmem [resolvable:$true] %s144
          %150 = dma.hbm_to_vmem [thread:$0]  %s2, 9216, %s145, [#allocation7], 64, 64, 4
        $region20: #{tpu_custom_call.1} parent=11 // pred_fallthru
          _
      $region12: #{tpu_custom_call.1} parent=5 // pred_fallthru
        _
      %p151 = scmp.lt.s32.totalorder %s16, 2
      // Predicated region
      $region21: #{tpu_custom_call.1} parent=5 // pred_check
        %p152 = pneg %p151
      $region22: #{tpu_custom_call.1} parent=5 // pred_check_branch
        %154 = sbr.rel (%p152) target = $region24
      $region23: #{tpu_custom_call.1} parent=5 // pred_region
        // Predicated region
        $region25: #{tpu_custom_call.1} parent=23 // pred_check
          %p155 = pneg %p36
        $region26: #{tpu_custom_call.1} parent=23 // pred_check_branch
          %157 = sbr.rel (%p155) target = $region28
        $region27: #{tpu_custom_call.1} parent=23 // pred_region
          %s158 = sand.u32 %s26, 1
          %s159 = scalar_lea.sflag [#allocation4], %s158
          %s160 = sand.u32 %s26, 1
          %s161 = smul.addr %s160, 256
          %s162 = scalar_lea.vmem [#allocation3], %s161
          %s164 = ssub.s32 4096, 4096
          %165 = vsyncadd %s159, %s164
          %s166 = smul.addr %s16, 32
          %s167 = smul.addr %s166, 128
          %s168 = scalar_lea.hbm %s0, %s167
          %s169 = sshll.u32 %s162, 4
          %s170 = int_to_ptr.vmem [resolvable:$true] %s169
          %175 = dma.hbm_to_vmem [thread:$0]  %s168, 4096, %s170, %s159, 128, 128, 8
        $region28: #{tpu_custom_call.1} parent=23 // pred_fallthru
          _
      $region24: #{tpu_custom_call.1} parent=5 // pred_fallthru
        _
      %p176 = scmp.le.s32.totalorder 1, %s16
      %p177 = scmp.lt.s32.totalorder %s16, 3
      %p178 = pnand %p176, %p177
      %p179 = pneg %p178
      // Predicated region
      $region29: #{tpu_custom_call.1} parent=5 // pred_check
        _
      $region30: #{tpu_custom_call.1} parent=5 // pred_check_branch
        %181 = sbr.rel (%p178) target = $region32
      $region31: #{tpu_custom_call.1} parent=5 // pred_region
        %s182 = ssub.s32 %s16, 1
        %s183 = sand.u32 %s29, 1
        %s184 = scalar_lea.sflag [#allocation4], %s183
        %s185 = sand.u32 %s29, 1
        %s186 = smul.addr %s185, 256
        %s187 = scalar_lea.vmem [#allocation3], %s186
        // Predicated region
        $region33: #{tpu_custom_call.1} parent=31 // pred_check
          %p188 = pneg %p42
        $region34: #{tpu_custom_call.1} parent=31 // pred_check_branch
          %190 = sbr.rel (%p188) target = $region36
        $region35: #{tpu_custom_call.1} parent=31 // pred_region
          %191 = dma.done %s184, 4096
        $region36: #{tpu_custom_call.1} parent=31 // pred_fallthru
          _
        // Predicated region
        $region37: #{tpu_custom_call.1} parent=31 // pred_check
          %p192 = pneg %p63
        $region38: #{tpu_custom_call.1} parent=31 // pred_check_branch
          %194 = sbr.rel (%p192) target = $region40
        $region39: #{tpu_custom_call.1} parent=31 // pred_region
          %195 = dma.done [#allocation7], 9216
        $region40: #{tpu_custom_call.1} parent=31 // pred_fallthru
          _
        // Predicated region
        $region41: #{tpu_custom_call.1} parent=31 // pred_check
          %p196 = pneg %p84
        $region42: #{tpu_custom_call.1} parent=31 // pred_check_branch
          %198 = sbr.rel (%p196) target = $region44
        $region43: #{tpu_custom_call.1} parent=31 // pred_region
          %199 = dma.done [#allocation7], 9216
        $region44: #{tpu_custom_call.1} parent=31 // pred_fallthru
          _
        %s200 = sand.u32 %s29, 1
        %s201 = scalar_lea.sflag [#allocation4], %s200
        %s202 = sand.u32 %s29, 1
        %s203 = smul.addr %s202, 256
        %s204 = scalar_lea.vmem [#allocation3], %s203
        %p205 = pneg %p42
        %p206 = pneg %p39
        %p207 = pneg %p63
        %p208 = pneg %p60
        %p209 = pneg %p84
        %p210 = pneg %p81
        %p211 = pneg %p110
        %p212 = pneg %p107
        %s213 = sand.u32 %s97, 1
        %s214 = scalar_lea.sflag [#allocation5], %s213
        %s215 = sand.u32 %s97, 1
        %s216 = smul.addr %s215, 256
        %s217 = scalar_lea.vmem [#allocation9], %s216
        %219 = vst [vmem:[#allocation2 + $0x8] sm:$0xe] 0
        %220 = vst [vmem:[#allocation2 + $0xc] sm:$0xf] 0
        %221 = vst [vmem:[#allocation2 + $0x18] sm:$0xe] 0
        %222 = vst [vmem:[#allocation2 + $0x1c] sm:$0xf] 0
        %223 = vst [vmem:[#allocation2 + $0x28] sm:$0xe] 0
        %224 = vst [vmem:[#allocation2 + $0x2c] sm:$0xf] 0
        %225 = vst [vmem:[#allocation2 + $0x38] sm:$0xe] 0
        %226 = vst [vmem:[#allocation2 + $0x3c] sm:$0xf] 0
        %227 = vst [vmem:[#allocation2 + $0x48] sm:$0xe] 0
        %228 = vst [vmem:[#allocation2 + $0x4c] sm:$0xf] 0
        %229 = vst [vmem:[#allocation2 + $0x58] sm:$0xe] 0
        %230 = vst [vmem:[#allocation2 + $0x5c] sm:$0xf] 0
        %231 = vst [vmem:[#allocation2 + $0x68] sm:$0xe] 0
        %232 = vst [vmem:[#allocation2 + $0x6c] sm:$0xf] 0
        %233 = vst [vmem:[#allocation2 + $0x78] sm:$0xe] 0
        %234 = vst [vmem:[#allocation2 + $0x7c] sm:$0xf] 0
        %235 = vst [vmem:[#allocation2 + $0x88] sm:$0xe] 0
        %236 = vst [vmem:[#allocation2 + $0x8c] sm:$0xf] 0
        %237 = vst [vmem:[#allocation2 + $0x98] sm:$0xe] 0
        %238 = vst [vmem:[#allocation2 + $0x9c] sm:$0xf] 0
        %239 = vst [vmem:[#allocation2 + $0xa8] sm:$0xe] 0
        %240 = vst [vmem:[#allocation2 + $0xac] sm:$0xf] 0
        %241 = vst [vmem:[#allocation2 + $0xb8] sm:$0xe] 0
        %242 = vst [vmem:[#allocation2 + $0xbc] sm:$0xf] 0
        %243 = vst [vmem:[#allocation2 + $0xc8] sm:$0xe] 0
        %244 = vst [vmem:[#allocation2 + $0xcc] sm:$0xf] 0
        %245 = vst [vmem:[#allocation2 + $0xd8] sm:$0xe] 0
        %246 = vst [vmem:[#allocation2 + $0xdc] sm:$0xf] 0
        %247 = vst [vmem:[#allocation2 + $0xe8] sm:$0xe] 0
        %248 = vst [vmem:[#allocation2 + $0xec] sm:$0xf] 0
        %249 = vst [vmem:[#allocation2 + $0xf8] sm:$0xe] 0
        %250 = vst [vmem:[#allocation2 + $0xfc] sm:$0xf] 0
        %251 = vst [vmem:[#allocation2 + $0x108] sm:$0xe] 0
        %252 = vst [vmem:[#allocation2 + $0x10c] sm:$0xf] 0
        %253 = vst [vmem:[#allocation2 + $0x118] sm:$0xe] 0
        %254 = vst [vmem:[#allocation2 + $0x11c] sm:$0xf] 0
        %v255 = vld [vmem:[%s187] sm:$0xff]
        %v256 = vld [vmem:[%s187 + $0x8] sm:$0xff]
        %v257 = vld [vmem:[%s187 + $0x10] sm:$0xff]
        %v258 = vld [vmem:[%s187 + $0x18] sm:$0xff]
        %v259 = vld [vmem:[%s187 + $0x20] sm:$0xff]
        %v260 = vld [vmem:[%s187 + $0x28] sm:$0xff]
        %v261 = vld [vmem:[%s187 + $0x30] sm:$0xff]
        %v262 = vld [vmem:[%s187 + $0x38] sm:$0xff]
        %v263 = vld [vmem:[%s187 + $0x40] sm:$0xff]
        %v264 = vld [vmem:[%s187 + $0x48] sm:$0xff]
        %v265 = vld [vmem:[%s187 + $0x50] sm:$0xff]
        %v266 = vld [vmem:[%s187 + $0x58] sm:$0xff]
        %v267 = vld [vmem:[%s187 + $0x60] sm:$0xff]
        %v268 = vld [vmem:[%s187 + $0x68] sm:$0xff]
        %v269 = vld [vmem:[%s187 + $0x70] sm:$0xff]
        %v270 = vld [vmem:[%s187 + $0x78] sm:$0xff]
        %v271 = vld [vmem:[%s187 + $0x80] sm:$0xff]
        %v272 = vld [vmem:[%s187 + $0x88] sm:$0xff]
        %v273 = vld [vmem:[%s187 + $0x90] sm:$0xff]
        %v274 = vld [vmem:[%s187 + $0x98] sm:$0xff]
        %v275 = vld [vmem:[%s187 + $0xa0] sm:$0xff]
        %v276 = vld [vmem:[%s187 + $0xa8] sm:$0xff]
        %v277 = vld [vmem:[%s187 + $0xb0] sm:$0xff]
        %v278 = vld [vmem:[%s187 + $0xb8] sm:$0xff]
        %v279 = vld [vmem:[%s187 + $0xc0] sm:$0xff]
        %v280 = vld [vmem:[%s187 + $0xc8] sm:$0xff]
        %v281 = vld [vmem:[%s187 + $0xd0] sm:$0xff]
        %v282 = vld [vmem:[%s187 + $0xd8] sm:$0xff]
        %v283 = vld [vmem:[%s187 + $0xe0] sm:$0xff]
        %v284 = vld [vmem:[%s187 + $0xe8] sm:$0xff]
        %v285 = vld [vmem:[%s187 + $0xf0] sm:$0xff]
        %v286 = vld [vmem:[%s187 + $0xf8] sm:$0xff]
        %v287 = vpack.c.bf16 %v256, %v255
        %v288 = vpack.c.bf16 %v258, %v257
        %v289 = vpack.c.bf16 %v260, %v259
        %v290 = vpack.c.bf16 %v262, %v261
        %v291 = vpack.c.bf16 %v264, %v263
        %v292 = vpack.c.bf16 %v266, %v265
        %v293 = vpack.c.bf16 %v268, %v267
        %v294 = vpack.c.bf16 %v270, %v269
        %v295 = vpack.c.bf16 %v272, %v271
        %v296 = vpack.c.bf16 %v274, %v273
        %v297 = vpack.c.bf16 %v276, %v275
        %v298 = vpack.c.bf16 %v278, %v277
        %v299 = vpack.c.bf16 %v280, %v279
        %v300 = vpack.c.bf16 %v282, %v281
        %v301 = vpack.c.bf16 %v284, %v283
        %v302 = vpack.c.bf16 %v286, %v285
        %v319 = vunpack.c.l.b16 %v287
        %v320 = vunpack.c.h.b16 %v287
        %v321 = vunpack.c.l.b16 %v288
        %v322 = vunpack.c.h.b16 %v288
        %v323 = vunpack.c.l.b16 %v289
        %v324 = vunpack.c.h.b16 %v289
        %v325 = vunpack.c.l.b16 %v290
        %v326 = vunpack.c.h.b16 %v290
        %v327 = vunpack.c.l.b16 %v291
        %v328 = vunpack.c.h.b16 %v291
        %v329 = vunpack.c.l.b16 %v292
        %v330 = vunpack.c.h.b16 %v292
        %v331 = vunpack.c.l.b16 %v293
        %v332 = vunpack.c.h.b16 %v293
        %v333 = vunpack.c.l.b16 %v294
        %v334 = vunpack.c.h.b16 %v294
        %v335 = vunpack.c.l.b16 %v295
        %v336 = vunpack.c.h.b16 %v295
        %v337 = vunpack.c.l.b16 %v296
        %v338 = vunpack.c.h.b16 %v296
        %v339 = vunpack.c.l.b16 %v297
        %v340 = vunpack.c.h.b16 %v297
        %v341 = vunpack.c.l.b16 %v298
        %v342 = vunpack.c.h.b16 %v298
        %v343 = vunpack.c.l.b16 %v299
        %v344 = vunpack.c.h.b16 %v299
        %v345 = vunpack.c.l.b16 %v300
        %v346 = vunpack.c.h.b16 %v300
        %v347 = vunpack.c.l.b16 %v301
        %v348 = vunpack.c.h.b16 %v301
        %v349 = vunpack.c.l.b16 %v302
        %v350 = vunpack.c.h.b16 %v302
        %v351 = vpack.c.b16 %v319, %v319
        %v352 = vpack.c.b16 %v320, %v320
        %v353 = vpack.c.b16 %v321, %v321
        %v354 = vpack.c.b16 %v322, %v322
        %v355 = vpack.c.b16 %v323, %v323
        %v356 = vpack.c.b16 %v324, %v324
        %v357 = vpack.c.b16 %v325, %v325
        %v358 = vpack.c.b16 %v326, %v326
        %v359 = vpack.c.b16 %v327, %v327
        %v360 = vpack.c.b16 %v328, %v328
        %v361 = vpack.c.b16 %v329, %v329
        %v362 = vpack.c.b16 %v330, %v330
        %v363 = vpack.c.b16 %v331, %v331
        %v364 = vpack.c.b16 %v332, %v332
        %v365 = vpack.c.b16 %v333, %v333
        %v366 = vpack.c.b16 %v334, %v334
        %v367 = vpack.c.b16 %v335, %v335
        %v368 = vpack.c.b16 %v336, %v336
        %v369 = vpack.c.b16 %v337, %v337
        %v370 = vpack.c.b16 %v338, %v338
        %v371 = vpack.c.b16 %v339, %v339
        %v372 = vpack.c.b16 %v340, %v340
        %v373 = vpack.c.b16 %v341, %v341
        %v374 = vpack.c.b16 %v342, %v342
        %v375 = vpack.c.b16 %v343, %v343
        %v376 = vpack.c.b16 %v344, %v344
        %v377 = vpack.c.b16 %v345, %v345
        %v378 = vpack.c.b16 %v346, %v346
        %v379 = vpack.c.b16 %v347, %v347
        %v380 = vpack.c.b16 %v348, %v348
        %v381 = vpack.c.b16 %v349, %v349
        %v382 = vpack.c.b16 %v350, %v350
        %vm383 = vsmask.f32 256
        %vm384 = vsmask.f32 4368
        %vm385 = vmor %vm383, %vm384
        %v387 = vshrl.u32 %v351, 16
        %v389 = vrot.slane %v387, 7
        %v390 = vshll.u32 %v351, 16
        %v392 = vor.u32 %v389, %v390
        %v393 = vrot.slane %v389, 4
        %v395 = vshrl.u32 %v352, 16
        %v397 = vrot.slane %v395, 7
        %v398 = vshll.u32 %v352, 16
        %v400 = vor.u32 %v397, %v398
        %v401 = vsel %vm385, %v393, %v400
        %v402 = vrot.slane %v397, 4
        %v404 = vshrl.u32 %v353, 16
        %v406 = vrot.slane %v404, 7
        %v407 = vshll.u32 %v353, 16
        %v409 = vor.u32 %v406, %v407
        %v410 = vrot.slane %v406, 4
        %v412 = vshrl.u32 %v354, 16
        %v414 = vrot.slane %v412, 7
        %v415 = vshll.u32 %v354, 16
        %v417 = vor.u32 %v414, %v415
        %v418 = vsel %vm385, %v410, %v417
        %v419 = vrot.slane %v414, 4
        %v421 = vshrl.u32 %v355, 16
        %v423 = vrot.slane %v421, 7
        %v424 = vshll.u32 %v355, 16
        %v426 = vor.u32 %v423, %v424
        %v427 = vrot.slane %v423, 4
        %v429 = vshrl.u32 %v356, 16
        %v431 = vrot.slane %v429, 7
        %v432 = vshll.u32 %v356, 16
        %v434 = vor.u32 %v431, %v432
        %v435 = vsel %vm385, %v427, %v434
        %v436 = vrot.slane %v431, 4
        %v438 = vshrl.u32 %v357, 16
        %v440 = vrot.slane %v438, 7
        %v441 = vshll.u32 %v357, 16
        %v443 = vor.u32 %v440, %v441
        %v444 = vrot.slane %v440, 4
        %v446 = vshrl.u32 %v358, 16
        %v448 = vrot.slane %v446, 7
        %v449 = vshll.u32 %v358, 16
        %v451 = vor.u32 %v448, %v449
        %v452 = vsel %vm385, %v444, %v451
        %v453 = vrot.slane %v448, 4
        %v455 = vshrl.u32 %v359, 16
        %v457 = vrot.slane %v455, 7
        %v458 = vshll.u32 %v359, 16
        %v460 = vor.u32 %v457, %v458
        %v461 = vrot.slane %v457, 4
        %v463 = vshrl.u32 %v360, 16
        %v465 = vrot.slane %v463, 7
        %v466 = vshll.u32 %v360, 16
        %v468 = vor.u32 %v465, %v466
        %v469 = vsel %vm385, %v461, %v468
        %v470 = vrot.slane %v465, 4
        %v472 = vshrl.u32 %v361, 16
        %v474 = vrot.slane %v472, 7
        %v475 = vshll.u32 %v361, 16
        %v477 = vor.u32 %v474, %v475
        %v478 = vrot.slane %v474, 4
        %v480 = vshrl.u32 %v362, 16
        %v482 = vrot.slane %v480, 7
        %v483 = vshll.u32 %v362, 16
        %v485 = vor.u32 %v482, %v483
        %v486 = vsel %vm385, %v478, %v485
        %v487 = vrot.slane %v482, 4
        %v489 = vshrl.u32 %v363, 16
        %v491 = vrot.slane %v489, 7
        %v492 = vshll.u32 %v363, 16
        %v494 = vor.u32 %v491, %v492
        %v495 = vrot.slane %v491, 4
        %v497 = vshrl.u32 %v364, 16
        %v499 = vrot.slane %v497, 7
        %v500 = vshll.u32 %v364, 16
        %v502 = vor.u32 %v499, %v500
        %v503 = vsel %vm385, %v495, %v502
        %v504 = vrot.slane %v499, 4
        %v506 = vshrl.u32 %v365, 16
        %v508 = vrot.slane %v506, 7
        %v509 = vshll.u32 %v365, 16
        %v511 = vor.u32 %v508, %v509
        %v512 = vrot.slane %v508, 4
        %v514 = vshrl.u32 %v366, 16
        %v516 = vrot.slane %v514, 7
        %v517 = vshll.u32 %v366, 16
        %v519 = vor.u32 %v516, %v517
        %v520 = vsel %vm385, %v512, %v519
        %v521 = vrot.slane %v516, 4
        %v523 = vshrl.u32 %v367, 16
        %v525 = vrot.slane %v523, 7
        %v526 = vshll.u32 %v367, 16
        %v528 = vor.u32 %v525, %v526
        %v529 = vrot.slane %v525, 4
        %v531 = vshrl.u32 %v368, 16
        %v533 = vrot.slane %v531, 7
        %v534 = vshll.u32 %v368, 16
        %v536 = vor.u32 %v533, %v534
        %v537 = vsel %vm385, %v529, %v536
        %v538 = vrot.slane %v533, 4
        %v540 = vshrl.u32 %v369, 16
        %v542 = vrot.slane %v540, 7
        %v543 = vshll.u32 %v369, 16
        %v545 = vor.u32 %v542, %v543
        %v546 = vrot.slane %v542, 4
        %v548 = vshrl.u32 %v370, 16
        %v550 = vrot.slane %v548, 7
        %v551 = vshll.u32 %v370, 16
        %v553 = vor.u32 %v550, %v551
        %v554 = vsel %vm385, %v546, %v553
        %v555 = vrot.slane %v550, 4
        %v557 = vshrl.u32 %v371, 16
        %v559 = vrot.slane %v557, 7
        %v560 = vshll.u32 %v371, 16
        %v562 = vor.u32 %v559, %v560
        %v563 = vrot.slane %v559, 4
        %v565 = vshrl.u32 %v372, 16
        %v567 = vrot.slane %v565, 7
        %v568 = vshll.u32 %v372, 16
        %v570 = vor.u32 %v567, %v568
        %v571 = vsel %vm385, %v563, %v570
        %v572 = vrot.slane %v567, 4
        %v574 = vshrl.u32 %v373, 16
        %v576 = vrot.slane %v574, 7
        %v577 = vshll.u32 %v373, 16
        %v579 = vor.u32 %v576, %v577
        %v580 = vrot.slane %v576, 4
        %v582 = vshrl.u32 %v374, 16
        %v584 = vrot.slane %v582, 7
        %v585 = vshll.u32 %v374, 16
        %v587 = vor.u32 %v584, %v585
        %v588 = vsel %vm385, %v580, %v587
        %v589 = vrot.slane %v584, 4
        %v591 = vshrl.u32 %v375, 16
        %v593 = vrot.slane %v591, 7
        %v594 = vshll.u32 %v375, 16
        %v596 = vor.u32 %v593, %v594
        %v597 = vrot.slane %v593, 4
        %v599 = vshrl.u32 %v376, 16
        %v601 = vrot.slane %v599, 7
        %v602 = vshll.u32 %v376, 16
        %v604 = vor.u32 %v601, %v602
        %v605 = vsel %vm385, %v597, %v604
        %v606 = vrot.slane %v601, 4
        %v608 = vshrl.u32 %v377, 16
        %v610 = vrot.slane %v608, 7
        %v611 = vshll.u32 %v377, 16
        %v613 = vor.u32 %v610, %v611
        %v614 = vrot.slane %v610, 4
        %v616 = vshrl.u32 %v378, 16
        %v618 = vrot.slane %v616, 7
        %v619 = vshll.u32 %v378, 16
        %v621 = vor.u32 %v618, %v619
        %v622 = vsel %vm385, %v614, %v621
        %v623 = vrot.slane %v618, 4
        %v625 = vshrl.u32 %v379, 16
        %v627 = vrot.slane %v625, 7
        %v628 = vshll.u32 %v379, 16
        %v630 = vor.u32 %v627, %v628
        %v631 = vrot.slane %v627, 4
        %v633 = vshrl.u32 %v380, 16
        %v635 = vrot.slane %v633, 7
        %v636 = vshll.u32 %v380, 16
        %v638 = vor.u32 %v635, %v636
        %v639 = vsel %vm385, %v631, %v638
        %v640 = vrot.slane %v635, 4
        %v642 = vshrl.u32 %v381, 16
        %v644 = vrot.slane %v642, 7
        %v645 = vshll.u32 %v381, 16
        %v647 = vor.u32 %v644, %v645
        %v648 = vrot.slane %v644, 4
        %v650 = vshrl.u32 %v382, 16
        %v652 = vrot.slane %v650, 7
        %v653 = vshll.u32 %v382, 16
        %v655 = vor.u32 %v652, %v653
        %v656 = vsel %vm385, %v648, %v655
        %v657 = vrot.slane %v652, 4
        %s706 = scalar_lea.vmem [#allocation2], 16
        %vm707 = vcmask 1043456
        %vm708 = vsmask.f32 7938
        %vm709 = vmand %vm707, %vm708
        %v710 = vld [vmem:[%s706] sm:$0xf]
        %v711 = vsel %vm709, %v392, %v710
        %712 = vst [vmem:[%s706] sm:$0xf] %v711
        %713 = vst [vmem:[%s706 + $0x4] sm:$0xf] %v401
        %vm714 = vcmask 1040384
        %vm715 = vmand %vm714, %vm383
        %v716 = vld [vmem:[%s706 + $0x8] sm:$0x1]
        %v717 = vsel %vm715, %v402, %v716
        %718 = vst [vmem:[%s706 + $0x8] sm:$0x1] %v717
        %v719 = vld [vmem:[%s706 + $0x10] sm:$0xf]
        %v720 = vsel %vm709, %v409, %v719
        %721 = vst [vmem:[%s706 + $0x10] sm:$0xf] %v720
        %722 = vst [vmem:[%s706 + $0x14] sm:$0xf] %v418
        %v723 = vld [vmem:[%s706 + $0x18] sm:$0x1]
        %v724 = vsel %vm715, %v419, %v723
        %725 = vst [vmem:[%s706 + $0x18] sm:$0x1] %v724
        %v726 = vld [vmem:[%s706 + $0x20] sm:$0xf]
        %v727 = vsel %vm709, %v426, %v726
        %728 = vst [vmem:[%s706 + $0x20] sm:$0xf] %v727
        %729 = vst [vmem:[%s706 + $0x24] sm:$0xf] %v435
        %v730 = vld [vmem:[%s706 + $0x28] sm:$0x1]
        %v731 = vsel %vm715, %v436, %v730
        %732 = vst [vmem:[%s706 + $0x28] sm:$0x1] %v731
        %v733 = vld [vmem:[%s706 + $0x30] sm:$0xf]
        %v734 = vsel %vm709, %v443, %v733
        %735 = vst [vmem:[%s706 + $0x30] sm:$0xf] %v734
        %736 = vst [vmem:[%s706 + $0x34] sm:$0xf] %v452
        %v737 = vld [vmem:[%s706 + $0x38] sm:$0x1]
        %v738 = vsel %vm715, %v453, %v737
        %739 = vst [vmem:[%s706 + $0x38] sm:$0x1] %v738
        %v740 = vld [vmem:[%s706 + $0x40] sm:$0xf]
        %v741 = vsel %vm709, %v460, %v740
        %742 = vst [vmem:[%s706 + $0x40] sm:$0xf] %v741
        %743 = vst [vmem:[%s706 + $0x44] sm:$0xf] %v469
        %v744 = vld [vmem:[%s706 + $0x48] sm:$0x1]
        %v745 = vsel %vm715, %v470, %v744
        %746 = vst [vmem:[%s706 + $0x48] sm:$0x1] %v745
        %v747 = vld [vmem:[%s706 + $0x50] sm:$0xf]
        %v748 = vsel %vm709, %v477, %v747
        %749 = vst [vmem:[%s706 + $0x50] sm:$0xf] %v748
        %750 = vst [vmem:[%s706 + $0x54] sm:$0xf] %v486
        %v751 = vld [vmem:[%s706 + $0x58] sm:$0x1]
        %v752 = vsel %vm715, %v487, %v751
        %753 = vst [vmem:[%s706 + $0x58] sm:$0x1] %v752
        %v754 = vld [vmem:[%s706 + $0x60] sm:$0xf]
        %v755 = vsel %vm709, %v494, %v754
        %756 = vst [vmem:[%s706 + $0x60] sm:$0xf] %v755
        %757 = vst [vmem:[%s706 + $0x64] sm:$0xf] %v503
        %v758 = vld [vmem:[%s706 + $0x68] sm:$0x1]
        %v759 = vsel %vm715, %v504, %v758
        %760 = vst [vmem:[%s706 + $0x68] sm:$0x1] %v759
        %v761 = vld [vmem:[%s706 + $0x70] sm:$0xf]
        %v762 = vsel %vm709, %v511, %v761
        %763 = vst [vmem:[%s706 + $0x70] sm:$0xf] %v762
        %764 = vst [vmem:[%s706 + $0x74] sm:$0xf] %v520
        %v765 = vld [vmem:[%s706 + $0x78] sm:$0x1]
        %v766 = vsel %vm715, %v521, %v765
        %767 = vst [vmem:[%s706 + $0x78] sm:$0x1] %v766
        %v768 = vld [vmem:[%s706 + $0x80] sm:$0xf]
        %v769 = vsel %vm709, %v528, %v768
        %770 = vst [vmem:[%s706 + $0x80] sm:$0xf] %v769
        %771 = vst [vmem:[%s706 + $0x84] sm:$0xf] %v537
        %v772 = vld [vmem:[%s706 + $0x88] sm:$0x1]
        %v773 = vsel %vm715, %v538, %v772
        %774 = vst [vmem:[%s706 + $0x88] sm:$0x1] %v773
        %v775 = vld [vmem:[%s706 + $0x90] sm:$0xf]
        %v776 = vsel %vm709, %v545, %v775
        %777 = vst [vmem:[%s706 + $0x90] sm:$0xf] %v776
        %778 = vst [vmem:[%s706 + $0x94] sm:$0xf] %v554
        %v779 = vld [vmem:[%s706 + $0x98] sm:$0x1]
        %v780 = vsel %vm715, %v555, %v779
        %781 = vst [vmem:[%s706 + $0x98] sm:$0x1] %v780
        %v782 = vld [vmem:[%s706 + $0xa0] sm:$0xf]
        %v783 = vsel %vm709, %v562, %v782
        %784 = vst [vmem:[%s706 + $0xa0] sm:$0xf] %v783
        %785 = vst [vmem:[%s706 + $0xa4] sm:$0xf] %v571
        %v786 = vld [vmem:[%s706 + $0xa8] sm:$0x1]
        %v787 = vsel %vm715, %v572, %v786
        %788 = vst [vmem:[%s706 + $0xa8] sm:$0x1] %v787
        %v789 = vld [vmem:[%s706 + $0xb0] sm:$0xf]
        %v790 = vsel %vm709, %v579, %v789
        %791 = vst [vmem:[%s706 + $0xb0] sm:$0xf] %v790
        %792 = vst [vmem:[%s706 + $0xb4] sm:$0xf] %v588
        %v793 = vld [vmem:[%s706 + $0xb8] sm:$0x1]
        %v794 = vsel %vm715, %v589, %v793
        %795 = vst [vmem:[%s706 + $0xb8] sm:$0x1] %v794
        %v796 = vld [vmem:[%s706 + $0xc0] sm:$0xf]
        %v797 = vsel %vm709, %v596, %v796
        %798 = vst [vmem:[%s706 + $0xc0] sm:$0xf] %v797
        %799 = vst [vmem:[%s706 + $0xc4] sm:$0xf] %v605
        %v800 = vld [vmem:[%s706 + $0xc8] sm:$0x1]
        %v801 = vsel %vm715, %v606, %v800
        %802 = vst [vmem:[%s706 + $0xc8] sm:$0x1] %v801
        %v803 = vld [vmem:[%s706 + $0xd0] sm:$0xf]
        %v804 = vsel %vm709, %v613, %v803
        %805 = vst [vmem:[%s706 + $0xd0] sm:$0xf] %v804
        %806 = vst [vmem:[%s706 + $0xd4] sm:$0xf] %v622
        %v807 = vld [vmem:[%s706 + $0xd8] sm:$0x1]
        %v808 = vsel %vm715, %v623, %v807
        %809 = vst [vmem:[%s706 + $0xd8] sm:$0x1] %v808
        %v810 = vld [vmem:[%s706 + $0xe0] sm:$0xf]
        %v811 = vsel %vm709, %v630, %v810
        %812 = vst [vmem:[%s706 + $0xe0] sm:$0xf] %v811
        %813 = vst [vmem:[%s706 + $0xe4] sm:$0xf] %v639
        %v814 = vld [vmem:[%s706 + $0xe8] sm:$0x1]
        %v815 = vsel %vm715, %v640, %v814
        %816 = vst [vmem:[%s706 + $0xe8] sm:$0x1] %v815
        %v817 = vld [vmem:[%s706 + $0xf0] sm:$0xf]
        %v818 = vsel %vm709, %v647, %v817
        %819 = vst [vmem:[%s706 + $0xf0] sm:$0xf] %v818
        %820 = vst [vmem:[%s706 + $0xf4] sm:$0xf] %v656
        %v821 = vld [vmem:[%s706 + $0xf8] sm:$0x1]
        %v822 = vsel %vm715, %v657, %v821
        %823 = vst [vmem:[%s706 + $0xf8] sm:$0x1] %v822
        %v824 = vld [vmem:[#allocation2] sm:$0xf]
        %v825 = vsel %vm709, %v409, %v824
        %826 = vst [vmem:[#allocation2] sm:$0xf] %v825
        %827 = vst [vmem:[#allocation2 + $0x4] sm:$0xf] %v418
        %v828 = vld [vmem:[#allocation2 + $0x8] sm:$0x1]
        %v829 = vsel %vm715, %v419, %v828
        %830 = vst [vmem:[#allocation2 + $0x8] sm:$0x1] %v829
        %s831 = scalar_lea.vmem [#allocation2], 272
        %v832 = vld [vmem:[%s831] sm:$0xf]
        %v833 = vsel %vm709, %v630, %v832
        %834 = vst [vmem:[%s831] sm:$0xf] %v833
        %835 = vst [vmem:[%s831 + $0x4] sm:$0xf] %v639
        %v836 = vld [vmem:[%s831 + $0x8] sm:$0x1]
        %v837 = vsel %vm715, %v640, %v836
        %838 = vst [vmem:[%s831 + $0x8] sm:$0x1] %v837
        %v839 = vld [vmem:[#allocation2] sm:$0x2]
        %v840 = vld [vmem:[#allocation2 + $0x10] sm:$0x2]
        %v841 = vld [vmem:[#allocation2 + $0x20] sm:$0x2]
        %v842 = vld [vmem:[#allocation2 + $0x30] sm:$0x2]
        %v843 = vld [vmem:[#allocation2 + $0x40] sm:$0x2]
        %v844 = vld [vmem:[#allocation2 + $0x50] sm:$0x2]
        %v845 = vld [vmem:[#allocation2 + $0x60] sm:$0x2]
        %v846 = vld [vmem:[#allocation2 + $0x70] sm:$0x2]
        %v847 = vld [vmem:[#allocation2 + $0x80] sm:$0x2]
        %v848 = vld [vmem:[#allocation2 + $0x90] sm:$0x2]
        %v849 = vld [vmem:[#allocation2 + $0xa0] sm:$0x2]
        %v850 = vld [vmem:[#allocation2 + $0xb0] sm:$0x2]
        %v851 = vld [vmem:[#allocation2 + $0xc0] sm:$0x2]
        %v852 = vld [vmem:[#allocation2 + $0xd0] sm:$0x2]
        %v853 = vld [vmem:[#allocation2 + $0xe0] sm:$0x2]
        %v854 = vld [vmem:[#allocation2 + $0xf0] sm:$0x2]
        %v855 = vld [vmem:[#allocation2 + $0x100] sm:$0x2]
        %v856 = vld [vmem:[#allocation2 + $0x110] sm:$0x2]
        %v875 = vrot.slane %v839, 5
        %v876 = vrot.slane %v875, 4
        %v877 = vrot.slane %v840, 5
        %v878 = vrot.slane %v877, 4
        %v879 = vrot.slane %v841, 5
        %v880 = vrot.slane %v879, 4
        %v881 = vrot.slane %v842, 5
        %v882 = vrot.slane %v881, 4
        %v883 = vrot.slane %v843, 5
        %v884 = vrot.slane %v883, 4
        %v885 = vrot.slane %v844, 5
        %v886 = vrot.slane %v885, 4
        %v887 = vrot.slane %v845, 5
        %v888 = vrot.slane %v887, 4
        %v889 = vrot.slane %v846, 5
        %v890 = vrot.slane %v889, 4
        %v891 = vrot.slane %v847, 5
        %v892 = vrot.slane %v891, 4
        %v893 = vrot.slane %v848, 5
        %v894 = vrot.slane %v893, 4
        %v895 = vrot.slane %v849, 5
        %v896 = vrot.slane %v895, 4
        %v897 = vrot.slane %v850, 5
        %v898 = vrot.slane %v897, 4
        %v899 = vrot.slane %v851, 5
        %v900 = vrot.slane %v899, 4
        %v901 = vrot.slane %v852, 5
        %v902 = vrot.slane %v901, 4
        %v903 = vrot.slane %v853, 5
        %v904 = vrot.slane %v903, 4
        %v905 = vrot.slane %v854, 5
        %v906 = vrot.slane %v905, 4
        %v907 = vrot.slane %v855, 5
        %v908 = vrot.slane %v907, 4
        %v909 = vrot.slane %v856, 5
        %v910 = vrot.slane %v909, 4
        %v929 = vld [vmem:[#allocation2] sm:$0x1]
        %v930 = vsel %vm715, %v876, %v929
        %931 = vst [vmem:[#allocation2] sm:$0x1] %v930
        %v932 = vld [vmem:[#allocation2 + $0x10] sm:$0x1]
        %v933 = vsel %vm715, %v878, %v932
        %934 = vst [vmem:[#allocation2 + $0x10] sm:$0x1] %v933
        %v935 = vld [vmem:[#allocation2 + $0x20] sm:$0x1]
        %v936 = vsel %vm715, %v880, %v935
        %937 = vst [vmem:[#allocation2 + $0x20] sm:$0x1] %v936
        %v938 = vld [vmem:[#allocation2 + $0x30] sm:$0x1]
        %v939 = vsel %vm715, %v882, %v938
        %940 = vst [vmem:[#allocation2 + $0x30] sm:$0x1] %v939
        %v941 = vld [vmem:[#allocation2 + $0x40] sm:$0x1]
        %v942 = vsel %vm715, %v884, %v941
        %943 = vst [vmem:[#allocation2 + $0x40] sm:$0x1] %v942
        %v944 = vld [vmem:[#allocation2 + $0x50] sm:$0x1]
        %v945 = vsel %vm715, %v886, %v944
        %946 = vst [vmem:[#allocation2 + $0x50] sm:$0x1] %v945
        %v947 = vld [vmem:[#allocation2 + $0x60] sm:$0x1]
        %v948 = vsel %vm715, %v888, %v947
        %949 = vst [vmem:[#allocation2 + $0x60] sm:$0x1] %v948
        %v950 = vld [vmem:[#allocation2 + $0x70] sm:$0x1]
        %v951 = vsel %vm715, %v890, %v950
        %952 = vst [vmem:[#allocation2 + $0x70] sm:$0x1] %v951
        %v953 = vld [vmem:[#allocation2 + $0x80] sm:$0x1]
        %v954 = vsel %vm715, %v892, %v953
        %955 = vst [vmem:[#allocation2 + $0x80] sm:$0x1] %v954
        %v956 = vld [vmem:[#allocation2 + $0x90] sm:$0x1]
        %v957 = vsel %vm715, %v894, %v956
        %958 = vst [vmem:[#allocation2 + $0x90] sm:$0x1] %v957
        %v959 = vld [vmem:[#allocation2 + $0xa0] sm:$0x1]
        %v960 = vsel %vm715, %v896, %v959
        %961 = vst [vmem:[#allocation2 + $0xa0] sm:$0x1] %v960
        %v962 = vld [vmem:[#allocation2 + $0xb0] sm:$0x1]
        %v963 = vsel %vm715, %v898, %v962
        %964 = vst [vmem:[#allocation2 + $0xb0] sm:$0x1] %v963
        %v965 = vld [vmem:[#allocation2 + $0xc0] sm:$0x1]
        %v966 = vsel %vm715, %v900, %v965
        %967 = vst [vmem:[#allocation2 + $0xc0] sm:$0x1] %v966
        %v968 = vld [vmem:[#allocation2 + $0xd0] sm:$0x1]
        %v969 = vsel %vm715, %v902, %v968
        %970 = vst [vmem:[#allocation2 + $0xd0] sm:$0x1] %v969
        %v971 = vld [vmem:[#allocation2 + $0xe0] sm:$0x1]
        %v972 = vsel %vm715, %v904, %v971
        %973 = vst [vmem:[#allocation2 + $0xe0] sm:$0x1] %v972
        %v974 = vld [vmem:[#allocation2 + $0xf0] sm:$0x1]
        %v975 = vsel %vm715, %v906, %v974
        %976 = vst [vmem:[#allocation2 + $0xf0] sm:$0x1] %v975
        %v977 = vld [vmem:[#allocation2 + $0x100] sm:$0x1]
        %v978 = vsel %vm715, %v908, %v977
        %979 = vst [vmem:[#allocation2 + $0x100] sm:$0x1] %v978
        %v980 = vld [vmem:[#allocation2 + $0x110] sm:$0x1]
        %v981 = vsel %vm715, %v910, %v980
        %982 = vst [vmem:[#allocation2 + $0x110] sm:$0x1] %v981
        %v983 = vld [vmem:[#allocation2 + $0x4] sm:$0x8]
        %v984 = vld [vmem:[#allocation2 + $0x14] sm:$0x8]
        %v985 = vld [vmem:[#allocation2 + $0x24] sm:$0x8]
        %v986 = vld [vmem:[#allocation2 + $0x34] sm:$0x8]
        %v987 = vld [vmem:[#allocation2 + $0x44] sm:$0x8]
        %v988 = vld [vmem:[#allocation2 + $0x54] sm:$0x8]
        %v989 = vld [vmem:[#allocation2 + $0x64] sm:$0x8]
        %v990 = vld [vmem:[#allocation2 + $0x74] sm:$0x8]
        %v991 = vld [vmem:[#allocation2 + $0x84] sm:$0x8]
        %v992 = vld [vmem:[#allocation2 + $0x94] sm:$0x8]
        %v993 = vld [vmem:[#allocation2 + $0xa4] sm:$0x8]
        %v994 = vld [vmem:[#allocation2 + $0xb4] sm:$0x8]
        %v995 = vld [vmem:[#allocation2 + $0xc4] sm:$0x8]
        %v996 = vld [vmem:[#allocation2 + $0xd4] sm:$0x8]
        %v997 = vld [vmem:[#allocation2 + $0xe4] sm:$0x8]
        %v998 = vld [vmem:[#allocation2 + $0xf4] sm:$0x8]
        %v999 = vld [vmem:[#allocation2 + $0x104] sm:$0x8]
        %v1000 = vld [vmem:[#allocation2 + $0x114] sm:$0x8]
        %v1019 = vrot.slane %v983, 7
        %v1020 = vrot.slane %v1019, 4
        %v1021 = vrot.slane %v984, 7
        %v1022 = vrot.slane %v1021, 4
        %v1023 = vrot.slane %v985, 7
        %v1024 = vrot.slane %v1023, 4
        %v1025 = vrot.slane %v986, 7
        %v1026 = vrot.slane %v1025, 4
        %v1027 = vrot.slane %v987, 7
        %v1028 = vrot.slane %v1027, 4
        %v1029 = vrot.slane %v988, 7
        %v1030 = vrot.slane %v1029, 4
        %v1031 = vrot.slane %v989, 7
        %v1032 = vrot.slane %v1031, 4
        %v1033 = vrot.slane %v990, 7
        %v1034 = vrot.slane %v1033, 4
        %v1035 = vrot.slane %v991, 7
        %v1036 = vrot.slane %v1035, 4
        %v1037 = vrot.slane %v992, 7
        %v1038 = vrot.slane %v1037, 4
        %v1039 = vrot.slane %v993, 7
        %v1040 = vrot.slane %v1039, 4
        %v1041 = vrot.slane %v994, 7
        %v1042 = vrot.slane %v1041, 4
        %v1043 = vrot.slane %v995, 7
        %v1044 = vrot.slane %v1043, 4
        %v1045 = vrot.slane %v996, 7
        %v1046 = vrot.slane %v1045, 4
        %v1047 = vrot.slane %v997, 7
        %v1048 = vrot.slane %v1047, 4
        %v1049 = vrot.slane %v998, 7
        %v1050 = vrot.slane %v1049, 4
        %v1051 = vrot.slane %v999, 7
        %v1052 = vrot.slane %v1051, 4
        %v1053 = vrot.slane %v1000, 7
        %v1054 = vrot.slane %v1053, 4
        %vm1073 = vmand %vm714, %vm708
        %v1074 = vld [vmem:[#allocation2 + $0x8] sm:$0x1]
        %v1075 = vsel %vm1073, %v1020, %v1074
        %1076 = vst [vmem:[#allocation2 + $0x8] sm:$0x1] %v1075
        %v1077 = vld [vmem:[#allocation2 + $0x18] sm:$0x1]
        %v1078 = vsel %vm1073, %v1022, %v1077
        %1079 = vst [vmem:[#allocation2 + $0x18] sm:$0x1] %v1078
        %v1080 = vld [vmem:[#allocation2 + $0x28] sm:$0x1]
        %v1081 = vsel %vm1073, %v1024, %v1080
        %1082 = vst [vmem:[#allocation2 + $0x28] sm:$0x1] %v1081
        %v1083 = vld [vmem:[#allocation2 + $0x38] sm:$0x1]
        %v1084 = vsel %vm1073, %v1026, %v1083
        %1085 = vst [vmem:[#allocation2 + $0x38] sm:$0x1] %v1084
        %v1086 = vld [vmem:[#allocation2 + $0x48] sm:$0x1]
        %v1087 = vsel %vm1073, %v1028, %v1086
        %1088 = vst [vmem:[#allocation2 + $0x48] sm:$0x1] %v1087
        %v1089 = vld [vmem:[#allocation2 + $0x58] sm:$0x1]
        %v1090 = vsel %vm1073, %v1030, %v1089
        %1091 = vst [vmem:[#allocation2 + $0x58] sm:$0x1] %v1090
        %v1092 = vld [vmem:[#allocation2 + $0x68] sm:$0x1]
        %v1093 = vsel %vm1073, %v1032, %v1092
        %1094 = vst [vmem:[#allocation2 + $0x68] sm:$0x1] %v1093
        %v1095 = vld [vmem:[#allocation2 + $0x78] sm:$0x1]
        %v1096 = vsel %vm1073, %v1034, %v1095
        %1097 = vst [vmem:[#allocation2 + $0x78] sm:$0x1] %v1096
        %v1098 = vld [vmem:[#allocation2 + $0x88] sm:$0x1]
        %v1099 = vsel %vm1073, %v1036, %v1098
        %1100 = vst [vmem:[#allocation2 + $0x88] sm:$0x1] %v1099
        %v1101 = vld [vmem:[#allocation2 + $0x98] sm:$0x1]
        %v1102 = vsel %vm1073, %v1038, %v1101
        %1103 = vst [vmem:[#allocation2 + $0x98] sm:$0x1] %v1102
        %v1104 = vld [vmem:[#allocation2 + $0xa8] sm:$0x1]
        %v1105 = vsel %vm1073, %v1040, %v1104
        %1106 = vst [vmem:[#allocation2 + $0xa8] sm:$0x1] %v1105
        %v1107 = vld [vmem:[#allocation2 + $0xb8] sm:$0x1]
        %v1108 = vsel %vm1073, %v1042, %v1107
        %1109 = vst [vmem:[#allocation2 + $0xb8] sm:$0x1] %v1108
        %v1110 = vld [vmem:[#allocation2 + $0xc8] sm:$0x1]
        %v1111 = vsel %vm1073, %v1044, %v1110
        %1112 = vst [vmem:[#allocation2 + $0xc8] sm:$0x1] %v1111
        %v1113 = vld [vmem:[#allocation2 + $0xd8] sm:$0x1]
        %v1114 = vsel %vm1073, %v1046, %v1113
        %1115 = vst [vmem:[#allocation2 + $0xd8] sm:$0x1] %v1114
        %v1116 = vld [vmem:[#allocation2 + $0xe8] sm:$0x1]
        %v1117 = vsel %vm1073, %v1048, %v1116
        %1118 = vst [vmem:[#allocation2 + $0xe8] sm:$0x1] %v1117
        %v1119 = vld [vmem:[#allocation2 + $0xf8] sm:$0x1]
        %v1120 = vsel %vm1073, %v1050, %v1119
        %1121 = vst [vmem:[#allocation2 + $0xf8] sm:$0x1] %v1120
        %v1122 = vld [vmem:[#allocation2 + $0x108] sm:$0x1]
        %v1123 = vsel %vm1073, %v1052, %v1122
        %1124 = vst [vmem:[#allocation2 + $0x108] sm:$0x1] %v1123
        %v1125 = vld [vmem:[#allocation2 + $0x118] sm:$0x1]
        %v1126 = vsel %vm1073, %v1054, %v1125
        %1127 = vst [vmem:[#allocation2 + $0x118] sm:$0x1] %v1126
        %v1128 = vld [vmem:[#allocation2] sm:$0xf]
        %v1129 = vld [vmem:[#allocation2 + $0x4] sm:$0xf]
        %v1130 = vld [vmem:[#allocation2 + $0x8] sm:$0xf]
        %v1131 = vld [vmem:[#allocation2 + $0xc] sm:$0xf]
        %v1132 = vld [vmem:[#allocation2 + $0x10] sm:$0xf]
        %v1133 = vld [vmem:[#allocation2 + $0x14] sm:$0xf]
        %v1134 = vld [vmem:[#allocation2 + $0x18] sm:$0xf]
        %v1135 = vld [vmem:[#allocation2 + $0x1c] sm:$0xf]
        %v1136 = vld [vmem:[#allocation2 + $0x20] sm:$0xf]
        %v1137 = vld [vmem:[#allocation2 + $0x24] sm:$0xf]
        %v1138 = vld [vmem:[#allocation2 + $0x28] sm:$0xf]
        %v1139 = vld [vmem:[#allocation2 + $0x2c] sm:$0xf]
        %v1140 = vld [vmem:[#allocation2 + $0x30] sm:$0xf]
        %v1141 = vld [vmem:[#allocation2 + $0x34] sm:$0xf]
        %v1142 = vld [vmem:[#allocation2 + $0x38] sm:$0xf]
        %v1143 = vld [vmem:[#allocation2 + $0x3c] sm:$0xf]
        %v1144 = vld [vmem:[#allocation2 + $0x40] sm:$0xf]
        %v1145 = vld [vmem:[#allocation2 + $0x44] sm:$0xf]
        %v1146 = vld [vmem:[#allocation2 + $0x48] sm:$0xf]
        %v1147 = vld [vmem:[#allocation2 + $0x4c] sm:$0xf]
        %v1148 = vld [vmem:[#allocation2 + $0x50] sm:$0xf]
        %v1149 = vld [vmem:[#allocation2 + $0x54] sm:$0xf]
        %v1150 = vld [vmem:[#allocation2 + $0x58] sm:$0xf]
        %v1151 = vld [vmem:[#allocation2 + $0x5c] sm:$0xf]
        %v1152 = vld [vmem:[#allocation2 + $0x60] sm:$0xf]
        %v1153 = vld [vmem:[#allocation2 + $0x64] sm:$0xf]
        %v1154 = vld [vmem:[#allocation2 + $0x68] sm:$0xf]
        %v1155 = vld [vmem:[#allocation2 + $0x6c] sm:$0xf]
        %v1156 = vld [vmem:[#allocation2 + $0x70] sm:$0xf]
        %v1157 = vld [vmem:[#allocation2 + $0x74] sm:$0xf]
        %v1158 = vld [vmem:[#allocation2 + $0x78] sm:$0xf]
        %v1159 = vld [vmem:[#allocation2 + $0x7c] sm:$0xf]
        %v1160 = vld [vmem:[#allocation2 + $0x80] sm:$0xf]
        %v1161 = vld [vmem:[#allocation2 + $0x84] sm:$0xf]
        %v1162 = vld [vmem:[#allocation2 + $0x88] sm:$0xf]
        %v1163 = vld [vmem:[#allocation2 + $0x8c] sm:$0xf]
        %v1164 = vld [vmem:[#allocation2 + $0x90] sm:$0xf]
        %v1165 = vld [vmem:[#allocation2 + $0x94] sm:$0xf]
        %v1166 = vld [vmem:[#allocation2 + $0x98] sm:$0xf]
        %v1167 = vld [vmem:[#allocation2 + $0x9c] sm:$0xf]
        %v1168 = vld [vmem:[#allocation2 + $0xa0] sm:$0xf]
        %v1169 = vld [vmem:[#allocation2 + $0xa4] sm:$0xf]
        %v1170 = vld [vmem:[#allocation2 + $0xa8] sm:$0xf]
        %v1171 = vld [vmem:[#allocation2 + $0xac] sm:$0xf]
        %v1172 = vld [vmem:[#allocation2 + $0xb0] sm:$0xf]
        %v1173 = vld [vmem:[#allocation2 + $0xb4] sm:$0xf]
        %v1174 = vld [vmem:[#allocation2 + $0xb8] sm:$0xf]
        %v1175 = vld [vmem:[#allocation2 + $0xbc] sm:$0xf]
        %v1176 = vld [vmem:[#allocation2 + $0xc0] sm:$0xf]
        %v1177 = vld [vmem:[#allocation2 + $0xc4] sm:$0xf]
        %v1178 = vld [vmem:[#allocation2 + $0xc8] sm:$0xf]
        %v1179 = vld [vmem:[#allocation2 + $0xcc] sm:$0xf]
        %v1180 = vld [vmem:[#allocation2 + $0xd0] sm:$0xf]
        %v1181 = vld [vmem:[#allocation2 + $0xd4] sm:$0xf]
        %v1182 = vld [vmem:[#allocation2 + $0xd8] sm:$0xf]
        %v1183 = vld [vmem:[#allocation2 + $0xdc] sm:$0xf]
        %v1184 = vld [vmem:[#allocation2 + $0xe0] sm:$0xf]
        %v1185 = vld [vmem:[#allocation2 + $0xe4] sm:$0xf]
        %v1186 = vld [vmem:[#allocation2 + $0xe8] sm:$0xf]
        %v1187 = vld [vmem:[#allocation2 + $0xec] sm:$0xf]
        %v1188 = vld [vmem:[#allocation2 + $0xf0] sm:$0xf]
        %v1189 = vld [vmem:[#allocation2 + $0xf4] sm:$0xf]
        %v1190 = vld [vmem:[#allocation2 + $0xf8] sm:$0xf]
        %v1191 = vld [vmem:[#allocation2 + $0xfc] sm:$0xf]
        %v1192 = vld [vmem:[#allocation2 + $0x100] sm:$0xf]
        %v1193 = vld [vmem:[#allocation2 + $0x104] sm:$0xf]
        %v1194 = vld [vmem:[#allocation2 + $0x108] sm:$0xf]
        %v1195 = vld [vmem:[#allocation2 + $0x10c] sm:$0xf]
        %v1196 = vld [vmem:[#allocation2 + $0x110] sm:$0xf]
        %v1197 = vld [vmem:[#allocation2 + $0x114] sm:$0xf]
        %v1198 = vld [vmem:[#allocation2 + $0x118] sm:$0xf]
        %v1199 = vld [vmem:[#allocation2 + $0x11c] sm:$0xf]
        %v1200 = vld [vmem:[#allocation6] sm:$0xf]
        %v1201 = vld [vmem:[#allocation6 + $0x4] sm:$0xf]
        %v1202 = vld [vmem:[#allocation6 + $0x8] sm:$0xf]
        %v1203 = vld [vmem:[#allocation6 + $0xc] sm:$0xf]
        %v1204 = vld [vmem:[#allocation6 + $0x10] sm:$0xf]
        %v1205 = vld [vmem:[#allocation6 + $0x14] sm:$0xf]
        %v1206 = vld [vmem:[#allocation6 + $0x18] sm:$0xf]
        %v1207 = vld [vmem:[#allocation6 + $0x1c] sm:$0xf]
        %v1208 = vld [vmem:[#allocation6 + $0x20] sm:$0xf]
        %v1209 = vld [vmem:[#allocation6 + $0x24] sm:$0xf]
        %v1210 = vld [vmem:[#allocation6 + $0x28] sm:$0xf]
        %v1211 = vld [vmem:[#allocation6 + $0x2c] sm:$0xf]
        %v1212 = vld [vmem:[#allocation6 + $0x30] sm:$0xf]
        %v1213 = vld [vmem:[#allocation6 + $0x34] sm:$0xf]
        %v1214 = vld [vmem:[#allocation6 + $0x38] sm:$0xf]
        %v1215 = vld [vmem:[#allocation6 + $0x3c] sm:$0xf]
        %v1216 = vld [vmem:[#allocation6 + $0xc0] sm:$0xf]
        %v1217 = vld [vmem:[#allocation6 + $0xc4] sm:$0xf]
        %v1218 = vld [vmem:[#allocation6 + $0xc8] sm:$0xf]
        %v1219 = vld [vmem:[#allocation6 + $0xcc] sm:$0xf]
        %v1220 = vld [vmem:[#allocation6 + $0xd0] sm:$0xf]
        %v1221 = vld [vmem:[#allocation6 + $0xd4] sm:$0xf]
        %v1222 = vld [vmem:[#allocation6 + $0xd8] sm:$0xf]
        %v1223 = vld [vmem:[#allocation6 + $0xdc] sm:$0xf]
        %v1224 = vld [vmem:[#allocation6 + $0xe0] sm:$0xf]
        %v1225 = vld [vmem:[#allocation6 + $0xe4] sm:$0xf]
        %v1226 = vld [vmem:[#allocation6 + $0xe8] sm:$0xf]
        %v1227 = vld [vmem:[#allocation6 + $0xec] sm:$0xf]
        %v1228 = vld [vmem:[#allocation6 + $0xf0] sm:$0xf]
        %v1229 = vld [vmem:[#allocation6 + $0xf4] sm:$0xf]
        %v1230 = vld [vmem:[#allocation6 + $0xf8] sm:$0xf]
        %v1231 = vld [vmem:[#allocation6 + $0xfc] sm:$0xf]
        %v1296 = vunpack.c.l.b16 %v1132
        %v1297 = vunpack.c.l.b16 %v1133
        %v1298 = vunpack.c.l.b16 %v1134
        %v1299 = vunpack.c.l.b16 %v1135
        %v1300 = vunpack.c.l.b16 %v1136
        %v1301 = vunpack.c.l.b16 %v1137
        %v1302 = vunpack.c.l.b16 %v1138
        %v1303 = vunpack.c.l.b16 %v1139
        %v1304 = vunpack.c.l.b16 %v1140
        %v1305 = vunpack.c.l.b16 %v1141
        %v1306 = vunpack.c.l.b16 %v1142
        %v1307 = vunpack.c.l.b16 %v1143
        %v1308 = vunpack.c.l.b16 %v1144
        %v1309 = vunpack.c.l.b16 %v1145
        %v1310 = vunpack.c.l.b16 %v1146
        %v1311 = vunpack.c.l.b16 %v1147
        %v1312 = vunpack.c.l.b16 %v1148
        %v1313 = vunpack.c.l.b16 %v1149
        %v1314 = vunpack.c.l.b16 %v1150
        %v1315 = vunpack.c.l.b16 %v1151
        %v1316 = vunpack.c.l.b16 %v1152
        %v1317 = vunpack.c.l.b16 %v1153
        %v1318 = vunpack.c.l.b16 %v1154
        %v1319 = vunpack.c.l.b16 %v1155
        %v1320 = vunpack.c.l.b16 %v1156
        %v1321 = vunpack.c.l.b16 %v1157
        %v1322 = vunpack.c.l.b16 %v1158
        %v1323 = vunpack.c.l.b16 %v1159
        %v1324 = vunpack.c.l.b16 %v1160
        %v1325 = vunpack.c.l.b16 %v1161
        %v1326 = vunpack.c.l.b16 %v1162
        %v1327 = vunpack.c.l.b16 %v1163
        %v1328 = vunpack.c.l.b16 %v1164
        %v1329 = vunpack.c.l.b16 %v1165
        %v1330 = vunpack.c.l.b16 %v1166
        %v1331 = vunpack.c.l.b16 %v1167
        %v1332 = vunpack.c.l.b16 %v1168
        %v1333 = vunpack.c.l.b16 %v1169
        %v1334 = vunpack.c.l.b16 %v1170
        %v1335 = vunpack.c.l.b16 %v1171
        %v1336 = vunpack.c.l.b16 %v1172
        %v1337 = vunpack.c.l.b16 %v1173
        %v1338 = vunpack.c.l.b16 %v1174
        %v1339 = vunpack.c.l.b16 %v1175
        %v1340 = vunpack.c.l.b16 %v1176
        %v1341 = vunpack.c.l.b16 %v1177
        %v1342 = vunpack.c.l.b16 %v1178
        %v1343 = vunpack.c.l.b16 %v1179
        %v1344 = vunpack.c.l.b16 %v1180
        %v1345 = vunpack.c.l.b16 %v1181
        %v1346 = vunpack.c.l.b16 %v1182
        %v1347 = vunpack.c.l.b16 %v1183
        %v1348 = vunpack.c.l.b16 %v1184
        %v1349 = vunpack.c.l.b16 %v1185
        %v1350 = vunpack.c.l.b16 %v1186
        %v1351 = vunpack.c.l.b16 %v1187
        %v1352 = vunpack.c.l.b16 %v1188
        %v1353 = vunpack.c.l.b16 %v1189
        %v1354 = vunpack.c.l.b16 %v1190
        %v1355 = vunpack.c.l.b16 %v1191
        %v1356 = vunpack.c.l.b16 %v1192
        %v1357 = vunpack.c.l.b16 %v1193
        %v1358 = vunpack.c.l.b16 %v1194
        %v1359 = vunpack.c.l.b16 %v1195
        %v1360 = vpack.c.b16 %v1297, %v1296
        %v1361 = vpack.c.b16 %v1299, %v1298
        %v1362 = vpack.c.b16 %v1301, %v1300
        %v1363 = vpack.c.b16 %v1303, %v1302
        %v1364 = vpack.c.b16 %v1305, %v1304
        %v1365 = vpack.c.b16 %v1307, %v1306
        %v1366 = vpack.c.b16 %v1309, %v1308
        %v1367 = vpack.c.b16 %v1311, %v1310
        %v1368 = vpack.c.b16 %v1313, %v1312
        %v1369 = vpack.c.b16 %v1315, %v1314
        %v1370 = vpack.c.b16 %v1317, %v1316
        %v1371 = vpack.c.b16 %v1319, %v1318
        %v1372 = vpack.c.b16 %v1321, %v1320
        %v1373 = vpack.c.b16 %v1323, %v1322
        %v1374 = vpack.c.b16 %v1325, %v1324
        %v1375 = vpack.c.b16 %v1327, %v1326
        %v1376 = vpack.c.b16 %v1329, %v1328
        %v1377 = vpack.c.b16 %v1331, %v1330
        %v1378 = vpack.c.b16 %v1333, %v1332
        %v1379 = vpack.c.b16 %v1335, %v1334
        %v1380 = vpack.c.b16 %v1337, %v1336
        %v1381 = vpack.c.b16 %v1339, %v1338
        %v1382 = vpack.c.b16 %v1341, %v1340
        %v1383 = vpack.c.b16 %v1343, %v1342
        %v1384 = vpack.c.b16 %v1345, %v1344
        %v1385 = vpack.c.b16 %v1347, %v1346
        %v1386 = vpack.c.b16 %v1349, %v1348
        %v1387 = vpack.c.b16 %v1351, %v1350
        %v1388 = vpack.c.b16 %v1353, %v1352
        %v1389 = vpack.c.b16 %v1355, %v1354
        %v1390 = vpack.c.b16 %v1357, %v1356
        %v1391 = vpack.c.b16 %v1359, %v1358
        %v1440 = vunpack.c.l.b16 %v1216
        %v1441 = vunpack.c.l.b16 %v1217
        %v1442 = vunpack.c.l.b16 %v1218
        %v1443 = vunpack.c.l.b16 %v1219
        %v1444 = vunpack.c.l.b16 %v1220
        %v1445 = vunpack.c.l.b16 %v1221
        %v1446 = vunpack.c.l.b16 %v1222
        %v1447 = vunpack.c.l.b16 %v1223
        %v1448 = vunpack.c.l.b16 %v1224
        %v1449 = vunpack.c.l.b16 %v1225
        %v1450 = vunpack.c.l.b16 %v1226
        %v1451 = vunpack.c.l.b16 %v1227
        %v1452 = vunpack.c.l.b16 %v1228
        %v1453 = vunpack.c.l.b16 %v1229
        %v1454 = vunpack.c.l.b16 %v1230
        %v1455 = vunpack.c.l.b16 %v1231
        %v1456 = vpack.c.b16 %v1441, %v1440
        %v1457 = vpack.c.b16 %v1443, %v1442
        %v1458 = vpack.c.b16 %v1445, %v1444
        %v1459 = vpack.c.b16 %v1447, %v1446
        %v1460 = vpack.c.b16 %v1449, %v1448
        %v1461 = vpack.c.b16 %v1451, %v1450
        %v1462 = vpack.c.b16 %v1453, %v1452
        %v1463 = vpack.c.b16 %v1455, %v1454
        %1472 = vmatprep.subr.bf16.mxu0 0
        %1473 = vmatpush1.bf16.msra.mxu0 %v1463
        %1474 = vmatprep.subr.bf16.mxu0 0
        %1475 = vmatpush1.bf16.msra.mxu0 %v1462
        %1476 = vmatprep.subr.bf16.mxu0 0
        %1477 = vmatpush1.bf16.msra.mxu0 %v1461
        %1478 = vmatprep.subr.bf16.mxu0 0
        %1479 = vmatpush1.bf16.msra.mxu0 %v1460
        %1480 = vmatprep.subr.bf16.mxu0 0
        %1481 = vmatpush1.bf16.msra.mxu0 %v1459
        %1482 = vmatprep.subr.bf16.mxu0 0
        %1483 = vmatpush1.bf16.msra.mxu0 %v1458
        %1484 = vmatprep.subr.bf16.mxu0 0
        %1485 = vmatpush1.bf16.msra.mxu0 %v1457
        %1486 = vmatprep.subr.bf16.mxu0 0
        %1487 = vmatpush1.bf16.msra.mxu0 %v1456
        %1488 = vmatprep.subr.bf16.mxu0 0
        %1489 = vmatpush2.bf16.msra.mxu0 0
        %1490 = vmatprep.subr.bf16.mxu0 0
        %1491 = vmatpush2.bf16.msra.mxu0 0
        %1492 = vmatprep.subr.bf16.mxu0 0
        %1493 = vmatpush2.bf16.msra.mxu0 0
        %1494 = vmatprep.subr.bf16.mxu0 0
        %1495 = vmatpush2.bf16.msra.mxu0 0
        %1496 = vmatprep.subr.bf16.mxu0 0
        %1497 = vmatpush2.bf16.msra.mxu0 0
        %1498 = vmatprep.subr.bf16.mxu0 0
        %1499 = vmatpush2.bf16.msra.mxu0 0
        %1500 = vmatprep.subr.bf16.mxu0 0
        %1501 = vmatpush2.bf16.msra.mxu0 0
        %1502 = vmatprep.subr.bf16.mxu0 0
        %1503 = vmatpush2.bf16.msra.mxu0 0
        %1504 = vmatprep.mubr.bf16.mxu0 0
        %1505 = vmatmul.mubr.bf16.gmra.mxu0 %v1360
        %v1506 = vpop.f32.mrf.mxu0
        %v1507 = vadd.f32 0.0, %v1506
        %v1508 = vpop.f32.mrf.mxu0
        %v1509 = vpop.f32.mrf.mxu0
        %v1510 = vadd.f32 0.0, %v1509
        %v1511 = vpop.f32.mrf.mxu0
        %1512 = vmatprep.mubr.bf16.mxu0 0
        %1513 = vmatmul.mubr.bf16.gmra.mxu0 %v1361
        %v1514 = vpop.f32.mrf.mxu0
        %v1515 = vpop.f32.mrf.mxu0
        %v1516 = vpop.f32.mrf.mxu0
        %v1517 = vpop.f32.mrf.mxu0
        %1518 = vmatprep.mubr.bf16.mxu0 0
        %1519 = vmatmul.mubr.bf16.gmra.mxu0 %v1362
        %v1520 = vpop.f32.mrf.mxu0
        %v1521 = vadd.f32 0.0, %v1520
        %v1522 = vpop.f32.mrf.mxu0
        %v1523 = vpop.f32.mrf.mxu0
        %v1524 = vadd.f32 0.0, %v1523
        %v1525 = vpop.f32.mrf.mxu0
        %1526 = vmatprep.mubr.bf16.mxu0 0
        %1527 = vmatmul.mubr.bf16.gmra.mxu0 %v1363
        %v1528 = vpop.f32.mrf.mxu0
        %v1529 = vpop.f32.mrf.mxu0
        %v1530 = vpop.f32.mrf.mxu0
        %v1531 = vpop.f32.mrf.mxu0
        %1532 = vmatprep.mubr.bf16.mxu0 0
        %1533 = vmatmul.mubr.bf16.gmra.mxu0 %v1364
        %v1534 = vpop.f32.mrf.mxu0
        %v1535 = vadd.f32 0.0, %v1534
        %v1536 = vpop.f32.mrf.mxu0
        %v1537 = vpop.f32.mrf.mxu0
        %v1538 = vadd.f32 0.0, %v1537
        %v1539 = vpop.f32.mrf.mxu0
        %1540 = vmatprep.mubr.bf16.mxu0 0
        %1541 = vmatmul.mubr.bf16.gmra.mxu0 %v1365
        %v1542 = vpop.f32.mrf.mxu0
        %v1543 = vpop.f32.mrf.mxu0
        %v1544 = vpop.f32.mrf.mxu0
        %v1545 = vpop.f32.mrf.mxu0
        %1546 = vmatprep.mubr.bf16.mxu0 0
        %1547 = vmatmul.mubr.bf16.gmra.mxu0 %v1366
        %v1548 = vpop.f32.mrf.mxu0
        %v1549 = vadd.f32 0.0, %v1548
        %v1550 = vpop.f32.mrf.mxu0
        %v1551 = vpop.f32.mrf.mxu0
        %v1552 = vadd.f32 0.0, %v1551
        %v1553 = vpop.f32.mrf.mxu0
        %1554 = vmatprep.mubr.bf16.mxu0 0
        %1555 = vmatmul.mubr.bf16.gmra.mxu0 %v1367
        %v1556 = vpop.f32.mrf.mxu0
        %v1557 = vpop.f32.mrf.mxu0
        %v1558 = vpop.f32.mrf.mxu0
        %v1559 = vpop.f32.mrf.mxu0
        %1560 = vmatprep.mubr.bf16.mxu0 0
        %1561 = vmatmul.mubr.bf16.gmra.mxu0 %v1368
        %v1562 = vpop.f32.mrf.mxu0
        %v1563 = vadd.f32 0.0, %v1562
        %v1564 = vpop.f32.mrf.mxu0
        %v1565 = vpop.f32.mrf.mxu0
        %v1566 = vadd.f32 0.0, %v1565
        %v1567 = vpop.f32.mrf.mxu0
        %1568 = vmatprep.mubr.bf16.mxu0 0
        %1569 = vmatmul.mubr.bf16.gmra.mxu0 %v1369
        %v1570 = vpop.f32.mrf.mxu0
        %v1571 = vpop.f32.mrf.mxu0
        %v1572 = vpop.f32.mrf.mxu0
        %v1573 = vpop.f32.mrf.mxu0
        %1574 = vmatprep.mubr.bf16.mxu0 0
        %1575 = vmatmul.mubr.bf16.gmra.mxu0 %v1370
        %v1576 = vpop.f32.mrf.mxu0
        %v1577 = vadd.f32 0.0, %v1576
        %v1578 = vpop.f32.mrf.mxu0
        %v1579 = vpop.f32.mrf.mxu0
        %v1580 = vadd.f32 0.0, %v1579
        %v1581 = vpop.f32.mrf.mxu0
        %1582 = vmatprep.mubr.bf16.mxu0 0
        %1583 = vmatmul.mubr.bf16.gmra.mxu0 %v1371
        %v1584 = vpop.f32.mrf.mxu0
        %v1585 = vpop.f32.mrf.mxu0
        %v1586 = vpop.f32.mrf.mxu0
        %v1587 = vpop.f32.mrf.mxu0
        %1588 = vmatprep.mubr.bf16.mxu0 0
        %1589 = vmatmul.mubr.bf16.gmra.mxu0 %v1372
        %v1590 = vpop.f32.mrf.mxu0
        %v1591 = vadd.f32 0.0, %v1590
        %v1592 = vpop.f32.mrf.mxu0
        %v1593 = vpop.f32.mrf.mxu0
        %v1594 = vadd.f32 0.0, %v1593
        %v1595 = vpop.f32.mrf.mxu0
        %1596 = vmatprep.mubr.bf16.mxu0 0
        %1597 = vmatmul.mubr.bf16.gmra.mxu0 %v1373
        %v1598 = vpop.f32.mrf.mxu0
        %v1599 = vpop.f32.mrf.mxu0
        %v1600 = vpop.f32.mrf.mxu0
        %v1601 = vpop.f32.mrf.mxu0
        %1602 = vmatprep.mubr.bf16.mxu0 0
        %1603 = vmatmul.mubr.bf16.gmra.mxu0 %v1374
        %v1604 = vpop.f32.mrf.mxu0
        %v1605 = vadd.f32 0.0, %v1604
        %v1606 = vpop.f32.mrf.mxu0
        %v1607 = vpop.f32.mrf.mxu0
        %v1608 = vadd.f32 0.0, %v1607
        %v1609 = vpop.f32.mrf.mxu0
        %1610 = vmatprep.mubr.bf16.mxu0 0
        %1611 = vmatmul.mubr.bf16.gmra.mxu0 %v1375
        %v1612 = vpop.f32.mrf.mxu0
        %v1613 = vpop.f32.mrf.mxu0
        %v1614 = vpop.f32.mrf.mxu0
        %v1615 = vpop.f32.mrf.mxu0
        %1616 = vmatprep.mubr.bf16.mxu0 0
        %1617 = vmatmul.mubr.bf16.gmra.mxu0 %v1376
        %v1618 = vpop.f32.mrf.mxu0
        %v1619 = vadd.f32 0.0, %v1618
        %v1620 = vpop.f32.mrf.mxu0
        %v1621 = vpop.f32.mrf.mxu0
        %v1622 = vadd.f32 0.0, %v1621
        %v1623 = vpop.f32.mrf.mxu0
        %1624 = vmatprep.mubr.bf16.mxu0 0
        %1625 = vmatmul.mubr.bf16.gmra.mxu0 %v1377
        %v1626 = vpop.f32.mrf.mxu0
        %v1627 = vpop.f32.mrf.mxu0
        %v1628 = vpop.f32.mrf.mxu0
        %v1629 = vpop.f32.mrf.mxu0
        %1630 = vmatprep.mubr.bf16.mxu0 0
        %1631 = vmatmul.mubr.bf16.gmra.mxu0 %v1378
        %v1632 = vpop.f32.mrf.mxu0
        %v1633 = vadd.f32 0.0, %v1632
        %v1634 = vpop.f32.mrf.mxu0
        %v1635 = vpop.f32.mrf.mxu0
        %v1636 = vadd.f32 0.0, %v1635
        %v1637 = vpop.f32.mrf.mxu0
        %1638 = vmatprep.mubr.bf16.mxu0 0
        %1639 = vmatmul.mubr.bf16.gmra.mxu0 %v1379
        %v1640 = vpop.f32.mrf.mxu0
        %v1641 = vpop.f32.mrf.mxu0
        %v1642 = vpop.f32.mrf.mxu0
        %v1643 = vpop.f32.mrf.mxu0
        %1644 = vmatprep.mubr.bf16.mxu0 0
        %1645 = vmatmul.mubr.bf16.gmra.mxu0 %v1380
        %v1646 = vpop.f32.mrf.mxu0
        %v1647 = vadd.f32 0.0, %v1646
        %v1648 = vpop.f32.mrf.mxu0
        %v1649 = vpop.f32.mrf.mxu0
        %v1650 = vadd.f32 0.0, %v1649
        %v1651 = vpop.f32.mrf.mxu0
        %1652 = vmatprep.mubr.bf16.mxu0 0
        %1653 = vmatmul.mubr.bf16.gmra.mxu0 %v1381
        %v1654 = vpop.f32.mrf.mxu0
        %v1655 = vpop.f32.mrf.mxu0
        %v1656 = vpop.f32.mrf.mxu0
        %v1657 = vpop.f32.mrf.mxu0
        %1658 = vmatprep.mubr.bf16.mxu0 0
        %1659 = vmatmul.mubr.bf16.gmra.mxu0 %v1382
        %v1660 = vpop.f32.mrf.mxu0
        %v1661 = vadd.f32 0.0, %v1660
        %v1662 = vpop.f32.mrf.mxu0
        %v1663 = vpop.f32.mrf.mxu0
        %v1664 = vadd.f32 0.0, %v1663
        %v1665 = vpop.f32.mrf.mxu0
        %1666 = vmatprep.mubr.bf16.mxu0 0
        %1667 = vmatmul.mubr.bf16.gmra.mxu0 %v1383
        %v1668 = vpop.f32.mrf.mxu0
        %v1669 = vpop.f32.mrf.mxu0
        %v1670 = vpop.f32.mrf.mxu0
        %v1671 = vpop.f32.mrf.mxu0
        %1672 = vmatprep.mubr.bf16.mxu0 0
        %1673 = vmatmul.mubr.bf16.gmra.mxu0 %v1384
        %v1674 = vpop.f32.mrf.mxu0
        %v1675 = vadd.f32 0.0, %v1674
        %v1676 = vpop.f32.mrf.mxu0
        %v1677 = vpop.f32.mrf.mxu0
        %v1678 = vadd.f32 0.0, %v1677
        %v1679 = vpop.f32.mrf.mxu0
        %1680 = vmatprep.mubr.bf16.mxu0 0
        %1681 = vmatmul.mubr.bf16.gmra.mxu0 %v1385
        %v1682 = vpop.f32.mrf.mxu0
        %v1683 = vpop.f32.mrf.mxu0
        %v1684 = vpop.f32.mrf.mxu0
        %v1685 = vpop.f32.mrf.mxu0
        %1686 = vmatprep.mubr.bf16.mxu0 0
        %1687 = vmatmul.mubr.bf16.gmra.mxu0 %v1386
        %v1688 = vpop.f32.mrf.mxu0
        %v1689 = vadd.f32 0.0, %v1688
        %v1690 = vpop.f32.mrf.mxu0
        %v1691 = vpop.f32.mrf.mxu0
        %v1692 = vadd.f32 0.0, %v1691
        %v1693 = vpop.f32.mrf.mxu0
        %1694 = vmatprep.mubr.bf16.mxu0 0
        %1695 = vmatmul.mubr.bf16.gmra.mxu0 %v1387
        %v1696 = vpop.f32.mrf.mxu0
        %v1697 = vpop.f32.mrf.mxu0
        %v1698 = vpop.f32.mrf.mxu0
        %v1699 = vpop.f32.mrf.mxu0
        %1700 = vmatprep.mubr.bf16.mxu0 0
        %1701 = vmatmul.mubr.bf16.gmra.mxu0 %v1388
        %v1702 = vpop.f32.mrf.mxu0
        %v1703 = vadd.f32 0.0, %v1702
        %v1704 = vpop.f32.mrf.mxu0
        %v1705 = vpop.f32.mrf.mxu0
        %v1706 = vadd.f32 0.0, %v1705
        %v1707 = vpop.f32.mrf.mxu0
        %1708 = vmatprep.mubr.bf16.mxu0 0
        %1709 = vmatmul.mubr.bf16.gmra.mxu0 %v1389
        %v1710 = vpop.f32.mrf.mxu0
        %v1711 = vpop.f32.mrf.mxu0
        %v1712 = vpop.f32.mrf.mxu0
        %v1713 = vpop.f32.mrf.mxu0
        %1714 = vmatprep.mubr.bf16.mxu0 0
        %1715 = vmatmul.mubr.bf16.gmra.mxu0 %v1390
        %v1716 = vpop.f32.mrf.mxu0
        %v1717 = vadd.f32 0.0, %v1716
        %v1718 = vpop.f32.mrf.mxu0
        %v1719 = vpop.f32.mrf.mxu0
        %v1720 = vadd.f32 0.0, %v1719
        %v1721 = vpop.f32.mrf.mxu0
        %1722 = vmatprep.mubr.bf16.mxu0 0
        %1723 = vmatmul.mubr.bf16.gmra.mxu0 %v1391
        %v1724 = vpop.f32.mrf.mxu0
        %v1725 = vpop.f32.mrf.mxu0
        %v1726 = vpop.f32.mrf.mxu0
        %v1727 = vpop.f32.mrf.mxu0
        %1728 = vdwg.mxu0
        %v1733 = vunpack.c.l.b16 %v1128
        %v1734 = vunpack.c.l.b16 %v1129
        %v1735 = vunpack.c.l.b16 %v1130
        %v1736 = vunpack.c.l.b16 %v1131
        %v1737 = vpack.c.b16 %v1734, %v1733
        %v1738 = vpack.c.b16 %v1736, %v1735
        %v1757 = vunpack.c.l.b16 %v1200
        %v1758 = vunpack.c.l.b16 %v1201
        %v1759 = vunpack.c.l.b16 %v1202
        %v1760 = vunpack.c.l.b16 %v1203
        %v1761 = vunpack.c.l.b16 %v1204
        %v1762 = vunpack.c.l.b16 %v1205
        %v1763 = vunpack.c.l.b16 %v1206
        %v1764 = vunpack.c.l.b16 %v1207
        %v1765 = vunpack.c.l.b16 %v1208
        %v1766 = vunpack.c.l.b16 %v1209
        %v1767 = vunpack.c.l.b16 %v1210
        %v1768 = vunpack.c.l.b16 %v1211
        %v1769 = vunpack.c.l.b16 %v1212
        %v1770 = vunpack.c.l.b16 %v1213
        %v1771 = vunpack.c.l.b16 %v1214
        %v1772 = vunpack.c.l.b16 %v1215
        %v1773 = vpack.c.b16 %v1758, %v1757
        %v1774 = vpack.c.b16 %v1760, %v1759
        %v1775 = vpack.c.b16 %v1762, %v1761
        %v1776 = vpack.c.b16 %v1764, %v1763
        %v1777 = vpack.c.b16 %v1766, %v1765
        %v1778 = vpack.c.b16 %v1768, %v1767
        %v1779 = vpack.c.b16 %v1770, %v1769
        %v1780 = vpack.c.b16 %v1772, %v1771
        %1789 = vmatprep.subr.bf16.mxu0 0
        %1790 = vmatpush1.bf16.msra.mxu0 %v1780
        %1791 = vmatprep.subr.bf16.mxu0 0
        %1792 = vmatpush1.bf16.msra.mxu0 %v1779
        %1793 = vmatprep.subr.bf16.mxu0 0
        %1794 = vmatpush1.bf16.msra.mxu0 %v1778
        %1795 = vmatprep.subr.bf16.mxu0 0
        %1796 = vmatpush1.bf16.msra.mxu0 %v1777
        %1797 = vmatprep.subr.bf16.mxu0 0
        %1798 = vmatpush1.bf16.msra.mxu0 %v1776
        %1799 = vmatprep.subr.bf16.mxu0 0
        %1800 = vmatpush1.bf16.msra.mxu0 %v1775
        %1801 = vmatprep.subr.bf16.mxu0 0
        %1802 = vmatpush1.bf16.msra.mxu0 %v1774
        %1803 = vmatprep.subr.bf16.mxu0 0
        %1804 = vmatpush1.bf16.msra.mxu0 %v1773
        %1805 = vmatprep.subr.bf16.mxu0 0
        %1806 = vmatpush2.bf16.msra.mxu0 0
        %1807 = vmatprep.subr.bf16.mxu0 0
        %1808 = vmatpush2.bf16.msra.mxu0 0
        %1809 = vmatprep.subr.bf16.mxu0 0
        %1810 = vmatpush2.bf16.msra.mxu0 0
        %1811 = vmatprep.subr.bf16.mxu0 0
        %1812 = vmatpush2.bf16.msra.mxu0 0
        %1813 = vmatprep.subr.bf16.mxu0 0
        %1814 = vmatpush2.bf16.msra.mxu0 0
        %1815 = vmatprep.subr.bf16.mxu0 0
        %1816 = vmatpush2.bf16.msra.mxu0 0
        %1817 = vmatprep.subr.bf16.mxu0 0
        %1818 = vmatpush2.bf16.msra.mxu0 0
        %1819 = vmatprep.subr.bf16.mxu0 0
        %1820 = vmatpush2.bf16.msra.mxu0 0
        %1821 = vmatprep.mubr.bf16.mxu0 0
        %1822 = vmatmul.mubr.bf16.gmra.mxu0 %v1737
        %v1823 = vpop.f32.mrf.mxu0
        %v1824 = vadd.f32 %v1507, %v1823
        %v1825 = vpop.f32.mrf.mxu0
        %v1826 = vpop.f32.mrf.mxu0
        %v1827 = vadd.f32 %v1510, %v1826
        %v1828 = vpop.f32.mrf.mxu0
        %1829 = vmatprep.mubr.bf16.mxu0 0
        %1830 = vmatmul.mubr.bf16.gmra.mxu0 %v1738
        %v1831 = vpop.f32.mrf.mxu0
        %v1832 = vpop.f32.mrf.mxu0
        %v1833 = vpop.f32.mrf.mxu0
        %v1834 = vpop.f32.mrf.mxu0
        %1835 = vmatprep.mubr.bf16.mxu0 0
        %1836 = vmatmul.mubr.bf16.gmra.mxu0 %v1360
        %v1837 = vpop.f32.mrf.mxu0
        %v1838 = vadd.f32 %v1521, %v1837
        %v1839 = vpop.f32.mrf.mxu0
        %v1840 = vpop.f32.mrf.mxu0
        %v1841 = vadd.f32 %v1524, %v1840
        %v1842 = vpop.f32.mrf.mxu0
        %1843 = vmatprep.mubr.bf16.mxu0 0
        %1844 = vmatmul.mubr.bf16.gmra.mxu0 %v1361
        %v1845 = vpop.f32.mrf.mxu0
        %v1846 = vpop.f32.mrf.mxu0
        %v1847 = vpop.f32.mrf.mxu0
        %v1848 = vpop.f32.mrf.mxu0
        %1849 = vmatprep.mubr.bf16.mxu0 0
        %1850 = vmatmul.mubr.bf16.gmra.mxu0 %v1362
        %v1851 = vpop.f32.mrf.mxu0
        %v1852 = vadd.f32 %v1535, %v1851
        %v1853 = vpop.f32.mrf.mxu0
        %v1854 = vpop.f32.mrf.mxu0
        %v1855 = vadd.f32 %v1538, %v1854
        %v1856 = vpop.f32.mrf.mxu0
        %1857 = vmatprep.mubr.bf16.mxu0 0
        %1858 = vmatmul.mubr.bf16.gmra.mxu0 %v1363
        %v1859 = vpop.f32.mrf.mxu0
        %v1860 = vpop.f32.mrf.mxu0
        %v1861 = vpop.f32.mrf.mxu0
        %v1862 = vpop.f32.mrf.mxu0
        %1863 = vmatprep.mubr.bf16.mxu0 0
        %1864 = vmatmul.mubr.bf16.gmra.mxu0 %v1364
        %v1865 = vpop.f32.mrf.mxu0
        %v1866 = vadd.f32 %v1549, %v1865
        %v1867 = vpop.f32.mrf.mxu0
        %v1868 = vpop.f32.mrf.mxu0
        %v1869 = vadd.f32 %v1552, %v1868
        %v1870 = vpop.f32.mrf.mxu0
        %1871 = vmatprep.mubr.bf16.mxu0 0
        %1872 = vmatmul.mubr.bf16.gmra.mxu0 %v1365
        %v1873 = vpop.f32.mrf.mxu0
        %v1874 = vpop.f32.mrf.mxu0
        %v1875 = vpop.f32.mrf.mxu0
        %v1876 = vpop.f32.mrf.mxu0
        %1877 = vmatprep.mubr.bf16.mxu0 0
        %1878 = vmatmul.mubr.bf16.gmra.mxu0 %v1366
        %v1879 = vpop.f32.mrf.mxu0
        %v1880 = vadd.f32 %v1563, %v1879
        %v1881 = vpop.f32.mrf.mxu0
        %v1882 = vpop.f32.mrf.mxu0
        %v1883 = vadd.f32 %v1566, %v1882
        %v1884 = vpop.f32.mrf.mxu0
        %1885 = vmatprep.mubr.bf16.mxu0 0
        %1886 = vmatmul.mubr.bf16.gmra.mxu0 %v1367
        %v1887 = vpop.f32.mrf.mxu0
        %v1888 = vpop.f32.mrf.mxu0
        %v1889 = vpop.f32.mrf.mxu0
        %v1890 = vpop.f32.mrf.mxu0
        %1891 = vmatprep.mubr.bf16.mxu0 0
        %1892 = vmatmul.mubr.bf16.gmra.mxu0 %v1368
        %v1893 = vpop.f32.mrf.mxu0
        %v1894 = vadd.f32 %v1577, %v1893
        %v1895 = vpop.f32.mrf.mxu0
        %v1896 = vpop.f32.mrf.mxu0
        %v1897 = vadd.f32 %v1580, %v1896
        %v1898 = vpop.f32.mrf.mxu0
        %1899 = vmatprep.mubr.bf16.mxu0 0
        %1900 = vmatmul.mubr.bf16.gmra.mxu0 %v1369
        %v1901 = vpop.f32.mrf.mxu0
        %v1902 = vpop.f32.mrf.mxu0
        %v1903 = vpop.f32.mrf.mxu0
        %v1904 = vpop.f32.mrf.mxu0
        %1905 = vmatprep.mubr.bf16.mxu0 0
        %1906 = vmatmul.mubr.bf16.gmra.mxu0 %v1370
        %v1907 = vpop.f32.mrf.mxu0
        %v1908 = vadd.f32 %v1591, %v1907
        %v1909 = vpop.f32.mrf.mxu0
        %v1910 = vpop.f32.mrf.mxu0
        %v1911 = vadd.f32 %v1594, %v1910
        %v1912 = vpop.f32.mrf.mxu0
        %1913 = vmatprep.mubr.bf16.mxu0 0
        %1914 = vmatmul.mubr.bf16.gmra.mxu0 %v1371
        %v1915 = vpop.f32.mrf.mxu0
        %v1916 = vpop.f32.mrf.mxu0
        %v1917 = vpop.f32.mrf.mxu0
        %v1918 = vpop.f32.mrf.mxu0
        %1919 = vmatprep.mubr.bf16.mxu0 0
        %1920 = vmatmul.mubr.bf16.gmra.mxu0 %v1372
        %v1921 = vpop.f32.mrf.mxu0
        %v1922 = vadd.f32 %v1605, %v1921
        %v1923 = vpop.f32.mrf.mxu0
        %v1924 = vpop.f32.mrf.mxu0
        %v1925 = vadd.f32 %v1608, %v1924
        %v1926 = vpop.f32.mrf.mxu0
        %1927 = vmatprep.mubr.bf16.mxu0 0
        %1928 = vmatmul.mubr.bf16.gmra.mxu0 %v1373
        %v1929 = vpop.f32.mrf.mxu0
        %v1930 = vpop.f32.mrf.mxu0
        %v1931 = vpop.f32.mrf.mxu0
        %v1932 = vpop.f32.mrf.mxu0
        %1933 = vmatprep.mubr.bf16.mxu0 0
        %1934 = vmatmul.mubr.bf16.gmra.mxu0 %v1374
        %v1935 = vpop.f32.mrf.mxu0
        %v1936 = vadd.f32 %v1619, %v1935
        %v1937 = vpop.f32.mrf.mxu0
        %v1938 = vpop.f32.mrf.mxu0
        %v1939 = vadd.f32 %v1622, %v1938
        %v1940 = vpop.f32.mrf.mxu0
        %1941 = vmatprep.mubr.bf16.mxu0 0
        %1942 = vmatmul.mubr.bf16.gmra.mxu0 %v1375
        %v1943 = vpop.f32.mrf.mxu0
        %v1944 = vpop.f32.mrf.mxu0
        %v1945 = vpop.f32.mrf.mxu0
        %v1946 = vpop.f32.mrf.mxu0
        %1947 = vmatprep.mubr.bf16.mxu0 0
        %1948 = vmatmul.mubr.bf16.gmra.mxu0 %v1376
        %v1949 = vpop.f32.mrf.mxu0
        %v1950 = vadd.f32 %v1633, %v1949
        %v1951 = vpop.f32.mrf.mxu0
        %v1952 = vpop.f32.mrf.mxu0
        %v1953 = vadd.f32 %v1636, %v1952
        %v1954 = vpop.f32.mrf.mxu0
        %1955 = vmatprep.mubr.bf16.mxu0 0
        %1956 = vmatmul.mubr.bf16.gmra.mxu0 %v1377
        %v1957 = vpop.f32.mrf.mxu0
        %v1958 = vpop.f32.mrf.mxu0
        %v1959 = vpop.f32.mrf.mxu0
        %v1960 = vpop.f32.mrf.mxu0
        %1961 = vmatprep.mubr.bf16.mxu0 0
        %1962 = vmatmul.mubr.bf16.gmra.mxu0 %v1378
        %v1963 = vpop.f32.mrf.mxu0
        %v1964 = vadd.f32 %v1647, %v1963
        %v1965 = vpop.f32.mrf.mxu0
        %v1966 = vpop.f32.mrf.mxu0
        %v1967 = vadd.f32 %v1650, %v1966
        %v1968 = vpop.f32.mrf.mxu0
        %1969 = vmatprep.mubr.bf16.mxu0 0
        %1970 = vmatmul.mubr.bf16.gmra.mxu0 %v1379
        %v1971 = vpop.f32.mrf.mxu0
        %v1972 = vpop.f32.mrf.mxu0
        %v1973 = vpop.f32.mrf.mxu0
        %v1974 = vpop.f32.mrf.mxu0
        %1975 = vmatprep.mubr.bf16.mxu0 0
        %1976 = vmatmul.mubr.bf16.gmra.mxu0 %v1380
        %v1977 = vpop.f32.mrf.mxu0
        %v1978 = vadd.f32 %v1661, %v1977
        %v1979 = vpop.f32.mrf.mxu0
        %v1980 = vpop.f32.mrf.mxu0
        %v1981 = vadd.f32 %v1664, %v1980
        %v1982 = vpop.f32.mrf.mxu0
        %1983 = vmatprep.mubr.bf16.mxu0 0
        %1984 = vmatmul.mubr.bf16.gmra.mxu0 %v1381
        %v1985 = vpop.f32.mrf.mxu0
        %v1986 = vpop.f32.mrf.mxu0
        %v1987 = vpop.f32.mrf.mxu0
        %v1988 = vpop.f32.mrf.mxu0
        %1989 = vmatprep.mubr.bf16.mxu0 0
        %1990 = vmatmul.mubr.bf16.gmra.mxu0 %v1382
        %v1991 = vpop.f32.mrf.mxu0
        %v1992 = vadd.f32 %v1675, %v1991
        %v1993 = vpop.f32.mrf.mxu0
        %v1994 = vpop.f32.mrf.mxu0
        %v1995 = vadd.f32 %v1678, %v1994
        %v1996 = vpop.f32.mrf.mxu0
        %1997 = vmatprep.mubr.bf16.mxu0 0
        %1998 = vmatmul.mubr.bf16.gmra.mxu0 %v1383
        %v1999 = vpop.f32.mrf.mxu0
        %v2000 = vpop.f32.mrf.mxu0
        %v2001 = vpop.f32.mrf.mxu0
        %v2002 = vpop.f32.mrf.mxu0
        %2003 = vmatprep.mubr.bf16.mxu0 0
        %2004 = vmatmul.mubr.bf16.gmra.mxu0 %v1384
        %v2005 = vpop.f32.mrf.mxu0
        %v2006 = vadd.f32 %v1689, %v2005
        %v2007 = vpop.f32.mrf.mxu0
        %v2008 = vpop.f32.mrf.mxu0
        %v2009 = vadd.f32 %v1692, %v2008
        %v2010 = vpop.f32.mrf.mxu0
        %2011 = vmatprep.mubr.bf16.mxu0 0
        %2012 = vmatmul.mubr.bf16.gmra.mxu0 %v1385
        %v2013 = vpop.f32.mrf.mxu0
        %v2014 = vpop.f32.mrf.mxu0
        %v2015 = vpop.f32.mrf.mxu0
        %v2016 = vpop.f32.mrf.mxu0
        %2017 = vmatprep.mubr.bf16.mxu0 0
        %2018 = vmatmul.mubr.bf16.gmra.mxu0 %v1386
        %v2019 = vpop.f32.mrf.mxu0
        %v2020 = vadd.f32 %v1703, %v2019
        %v2021 = vpop.f32.mrf.mxu0
        %v2022 = vpop.f32.mrf.mxu0
        %v2023 = vadd.f32 %v1706, %v2022
        %v2024 = vpop.f32.mrf.mxu0
        %2025 = vmatprep.mubr.bf16.mxu0 0
        %2026 = vmatmul.mubr.bf16.gmra.mxu0 %v1387
        %v2027 = vpop.f32.mrf.mxu0
        %v2028 = vpop.f32.mrf.mxu0
        %v2029 = vpop.f32.mrf.mxu0
        %v2030 = vpop.f32.mrf.mxu0
        %2031 = vmatprep.mubr.bf16.mxu0 0
        %2032 = vmatmul.mubr.bf16.gmra.mxu0 %v1388
        %v2033 = vpop.f32.mrf.mxu0
        %v2034 = vadd.f32 %v1717, %v2033
        %v2035 = vpop.f32.mrf.mxu0
        %v2036 = vpop.f32.mrf.mxu0
        %v2037 = vadd.f32 %v1720, %v2036
        %v2038 = vpop.f32.mrf.mxu0
        %2039 = vmatprep.mubr.bf16.mxu0 0
        %2040 = vmatmul.mubr.bf16.gmra.mxu0 %v1389
        %v2041 = vpop.f32.mrf.mxu0
        %v2042 = vpop.f32.mrf.mxu0
        %v2043 = vpop.f32.mrf.mxu0
        %v2044 = vpop.f32.mrf.mxu0
        %2045 = vdwg.mxu0
        %v2046 = vld [vmem:[#allocation6 + $0x180] sm:$0xf]
        %v2047 = vld [vmem:[#allocation6 + $0x184] sm:$0xf]
        %v2048 = vld [vmem:[#allocation6 + $0x188] sm:$0xf]
        %v2049 = vld [vmem:[#allocation6 + $0x18c] sm:$0xf]
        %v2050 = vld [vmem:[#allocation6 + $0x190] sm:$0xf]
        %v2051 = vld [vmem:[#allocation6 + $0x194] sm:$0xf]
        %v2052 = vld [vmem:[#allocation6 + $0x198] sm:$0xf]
        %v2053 = vld [vmem:[#allocation6 + $0x19c] sm:$0xf]
        %v2054 = vld [vmem:[#allocation6 + $0x1a0] sm:$0xf]
        %v2055 = vld [vmem:[#allocation6 + $0x1a4] sm:$0xf]
        %v2056 = vld [vmem:[#allocation6 + $0x1a8] sm:$0xf]
        %v2057 = vld [vmem:[#allocation6 + $0x1ac] sm:$0xf]
        %v2058 = vld [vmem:[#allocation6 + $0x1b0] sm:$0xf]
        %v2059 = vld [vmem:[#allocation6 + $0x1b4] sm:$0xf]
        %v2060 = vld [vmem:[#allocation6 + $0x1b8] sm:$0xf]
        %v2061 = vld [vmem:[#allocation6 + $0x1bc] sm:$0xf]
        %v2066 = vunpack.c.l.b16 %v1196
        %v2067 = vunpack.c.l.b16 %v1197
        %v2068 = vunpack.c.l.b16 %v1198
        %v2069 = vunpack.c.l.b16 %v1199
        %v2070 = vpack.c.b16 %v2067, %v2066
        %v2071 = vpack.c.b16 %v2069, %v2068
        %v2090 = vunpack.c.l.b16 %v2046
        %v2091 = vunpack.c.l.b16 %v2047
        %v2092 = vunpack.c.l.b16 %v2048
        %v2093 = vunpack.c.l.b16 %v2049
        %v2094 = vunpack.c.l.b16 %v2050
        %v2095 = vunpack.c.l.b16 %v2051
        %v2096 = vunpack.c.l.b16 %v2052
        %v2097 = vunpack.c.l.b16 %v2053
        %v2098 = vunpack.c.l.b16 %v2054
        %v2099 = vunpack.c.l.b16 %v2055
        %v2100 = vunpack.c.l.b16 %v2056
        %v2101 = vunpack.c.l.b16 %v2057
        %v2102 = vunpack.c.l.b16 %v2058
        %v2103 = vunpack.c.l.b16 %v2059
        %v2104 = vunpack.c.l.b16 %v2060
        %v2105 = vunpack.c.l.b16 %v2061
        %v2106 = vpack.c.b16 %v2091, %v2090
        %v2107 = vpack.c.b16 %v2093, %v2092
        %v2108 = vpack.c.b16 %v2095, %v2094
        %v2109 = vpack.c.b16 %v2097, %v2096
        %v2110 = vpack.c.b16 %v2099, %v2098
        %v2111 = vpack.c.b16 %v2101, %v2100
        %v2112 = vpack.c.b16 %v2103, %v2102
        %v2113 = vpack.c.b16 %v2105, %v2104
        %2122 = vmatprep.subr.bf16.mxu0 0
        %2123 = vmatpush1.bf16.msra.mxu0 %v2113
        %2124 = vmatprep.subr.bf16.mxu0 0
        %2125 = vmatpush1.bf16.msra.mxu0 %v2112
        %2126 = vmatprep.subr.bf16.mxu0 0
        %2127 = vmatpush1.bf16.msra.mxu0 %v2111
        %2128 = vmatprep.subr.bf16.mxu0 0
        %2129 = vmatpush1.bf16.msra.mxu0 %v2110
        %2130 = vmatprep.subr.bf16.mxu0 0
        %2131 = vmatpush1.bf16.msra.mxu0 %v2109
        %2132 = vmatprep.subr.bf16.mxu0 0
        %2133 = vmatpush1.bf16.msra.mxu0 %v2108
        %2134 = vmatprep.subr.bf16.mxu0 0
        %2135 = vmatpush1.bf16.msra.mxu0 %v2107
        %2136 = vmatprep.subr.bf16.mxu0 0
        %2137 = vmatpush1.bf16.msra.mxu0 %v2106
        %2138 = vmatprep.subr.bf16.mxu0 0
        %2139 = vmatpush2.bf16.msra.mxu0 0
        %2140 = vmatprep.subr.bf16.mxu0 0
        %2141 = vmatpush2.bf16.msra.mxu0 0
        %2142 = vmatprep.subr.bf16.mxu0 0
        %2143 = vmatpush2.bf16.msra.mxu0 0
        %2144 = vmatprep.subr.bf16.mxu0 0
        %2145 = vmatpush2.bf16.msra.mxu0 0
        %2146 = vmatprep.subr.bf16.mxu0 0
        %2147 = vmatpush2.bf16.msra.mxu0 0
        %2148 = vmatprep.subr.bf16.mxu0 0
        %2149 = vmatpush2.bf16.msra.mxu0 0
        %2150 = vmatprep.subr.bf16.mxu0 0
        %2151 = vmatpush2.bf16.msra.mxu0 0
        %2152 = vmatprep.subr.bf16.mxu0 0
        %2153 = vmatpush2.bf16.msra.mxu0 0
        %2154 = vmatprep.mubr.bf16.mxu0 0
        %2155 = vmatmul.mubr.bf16.gmra.mxu0 %v1362
        %v2156 = vpop.f32.mrf.mxu0
        %v2157 = vadd.f32 0.0, %v2156
        %v2158 = vpop.f32.mrf.mxu0
        %v2159 = vpop.f32.mrf.mxu0
        %v2160 = vadd.f32 0.0, %v2159
        %v2161 = vpop.f32.mrf.mxu0
        %2162 = vmatprep.mubr.bf16.mxu0 0
        %2163 = vmatmul.mubr.bf16.gmra.mxu0 %v1363
        %v2164 = vpop.f32.mrf.mxu0
        %v2165 = vpop.f32.mrf.mxu0
        %v2166 = vpop.f32.mrf.mxu0
        %v2167 = vpop.f32.mrf.mxu0
        %2168 = vmatprep.mubr.bf16.mxu0 0
        %2169 = vmatmul.mubr.bf16.gmra.mxu0 %v1364
        %v2170 = vpop.f32.mrf.mxu0
        %v2171 = vadd.f32 0.0, %v2170
        %v2172 = vpop.f32.mrf.mxu0
        %v2173 = vpop.f32.mrf.mxu0
        %v2174 = vadd.f32 0.0, %v2173
        %v2175 = vpop.f32.mrf.mxu0
        %2176 = vmatprep.mubr.bf16.mxu0 0
        %2177 = vmatmul.mubr.bf16.gmra.mxu0 %v1365
        %v2178 = vpop.f32.mrf.mxu0
        %v2179 = vpop.f32.mrf.mxu0
        %v2180 = vpop.f32.mrf.mxu0
        %v2181 = vpop.f32.mrf.mxu0
        %2182 = vmatprep.mubr.bf16.mxu0 0
        %2183 = vmatmul.mubr.bf16.gmra.mxu0 %v1366
        %v2184 = vpop.f32.mrf.mxu0
        %v2185 = vadd.f32 0.0, %v2184
        %v2186 = vpop.f32.mrf.mxu0
        %v2187 = vpop.f32.mrf.mxu0
        %v2188 = vadd.f32 0.0, %v2187
        %v2189 = vpop.f32.mrf.mxu0
        %2190 = vmatprep.mubr.bf16.mxu0 0
        %2191 = vmatmul.mubr.bf16.gmra.mxu0 %v1367
        %v2192 = vpop.f32.mrf.mxu0
        %v2193 = vpop.f32.mrf.mxu0
        %v2194 = vpop.f32.mrf.mxu0
        %v2195 = vpop.f32.mrf.mxu0
        %2196 = vmatprep.mubr.bf16.mxu0 0
        %2197 = vmatmul.mubr.bf16.gmra.mxu0 %v1368
        %v2198 = vpop.f32.mrf.mxu0
        %v2199 = vadd.f32 0.0, %v2198
        %v2200 = vpop.f32.mrf.mxu0
        %v2201 = vpop.f32.mrf.mxu0
        %v2202 = vadd.f32 0.0, %v2201
        %v2203 = vpop.f32.mrf.mxu0
        %2204 = vmatprep.mubr.bf16.mxu0 0
        %2205 = vmatmul.mubr.bf16.gmra.mxu0 %v1369
        %v2206 = vpop.f32.mrf.mxu0
        %v2207 = vpop.f32.mrf.mxu0
        %v2208 = vpop.f32.mrf.mxu0
        %v2209 = vpop.f32.mrf.mxu0
        %2210 = vmatprep.mubr.bf16.mxu0 0
        %2211 = vmatmul.mubr.bf16.gmra.mxu0 %v1370
        %v2212 = vpop.f32.mrf.mxu0
        %v2213 = vadd.f32 0.0, %v2212
        %v2214 = vpop.f32.mrf.mxu0
        %v2215 = vpop.f32.mrf.mxu0
        %v2216 = vadd.f32 0.0, %v2215
        %v2217 = vpop.f32.mrf.mxu0
        %2218 = vmatprep.mubr.bf16.mxu0 0
        %2219 = vmatmul.mubr.bf16.gmra.mxu0 %v1371
        %v2220 = vpop.f32.mrf.mxu0
        %v2221 = vpop.f32.mrf.mxu0
        %v2222 = vpop.f32.mrf.mxu0
        %v2223 = vpop.f32.mrf.mxu0
        %2224 = vmatprep.mubr.bf16.mxu0 0
        %2225 = vmatmul.mubr.bf16.gmra.mxu0 %v1372
        %v2226 = vpop.f32.mrf.mxu0
        %v2227 = vadd.f32 0.0, %v2226
        %v2228 = vpop.f32.mrf.mxu0
        %v2229 = vpop.f32.mrf.mxu0
        %v2230 = vadd.f32 0.0, %v2229
        %v2231 = vpop.f32.mrf.mxu0
        %2232 = vmatprep.mubr.bf16.mxu0 0
        %2233 = vmatmul.mubr.bf16.gmra.mxu0 %v1373
        %v2234 = vpop.f32.mrf.mxu0
        %v2235 = vpop.f32.mrf.mxu0
        %v2236 = vpop.f32.mrf.mxu0
        %v2237 = vpop.f32.mrf.mxu0
        %2238 = vmatprep.mubr.bf16.mxu0 0
        %2239 = vmatmul.mubr.bf16.gmra.mxu0 %v1374
        %v2240 = vpop.f32.mrf.mxu0
        %v2241 = vadd.f32 0.0, %v2240
        %v2242 = vpop.f32.mrf.mxu0
        %v2243 = vpop.f32.mrf.mxu0
        %v2244 = vadd.f32 0.0, %v2243
        %v2245 = vpop.f32.mrf.mxu0
        %2246 = vmatprep.mubr.bf16.mxu0 0
        %2247 = vmatmul.mubr.bf16.gmra.mxu0 %v1375
        %v2248 = vpop.f32.mrf.mxu0
        %v2249 = vpop.f32.mrf.mxu0
        %v2250 = vpop.f32.mrf.mxu0
        %v2251 = vpop.f32.mrf.mxu0
        %2252 = vmatprep.mubr.bf16.mxu0 0
        %2253 = vmatmul.mubr.bf16.gmra.mxu0 %v1376
        %v2254 = vpop.f32.mrf.mxu0
        %v2255 = vadd.f32 0.0, %v2254
        %v2256 = vpop.f32.mrf.mxu0
        %v2257 = vpop.f32.mrf.mxu0
        %v2258 = vadd.f32 0.0, %v2257
        %v2259 = vpop.f32.mrf.mxu0
        %2260 = vmatprep.mubr.bf16.mxu0 0
        %2261 = vmatmul.mubr.bf16.gmra.mxu0 %v1377
        %v2262 = vpop.f32.mrf.mxu0
        %v2263 = vpop.f32.mrf.mxu0
        %v2264 = vpop.f32.mrf.mxu0
        %v2265 = vpop.f32.mrf.mxu0
        %2266 = vmatprep.mubr.bf16.mxu0 0
        %2267 = vmatmul.mubr.bf16.gmra.mxu0 %v1378
        %v2268 = vpop.f32.mrf.mxu0
        %v2269 = vadd.f32 0.0, %v2268
        %v2270 = vpop.f32.mrf.mxu0
        %v2271 = vpop.f32.mrf.mxu0
        %v2272 = vadd.f32 0.0, %v2271
        %v2273 = vpop.f32.mrf.mxu0
        %2274 = vmatprep.mubr.bf16.mxu0 0
        %2275 = vmatmul.mubr.bf16.gmra.mxu0 %v1379
        %v2276 = vpop.f32.mrf.mxu0
        %v2277 = vpop.f32.mrf.mxu0
        %v2278 = vpop.f32.mrf.mxu0
        %v2279 = vpop.f32.mrf.mxu0
        %2280 = vmatprep.mubr.bf16.mxu0 0
        %2281 = vmatmul.mubr.bf16.gmra.mxu0 %v1380
        %v2282 = vpop.f32.mrf.mxu0
        %v2283 = vadd.f32 0.0, %v2282
        %v2284 = vpop.f32.mrf.mxu0
        %v2285 = vpop.f32.mrf.mxu0
        %v2286 = vadd.f32 0.0, %v2285
        %v2287 = vpop.f32.mrf.mxu0
        %2288 = vmatprep.mubr.bf16.mxu0 0
        %2289 = vmatmul.mubr.bf16.gmra.mxu0 %v1381
        %v2290 = vpop.f32.mrf.mxu0
        %v2291 = vpop.f32.mrf.mxu0
        %v2292 = vpop.f32.mrf.mxu0
        %v2293 = vpop.f32.mrf.mxu0
        %2294 = vmatprep.mubr.bf16.mxu0 0
        %2295 = vmatmul.mubr.bf16.gmra.mxu0 %v1382
        %v2296 = vpop.f32.mrf.mxu0
        %v2297 = vadd.f32 0.0, %v2296
        %v2298 = vpop.f32.mrf.mxu0
        %v2299 = vpop.f32.mrf.mxu0
        %v2300 = vadd.f32 0.0, %v2299
        %v2301 = vpop.f32.mrf.mxu0
        %2302 = vmatprep.mubr.bf16.mxu0 0
        %2303 = vmatmul.mubr.bf16.gmra.mxu0 %v1383
        %v2304 = vpop.f32.mrf.mxu0
        %v2305 = vpop.f32.mrf.mxu0
        %v2306 = vpop.f32.mrf.mxu0
        %v2307 = vpop.f32.mrf.mxu0
        %2308 = vmatprep.mubr.bf16.mxu0 0
        %2309 = vmatmul.mubr.bf16.gmra.mxu0 %v1384
        %v2310 = vpop.f32.mrf.mxu0
        %v2311 = vadd.f32 0.0, %v2310
        %v2312 = vpop.f32.mrf.mxu0
        %v2313 = vpop.f32.mrf.mxu0
        %v2314 = vadd.f32 0.0, %v2313
        %v2315 = vpop.f32.mrf.mxu0
        %2316 = vmatprep.mubr.bf16.mxu0 0
        %2317 = vmatmul.mubr.bf16.gmra.mxu0 %v1385
        %v2318 = vpop.f32.mrf.mxu0
        %v2319 = vpop.f32.mrf.mxu0
        %v2320 = vpop.f32.mrf.mxu0
        %v2321 = vpop.f32.mrf.mxu0
        %2322 = vmatprep.mubr.bf16.mxu0 0
        %2323 = vmatmul.mubr.bf16.gmra.mxu0 %v1386
        %v2324 = vpop.f32.mrf.mxu0
        %v2325 = vadd.f32 0.0, %v2324
        %v2326 = vpop.f32.mrf.mxu0
        %v2327 = vpop.f32.mrf.mxu0
        %v2328 = vadd.f32 0.0, %v2327
        %v2329 = vpop.f32.mrf.mxu0
        %2330 = vmatprep.mubr.bf16.mxu0 0
        %2331 = vmatmul.mubr.bf16.gmra.mxu0 %v1387
        %v2332 = vpop.f32.mrf.mxu0
        %v2333 = vpop.f32.mrf.mxu0
        %v2334 = vpop.f32.mrf.mxu0
        %v2335 = vpop.f32.mrf.mxu0
        %2336 = vmatprep.mubr.bf16.mxu0 0
        %2337 = vmatmul.mubr.bf16.gmra.mxu0 %v1388
        %v2338 = vpop.f32.mrf.mxu0
        %v2339 = vadd.f32 0.0, %v2338
        %v2340 = vpop.f32.mrf.mxu0
        %v2341 = vpop.f32.mrf.mxu0
        %v2342 = vadd.f32 0.0, %v2341
        %v2343 = vpop.f32.mrf.mxu0
        %2344 = vmatprep.mubr.bf16.mxu0 0
        %2345 = vmatmul.mubr.bf16.gmra.mxu0 %v1389
        %v2346 = vpop.f32.mrf.mxu0
        %v2347 = vpop.f32.mrf.mxu0
        %v2348 = vpop.f32.mrf.mxu0
        %v2349 = vpop.f32.mrf.mxu0
        %2350 = vmatprep.mubr.bf16.mxu0 0
        %2351 = vmatmul.mubr.bf16.gmra.mxu0 %v1390
        %v2352 = vpop.f32.mrf.mxu0
        %v2353 = vadd.f32 0.0, %v2352
        %v2354 = vpop.f32.mrf.mxu0
        %v2355 = vpop.f32.mrf.mxu0
        %v2356 = vadd.f32 0.0, %v2355
        %v2357 = vpop.f32.mrf.mxu0
        %2358 = vmatprep.mubr.bf16.mxu0 0
        %2359 = vmatmul.mubr.bf16.gmra.mxu0 %v1391
        %v2360 = vpop.f32.mrf.mxu0
        %v2361 = vpop.f32.mrf.mxu0
        %v2362 = vpop.f32.mrf.mxu0
        %v2363 = vpop.f32.mrf.mxu0
        %2364 = vmatprep.mubr.bf16.mxu0 0
        %2365 = vmatmul.mubr.bf16.gmra.mxu0 %v2070
        %v2366 = vpop.f32.mrf.mxu0
        %v2367 = vadd.f32 0.0, %v2366
        %v2368 = vpop.f32.mrf.mxu0
        %v2369 = vpop.f32.mrf.mxu0
        %v2370 = vadd.f32 0.0, %v2369
        %v2371 = vpop.f32.mrf.mxu0
        %2372 = vmatprep.mubr.bf16.mxu0 0
        %2373 = vmatmul.mubr.bf16.gmra.mxu0 %v2071
        %v2374 = vpop.f32.mrf.mxu0
        %v2375 = vpop.f32.mrf.mxu0
        %v2376 = vpop.f32.mrf.mxu0
        %v2377 = vpop.f32.mrf.mxu0
        %2378 = vdwg.mxu0
        %v2379 = vadd.f32 %v1824, %v2157
        %v2380 = vadd.f32 %v1827, %v2160
        %v2381 = vadd.f32 %v1838, %v2171
        %v2382 = vadd.f32 %v1841, %v2174
        %v2383 = vadd.f32 %v1852, %v2185
        %v2384 = vadd.f32 %v1855, %v2188
        %v2385 = vadd.f32 %v1866, %v2199
        %v2386 = vadd.f32 %v1869, %v2202
        %v2387 = vadd.f32 %v1880, %v2213
        %v2388 = vadd.f32 %v1883, %v2216
        %v2389 = vadd.f32 %v1894, %v2227
        %v2390 = vadd.f32 %v1897, %v2230
        %v2391 = vadd.f32 %v1908, %v2241
        %v2392 = vadd.f32 %v1911, %v2244
        %v2393 = vadd.f32 %v1922, %v2255
        %v2394 = vadd.f32 %v1925, %v2258
        %v2395 = vadd.f32 %v1936, %v2269
        %v2396 = vadd.f32 %v1939, %v2272
        %v2397 = vadd.f32 %v1950, %v2283
        %v2398 = vadd.f32 %v1953, %v2286
        %v2399 = vadd.f32 %v1964, %v2297
        %v2400 = vadd.f32 %v1967, %v2300
        %v2401 = vadd.f32 %v1978, %v2311
        %v2402 = vadd.f32 %v1981, %v2314
        %v2403 = vadd.f32 %v1992, %v2325
        %v2404 = vadd.f32 %v1995, %v2328
        %v2405 = vadd.f32 %v2006, %v2339
        %v2406 = vadd.f32 %v2009, %v2342
        %v2407 = vadd.f32 %v2020, %v2353
        %v2408 = vadd.f32 %v2023, %v2356
        %v2409 = vadd.f32 %v2034, %v2367
        %v2410 = vadd.f32 %v2037, %v2370
        %v2411 = vld [vmem:[#allocation6 + $0x40] sm:$0xf]
        %v2412 = vld [vmem:[#allocation6 + $0x44] sm:$0xf]
        %v2413 = vld [vmem:[#allocation6 + $0x48] sm:$0xf]
        %v2414 = vld [vmem:[#allocation6 + $0x4c] sm:$0xf]
        %v2415 = vld [vmem:[#allocation6 + $0x50] sm:$0xf]
        %v2416 = vld [vmem:[#allocation6 + $0x54] sm:$0xf]
        %v2417 = vld [vmem:[#allocation6 + $0x58] sm:$0xf]
        %v2418 = vld [vmem:[#allocation6 + $0x5c] sm:$0xf]
        %v2419 = vld [vmem:[#allocation6 + $0x60] sm:$0xf]
        %v2420 = vld [vmem:[#allocation6 + $0x64] sm:$0xf]
        %v2421 = vld [vmem:[#allocation6 + $0x68] sm:$0xf]
        %v2422 = vld [vmem:[#allocation6 + $0x6c] sm:$0xf]
        %v2423 = vld [vmem:[#allocation6 + $0x70] sm:$0xf]
        %v2424 = vld [vmem:[#allocation6 + $0x74] sm:$0xf]
        %v2425 = vld [vmem:[#allocation6 + $0x78] sm:$0xf]
        %v2426 = vld [vmem:[#allocation6 + $0x7c] sm:$0xf]
        %v2427 = vld [vmem:[#allocation6 + $0x100] sm:$0xf]
        %v2428 = vld [vmem:[#allocation6 + $0x104] sm:$0xf]
        %v2429 = vld [vmem:[#allocation6 + $0x108] sm:$0xf]
        %v2430 = vld [vmem:[#allocation6 + $0x10c] sm:$0xf]
        %v2431 = vld [vmem:[#allocation6 + $0x110] sm:$0xf]
        %v2432 = vld [vmem:[#allocation6 + $0x114] sm:$0xf]
        %v2433 = vld [vmem:[#allocation6 + $0x118] sm:$0xf]
        %v2434 = vld [vmem:[#allocation6 + $0x11c] sm:$0xf]
        %v2435 = vld [vmem:[#allocation6 + $0x120] sm:$0xf]
        %v2436 = vld [vmem:[#allocation6 + $0x124] sm:$0xf]
        %v2437 = vld [vmem:[#allocation6 + $0x128] sm:$0xf]
        %v2438 = vld [vmem:[#allocation6 + $0x12c] sm:$0xf]
        %v2439 = vld [vmem:[#allocation6 + $0x130] sm:$0xf]
        %v2440 = vld [vmem:[#allocation6 + $0x134] sm:$0xf]
        %v2441 = vld [vmem:[#allocation6 + $0x138] sm:$0xf]
        %v2442 = vld [vmem:[#allocation6 + $0x13c] sm:$0xf]
        %v2459 = vunpack.c.l.b16 %v2427
        %v2460 = vunpack.c.l.b16 %v2428
        %v2461 = vunpack.c.l.b16 %v2429
        %v2462 = vunpack.c.l.b16 %v2430
        %v2463 = vunpack.c.l.b16 %v2431
        %v2464 = vunpack.c.l.b16 %v2432
        %v2465 = vunpack.c.l.b16 %v2433
        %v2466 = vunpack.c.l.b16 %v2434
        %v2467 = vunpack.c.l.b16 %v2435
        %v2468 = vunpack.c.l.b16 %v2436
        %v2469 = vunpack.c.l.b16 %v2437
        %v2470 = vunpack.c.l.b16 %v2438
        %v2471 = vunpack.c.l.b16 %v2439
        %v2472 = vunpack.c.l.b16 %v2440
        %v2473 = vunpack.c.l.b16 %v2441
        %v2474 = vunpack.c.l.b16 %v2442
        %v2475 = vpack.c.b16 %v2460, %v2459
        %v2476 = vpack.c.b16 %v2462, %v2461
        %v2477 = vpack.c.b16 %v2464, %v2463
        %v2478 = vpack.c.b16 %v2466, %v2465
        %v2479 = vpack.c.b16 %v2468, %v2467
        %v2480 = vpack.c.b16 %v2470, %v2469
        %v2481 = vpack.c.b16 %v2472, %v2471
        %v2482 = vpack.c.b16 %v2474, %v2473
        %2491 = vmatprep.subr.bf16.mxu0 0
        %2492 = vmatpush1.bf16.msra.mxu0 %v2482
        %2493 = vmatprep.subr.bf16.mxu0 0
        %2494 = vmatpush1.bf16.msra.mxu0 %v2481
        %2495 = vmatprep.subr.bf16.mxu0 0
        %2496 = vmatpush1.bf16.msra.mxu0 %v2480
        %2497 = vmatprep.subr.bf16.mxu0 0
        %2498 = vmatpush1.bf16.msra.mxu0 %v2479
        %2499 = vmatprep.subr.bf16.mxu0 0
        %2500 = vmatpush1.bf16.msra.mxu0 %v2478
        %2501 = vmatprep.subr.bf16.mxu0 0
        %2502 = vmatpush1.bf16.msra.mxu0 %v2477
        %2503 = vmatprep.subr.bf16.mxu0 0
        %2504 = vmatpush1.bf16.msra.mxu0 %v2476
        %2505 = vmatprep.subr.bf16.mxu0 0
        %2506 = vmatpush1.bf16.msra.mxu0 %v2475
        %2507 = vmatprep.subr.bf16.mxu0 0
        %2508 = vmatpush2.bf16.msra.mxu0 0
        %2509 = vmatprep.subr.bf16.mxu0 0
        %2510 = vmatpush2.bf16.msra.mxu0 0
        %2511 = vmatprep.subr.bf16.mxu0 0
        %2512 = vmatpush2.bf16.msra.mxu0 0
        %2513 = vmatprep.subr.bf16.mxu0 0
        %2514 = vmatpush2.bf16.msra.mxu0 0
        %2515 = vmatprep.subr.bf16.mxu0 0
        %2516 = vmatpush2.bf16.msra.mxu0 0
        %2517 = vmatprep.subr.bf16.mxu0 0
        %2518 = vmatpush2.bf16.msra.mxu0 0
        %2519 = vmatprep.subr.bf16.mxu0 0
        %2520 = vmatpush2.bf16.msra.mxu0 0
        %2521 = vmatprep.subr.bf16.mxu0 0
        %2522 = vmatpush2.bf16.msra.mxu0 0
        %2523 = vmatprep.mubr.bf16.mxu0 0
        %2524 = vmatmul.mubr.bf16.gmra.mxu0 %v1360
        %v2525 = vpop.f32.mrf.mxu0
        %v2526 = vadd.f32 0.0, %v2525
        %v2527 = vpop.f32.mrf.mxu0
        %v2528 = vpop.f32.mrf.mxu0
        %v2529 = vadd.f32 0.0, %v2528
        %v2530 = vpop.f32.mrf.mxu0
        %2531 = vmatprep.mubr.bf16.mxu0 0
        %2532 = vmatmul.mubr.bf16.gmra.mxu0 %v1361
        %v2533 = vpop.f32.mrf.mxu0
        %v2534 = vadd.f32 0.0, %v2533
        %v2535 = vpop.f32.mrf.mxu0
        %v2536 = vpop.f32.mrf.mxu0
        %v2537 = vpop.f32.mrf.mxu0
        %2538 = vmatprep.mubr.bf16.mxu0 0
        %2539 = vmatmul.mubr.bf16.gmra.mxu0 %v1362
        %v2540 = vpop.f32.mrf.mxu0
        %v2541 = vadd.f32 0.0, %v2540
        %v2542 = vpop.f32.mrf.mxu0
        %v2543 = vpop.f32.mrf.mxu0
        %v2544 = vadd.f32 0.0, %v2543
        %v2545 = vpop.f32.mrf.mxu0
        %2546 = vmatprep.mubr.bf16.mxu0 0
        %2547 = vmatmul.mubr.bf16.gmra.mxu0 %v1363
        %v2548 = vpop.f32.mrf.mxu0
        %v2549 = vadd.f32 0.0, %v2548
        %v2550 = vpop.f32.mrf.mxu0
        %v2551 = vpop.f32.mrf.mxu0
        %v2552 = vpop.f32.mrf.mxu0
        %2553 = vmatprep.mubr.bf16.mxu0 0
        %2554 = vmatmul.mubr.bf16.gmra.mxu0 %v1364
        %v2555 = vpop.f32.mrf.mxu0
        %v2556 = vadd.f32 0.0, %v2555
        %v2557 = vpop.f32.mrf.mxu0
        %v2558 = vpop.f32.mrf.mxu0
        %v2559 = vadd.f32 0.0, %v2558
        %v2560 = vpop.f32.mrf.mxu0
        %2561 = vmatprep.mubr.bf16.mxu0 0
        %2562 = vmatmul.mubr.bf16.gmra.mxu0 %v1365
        %v2563 = vpop.f32.mrf.mxu0
        %v2564 = vadd.f32 0.0, %v2563
        %v2565 = vpop.f32.mrf.mxu0
        %v2566 = vpop.f32.mrf.mxu0
        %v2567 = vpop.f32.mrf.mxu0
        %2568 = vmatprep.mubr.bf16.mxu0 0
        %2569 = vmatmul.mubr.bf16.gmra.mxu0 %v1366
        %v2570 = vpop.f32.mrf.mxu0
        %v2571 = vadd.f32 0.0, %v2570
        %v2572 = vpop.f32.mrf.mxu0
        %v2573 = vpop.f32.mrf.mxu0
        %v2574 = vadd.f32 0.0, %v2573
        %v2575 = vpop.f32.mrf.mxu0
        %2576 = vmatprep.mubr.bf16.mxu0 0
        %2577 = vmatmul.mubr.bf16.gmra.mxu0 %v1367
        %v2578 = vpop.f32.mrf.mxu0
        %v2579 = vadd.f32 0.0, %v2578
        %v2580 = vpop.f32.mrf.mxu0
        %v2581 = vpop.f32.mrf.mxu0
        %v2582 = vpop.f32.mrf.mxu0
        %2583 = vmatprep.mubr.bf16.mxu0 0
        %2584 = vmatmul.mubr.bf16.gmra.mxu0 %v1368
        %v2585 = vpop.f32.mrf.mxu0
        %v2586 = vadd.f32 0.0, %v2585
        %v2587 = vpop.f32.mrf.mxu0
        %v2588 = vpop.f32.mrf.mxu0
        %v2589 = vadd.f32 0.0, %v2588
        %v2590 = vpop.f32.mrf.mxu0
        %2591 = vmatprep.mubr.bf16.mxu0 0
        %2592 = vmatmul.mubr.bf16.gmra.mxu0 %v1369
        %v2593 = vpop.f32.mrf.mxu0
        %v2594 = vadd.f32 0.0, %v2593
        %v2595 = vpop.f32.mrf.mxu0
        %v2596 = vpop.f32.mrf.mxu0
        %v2597 = vpop.f32.mrf.mxu0
        %2598 = vmatprep.mubr.bf16.mxu0 0
        %2599 = vmatmul.mubr.bf16.gmra.mxu0 %v1370
        %v2600 = vpop.f32.mrf.mxu0
        %v2601 = vadd.f32 0.0, %v2600
        %v2602 = vpop.f32.mrf.mxu0
        %v2603 = vpop.f32.mrf.mxu0
        %v2604 = vadd.f32 0.0, %v2603
        %v2605 = vpop.f32.mrf.mxu0
        %2606 = vmatprep.mubr.bf16.mxu0 0
        %2607 = vmatmul.mubr.bf16.gmra.mxu0 %v1371
        %v2608 = vpop.f32.mrf.mxu0
        %v2609 = vadd.f32 0.0, %v2608
        %v2610 = vpop.f32.mrf.mxu0
        %v2611 = vpop.f32.mrf.mxu0
        %v2612 = vpop.f32.mrf.mxu0
        %2613 = vmatprep.mubr.bf16.mxu0 0
        %2614 = vmatmul.mubr.bf16.gmra.mxu0 %v1372
        %v2615 = vpop.f32.mrf.mxu0
        %v2616 = vadd.f32 0.0, %v2615
        %v2617 = vpop.f32.mrf.mxu0
        %v2618 = vpop.f32.mrf.mxu0
        %v2619 = vadd.f32 0.0, %v2618
        %v2620 = vpop.f32.mrf.mxu0
        %2621 = vmatprep.mubr.bf16.mxu0 0
        %2622 = vmatmul.mubr.bf16.gmra.mxu0 %v1373
        %v2623 = vpop.f32.mrf.mxu0
        %v2624 = vadd.f32 0.0, %v2623
        %v2625 = vpop.f32.mrf.mxu0
        %v2626 = vpop.f32.mrf.mxu0
        %v2627 = vpop.f32.mrf.mxu0
        %2628 = vmatprep.mubr.bf16.mxu0 0
        %2629 = vmatmul.mubr.bf16.gmra.mxu0 %v1374
        %v2630 = vpop.f32.mrf.mxu0
        %v2631 = vadd.f32 0.0, %v2630
        %v2632 = vpop.f32.mrf.mxu0
        %v2633 = vpop.f32.mrf.mxu0
        %v2634 = vadd.f32 0.0, %v2633
        %v2635 = vpop.f32.mrf.mxu0
        %2636 = vmatprep.mubr.bf16.mxu0 0
        %2637 = vmatmul.mubr.bf16.gmra.mxu0 %v1375
        %v2638 = vpop.f32.mrf.mxu0
        %v2639 = vadd.f32 0.0, %v2638
        %v2640 = vpop.f32.mrf.mxu0
        %v2641 = vpop.f32.mrf.mxu0
        %v2642 = vpop.f32.mrf.mxu0
        %2643 = vmatprep.mubr.bf16.mxu0 0
        %2644 = vmatmul.mubr.bf16.gmra.mxu0 %v1376
        %v2645 = vpop.f32.mrf.mxu0
        %v2646 = vadd.f32 0.0, %v2645
        %v2647 = vpop.f32.mrf.mxu0
        %v2648 = vpop.f32.mrf.mxu0
        %v2649 = vadd.f32 0.0, %v2648
        %v2650 = vpop.f32.mrf.mxu0
        %2651 = vmatprep.mubr.bf16.mxu0 0
        %2652 = vmatmul.mubr.bf16.gmra.mxu0 %v1377
        %v2653 = vpop.f32.mrf.mxu0
        %v2654 = vadd.f32 0.0, %v2653
        %v2655 = vpop.f32.mrf.mxu0
        %v2656 = vpop.f32.mrf.mxu0
        %v2657 = vpop.f32.mrf.mxu0
        %2658 = vmatprep.mubr.bf16.mxu0 0
        %2659 = vmatmul.mubr.bf16.gmra.mxu0 %v1378
        %v2660 = vpop.f32.mrf.mxu0
        %v2661 = vadd.f32 0.0, %v2660
        %v2662 = vpop.f32.mrf.mxu0
        %v2663 = vpop.f32.mrf.mxu0
        %v2664 = vadd.f32 0.0, %v2663
        %v2665 = vpop.f32.mrf.mxu0
        %2666 = vmatprep.mubr.bf16.mxu0 0
        %2667 = vmatmul.mubr.bf16.gmra.mxu0 %v1379
        %v2668 = vpop.f32.mrf.mxu0
        %v2669 = vadd.f32 0.0, %v2668
        %v2670 = vpop.f32.mrf.mxu0
        %v2671 = vpop.f32.mrf.mxu0
        %v2672 = vpop.f32.mrf.mxu0
        %2673 = vmatprep.mubr.bf16.mxu0 0
        %2674 = vmatmul.mubr.bf16.gmra.mxu0 %v1380
        %v2675 = vpop.f32.mrf.mxu0
        %v2676 = vadd.f32 0.0, %v2675
        %v2677 = vpop.f32.mrf.mxu0
        %v2678 = vpop.f32.mrf.mxu0
        %v2679 = vadd.f32 0.0, %v2678
        %v2680 = vpop.f32.mrf.mxu0
        %2681 = vmatprep.mubr.bf16.mxu0 0
        %2682 = vmatmul.mubr.bf16.gmra.mxu0 %v1381
        %v2683 = vpop.f32.mrf.mxu0
        %v2684 = vadd.f32 0.0, %v2683
        %v2685 = vpop.f32.mrf.mxu0
        %v2686 = vpop.f32.mrf.mxu0
        %v2687 = vpop.f32.mrf.mxu0
        %2688 = vmatprep.mubr.bf16.mxu0 0
        %2689 = vmatmul.mubr.bf16.gmra.mxu0 %v1382
        %v2690 = vpop.f32.mrf.mxu0
        %v2691 = vadd.f32 0.0, %v2690
        %v2692 = vpop.f32.mrf.mxu0
        %v2693 = vpop.f32.mrf.mxu0
        %v2694 = vadd.f32 0.0, %v2693
        %v2695 = vpop.f32.mrf.mxu0
        %2696 = vmatprep.mubr.bf16.mxu0 0
        %2697 = vmatmul.mubr.bf16.gmra.mxu0 %v1383
        %v2698 = vpop.f32.mrf.mxu0
        %v2699 = vadd.f32 0.0, %v2698
        %v2700 = vpop.f32.mrf.mxu0
        %v2701 = vpop.f32.mrf.mxu0
        %v2702 = vpop.f32.mrf.mxu0
        %2703 = vmatprep.mubr.bf16.mxu0 0
        %2704 = vmatmul.mubr.bf16.gmra.mxu0 %v1384
        %v2705 = vpop.f32.mrf.mxu0
        %v2706 = vadd.f32 0.0, %v2705
        %v2707 = vpop.f32.mrf.mxu0
        %v2708 = vpop.f32.mrf.mxu0
        %v2709 = vadd.f32 0.0, %v2708
        %v2710 = vpop.f32.mrf.mxu0
        %2711 = vmatprep.mubr.bf16.mxu0 0
        %2712 = vmatmul.mubr.bf16.gmra.mxu0 %v1385
        %v2713 = vpop.f32.mrf.mxu0
        %v2714 = vadd.f32 0.0, %v2713
        %v2715 = vpop.f32.mrf.mxu0
        %v2716 = vpop.f32.mrf.mxu0
        %v2717 = vpop.f32.mrf.mxu0
        %2718 = vmatprep.mubr.bf16.mxu0 0
        %2719 = vmatmul.mubr.bf16.gmra.mxu0 %v1386
        %v2720 = vpop.f32.mrf.mxu0
        %v2721 = vadd.f32 0.0, %v2720
        %v2722 = vpop.f32.mrf.mxu0
        %v2723 = vpop.f32.mrf.mxu0
        %v2724 = vadd.f32 0.0, %v2723
        %v2725 = vpop.f32.mrf.mxu0
        %2726 = vmatprep.mubr.bf16.mxu0 0
        %2727 = vmatmul.mubr.bf16.gmra.mxu0 %v1387
        %v2728 = vpop.f32.mrf.mxu0
        %v2729 = vadd.f32 0.0, %v2728
        %v2730 = vpop.f32.mrf.mxu0
        %v2731 = vpop.f32.mrf.mxu0
        %v2732 = vpop.f32.mrf.mxu0
        %2733 = vmatprep.mubr.bf16.mxu0 0
        %2734 = vmatmul.mubr.bf16.gmra.mxu0 %v1388
        %v2735 = vpop.f32.mrf.mxu0
        %v2736 = vadd.f32 0.0, %v2735
        %v2737 = vpop.f32.mrf.mxu0
        %v2738 = vpop.f32.mrf.mxu0
        %v2739 = vadd.f32 0.0, %v2738
        %v2740 = vpop.f32.mrf.mxu0
        %2741 = vmatprep.mubr.bf16.mxu0 0
        %2742 = vmatmul.mubr.bf16.gmra.mxu0 %v1389
        %v2743 = vpop.f32.mrf.mxu0
        %v2744 = vadd.f32 0.0, %v2743
        %v2745 = vpop.f32.mrf.mxu0
        %v2746 = vpop.f32.mrf.mxu0
        %v2747 = vpop.f32.mrf.mxu0
        %2748 = vmatprep.mubr.bf16.mxu0 0
        %2749 = vmatmul.mubr.bf16.gmra.mxu0 %v1390
        %v2750 = vpop.f32.mrf.mxu0
        %v2751 = vadd.f32 0.0, %v2750
        %v2752 = vpop.f32.mrf.mxu0
        %v2753 = vpop.f32.mrf.mxu0
        %v2754 = vadd.f32 0.0, %v2753
        %v2755 = vpop.f32.mrf.mxu0
        %2756 = vmatprep.mubr.bf16.mxu0 0
        %2757 = vmatmul.mubr.bf16.gmra.mxu0 %v1391
        %v2758 = vpop.f32.mrf.mxu0
        %v2759 = vadd.f32 0.0, %v2758
        %v2760 = vpop.f32.mrf.mxu0
        %v2761 = vpop.f32.mrf.mxu0
        %v2762 = vpop.f32.mrf.mxu0
        %2763 = vdwg.mxu0
        %v2780 = vunpack.c.l.b16 %v2411
        %v2781 = vunpack.c.l.b16 %v2412
        %v2782 = vunpack.c.l.b16 %v2413
        %v2783 = vunpack.c.l.b16 %v2414
        %v2784 = vunpack.c.l.b16 %v2415
        %v2785 = vunpack.c.l.b16 %v2416
        %v2786 = vunpack.c.l.b16 %v2417
        %v2787 = vunpack.c.l.b16 %v2418
        %v2788 = vunpack.c.l.b16 %v2419
        %v2789 = vunpack.c.l.b16 %v2420
        %v2790 = vunpack.c.l.b16 %v2421
        %v2791 = vunpack.c.l.b16 %v2422
        %v2792 = vunpack.c.l.b16 %v2423
        %v2793 = vunpack.c.l.b16 %v2424
        %v2794 = vunpack.c.l.b16 %v2425
        %v2795 = vunpack.c.l.b16 %v2426
        %v2796 = vpack.c.b16 %v2781, %v2780
        %v2797 = vpack.c.b16 %v2783, %v2782
        %v2798 = vpack.c.b16 %v2785, %v2784
        %v2799 = vpack.c.b16 %v2787, %v2786
        %v2800 = vpack.c.b16 %v2789, %v2788
        %v2801 = vpack.c.b16 %v2791, %v2790
        %v2802 = vpack.c.b16 %v2793, %v2792
        %v2803 = vpack.c.b16 %v2795, %v2794
        %2812 = vmatprep.subr.bf16.mxu0 0
        %2813 = vmatpush1.bf16.msra.mxu0 %v2803
        %2814 = vmatprep.subr.bf16.mxu0 0
        %2815 = vmatpush1.bf16.msra.mxu0 %v2802
        %2816 = vmatprep.subr.bf16.mxu0 0
        %2817 = vmatpush1.bf16.msra.mxu0 %v2801
        %2818 = vmatprep.subr.bf16.mxu0 0
        %2819 = vmatpush1.bf16.msra.mxu0 %v2800
        %2820 = vmatprep.subr.bf16.mxu0 0
        %2821 = vmatpush1.bf16.msra.mxu0 %v2799
        %2822 = vmatprep.subr.bf16.mxu0 0
        %2823 = vmatpush1.bf16.msra.mxu0 %v2798
        %2824 = vmatprep.subr.bf16.mxu0 0
        %2825 = vmatpush1.bf16.msra.mxu0 %v2797
        %2826 = vmatprep.subr.bf16.mxu0 0
        %2827 = vmatpush1.bf16.msra.mxu0 %v2796
        %2828 = vmatprep.subr.bf16.mxu0 0
        %2829 = vmatpush2.bf16.msra.mxu0 0
        %2830 = vmatprep.subr.bf16.mxu0 0
        %2831 = vmatpush2.bf16.msra.mxu0 0
        %2832 = vmatprep.subr.bf16.mxu0 0
        %2833 = vmatpush2.bf16.msra.mxu0 0
        %2834 = vmatprep.subr.bf16.mxu0 0
        %2835 = vmatpush2.bf16.msra.mxu0 0
        %2836 = vmatprep.subr.bf16.mxu0 0
        %2837 = vmatpush2.bf16.msra.mxu0 0
        %2838 = vmatprep.subr.bf16.mxu0 0
        %2839 = vmatpush2.bf16.msra.mxu0 0
        %2840 = vmatprep.subr.bf16.mxu0 0
        %2841 = vmatpush2.bf16.msra.mxu0 0
        %2842 = vmatprep.subr.bf16.mxu0 0
        %2843 = vmatpush2.bf16.msra.mxu0 0
        %2844 = vmatprep.mubr.bf16.mxu0 0
        %2845 = vmatmul.mubr.bf16.gmra.mxu0 %v1737
        %v2846 = vpop.f32.mrf.mxu0
        %v2847 = vadd.f32 %v2526, %v2846
        %v2848 = vpop.f32.mrf.mxu0
        %v2849 = vpop.f32.mrf.mxu0
        %v2850 = vadd.f32 %v2529, %v2849
        %v2851 = vpop.f32.mrf.mxu0
        %2852 = vmatprep.mubr.bf16.mxu0 0
        %2853 = vmatmul.mubr.bf16.gmra.mxu0 %v1738
        %v2854 = vpop.f32.mrf.mxu0
        %v2855 = vadd.f32 %v2534, %v2854
        %v2856 = vpop.f32.mrf.mxu0
        %v2857 = vpop.f32.mrf.mxu0
        %v2858 = vpop.f32.mrf.mxu0
        %2859 = vmatprep.mubr.bf16.mxu0 0
        %2860 = vmatmul.mubr.bf16.gmra.mxu0 %v1360
        %v2861 = vpop.f32.mrf.mxu0
        %v2862 = vadd.f32 %v2541, %v2861
        %v2863 = vpop.f32.mrf.mxu0
        %v2864 = vpop.f32.mrf.mxu0
        %v2865 = vadd.f32 %v2544, %v2864
        %v2866 = vpop.f32.mrf.mxu0
        %2867 = vmatprep.mubr.bf16.mxu0 0
        %2868 = vmatmul.mubr.bf16.gmra.mxu0 %v1361
        %v2869 = vpop.f32.mrf.mxu0
        %v2870 = vadd.f32 %v2549, %v2869
        %v2871 = vpop.f32.mrf.mxu0
        %v2872 = vpop.f32.mrf.mxu0
        %v2873 = vpop.f32.mrf.mxu0
        %2874 = vmatprep.mubr.bf16.mxu0 0
        %2875 = vmatmul.mubr.bf16.gmra.mxu0 %v1362
        %v2876 = vpop.f32.mrf.mxu0
        %v2877 = vadd.f32 %v2556, %v2876
        %v2878 = vpop.f32.mrf.mxu0
        %v2879 = vpop.f32.mrf.mxu0
        %v2880 = vadd.f32 %v2559, %v2879
        %v2881 = vpop.f32.mrf.mxu0
        %2882 = vmatprep.mubr.bf16.mxu0 0
        %2883 = vmatmul.mubr.bf16.gmra.mxu0 %v1363
        %v2884 = vpop.f32.mrf.mxu0
        %v2885 = vadd.f32 %v2564, %v2884
        %v2886 = vpop.f32.mrf.mxu0
        %v2887 = vpop.f32.mrf.mxu0
        %v2888 = vpop.f32.mrf.mxu0
        %2889 = vmatprep.mubr.bf16.mxu0 0
        %2890 = vmatmul.mubr.bf16.gmra.mxu0 %v1364
        %v2891 = vpop.f32.mrf.mxu0
        %v2892 = vadd.f32 %v2571, %v2891
        %v2893 = vpop.f32.mrf.mxu0
        %v2894 = vpop.f32.mrf.mxu0
        %v2895 = vadd.f32 %v2574, %v2894
        %v2896 = vpop.f32.mrf.mxu0
        %2897 = vmatprep.mubr.bf16.mxu0 0
        %2898 = vmatmul.mubr.bf16.gmra.mxu0 %v1365
        %v2899 = vpop.f32.mrf.mxu0
        %v2900 = vadd.f32 %v2579, %v2899
        %v2901 = vpop.f32.mrf.mxu0
        %v2902 = vpop.f32.mrf.mxu0
        %v2903 = vpop.f32.mrf.mxu0
        %2904 = vmatprep.mubr.bf16.mxu0 0
        %2905 = vmatmul.mubr.bf16.gmra.mxu0 %v1366
        %v2906 = vpop.f32.mrf.mxu0
        %v2907 = vadd.f32 %v2586, %v2906
        %v2908 = vpop.f32.mrf.mxu0
        %v2909 = vpop.f32.mrf.mxu0
        %v2910 = vadd.f32 %v2589, %v2909
        %v2911 = vpop.f32.mrf.mxu0
        %2912 = vmatprep.mubr.bf16.mxu0 0
        %2913 = vmatmul.mubr.bf16.gmra.mxu0 %v1367
        %v2914 = vpop.f32.mrf.mxu0
        %v2915 = vadd.f32 %v2594, %v2914
        %v2916 = vpop.f32.mrf.mxu0
        %v2917 = vpop.f32.mrf.mxu0
        %v2918 = vpop.f32.mrf.mxu0
        %2919 = vmatprep.mubr.bf16.mxu0 0
        %2920 = vmatmul.mubr.bf16.gmra.mxu0 %v1368
        %v2921 = vpop.f32.mrf.mxu0
        %v2922 = vadd.f32 %v2601, %v2921
        %v2923 = vpop.f32.mrf.mxu0
        %v2924 = vpop.f32.mrf.mxu0
        %v2925 = vadd.f32 %v2604, %v2924
        %v2926 = vpop.f32.mrf.mxu0
        %2927 = vmatprep.mubr.bf16.mxu0 0
        %2928 = vmatmul.mubr.bf16.gmra.mxu0 %v1369
        %v2929 = vpop.f32.mrf.mxu0
        %v2930 = vadd.f32 %v2609, %v2929
        %v2931 = vpop.f32.mrf.mxu0
        %v2932 = vpop.f32.mrf.mxu0
        %v2933 = vpop.f32.mrf.mxu0
        %2934 = vmatprep.mubr.bf16.mxu0 0
        %2935 = vmatmul.mubr.bf16.gmra.mxu0 %v1370
        %v2936 = vpop.f32.mrf.mxu0
        %v2937 = vadd.f32 %v2616, %v2936
        %v2938 = vpop.f32.mrf.mxu0
        %v2939 = vpop.f32.mrf.mxu0
        %v2940 = vadd.f32 %v2619, %v2939
        %v2941 = vpop.f32.mrf.mxu0
        %2942 = vmatprep.mubr.bf16.mxu0 0
        %2943 = vmatmul.mubr.bf16.gmra.mxu0 %v1371
        %v2944 = vpop.f32.mrf.mxu0
        %v2945 = vadd.f32 %v2624, %v2944
        %v2946 = vpop.f32.mrf.mxu0
        %v2947 = vpop.f32.mrf.mxu0
        %v2948 = vpop.f32.mrf.mxu0
        %2949 = vmatprep.mubr.bf16.mxu0 0
        %2950 = vmatmul.mubr.bf16.gmra.mxu0 %v1372
        %v2951 = vpop.f32.mrf.mxu0
        %v2952 = vadd.f32 %v2631, %v2951
        %v2953 = vpop.f32.mrf.mxu0
        %v2954 = vpop.f32.mrf.mxu0
        %v2955 = vadd.f32 %v2634, %v2954
        %v2956 = vpop.f32.mrf.mxu0
        %2957 = vmatprep.mubr.bf16.mxu0 0
        %2958 = vmatmul.mubr.bf16.gmra.mxu0 %v1373
        %v2959 = vpop.f32.mrf.mxu0
        %v2960 = vadd.f32 %v2639, %v2959
        %v2961 = vpop.f32.mrf.mxu0
        %v2962 = vpop.f32.mrf.mxu0
        %v2963 = vpop.f32.mrf.mxu0
        %2964 = vmatprep.mubr.bf16.mxu0 0
        %2965 = vmatmul.mubr.bf16.gmra.mxu0 %v1374
        %v2966 = vpop.f32.mrf.mxu0
        %v2967 = vadd.f32 %v2646, %v2966
        %v2968 = vpop.f32.mrf.mxu0
        %v2969 = vpop.f32.mrf.mxu0
        %v2970 = vadd.f32 %v2649, %v2969
        %v2971 = vpop.f32.mrf.mxu0
        %2972 = vmatprep.mubr.bf16.mxu0 0
        %2973 = vmatmul.mubr.bf16.gmra.mxu0 %v1375
        %v2974 = vpop.f32.mrf.mxu0
        %v2975 = vadd.f32 %v2654, %v2974
        %v2976 = vpop.f32.mrf.mxu0
        %v2977 = vpop.f32.mrf.mxu0
        %v2978 = vpop.f32.mrf.mxu0
        %2979 = vmatprep.mubr.bf16.mxu0 0
        %2980 = vmatmul.mubr.bf16.gmra.mxu0 %v1376
        %v2981 = vpop.f32.mrf.mxu0
        %v2982 = vadd.f32 %v2661, %v2981
        %v2983 = vpop.f32.mrf.mxu0
        %v2984 = vpop.f32.mrf.mxu0
        %v2985 = vadd.f32 %v2664, %v2984
        %v2986 = vpop.f32.mrf.mxu0
        %2987 = vmatprep.mubr.bf16.mxu0 0
        %2988 = vmatmul.mubr.bf16.gmra.mxu0 %v1377
        %v2989 = vpop.f32.mrf.mxu0
        %v2990 = vadd.f32 %v2669, %v2989
        %v2991 = vpop.f32.mrf.mxu0
        %v2992 = vpop.f32.mrf.mxu0
        %v2993 = vpop.f32.mrf.mxu0
        %2994 = vmatprep.mubr.bf16.mxu0 0
        %2995 = vmatmul.mubr.bf16.gmra.mxu0 %v1378
        %v2996 = vpop.f32.mrf.mxu0
        %v2997 = vadd.f32 %v2676, %v2996
        %v2998 = vpop.f32.mrf.mxu0
        %v2999 = vpop.f32.mrf.mxu0
        %v3000 = vadd.f32 %v2679, %v2999
        %v3001 = vpop.f32.mrf.mxu0
        %3002 = vmatprep.mubr.bf16.mxu0 0
        %3003 = vmatmul.mubr.bf16.gmra.mxu0 %v1379
        %v3004 = vpop.f32.mrf.mxu0
        %v3005 = vadd.f32 %v2684, %v3004
        %v3006 = vpop.f32.mrf.mxu0
        %v3007 = vpop.f32.mrf.mxu0
        %v3008 = vpop.f32.mrf.mxu0
        %3009 = vmatprep.mubr.bf16.mxu0 0
        %3010 = vmatmul.mubr.bf16.gmra.mxu0 %v1380
        %v3011 = vpop.f32.mrf.mxu0
        %v3012 = vadd.f32 %v2691, %v3011
        %v3013 = vpop.f32.mrf.mxu0
        %v3014 = vpop.f32.mrf.mxu0
        %v3015 = vadd.f32 %v2694, %v3014
        %v3016 = vpop.f32.mrf.mxu0
        %3017 = vmatprep.mubr.bf16.mxu0 0
        %3018 = vmatmul.mubr.bf16.gmra.mxu0 %v1381
        %v3019 = vpop.f32.mrf.mxu0
        %v3020 = vadd.f32 %v2699, %v3019
        %v3021 = vpop.f32.mrf.mxu0
        %v3022 = vpop.f32.mrf.mxu0
        %v3023 = vpop.f32.mrf.mxu0
        %3024 = vmatprep.mubr.bf16.mxu0 0
        %3025 = vmatmul.mubr.bf16.gmra.mxu0 %v1382
        %v3026 = vpop.f32.mrf.mxu0
        %v3027 = vadd.f32 %v2706, %v3026
        %v3028 = vpop.f32.mrf.mxu0
        %v3029 = vpop.f32.mrf.mxu0
        %v3030 = vadd.f32 %v2709, %v3029
        %v3031 = vpop.f32.mrf.mxu0
        %3032 = vmatprep.mubr.bf16.mxu0 0
        %3033 = vmatmul.mubr.bf16.gmra.mxu0 %v1383
        %v3034 = vpop.f32.mrf.mxu0
        %v3035 = vadd.f32 %v2714, %v3034
        %v3036 = vpop.f32.mrf.mxu0
        %v3037 = vpop.f32.mrf.mxu0
        %v3038 = vpop.f32.mrf.mxu0
        %3039 = vmatprep.mubr.bf16.mxu0 0
        %3040 = vmatmul.mubr.bf16.gmra.mxu0 %v1384
        %v3041 = vpop.f32.mrf.mxu0
        %v3042 = vadd.f32 %v2721, %v3041
        %v3043 = vpop.f32.mrf.mxu0
        %v3044 = vpop.f32.mrf.mxu0
        %v3045 = vadd.f32 %v2724, %v3044
        %v3046 = vpop.f32.mrf.mxu0
        %3047 = vmatprep.mubr.bf16.mxu0 0
        %3048 = vmatmul.mubr.bf16.gmra.mxu0 %v1385
        %v3049 = vpop.f32.mrf.mxu0
        %v3050 = vadd.f32 %v2729, %v3049
        %v3051 = vpop.f32.mrf.mxu0
        %v3052 = vpop.f32.mrf.mxu0
        %v3053 = vpop.f32.mrf.mxu0
        %3054 = vmatprep.mubr.bf16.mxu0 0
        %3055 = vmatmul.mubr.bf16.gmra.mxu0 %v1386
        %v3056 = vpop.f32.mrf.mxu0
        %v3057 = vadd.f32 %v2736, %v3056
        %v3058 = vpop.f32.mrf.mxu0
        %v3059 = vpop.f32.mrf.mxu0
        %v3060 = vadd.f32 %v2739, %v3059
        %v3061 = vpop.f32.mrf.mxu0
        %3062 = vmatprep.mubr.bf16.mxu0 0
        %3063 = vmatmul.mubr.bf16.gmra.mxu0 %v1387
        %v3064 = vpop.f32.mrf.mxu0
        %v3065 = vadd.f32 %v2744, %v3064
        %v3066 = vpop.f32.mrf.mxu0
        %v3067 = vpop.f32.mrf.mxu0
        %v3068 = vpop.f32.mrf.mxu0
        %3069 = vmatprep.mubr.bf16.mxu0 0
        %3070 = vmatmul.mubr.bf16.gmra.mxu0 %v1388
        %v3071 = vpop.f32.mrf.mxu0
        %v3072 = vadd.f32 %v2751, %v3071
        %v3073 = vpop.f32.mrf.mxu0
        %v3074 = vpop.f32.mrf.mxu0
        %v3075 = vadd.f32 %v2754, %v3074
        %v3076 = vpop.f32.mrf.mxu0
        %3077 = vmatprep.mubr.bf16.mxu0 0
        %3078 = vmatmul.mubr.bf16.gmra.mxu0 %v1389
        %v3079 = vpop.f32.mrf.mxu0
        %v3080 = vadd.f32 %v2759, %v3079
        %v3081 = vpop.f32.mrf.mxu0
        %v3082 = vpop.f32.mrf.mxu0
        %v3083 = vpop.f32.mrf.mxu0
        %3084 = vdwg.mxu0
        %v3085 = vld [vmem:[#allocation6 + $0x1c0] sm:$0xf]
        %v3086 = vld [vmem:[#allocation6 + $0x1c4] sm:$0xf]
        %v3087 = vld [vmem:[#allocation6 + $0x1c8] sm:$0xf]
        %v3088 = vld [vmem:[#allocation6 + $0x1cc] sm:$0xf]
        %v3089 = vld [vmem:[#allocation6 + $0x1d0] sm:$0xf]
        %v3090 = vld [vmem:[#allocation6 + $0x1d4] sm:$0xf]
        %v3091 = vld [vmem:[#allocation6 + $0x1d8] sm:$0xf]
        %v3092 = vld [vmem:[#allocation6 + $0x1dc] sm:$0xf]
        %v3093 = vld [vmem:[#allocation6 + $0x1e0] sm:$0xf]
        %v3094 = vld [vmem:[#allocation6 + $0x1e4] sm:$0xf]
        %v3095 = vld [vmem:[#allocation6 + $0x1e8] sm:$0xf]
        %v3096 = vld [vmem:[#allocation6 + $0x1ec] sm:$0xf]
        %v3097 = vld [vmem:[#allocation6 + $0x1f0] sm:$0xf]
        %v3098 = vld [vmem:[#allocation6 + $0x1f4] sm:$0xf]
        %v3099 = vld [vmem:[#allocation6 + $0x1f8] sm:$0xf]
        %v3100 = vld [vmem:[#allocation6 + $0x1fc] sm:$0xf]
        %v3117 = vunpack.c.l.b16 %v3085
        %v3118 = vunpack.c.l.b16 %v3086
        %v3119 = vunpack.c.l.b16 %v3087
        %v3120 = vunpack.c.l.b16 %v3088
        %v3121 = vunpack.c.l.b16 %v3089
        %v3122 = vunpack.c.l.b16 %v3090
        %v3123 = vunpack.c.l.b16 %v3091
        %v3124 = vunpack.c.l.b16 %v3092
        %v3125 = vunpack.c.l.b16 %v3093
        %v3126 = vunpack.c.l.b16 %v3094
        %v3127 = vunpack.c.l.b16 %v3095
        %v3128 = vunpack.c.l.b16 %v3096
        %v3129 = vunpack.c.l.b16 %v3097
        %v3130 = vunpack.c.l.b16 %v3098
        %v3131 = vunpack.c.l.b16 %v3099
        %v3132 = vunpack.c.l.b16 %v3100
        %v3133 = vpack.c.b16 %v3118, %v3117
        %v3134 = vpack.c.b16 %v3120, %v3119
        %v3135 = vpack.c.b16 %v3122, %v3121
        %v3136 = vpack.c.b16 %v3124, %v3123
        %v3137 = vpack.c.b16 %v3126, %v3125
        %v3138 = vpack.c.b16 %v3128, %v3127
        %v3139 = vpack.c.b16 %v3130, %v3129
        %v3140 = vpack.c.b16 %v3132, %v3131
        %3149 = vmatprep.subr.bf16.mxu0 0
        %3150 = vmatpush1.bf16.msra.mxu0 %v3140
        %3151 = vmatprep.subr.bf16.mxu0 0
        %3152 = vmatpush1.bf16.msra.mxu0 %v3139
        %3153 = vmatprep.subr.bf16.mxu0 0
        %3154 = vmatpush1.bf16.msra.mxu0 %v3138
        %3155 = vmatprep.subr.bf16.mxu0 0
        %3156 = vmatpush1.bf16.msra.mxu0 %v3137
        %3157 = vmatprep.subr.bf16.mxu0 0
        %3158 = vmatpush1.bf16.msra.mxu0 %v3136
        %3159 = vmatprep.subr.bf16.mxu0 0
        %3160 = vmatpush1.bf16.msra.mxu0 %v3135
        %3161 = vmatprep.subr.bf16.mxu0 0
        %3162 = vmatpush1.bf16.msra.mxu0 %v3134
        %3163 = vmatprep.subr.bf16.mxu0 0
        %3164 = vmatpush1.bf16.msra.mxu0 %v3133
        %3165 = vmatprep.subr.bf16.mxu0 0
        %3166 = vmatpush2.bf16.msra.mxu0 0
        %3167 = vmatprep.subr.bf16.mxu0 0
        %3168 = vmatpush2.bf16.msra.mxu0 0
        %3169 = vmatprep.subr.bf16.mxu0 0
        %3170 = vmatpush2.bf16.msra.mxu0 0
        %3171 = vmatprep.subr.bf16.mxu0 0
        %3172 = vmatpush2.bf16.msra.mxu0 0
        %3173 = vmatprep.subr.bf16.mxu0 0
        %3174 = vmatpush2.bf16.msra.mxu0 0
        %3175 = vmatprep.subr.bf16.mxu0 0
        %3176 = vmatpush2.bf16.msra.mxu0 0
        %3177 = vmatprep.subr.bf16.mxu0 0
        %3178 = vmatpush2.bf16.msra.mxu0 0
        %3179 = vmatprep.subr.bf16.mxu0 0
        %3180 = vmatpush2.bf16.msra.mxu0 0
        %3181 = vmatprep.mubr.bf16.mxu0 0
        %3182 = vmatmul.mubr.bf16.gmra.mxu0 %v1362
        %v3183 = vpop.f32.mrf.mxu0
        %v3184 = vadd.f32 0.0, %v3183
        %v3185 = vpop.f32.mrf.mxu0
        %v3186 = vpop.f32.mrf.mxu0
        %v3187 = vadd.f32 0.0, %v3186
        %v3188 = vpop.f32.mrf.mxu0
        %3189 = vmatprep.mubr.bf16.mxu0 0
        %3190 = vmatmul.mubr.bf16.gmra.mxu0 %v1363
        %v3191 = vpop.f32.mrf.mxu0
        %v3192 = vadd.f32 0.0, %v3191
        %v3193 = vpop.f32.mrf.mxu0
        %v3194 = vpop.f32.mrf.mxu0
        %v3195 = vpop.f32.mrf.mxu0
        %3196 = vmatprep.mubr.bf16.mxu0 0
        %3197 = vmatmul.mubr.bf16.gmra.mxu0 %v1364
        %v3198 = vpop.f32.mrf.mxu0
        %v3199 = vadd.f32 0.0, %v3198
        %v3200 = vpop.f32.mrf.mxu0
        %v3201 = vpop.f32.mrf.mxu0
        %v3202 = vadd.f32 0.0, %v3201
        %v3203 = vpop.f32.mrf.mxu0
        %3204 = vmatprep.mubr.bf16.mxu0 0
        %3205 = vmatmul.mubr.bf16.gmra.mxu0 %v1365
        %v3206 = vpop.f32.mrf.mxu0
        %v3207 = vadd.f32 0.0, %v3206
        %v3208 = vpop.f32.mrf.mxu0
        %v3209 = vpop.f32.mrf.mxu0
        %v3210 = vpop.f32.mrf.mxu0
        %3211 = vmatprep.mubr.bf16.mxu0 0
        %3212 = vmatmul.mubr.bf16.gmra.mxu0 %v1366
        %v3213 = vpop.f32.mrf.mxu0
        %v3214 = vadd.f32 0.0, %v3213
        %v3215 = vpop.f32.mrf.mxu0
        %v3216 = vpop.f32.mrf.mxu0
        %v3217 = vadd.f32 0.0, %v3216
        %v3218 = vpop.f32.mrf.mxu0
        %3219 = vmatprep.mubr.bf16.mxu0 0
        %3220 = vmatmul.mubr.bf16.gmra.mxu0 %v1367
        %v3221 = vpop.f32.mrf.mxu0
        %v3222 = vadd.f32 0.0, %v3221
        %v3223 = vpop.f32.mrf.mxu0
        %v3224 = vpop.f32.mrf.mxu0
        %v3225 = vpop.f32.mrf.mxu0
        %3226 = vmatprep.mubr.bf16.mxu0 0
        %3227 = vmatmul.mubr.bf16.gmra.mxu0 %v1368
        %v3228 = vpop.f32.mrf.mxu0
        %v3229 = vadd.f32 0.0, %v3228
        %v3230 = vpop.f32.mrf.mxu0
        %v3231 = vpop.f32.mrf.mxu0
        %v3232 = vadd.f32 0.0, %v3231
        %v3233 = vpop.f32.mrf.mxu0
        %3234 = vmatprep.mubr.bf16.mxu0 0
        %3235 = vmatmul.mubr.bf16.gmra.mxu0 %v1369
        %v3236 = vpop.f32.mrf.mxu0
        %v3237 = vadd.f32 0.0, %v3236
        %v3238 = vpop.f32.mrf.mxu0
        %v3239 = vpop.f32.mrf.mxu0
        %v3240 = vpop.f32.mrf.mxu0
        %3241 = vmatprep.mubr.bf16.mxu0 0
        %3242 = vmatmul.mubr.bf16.gmra.mxu0 %v1370
        %v3243 = vpop.f32.mrf.mxu0
        %v3244 = vadd.f32 0.0, %v3243
        %v3245 = vpop.f32.mrf.mxu0
        %v3246 = vpop.f32.mrf.mxu0
        %v3247 = vadd.f32 0.0, %v3246
        %v3248 = vpop.f32.mrf.mxu0
        %3249 = vmatprep.mubr.bf16.mxu0 0
        %3250 = vmatmul.mubr.bf16.gmra.mxu0 %v1371
        %v3251 = vpop.f32.mrf.mxu0
        %v3252 = vadd.f32 0.0, %v3251
        %v3253 = vpop.f32.mrf.mxu0
        %v3254 = vpop.f32.mrf.mxu0
        %v3255 = vpop.f32.mrf.mxu0
        %3256 = vmatprep.mubr.bf16.mxu0 0
        %3257 = vmatmul.mubr.bf16.gmra.mxu0 %v1372
        %v3258 = vpop.f32.mrf.mxu0
        %v3259 = vadd.f32 0.0, %v3258
        %v3260 = vpop.f32.mrf.mxu0
        %v3261 = vpop.f32.mrf.mxu0
        %v3262 = vadd.f32 0.0, %v3261
        %v3263 = vpop.f32.mrf.mxu0
        %3264 = vmatprep.mubr.bf16.mxu0 0
        %3265 = vmatmul.mubr.bf16.gmra.mxu0 %v1373
        %v3266 = vpop.f32.mrf.mxu0
        %v3267 = vadd.f32 0.0, %v3266
        %v3268 = vpop.f32.mrf.mxu0
        %v3269 = vpop.f32.mrf.mxu0
        %v3270 = vpop.f32.mrf.mxu0
        %3271 = vmatprep.mubr.bf16.mxu0 0
        %3272 = vmatmul.mubr.bf16.gmra.mxu0 %v1374
        %v3273 = vpop.f32.mrf.mxu0
        %v3274 = vadd.f32 0.0, %v3273
        %v3275 = vpop.f32.mrf.mxu0
        %v3276 = vpop.f32.mrf.mxu0
        %v3277 = vadd.f32 0.0, %v3276
        %v3278 = vpop.f32.mrf.mxu0
        %3279 = vmatprep.mubr.bf16.mxu0 0
        %3280 = vmatmul.mubr.bf16.gmra.mxu0 %v1375
        %v3281 = vpop.f32.mrf.mxu0
        %v3282 = vadd.f32 0.0, %v3281
        %v3283 = vpop.f32.mrf.mxu0
        %v3284 = vpop.f32.mrf.mxu0
        %v3285 = vpop.f32.mrf.mxu0
        %3286 = vmatprep.mubr.bf16.mxu0 0
        %3287 = vmatmul.mubr.bf16.gmra.mxu0 %v1376
        %v3288 = vpop.f32.mrf.mxu0
        %v3289 = vadd.f32 0.0, %v3288
        %v3290 = vpop.f32.mrf.mxu0
        %v3291 = vpop.f32.mrf.mxu0
        %v3292 = vadd.f32 0.0, %v3291
        %v3293 = vpop.f32.mrf.mxu0
        %3294 = vmatprep.mubr.bf16.mxu0 0
        %3295 = vmatmul.mubr.bf16.gmra.mxu0 %v1377
        %v3296 = vpop.f32.mrf.mxu0
        %v3297 = vadd.f32 0.0, %v3296
        %v3298 = vpop.f32.mrf.mxu0
        %v3299 = vpop.f32.mrf.mxu0
        %v3300 = vpop.f32.mrf.mxu0
        %3301 = vmatprep.mubr.bf16.mxu0 0
        %3302 = vmatmul.mubr.bf16.gmra.mxu0 %v1378
        %v3303 = vpop.f32.mrf.mxu0
        %v3304 = vadd.f32 0.0, %v3303
        %v3305 = vpop.f32.mrf.mxu0
        %v3306 = vpop.f32.mrf.mxu0
        %v3307 = vadd.f32 0.0, %v3306
        %v3308 = vpop.f32.mrf.mxu0
        %3309 = vmatprep.mubr.bf16.mxu0 0
        %3310 = vmatmul.mubr.bf16.gmra.mxu0 %v1379
        %v3311 = vpop.f32.mrf.mxu0
        %v3312 = vadd.f32 0.0, %v3311
        %v3313 = vpop.f32.mrf.mxu0
        %v3314 = vpop.f32.mrf.mxu0
        %v3315 = vpop.f32.mrf.mxu0
        %3316 = vmatprep.mubr.bf16.mxu0 0
        %3317 = vmatmul.mubr.bf16.gmra.mxu0 %v1380
        %v3318 = vpop.f32.mrf.mxu0
        %v3319 = vadd.f32 0.0, %v3318
        %v3320 = vpop.f32.mrf.mxu0
        %v3321 = vpop.f32.mrf.mxu0
        %v3322 = vadd.f32 0.0, %v3321
        %v3323 = vpop.f32.mrf.mxu0
        %3324 = vmatprep.mubr.bf16.mxu0 0
        %3325 = vmatmul.mubr.bf16.gmra.mxu0 %v1381
        %v3326 = vpop.f32.mrf.mxu0
        %v3327 = vadd.f32 0.0, %v3326
        %v3328 = vpop.f32.mrf.mxu0
        %v3329 = vpop.f32.mrf.mxu0
        %v3330 = vpop.f32.mrf.mxu0
        %3331 = vmatprep.mubr.bf16.mxu0 0
        %3332 = vmatmul.mubr.bf16.gmra.mxu0 %v1382
        %v3333 = vpop.f32.mrf.mxu0
        %v3334 = vadd.f32 0.0, %v3333
        %v3335 = vpop.f32.mrf.mxu0
        %v3336 = vpop.f32.mrf.mxu0
        %v3337 = vadd.f32 0.0, %v3336
        %v3338 = vpop.f32.mrf.mxu0
        %3339 = vmatprep.mubr.bf16.mxu0 0
        %3340 = vmatmul.mubr.bf16.gmra.mxu0 %v1383
        %v3341 = vpop.f32.mrf.mxu0
        %v3342 = vadd.f32 0.0, %v3341
        %v3343 = vpop.f32.mrf.mxu0
        %v3344 = vpop.f32.mrf.mxu0
        %v3345 = vpop.f32.mrf.mxu0
        %3346 = vmatprep.mubr.bf16.mxu0 0
        %3347 = vmatmul.mubr.bf16.gmra.mxu0 %v1384
        %v3348 = vpop.f32.mrf.mxu0
        %v3349 = vadd.f32 0.0, %v3348
        %v3350 = vpop.f32.mrf.mxu0
        %v3351 = vpop.f32.mrf.mxu0
        %v3352 = vadd.f32 0.0, %v3351
        %v3353 = vpop.f32.mrf.mxu0
        %3354 = vmatprep.mubr.bf16.mxu0 0
        %3355 = vmatmul.mubr.bf16.gmra.mxu0 %v1385
        %v3356 = vpop.f32.mrf.mxu0
        %v3357 = vadd.f32 0.0, %v3356
        %v3358 = vpop.f32.mrf.mxu0
        %v3359 = vpop.f32.mrf.mxu0
        %v3360 = vpop.f32.mrf.mxu0
        %3361 = vmatprep.mubr.bf16.mxu0 0
        %3362 = vmatmul.mubr.bf16.gmra.mxu0 %v1386
        %v3363 = vpop.f32.mrf.mxu0
        %v3364 = vadd.f32 0.0, %v3363
        %v3365 = vpop.f32.mrf.mxu0
        %v3366 = vpop.f32.mrf.mxu0
        %v3367 = vadd.f32 0.0, %v3366
        %v3368 = vpop.f32.mrf.mxu0
        %3369 = vmatprep.mubr.bf16.mxu0 0
        %3370 = vmatmul.mubr.bf16.gmra.mxu0 %v1387
        %v3371 = vpop.f32.mrf.mxu0
        %v3372 = vadd.f32 0.0, %v3371
        %v3373 = vpop.f32.mrf.mxu0
        %v3374 = vpop.f32.mrf.mxu0
        %v3375 = vpop.f32.mrf.mxu0
        %3376 = vmatprep.mubr.bf16.mxu0 0
        %3377 = vmatmul.mubr.bf16.gmra.mxu0 %v1388
        %v3378 = vpop.f32.mrf.mxu0
        %v3379 = vadd.f32 0.0, %v3378
        %v3380 = vpop.f32.mrf.mxu0
        %v3381 = vpop.f32.mrf.mxu0
        %v3382 = vadd.f32 0.0, %v3381
        %v3383 = vpop.f32.mrf.mxu0
        %3384 = vmatprep.mubr.bf16.mxu0 0
        %3385 = vmatmul.mubr.bf16.gmra.mxu0 %v1389
        %v3386 = vpop.f32.mrf.mxu0
        %v3387 = vadd.f32 0.0, %v3386
        %v3388 = vpop.f32.mrf.mxu0
        %v3389 = vpop.f32.mrf.mxu0
        %v3390 = vpop.f32.mrf.mxu0
        %3391 = vmatprep.mubr.bf16.mxu0 0
        %3392 = vmatmul.mubr.bf16.gmra.mxu0 %v1390
        %v3393 = vpop.f32.mrf.mxu0
        %v3394 = vadd.f32 0.0, %v3393
        %v3395 = vpop.f32.mrf.mxu0
        %v3396 = vpop.f32.mrf.mxu0
        %v3397 = vadd.f32 0.0, %v3396
        %v3398 = vpop.f32.mrf.mxu0
        %3399 = vmatprep.mubr.bf16.mxu0 0
        %3400 = vmatmul.mubr.bf16.gmra.mxu0 %v1391
        %v3401 = vpop.f32.mrf.mxu0
        %v3402 = vadd.f32 0.0, %v3401
        %v3403 = vpop.f32.mrf.mxu0
        %v3404 = vpop.f32.mrf.mxu0
        %v3405 = vpop.f32.mrf.mxu0
        %3406 = vmatprep.mubr.bf16.mxu0 0
        %3407 = vmatmul.mubr.bf16.gmra.mxu0 %v2070
        %v3408 = vpop.f32.mrf.mxu0
        %v3409 = vadd.f32 0.0, %v3408
        %v3410 = vpop.f32.mrf.mxu0
        %v3411 = vpop.f32.mrf.mxu0
        %v3412 = vadd.f32 0.0, %v3411
        %v3413 = vpop.f32.mrf.mxu0
        %3414 = vmatprep.mubr.bf16.mxu0 0
        %3415 = vmatmul.mubr.bf16.gmra.mxu0 %v2071
        %v3416 = vpop.f32.mrf.mxu0
        %v3417 = vadd.f32 0.0, %v3416
        %v3418 = vpop.f32.mrf.mxu0
        %v3419 = vpop.f32.mrf.mxu0
        %v3420 = vpop.f32.mrf.mxu0
        %3421 = vdwg.mxu0
        %v3422 = vadd.f32 %v2847, %v3184
        %v3423 = vadd.f32 %v2850, %v3187
        %v3424 = vadd.f32 %v2855, %v3192
        %v3425 = vadd.f32 %v2862, %v3199
        %v3426 = vadd.f32 %v2865, %v3202
        %v3427 = vadd.f32 %v2870, %v3207
        %v3428 = vadd.f32 %v2877, %v3214
        %v3429 = vadd.f32 %v2880, %v3217
        %v3430 = vadd.f32 %v2885, %v3222
        %v3431 = vadd.f32 %v2892, %v3229
        %v3432 = vadd.f32 %v2895, %v3232
        %v3433 = vadd.f32 %v2900, %v3237
        %v3434 = vadd.f32 %v2907, %v3244
        %v3435 = vadd.f32 %v2910, %v3247
        %v3436 = vadd.f32 %v2915, %v3252
        %v3437 = vadd.f32 %v2922, %v3259
        %v3438 = vadd.f32 %v2925, %v3262
        %v3439 = vadd.f32 %v2930, %v3267
        %v3440 = vadd.f32 %v2937, %v3274
        %v3441 = vadd.f32 %v2940, %v3277
        %v3442 = vadd.f32 %v2945, %v3282
        %v3443 = vadd.f32 %v2952, %v3289
        %v3444 = vadd.f32 %v2955, %v3292
        %v3445 = vadd.f32 %v2960, %v3297
        %v3446 = vadd.f32 %v2967, %v3304
        %v3447 = vadd.f32 %v2970, %v3307
        %v3448 = vadd.f32 %v2975, %v3312
        %v3449 = vadd.f32 %v2982, %v3319
        %v3450 = vadd.f32 %v2985, %v3322
        %v3451 = vadd.f32 %v2990, %v3327
        %v3452 = vadd.f32 %v2997, %v3334
        %v3453 = vadd.f32 %v3000, %v3337
        %v3454 = vadd.f32 %v3005, %v3342
        %v3455 = vadd.f32 %v3012, %v3349
        %v3456 = vadd.f32 %v3015, %v3352
        %v3457 = vadd.f32 %v3020, %v3357
        %v3458 = vadd.f32 %v3027, %v3364
        %v3459 = vadd.f32 %v3030, %v3367
        %v3460 = vadd.f32 %v3035, %v3372
        %v3461 = vadd.f32 %v3042, %v3379
        %v3462 = vadd.f32 %v3045, %v3382
        %v3463 = vadd.f32 %v3050, %v3387
        %v3464 = vadd.f32 %v3057, %v3394
        %v3465 = vadd.f32 %v3060, %v3397
        %v3466 = vadd.f32 %v3065, %v3402
        %v3467 = vadd.f32 %v3072, %v3409
        %v3468 = vadd.f32 %v3075, %v3412
        %v3469 = vadd.f32 %v3080, %v3417
        %vm3518 = vcmask 1046528
        %v3519 = vrot.slane %v3422, 1
        %v3520 = vrot.slane %v3423, 1
        %v3521 = vsel %vm3518, %v3519, %v3520
        %v3522 = vrot.slane %v3424, 1
        %v3523 = vsel %vm3518, %v3520, %v3522
        %v3524 = vrot.slane %v3425, 1
        %v3525 = vrot.slane %v3426, 1
        %v3526 = vsel %vm3518, %v3524, %v3525
        %v3527 = vrot.slane %v3427, 1
        %v3528 = vsel %vm3518, %v3525, %v3527
        %v3529 = vrot.slane %v3428, 1
        %v3530 = vrot.slane %v3429, 1
        %v3531 = vsel %vm3518, %v3529, %v3530
        %v3532 = vrot.slane %v3430, 1
        %v3533 = vsel %vm3518, %v3530, %v3532
        %v3534 = vrot.slane %v3431, 1
        %v3535 = vrot.slane %v3432, 1
        %v3536 = vsel %vm3518, %v3534, %v3535
        %v3537 = vrot.slane %v3433, 1
        %v3538 = vsel %vm3518, %v3535, %v3537
        %v3539 = vrot.slane %v3434, 1
        %v3540 = vrot.slane %v3435, 1
        %v3541 = vsel %vm3518, %v3539, %v3540
        %v3542 = vrot.slane %v3436, 1
        %v3543 = vsel %vm3518, %v3540, %v3542
        %v3544 = vrot.slane %v3437, 1
        %v3545 = vrot.slane %v3438, 1
        %v3546 = vsel %vm3518, %v3544, %v3545
        %v3547 = vrot.slane %v3439, 1
        %v3548 = vsel %vm3518, %v3545, %v3547
        %v3549 = vrot.slane %v3440, 1
        %v3550 = vrot.slane %v3441, 1
        %v3551 = vsel %vm3518, %v3549, %v3550
        %v3552 = vrot.slane %v3442, 1
        %v3553 = vsel %vm3518, %v3550, %v3552
        %v3554 = vrot.slane %v3443, 1
        %v3555 = vrot.slane %v3444, 1
        %v3556 = vsel %vm3518, %v3554, %v3555
        %v3557 = vrot.slane %v3445, 1
        %v3558 = vsel %vm3518, %v3555, %v3557
        %v3559 = vrot.slane %v3446, 1
        %v3560 = vrot.slane %v3447, 1
        %v3561 = vsel %vm3518, %v3559, %v3560
        %v3562 = vrot.slane %v3448, 1
        %v3563 = vsel %vm3518, %v3560, %v3562
        %v3564 = vrot.slane %v3449, 1
        %v3565 = vrot.slane %v3450, 1
        %v3566 = vsel %vm3518, %v3564, %v3565
        %v3567 = vrot.slane %v3451, 1
        %v3568 = vsel %vm3518, %v3565, %v3567
        %v3569 = vrot.slane %v3452, 1
        %v3570 = vrot.slane %v3453, 1
        %v3571 = vsel %vm3518, %v3569, %v3570
        %v3572 = vrot.slane %v3454, 1
        %v3573 = vsel %vm3518, %v3570, %v3572
        %v3574 = vrot.slane %v3455, 1
        %v3575 = vrot.slane %v3456, 1
        %v3576 = vsel %vm3518, %v3574, %v3575
        %v3577 = vrot.slane %v3457, 1
        %v3578 = vsel %vm3518, %v3575, %v3577
        %v3579 = vrot.slane %v3458, 1
        %v3580 = vrot.slane %v3459, 1
        %v3581 = vsel %vm3518, %v3579, %v3580
        %v3582 = vrot.slane %v3460, 1
        %v3583 = vsel %vm3518, %v3580, %v3582
        %v3584 = vrot.slane %v3461, 1
        %v3585 = vrot.slane %v3462, 1
        %v3586 = vsel %vm3518, %v3584, %v3585
        %v3587 = vrot.slane %v3463, 1
        %v3588 = vsel %vm3518, %v3585, %v3587
        %v3589 = vrot.slane %v3464, 1
        %v3590 = vrot.slane %v3465, 1
        %v3591 = vsel %vm3518, %v3589, %v3590
        %v3592 = vrot.slane %v3466, 1
        %v3593 = vsel %vm3518, %v3590, %v3592
        %v3594 = vrot.slane %v3467, 1
        %v3595 = vrot.slane %v3468, 1
        %v3596 = vsel %vm3518, %v3594, %v3595
        %v3597 = vrot.slane %v3469, 1
        %v3598 = vsel %vm3518, %v3595, %v3597
        %v3631 = vadd.f32 %v2379, %v3521
        %v3632 = vadd.f32 %v2380, %v3523
        %v3633 = vadd.f32 %v2381, %v3526
        %v3634 = vadd.f32 %v2382, %v3528
        %v3635 = vadd.f32 %v2383, %v3531
        %v3636 = vadd.f32 %v2384, %v3533
        %v3637 = vadd.f32 %v2385, %v3536
        %v3638 = vadd.f32 %v2386, %v3538
        %v3639 = vadd.f32 %v2387, %v3541
        %v3640 = vadd.f32 %v2388, %v3543
        %v3641 = vadd.f32 %v2389, %v3546
        %v3642 = vadd.f32 %v2390, %v3548
        %v3643 = vadd.f32 %v2391, %v3551
        %v3644 = vadd.f32 %v2392, %v3553
        %v3645 = vadd.f32 %v2393, %v3556
        %v3646 = vadd.f32 %v2394, %v3558
        %v3647 = vadd.f32 %v2395, %v3561
        %v3648 = vadd.f32 %v2396, %v3563
        %v3649 = vadd.f32 %v2397, %v3566
        %v3650 = vadd.f32 %v2398, %v3568
        %v3651 = vadd.f32 %v2399, %v3571
        %v3652 = vadd.f32 %v2400, %v3573
        %v3653 = vadd.f32 %v2401, %v3576
        %v3654 = vadd.f32 %v2402, %v3578
        %v3655 = vadd.f32 %v2403, %v3581
        %v3656 = vadd.f32 %v2404, %v3583
        %v3657 = vadd.f32 %v2405, %v3586
        %v3658 = vadd.f32 %v2406, %v3588
        %v3659 = vadd.f32 %v2407, %v3591
        %v3660 = vadd.f32 %v2408, %v3593
        %v3661 = vadd.f32 %v2409, %v3596
        %v3662 = vadd.f32 %v2410, %v3598
        %v3663 = vld [vmem:[#allocation6 + $0x80] sm:$0xf]
        %v3664 = vld [vmem:[#allocation6 + $0x84] sm:$0xf]
        %v3665 = vld [vmem:[#allocation6 + $0x88] sm:$0xf]
        %v3666 = vld [vmem:[#allocation6 + $0x8c] sm:$0xf]
        %v3667 = vld [vmem:[#allocation6 + $0x90] sm:$0xf]
        %v3668 = vld [vmem:[#allocation6 + $0x94] sm:$0xf]
        %v3669 = vld [vmem:[#allocation6 + $0x98] sm:$0xf]
        %v3670 = vld [vmem:[#allocation6 + $0x9c] sm:$0xf]
        %v3671 = vld [vmem:[#allocation6 + $0xa0] sm:$0xf]
        %v3672 = vld [vmem:[#allocation6 + $0xa4] sm:$0xf]
        %v3673 = vld [vmem:[#allocation6 + $0xa8] sm:$0xf]
        %v3674 = vld [vmem:[#allocation6 + $0xac] sm:$0xf]
        %v3675 = vld [vmem:[#allocation6 + $0xb0] sm:$0xf]
        %v3676 = vld [vmem:[#allocation6 + $0xb4] sm:$0xf]
        %v3677 = vld [vmem:[#allocation6 + $0xb8] sm:$0xf]
        %v3678 = vld [vmem:[#allocation6 + $0xbc] sm:$0xf]
        %v3679 = vld [vmem:[#allocation6 + $0x140] sm:$0xf]
        %v3680 = vld [vmem:[#allocation6 + $0x144] sm:$0xf]
        %v3681 = vld [vmem:[#allocation6 + $0x148] sm:$0xf]
        %v3682 = vld [vmem:[#allocation6 + $0x14c] sm:$0xf]
        %v3683 = vld [vmem:[#allocation6 + $0x150] sm:$0xf]
        %v3684 = vld [vmem:[#allocation6 + $0x154] sm:$0xf]
        %v3685 = vld [vmem:[#allocation6 + $0x158] sm:$0xf]
        %v3686 = vld [vmem:[#allocation6 + $0x15c] sm:$0xf]
        %v3687 = vld [vmem:[#allocation6 + $0x160] sm:$0xf]
        %v3688 = vld [vmem:[#allocation6 + $0x164] sm:$0xf]
        %v3689 = vld [vmem:[#allocation6 + $0x168] sm:$0xf]
        %v3690 = vld [vmem:[#allocation6 + $0x16c] sm:$0xf]
        %v3691 = vld [vmem:[#allocation6 + $0x170] sm:$0xf]
        %v3692 = vld [vmem:[#allocation6 + $0x174] sm:$0xf]
        %v3693 = vld [vmem:[#allocation6 + $0x178] sm:$0xf]
        %v3694 = vld [vmem:[#allocation6 + $0x17c] sm:$0xf]
        %v3711 = vunpack.c.l.b16 %v3679
        %v3712 = vunpack.c.l.b16 %v3680
        %v3713 = vunpack.c.l.b16 %v3681
        %v3714 = vunpack.c.l.b16 %v3682
        %v3715 = vunpack.c.l.b16 %v3683
        %v3716 = vunpack.c.l.b16 %v3684
        %v3717 = vunpack.c.l.b16 %v3685
        %v3718 = vunpack.c.l.b16 %v3686
        %v3719 = vunpack.c.l.b16 %v3687
        %v3720 = vunpack.c.l.b16 %v3688
        %v3721 = vunpack.c.l.b16 %v3689
        %v3722 = vunpack.c.l.b16 %v3690
        %v3723 = vunpack.c.l.b16 %v3691
        %v3724 = vunpack.c.l.b16 %v3692
        %v3725 = vunpack.c.l.b16 %v3693
        %v3726 = vunpack.c.l.b16 %v3694
        %v3727 = vpack.c.b16 %v3712, %v3711
        %v3728 = vpack.c.b16 %v3714, %v3713
        %v3729 = vpack.c.b16 %v3716, %v3715
        %v3730 = vpack.c.b16 %v3718, %v3717
        %v3731 = vpack.c.b16 %v3720, %v3719
        %v3732 = vpack.c.b16 %v3722, %v3721
        %v3733 = vpack.c.b16 %v3724, %v3723
        %v3734 = vpack.c.b16 %v3726, %v3725
        %3743 = vmatprep.subr.bf16.mxu0 0
        %3744 = vmatpush1.bf16.msra.mxu0 %v3734
        %3745 = vmatprep.subr.bf16.mxu0 0
        %3746 = vmatpush1.bf16.msra.mxu0 %v3733
        %3747 = vmatprep.subr.bf16.mxu0 0
        %3748 = vmatpush1.bf16.msra.mxu0 %v3732
        %3749 = vmatprep.subr.bf16.mxu0 0
        %3750 = vmatpush1.bf16.msra.mxu0 %v3731
        %3751 = vmatprep.subr.bf16.mxu0 0
        %3752 = vmatpush1.bf16.msra.mxu0 %v3730
        %3753 = vmatprep.subr.bf16.mxu0 0
        %3754 = vmatpush1.bf16.msra.mxu0 %v3729
        %3755 = vmatprep.subr.bf16.mxu0 0
        %3756 = vmatpush1.bf16.msra.mxu0 %v3728
        %3757 = vmatprep.subr.bf16.mxu0 0
        %3758 = vmatpush1.bf16.msra.mxu0 %v3727
        %3759 = vmatprep.subr.bf16.mxu0 0
        %3760 = vmatpush2.bf16.msra.mxu0 0
        %3761 = vmatprep.subr.bf16.mxu0 0
        %3762 = vmatpush2.bf16.msra.mxu0 0
        %3763 = vmatprep.subr.bf16.mxu0 0
        %3764 = vmatpush2.bf16.msra.mxu0 0
        %3765 = vmatprep.subr.bf16.mxu0 0
        %3766 = vmatpush2.bf16.msra.mxu0 0
        %3767 = vmatprep.subr.bf16.mxu0 0
        %3768 = vmatpush2.bf16.msra.mxu0 0
        %3769 = vmatprep.subr.bf16.mxu0 0
        %3770 = vmatpush2.bf16.msra.mxu0 0
        %3771 = vmatprep.subr.bf16.mxu0 0
        %3772 = vmatpush2.bf16.msra.mxu0 0
        %3773 = vmatprep.subr.bf16.mxu0 0
        %3774 = vmatpush2.bf16.msra.mxu0 0
        %3775 = vmatprep.mubr.bf16.mxu0 0
        %3776 = vmatmul.mubr.bf16.gmra.mxu0 %v1360
        %v3777 = vpop.f32.mrf.mxu0
        %v3778 = vadd.f32 0.0, %v3777
        %v3779 = vpop.f32.mrf.mxu0
        %v3780 = vpop.f32.mrf.mxu0
        %v3781 = vadd.f32 0.0, %v3780
        %v3782 = vpop.f32.mrf.mxu0
        %3783 = vmatprep.mubr.bf16.mxu0 0
        %3784 = vmatmul.mubr.bf16.gmra.mxu0 %v1361
        %v3785 = vpop.f32.mrf.mxu0
        %v3786 = vadd.f32 0.0, %v3785
        %v3787 = vpop.f32.mrf.mxu0
        %v3788 = vpop.f32.mrf.mxu0
        %v3789 = vpop.f32.mrf.mxu0
        %3790 = vmatprep.mubr.bf16.mxu0 0
        %3791 = vmatmul.mubr.bf16.gmra.mxu0 %v1362
        %v3792 = vpop.f32.mrf.mxu0
        %v3793 = vadd.f32 0.0, %v3792
        %v3794 = vpop.f32.mrf.mxu0
        %v3795 = vpop.f32.mrf.mxu0
        %v3796 = vadd.f32 0.0, %v3795
        %v3797 = vpop.f32.mrf.mxu0
        %3798 = vmatprep.mubr.bf16.mxu0 0
        %3799 = vmatmul.mubr.bf16.gmra.mxu0 %v1363
        %v3800 = vpop.f32.mrf.mxu0
        %v3801 = vadd.f32 0.0, %v3800
        %v3802 = vpop.f32.mrf.mxu0
        %v3803 = vpop.f32.mrf.mxu0
        %v3804 = vpop.f32.mrf.mxu0
        %3805 = vmatprep.mubr.bf16.mxu0 0
        %3806 = vmatmul.mubr.bf16.gmra.mxu0 %v1364
        %v3807 = vpop.f32.mrf.mxu0
        %v3808 = vadd.f32 0.0, %v3807
        %v3809 = vpop.f32.mrf.mxu0
        %v3810 = vpop.f32.mrf.mxu0
        %v3811 = vadd.f32 0.0, %v3810
        %v3812 = vpop.f32.mrf.mxu0
        %3813 = vmatprep.mubr.bf16.mxu0 0
        %3814 = vmatmul.mubr.bf16.gmra.mxu0 %v1365
        %v3815 = vpop.f32.mrf.mxu0
        %v3816 = vadd.f32 0.0, %v3815
        %v3817 = vpop.f32.mrf.mxu0
        %v3818 = vpop.f32.mrf.mxu0
        %v3819 = vpop.f32.mrf.mxu0
        %3820 = vmatprep.mubr.bf16.mxu0 0
        %3821 = vmatmul.mubr.bf16.gmra.mxu0 %v1366
        %v3822 = vpop.f32.mrf.mxu0
        %v3823 = vadd.f32 0.0, %v3822
        %v3824 = vpop.f32.mrf.mxu0
        %v3825 = vpop.f32.mrf.mxu0
        %v3826 = vadd.f32 0.0, %v3825
        %v3827 = vpop.f32.mrf.mxu0
        %3828 = vmatprep.mubr.bf16.mxu0 0
        %3829 = vmatmul.mubr.bf16.gmra.mxu0 %v1367
        %v3830 = vpop.f32.mrf.mxu0
        %v3831 = vadd.f32 0.0, %v3830
        %v3832 = vpop.f32.mrf.mxu0
        %v3833 = vpop.f32.mrf.mxu0
        %v3834 = vpop.f32.mrf.mxu0
        %3835 = vmatprep.mubr.bf16.mxu0 0
        %3836 = vmatmul.mubr.bf16.gmra.mxu0 %v1368
        %v3837 = vpop.f32.mrf.mxu0
        %v3838 = vadd.f32 0.0, %v3837
        %v3839 = vpop.f32.mrf.mxu0
        %v3840 = vpop.f32.mrf.mxu0
        %v3841 = vadd.f32 0.0, %v3840
        %v3842 = vpop.f32.mrf.mxu0
        %3843 = vmatprep.mubr.bf16.mxu0 0
        %3844 = vmatmul.mubr.bf16.gmra.mxu0 %v1369
        %v3845 = vpop.f32.mrf.mxu0
        %v3846 = vadd.f32 0.0, %v3845
        %v3847 = vpop.f32.mrf.mxu0
        %v3848 = vpop.f32.mrf.mxu0
        %v3849 = vpop.f32.mrf.mxu0
        %3850 = vmatprep.mubr.bf16.mxu0 0
        %3851 = vmatmul.mubr.bf16.gmra.mxu0 %v1370
        %v3852 = vpop.f32.mrf.mxu0
        %v3853 = vadd.f32 0.0, %v3852
        %v3854 = vpop.f32.mrf.mxu0
        %v3855 = vpop.f32.mrf.mxu0
        %v3856 = vadd.f32 0.0, %v3855
        %v3857 = vpop.f32.mrf.mxu0
        %3858 = vmatprep.mubr.bf16.mxu0 0
        %3859 = vmatmul.mubr.bf16.gmra.mxu0 %v1371
        %v3860 = vpop.f32.mrf.mxu0
        %v3861 = vadd.f32 0.0, %v3860
        %v3862 = vpop.f32.mrf.mxu0
        %v3863 = vpop.f32.mrf.mxu0
        %v3864 = vpop.f32.mrf.mxu0
        %3865 = vmatprep.mubr.bf16.mxu0 0
        %3866 = vmatmul.mubr.bf16.gmra.mxu0 %v1372
        %v3867 = vpop.f32.mrf.mxu0
        %v3868 = vadd.f32 0.0, %v3867
        %v3869 = vpop.f32.mrf.mxu0
        %v3870 = vpop.f32.mrf.mxu0
        %v3871 = vadd.f32 0.0, %v3870
        %v3872 = vpop.f32.mrf.mxu0
        %3873 = vmatprep.mubr.bf16.mxu0 0
        %3874 = vmatmul.mubr.bf16.gmra.mxu0 %v1373
        %v3875 = vpop.f32.mrf.mxu0
        %v3876 = vadd.f32 0.0, %v3875
        %v3877 = vpop.f32.mrf.mxu0
        %v3878 = vpop.f32.mrf.mxu0
        %v3879 = vpop.f32.mrf.mxu0
        %3880 = vmatprep.mubr.bf16.mxu0 0
        %3881 = vmatmul.mubr.bf16.gmra.mxu0 %v1374
        %v3882 = vpop.f32.mrf.mxu0
        %v3883 = vadd.f32 0.0, %v3882
        %v3884 = vpop.f32.mrf.mxu0
        %v3885 = vpop.f32.mrf.mxu0
        %v3886 = vadd.f32 0.0, %v3885
        %v3887 = vpop.f32.mrf.mxu0
        %3888 = vmatprep.mubr.bf16.mxu0 0
        %3889 = vmatmul.mubr.bf16.gmra.mxu0 %v1375
        %v3890 = vpop.f32.mrf.mxu0
        %v3891 = vadd.f32 0.0, %v3890
        %v3892 = vpop.f32.mrf.mxu0
        %v3893 = vpop.f32.mrf.mxu0
        %v3894 = vpop.f32.mrf.mxu0
        %3895 = vmatprep.mubr.bf16.mxu0 0
        %3896 = vmatmul.mubr.bf16.gmra.mxu0 %v1376
        %v3897 = vpop.f32.mrf.mxu0
        %v3898 = vadd.f32 0.0, %v3897
        %v3899 = vpop.f32.mrf.mxu0
        %v3900 = vpop.f32.mrf.mxu0
        %v3901 = vadd.f32 0.0, %v3900
        %v3902 = vpop.f32.mrf.mxu0
        %3903 = vmatprep.mubr.bf16.mxu0 0
        %3904 = vmatmul.mubr.bf16.gmra.mxu0 %v1377
        %v3905 = vpop.f32.mrf.mxu0
        %v3906 = vadd.f32 0.0, %v3905
        %v3907 = vpop.f32.mrf.mxu0
        %v3908 = vpop.f32.mrf.mxu0
        %v3909 = vpop.f32.mrf.mxu0
        %3910 = vmatprep.mubr.bf16.mxu0 0
        %3911 = vmatmul.mubr.bf16.gmra.mxu0 %v1378
        %v3912 = vpop.f32.mrf.mxu0
        %v3913 = vadd.f32 0.0, %v3912
        %v3914 = vpop.f32.mrf.mxu0
        %v3915 = vpop.f32.mrf.mxu0
        %v3916 = vadd.f32 0.0, %v3915
        %v3917 = vpop.f32.mrf.mxu0
        %3918 = vmatprep.mubr.bf16.mxu0 0
        %3919 = vmatmul.mubr.bf16.gmra.mxu0 %v1379
        %v3920 = vpop.f32.mrf.mxu0
        %v3921 = vadd.f32 0.0, %v3920
        %v3922 = vpop.f32.mrf.mxu0
        %v3923 = vpop.f32.mrf.mxu0
        %v3924 = vpop.f32.mrf.mxu0
        %3925 = vmatprep.mubr.bf16.mxu0 0
        %3926 = vmatmul.mubr.bf16.gmra.mxu0 %v1380
        %v3927 = vpop.f32.mrf.mxu0
        %v3928 = vadd.f32 0.0, %v3927
        %v3929 = vpop.f32.mrf.mxu0
        %v3930 = vpop.f32.mrf.mxu0
        %v3931 = vadd.f32 0.0, %v3930
        %v3932 = vpop.f32.mrf.mxu0
        %3933 = vmatprep.mubr.bf16.mxu0 0
        %3934 = vmatmul.mubr.bf16.gmra.mxu0 %v1381
        %v3935 = vpop.f32.mrf.mxu0
        %v3936 = vadd.f32 0.0, %v3935
        %v3937 = vpop.f32.mrf.mxu0
        %v3938 = vpop.f32.mrf.mxu0
        %v3939 = vpop.f32.mrf.mxu0
        %3940 = vmatprep.mubr.bf16.mxu0 0
        %3941 = vmatmul.mubr.bf16.gmra.mxu0 %v1382
        %v3942 = vpop.f32.mrf.mxu0
        %v3943 = vadd.f32 0.0, %v3942
        %v3944 = vpop.f32.mrf.mxu0
        %v3945 = vpop.f32.mrf.mxu0
        %v3946 = vadd.f32 0.0, %v3945
        %v3947 = vpop.f32.mrf.mxu0
        %3948 = vmatprep.mubr.bf16.mxu0 0
        %3949 = vmatmul.mubr.bf16.gmra.mxu0 %v1383
        %v3950 = vpop.f32.mrf.mxu0
        %v3951 = vadd.f32 0.0, %v3950
        %v3952 = vpop.f32.mrf.mxu0
        %v3953 = vpop.f32.mrf.mxu0
        %v3954 = vpop.f32.mrf.mxu0
        %3955 = vmatprep.mubr.bf16.mxu0 0
        %3956 = vmatmul.mubr.bf16.gmra.mxu0 %v1384
        %v3957 = vpop.f32.mrf.mxu0
        %v3958 = vadd.f32 0.0, %v3957
        %v3959 = vpop.f32.mrf.mxu0
        %v3960 = vpop.f32.mrf.mxu0
        %v3961 = vadd.f32 0.0, %v3960
        %v3962 = vpop.f32.mrf.mxu0
        %3963 = vmatprep.mubr.bf16.mxu0 0
        %3964 = vmatmul.mubr.bf16.gmra.mxu0 %v1385
        %v3965 = vpop.f32.mrf.mxu0
        %v3966 = vadd.f32 0.0, %v3965
        %v3967 = vpop.f32.mrf.mxu0
        %v3968 = vpop.f32.mrf.mxu0
        %v3969 = vpop.f32.mrf.mxu0
        %3970 = vmatprep.mubr.bf16.mxu0 0
        %3971 = vmatmul.mubr.bf16.gmra.mxu0 %v1386
        %v3972 = vpop.f32.mrf.mxu0
        %v3973 = vadd.f32 0.0, %v3972
        %v3974 = vpop.f32.mrf.mxu0
        %v3975 = vpop.f32.mrf.mxu0
        %v3976 = vadd.f32 0.0, %v3975
        %v3977 = vpop.f32.mrf.mxu0
        %3978 = vmatprep.mubr.bf16.mxu0 0
        %3979 = vmatmul.mubr.bf16.gmra.mxu0 %v1387
        %v3980 = vpop.f32.mrf.mxu0
        %v3981 = vadd.f32 0.0, %v3980
        %v3982 = vpop.f32.mrf.mxu0
        %v3983 = vpop.f32.mrf.mxu0
        %v3984 = vpop.f32.mrf.mxu0
        %3985 = vmatprep.mubr.bf16.mxu0 0
        %3986 = vmatmul.mubr.bf16.gmra.mxu0 %v1388
        %v3987 = vpop.f32.mrf.mxu0
        %v3988 = vadd.f32 0.0, %v3987
        %v3989 = vpop.f32.mrf.mxu0
        %v3990 = vpop.f32.mrf.mxu0
        %v3991 = vadd.f32 0.0, %v3990
        %v3992 = vpop.f32.mrf.mxu0
        %3993 = vmatprep.mubr.bf16.mxu0 0
        %3994 = vmatmul.mubr.bf16.gmra.mxu0 %v1389
        %v3995 = vpop.f32.mrf.mxu0
        %v3996 = vadd.f32 0.0, %v3995
        %v3997 = vpop.f32.mrf.mxu0
        %v3998 = vpop.f32.mrf.mxu0
        %v3999 = vpop.f32.mrf.mxu0
        %4000 = vmatprep.mubr.bf16.mxu0 0
        %4001 = vmatmul.mubr.bf16.gmra.mxu0 %v1390
        %v4002 = vpop.f32.mrf.mxu0
        %v4003 = vadd.f32 0.0, %v4002
        %v4004 = vpop.f32.mrf.mxu0
        %v4005 = vpop.f32.mrf.mxu0
        %v4006 = vadd.f32 0.0, %v4005
        %v4007 = vpop.f32.mrf.mxu0
        %4008 = vmatprep.mubr.bf16.mxu0 0
        %4009 = vmatmul.mubr.bf16.gmra.mxu0 %v1391
        %v4010 = vpop.f32.mrf.mxu0
        %v4011 = vadd.f32 0.0, %v4010
        %v4012 = vpop.f32.mrf.mxu0
        %v4013 = vpop.f32.mrf.mxu0
        %v4014 = vpop.f32.mrf.mxu0
        %4015 = vdwg.mxu0
        %v4032 = vunpack.c.l.b16 %v3663
        %v4033 = vunpack.c.l.b16 %v3664
        %v4034 = vunpack.c.l.b16 %v3665
        %v4035 = vunpack.c.l.b16 %v3666
        %v4036 = vunpack.c.l.b16 %v3667
        %v4037 = vunpack.c.l.b16 %v3668
        %v4038 = vunpack.c.l.b16 %v3669
        %v4039 = vunpack.c.l.b16 %v3670
        %v4040 = vunpack.c.l.b16 %v3671
        %v4041 = vunpack.c.l.b16 %v3672
        %v4042 = vunpack.c.l.b16 %v3673
        %v4043 = vunpack.c.l.b16 %v3674
        %v4044 = vunpack.c.l.b16 %v3675
        %v4045 = vunpack.c.l.b16 %v3676
        %v4046 = vunpack.c.l.b16 %v3677
        %v4047 = vunpack.c.l.b16 %v3678
        %v4048 = vpack.c.b16 %v4033, %v4032
        %v4049 = vpack.c.b16 %v4035, %v4034
        %v4050 = vpack.c.b16 %v4037, %v4036
        %v4051 = vpack.c.b16 %v4039, %v4038
        %v4052 = vpack.c.b16 %v4041, %v4040
        %v4053 = vpack.c.b16 %v4043, %v4042
        %v4054 = vpack.c.b16 %v4045, %v4044
        %v4055 = vpack.c.b16 %v4047, %v4046
        %4064 = vmatprep.subr.bf16.mxu0 0
        %4065 = vmatpush1.bf16.msra.mxu0 %v4055
        %4066 = vmatprep.subr.bf16.mxu0 0
        %4067 = vmatpush1.bf16.msra.mxu0 %v4054
        %4068 = vmatprep.subr.bf16.mxu0 0
        %4069 = vmatpush1.bf16.msra.mxu0 %v4053
        %4070 = vmatprep.subr.bf16.mxu0 0
        %4071 = vmatpush1.bf16.msra.mxu0 %v4052
        %4072 = vmatprep.subr.bf16.mxu0 0
        %4073 = vmatpush1.bf16.msra.mxu0 %v4051
        %4074 = vmatprep.subr.bf16.mxu0 0
        %4075 = vmatpush1.bf16.msra.mxu0 %v4050
        %4076 = vmatprep.subr.bf16.mxu0 0
        %4077 = vmatpush1.bf16.msra.mxu0 %v4049
        %4078 = vmatprep.subr.bf16.mxu0 0
        %4079 = vmatpush1.bf16.msra.mxu0 %v4048
        %4080 = vmatprep.subr.bf16.mxu0 0
        %4081 = vmatpush2.bf16.msra.mxu0 0
        %4082 = vmatprep.subr.bf16.mxu0 0
        %4083 = vmatpush2.bf16.msra.mxu0 0
        %4084 = vmatprep.subr.bf16.mxu0 0
        %4085 = vmatpush2.bf16.msra.mxu0 0
        %4086 = vmatprep.subr.bf16.mxu0 0
        %4087 = vmatpush2.bf16.msra.mxu0 0
        %4088 = vmatprep.subr.bf16.mxu0 0
        %4089 = vmatpush2.bf16.msra.mxu0 0
        %4090 = vmatprep.subr.bf16.mxu0 0
        %4091 = vmatpush2.bf16.msra.mxu0 0
        %4092 = vmatprep.subr.bf16.mxu0 0
        %4093 = vmatpush2.bf16.msra.mxu0 0
        %4094 = vmatprep.subr.bf16.mxu0 0
        %4095 = vmatpush2.bf16.msra.mxu0 0
        %4096 = vmatprep.mubr.bf16.mxu0 0
        %4097 = vmatmul.mubr.bf16.gmra.mxu0 %v1737
        %v4098 = vpop.f32.mrf.mxu0
        %v4099 = vadd.f32 %v3778, %v4098
        %v4100 = vpop.f32.mrf.mxu0
        %v4101 = vpop.f32.mrf.mxu0
        %v4102 = vadd.f32 %v3781, %v4101
        %v4103 = vpop.f32.mrf.mxu0
        %4104 = vmatprep.mubr.bf16.mxu0 0
        %4105 = vmatmul.mubr.bf16.gmra.mxu0 %v1738
        %v4106 = vpop.f32.mrf.mxu0
        %v4107 = vadd.f32 %v3786, %v4106
        %v4108 = vpop.f32.mrf.mxu0
        %v4109 = vpop.f32.mrf.mxu0
        %v4110 = vpop.f32.mrf.mxu0
        %4111 = vmatprep.mubr.bf16.mxu0 0
        %4112 = vmatmul.mubr.bf16.gmra.mxu0 %v1360
        %v4113 = vpop.f32.mrf.mxu0
        %v4114 = vadd.f32 %v3793, %v4113
        %v4115 = vpop.f32.mrf.mxu0
        %v4116 = vpop.f32.mrf.mxu0
        %v4117 = vadd.f32 %v3796, %v4116
        %v4118 = vpop.f32.mrf.mxu0
        %4119 = vmatprep.mubr.bf16.mxu0 0
        %4120 = vmatmul.mubr.bf16.gmra.mxu0 %v1361
        %v4121 = vpop.f32.mrf.mxu0
        %v4122 = vadd.f32 %v3801, %v4121
        %v4123 = vpop.f32.mrf.mxu0
        %v4124 = vpop.f32.mrf.mxu0
        %v4125 = vpop.f32.mrf.mxu0
        %4126 = vmatprep.mubr.bf16.mxu0 0
        %4127 = vmatmul.mubr.bf16.gmra.mxu0 %v1362
        %v4128 = vpop.f32.mrf.mxu0
        %v4129 = vadd.f32 %v3808, %v4128
        %v4130 = vpop.f32.mrf.mxu0
        %v4131 = vpop.f32.mrf.mxu0
        %v4132 = vadd.f32 %v3811, %v4131
        %v4133 = vpop.f32.mrf.mxu0
        %4134 = vmatprep.mubr.bf16.mxu0 0
        %4135 = vmatmul.mubr.bf16.gmra.mxu0 %v1363
        %v4136 = vpop.f32.mrf.mxu0
        %v4137 = vadd.f32 %v3816, %v4136
        %v4138 = vpop.f32.mrf.mxu0
        %v4139 = vpop.f32.mrf.mxu0
        %v4140 = vpop.f32.mrf.mxu0
        %4141 = vmatprep.mubr.bf16.mxu0 0
        %4142 = vmatmul.mubr.bf16.gmra.mxu0 %v1364
        %v4143 = vpop.f32.mrf.mxu0
        %v4144 = vadd.f32 %v3823, %v4143
        %v4145 = vpop.f32.mrf.mxu0
        %v4146 = vpop.f32.mrf.mxu0
        %v4147 = vadd.f32 %v3826, %v4146
        %v4148 = vpop.f32.mrf.mxu0
        %4149 = vmatprep.mubr.bf16.mxu0 0
        %4150 = vmatmul.mubr.bf16.gmra.mxu0 %v1365
        %v4151 = vpop.f32.mrf.mxu0
        %v4152 = vadd.f32 %v3831, %v4151
        %v4153 = vpop.f32.mrf.mxu0
        %v4154 = vpop.f32.mrf.mxu0
        %v4155 = vpop.f32.mrf.mxu0
        %4156 = vmatprep.mubr.bf16.mxu0 0
        %4157 = vmatmul.mubr.bf16.gmra.mxu0 %v1366
        %v4158 = vpop.f32.mrf.mxu0
        %v4159 = vadd.f32 %v3838, %v4158
        %v4160 = vpop.f32.mrf.mxu0
        %v4161 = vpop.f32.mrf.mxu0
        %v4162 = vadd.f32 %v3841, %v4161
        %v4163 = vpop.f32.mrf.mxu0
        %4164 = vmatprep.mubr.bf16.mxu0 0
        %4165 = vmatmul.mubr.bf16.gmra.mxu0 %v1367
        %v4166 = vpop.f32.mrf.mxu0
        %v4167 = vadd.f32 %v3846, %v4166
        %v4168 = vpop.f32.mrf.mxu0
        %v4169 = vpop.f32.mrf.mxu0
        %v4170 = vpop.f32.mrf.mxu0
        %4171 = vmatprep.mubr.bf16.mxu0 0
        %4172 = vmatmul.mubr.bf16.gmra.mxu0 %v1368
        %v4173 = vpop.f32.mrf.mxu0
        %v4174 = vadd.f32 %v3853, %v4173
        %v4175 = vpop.f32.mrf.mxu0
        %v4176 = vpop.f32.mrf.mxu0
        %v4177 = vadd.f32 %v3856, %v4176
        %v4178 = vpop.f32.mrf.mxu0
        %4179 = vmatprep.mubr.bf16.mxu0 0
        %4180 = vmatmul.mubr.bf16.gmra.mxu0 %v1369
        %v4181 = vpop.f32.mrf.mxu0
        %v4182 = vadd.f32 %v3861, %v4181
        %v4183 = vpop.f32.mrf.mxu0
        %v4184 = vpop.f32.mrf.mxu0
        %v4185 = vpop.f32.mrf.mxu0
        %4186 = vmatprep.mubr.bf16.mxu0 0
        %4187 = vmatmul.mubr.bf16.gmra.mxu0 %v1370
        %v4188 = vpop.f32.mrf.mxu0
        %v4189 = vadd.f32 %v3868, %v4188
        %v4190 = vpop.f32.mrf.mxu0
        %v4191 = vpop.f32.mrf.mxu0
        %v4192 = vadd.f32 %v3871, %v4191
        %v4193 = vpop.f32.mrf.mxu0
        %4194 = vmatprep.mubr.bf16.mxu0 0
        %4195 = vmatmul.mubr.bf16.gmra.mxu0 %v1371
        %v4196 = vpop.f32.mrf.mxu0
        %v4197 = vadd.f32 %v3876, %v4196
        %v4198 = vpop.f32.mrf.mxu0
        %v4199 = vpop.f32.mrf.mxu0
        %v4200 = vpop.f32.mrf.mxu0
        %4201 = vmatprep.mubr.bf16.mxu0 0
        %4202 = vmatmul.mubr.bf16.gmra.mxu0 %v1372
        %v4203 = vpop.f32.mrf.mxu0
        %v4204 = vadd.f32 %v3883, %v4203
        %v4205 = vpop.f32.mrf.mxu0
        %v4206 = vpop.f32.mrf.mxu0
        %v4207 = vadd.f32 %v3886, %v4206
        %v4208 = vpop.f32.mrf.mxu0
        %4209 = vmatprep.mubr.bf16.mxu0 0
        %4210 = vmatmul.mubr.bf16.gmra.mxu0 %v1373
        %v4211 = vpop.f32.mrf.mxu0
        %v4212 = vadd.f32 %v3891, %v4211
        %v4213 = vpop.f32.mrf.mxu0
        %v4214 = vpop.f32.mrf.mxu0
        %v4215 = vpop.f32.mrf.mxu0
        %4216 = vmatprep.mubr.bf16.mxu0 0
        %4217 = vmatmul.mubr.bf16.gmra.mxu0 %v1374
        %v4218 = vpop.f32.mrf.mxu0
        %v4219 = vadd.f32 %v3898, %v4218
        %v4220 = vpop.f32.mrf.mxu0
        %v4221 = vpop.f32.mrf.mxu0
        %v4222 = vadd.f32 %v3901, %v4221
        %v4223 = vpop.f32.mrf.mxu0
        %4224 = vmatprep.mubr.bf16.mxu0 0
        %4225 = vmatmul.mubr.bf16.gmra.mxu0 %v1375
        %v4226 = vpop.f32.mrf.mxu0
        %v4227 = vadd.f32 %v3906, %v4226
        %v4228 = vpop.f32.mrf.mxu0
        %v4229 = vpop.f32.mrf.mxu0
        %v4230 = vpop.f32.mrf.mxu0
        %4231 = vmatprep.mubr.bf16.mxu0 0
        %4232 = vmatmul.mubr.bf16.gmra.mxu0 %v1376
        %v4233 = vpop.f32.mrf.mxu0
        %v4234 = vadd.f32 %v3913, %v4233
        %v4235 = vpop.f32.mrf.mxu0
        %v4236 = vpop.f32.mrf.mxu0
        %v4237 = vadd.f32 %v3916, %v4236
        %v4238 = vpop.f32.mrf.mxu0
        %4239 = vmatprep.mubr.bf16.mxu0 0
        %4240 = vmatmul.mubr.bf16.gmra.mxu0 %v1377
        %v4241 = vpop.f32.mrf.mxu0
        %v4242 = vadd.f32 %v3921, %v4241
        %v4243 = vpop.f32.mrf.mxu0
        %v4244 = vpop.f32.mrf.mxu0
        %v4245 = vpop.f32.mrf.mxu0
        %4246 = vmatprep.mubr.bf16.mxu0 0
        %4247 = vmatmul.mubr.bf16.gmra.mxu0 %v1378
        %v4248 = vpop.f32.mrf.mxu0
        %v4249 = vadd.f32 %v3928, %v4248
        %v4250 = vpop.f32.mrf.mxu0
        %v4251 = vpop.f32.mrf.mxu0
        %v4252 = vadd.f32 %v3931, %v4251
        %v4253 = vpop.f32.mrf.mxu0
        %4254 = vmatprep.mubr.bf16.mxu0 0
        %4255 = vmatmul.mubr.bf16.gmra.mxu0 %v1379
        %v4256 = vpop.f32.mrf.mxu0
        %v4257 = vadd.f32 %v3936, %v4256
        %v4258 = vpop.f32.mrf.mxu0
        %v4259 = vpop.f32.mrf.mxu0
        %v4260 = vpop.f32.mrf.mxu0
        %4261 = vmatprep.mubr.bf16.mxu0 0
        %4262 = vmatmul.mubr.bf16.gmra.mxu0 %v1380
        %v4263 = vpop.f32.mrf.mxu0
        %v4264 = vadd.f32 %v3943, %v4263
        %v4265 = vpop.f32.mrf.mxu0
        %v4266 = vpop.f32.mrf.mxu0
        %v4267 = vadd.f32 %v3946, %v4266
        %v4268 = vpop.f32.mrf.mxu0
        %4269 = vmatprep.mubr.bf16.mxu0 0
        %4270 = vmatmul.mubr.bf16.gmra.mxu0 %v1381
        %v4271 = vpop.f32.mrf.mxu0
        %v4272 = vadd.f32 %v3951, %v4271
        %v4273 = vpop.f32.mrf.mxu0
        %v4274 = vpop.f32.mrf.mxu0
        %v4275 = vpop.f32.mrf.mxu0
        %4276 = vmatprep.mubr.bf16.mxu0 0
        %4277 = vmatmul.mubr.bf16.gmra.mxu0 %v1382
        %v4278 = vpop.f32.mrf.mxu0
        %v4279 = vadd.f32 %v3958, %v4278
        %v4280 = vpop.f32.mrf.mxu0
        %v4281 = vpop.f32.mrf.mxu0
        %v4282 = vadd.f32 %v3961, %v4281
        %v4283 = vpop.f32.mrf.mxu0
        %4284 = vmatprep.mubr.bf16.mxu0 0
        %4285 = vmatmul.mubr.bf16.gmra.mxu0 %v1383
        %v4286 = vpop.f32.mrf.mxu0
        %v4287 = vadd.f32 %v3966, %v4286
        %v4288 = vpop.f32.mrf.mxu0
        %v4289 = vpop.f32.mrf.mxu0
        %v4290 = vpop.f32.mrf.mxu0
        %4291 = vmatprep.mubr.bf16.mxu0 0
        %4292 = vmatmul.mubr.bf16.gmra.mxu0 %v1384
        %v4293 = vpop.f32.mrf.mxu0
        %v4294 = vadd.f32 %v3973, %v4293
        %v4295 = vpop.f32.mrf.mxu0
        %v4296 = vpop.f32.mrf.mxu0
        %v4297 = vadd.f32 %v3976, %v4296
        %v4298 = vpop.f32.mrf.mxu0
        %4299 = vmatprep.mubr.bf16.mxu0 0
        %4300 = vmatmul.mubr.bf16.gmra.mxu0 %v1385
        %v4301 = vpop.f32.mrf.mxu0
        %v4302 = vadd.f32 %v3981, %v4301
        %v4303 = vpop.f32.mrf.mxu0
        %v4304 = vpop.f32.mrf.mxu0
        %v4305 = vpop.f32.mrf.mxu0
        %4306 = vmatprep.mubr.bf16.mxu0 0
        %4307 = vmatmul.mubr.bf16.gmra.mxu0 %v1386
        %v4308 = vpop.f32.mrf.mxu0
        %v4309 = vadd.f32 %v3988, %v4308
        %v4310 = vpop.f32.mrf.mxu0
        %v4311 = vpop.f32.mrf.mxu0
        %v4312 = vadd.f32 %v3991, %v4311
        %v4313 = vpop.f32.mrf.mxu0
        %4314 = vmatprep.mubr.bf16.mxu0 0
        %4315 = vmatmul.mubr.bf16.gmra.mxu0 %v1387
        %v4316 = vpop.f32.mrf.mxu0
        %v4317 = vadd.f32 %v3996, %v4316
        %v4318 = vpop.f32.mrf.mxu0
        %v4319 = vpop.f32.mrf.mxu0
        %v4320 = vpop.f32.mrf.mxu0
        %4321 = vmatprep.mubr.bf16.mxu0 0
        %4322 = vmatmul.mubr.bf16.gmra.mxu0 %v1388
        %v4323 = vpop.f32.mrf.mxu0
        %v4324 = vadd.f32 %v4003, %v4323
        %v4325 = vpop.f32.mrf.mxu0
        %v4326 = vpop.f32.mrf.mxu0
        %v4327 = vadd.f32 %v4006, %v4326
        %v4328 = vpop.f32.mrf.mxu0
        %4329 = vmatprep.mubr.bf16.mxu0 0
        %4330 = vmatmul.mubr.bf16.gmra.mxu0 %v1389
        %v4331 = vpop.f32.mrf.mxu0
        %v4332 = vadd.f32 %v4011, %v4331
        %v4333 = vpop.f32.mrf.mxu0
        %v4334 = vpop.f32.mrf.mxu0
        %v4335 = vpop.f32.mrf.mxu0
        %4336 = vdwg.mxu0
        %v4337 = vld [vmem:[#allocation6 + $0x200] sm:$0xf]
        %v4338 = vld [vmem:[#allocation6 + $0x204] sm:$0xf]
        %v4339 = vld [vmem:[#allocation6 + $0x208] sm:$0xf]
        %v4340 = vld [vmem:[#allocation6 + $0x20c] sm:$0xf]
        %v4341 = vld [vmem:[#allocation6 + $0x210] sm:$0xf]
        %v4342 = vld [vmem:[#allocation6 + $0x214] sm:$0xf]
        %v4343 = vld [vmem:[#allocation6 + $0x218] sm:$0xf]
        %v4344 = vld [vmem:[#allocation6 + $0x21c] sm:$0xf]
        %v4345 = vld [vmem:[#allocation6 + $0x220] sm:$0xf]
        %v4346 = vld [vmem:[#allocation6 + $0x224] sm:$0xf]
        %v4347 = vld [vmem:[#allocation6 + $0x228] sm:$0xf]
        %v4348 = vld [vmem:[#allocation6 + $0x22c] sm:$0xf]
        %v4349 = vld [vmem:[#allocation6 + $0x230] sm:$0xf]
        %v4350 = vld [vmem:[#allocation6 + $0x234] sm:$0xf]
        %v4351 = vld [vmem:[#allocation6 + $0x238] sm:$0xf]
        %v4352 = vld [vmem:[#allocation6 + $0x23c] sm:$0xf]
        %v4369 = vunpack.c.l.b16 %v4337
        %v4370 = vunpack.c.l.b16 %v4338
        %v4371 = vunpack.c.l.b16 %v4339
        %v4372 = vunpack.c.l.b16 %v4340
        %v4373 = vunpack.c.l.b16 %v4341
        %v4374 = vunpack.c.l.b16 %v4342
        %v4375 = vunpack.c.l.b16 %v4343
        %v4376 = vunpack.c.l.b16 %v4344
        %v4377 = vunpack.c.l.b16 %v4345
        %v4378 = vunpack.c.l.b16 %v4346
        %v4379 = vunpack.c.l.b16 %v4347
        %v4380 = vunpack.c.l.b16 %v4348
        %v4381 = vunpack.c.l.b16 %v4349
        %v4382 = vunpack.c.l.b16 %v4350
        %v4383 = vunpack.c.l.b16 %v4351
        %v4384 = vunpack.c.l.b16 %v4352
        %v4385 = vpack.c.b16 %v4370, %v4369
        %v4386 = vpack.c.b16 %v4372, %v4371
        %v4387 = vpack.c.b16 %v4374, %v4373
        %v4388 = vpack.c.b16 %v4376, %v4375
        %v4389 = vpack.c.b16 %v4378, %v4377
        %v4390 = vpack.c.b16 %v4380, %v4379
        %v4391 = vpack.c.b16 %v4382, %v4381
        %v4392 = vpack.c.b16 %v4384, %v4383
        %4401 = vmatprep.subr.bf16.mxu0 0
        %4402 = vmatpush1.bf16.msra.mxu0 %v4392
        %4403 = vmatprep.subr.bf16.mxu0 0
        %4404 = vmatpush1.bf16.msra.mxu0 %v4391
        %4405 = vmatprep.subr.bf16.mxu0 0
        %4406 = vmatpush1.bf16.msra.mxu0 %v4390
        %4407 = vmatprep.subr.bf16.mxu0 0
        %4408 = vmatpush1.bf16.msra.mxu0 %v4389
        %4409 = vmatprep.subr.bf16.mxu0 0
        %4410 = vmatpush1.bf16.msra.mxu0 %v4388
        %4411 = vmatprep.subr.bf16.mxu0 0
        %4412 = vmatpush1.bf16.msra.mxu0 %v4387
        %4413 = vmatprep.subr.bf16.mxu0 0
        %4414 = vmatpush1.bf16.msra.mxu0 %v4386
        %4415 = vmatprep.subr.bf16.mxu0 0
        %4416 = vmatpush1.bf16.msra.mxu0 %v4385
        %4417 = vmatprep.subr.bf16.mxu0 0
        %4418 = vmatpush2.bf16.msra.mxu0 0
        %4419 = vmatprep.subr.bf16.mxu0 0
        %4420 = vmatpush2.bf16.msra.mxu0 0
        %4421 = vmatprep.subr.bf16.mxu0 0
        %4422 = vmatpush2.bf16.msra.mxu0 0
        %4423 = vmatprep.subr.bf16.mxu0 0
        %4424 = vmatpush2.bf16.msra.mxu0 0
        %4425 = vmatprep.subr.bf16.mxu0 0
        %4426 = vmatpush2.bf16.msra.mxu0 0
        %4427 = vmatprep.subr.bf16.mxu0 0
        %4428 = vmatpush2.bf16.msra.mxu0 0
        %4429 = vmatprep.subr.bf16.mxu0 0
        %4430 = vmatpush2.bf16.msra.mxu0 0
        %4431 = vmatprep.subr.bf16.mxu0 0
        %4432 = vmatpush2.bf16.msra.mxu0 0
        %4433 = vmatprep.mubr.bf16.mxu0 0
        %4434 = vmatmul.mubr.bf16.gmra.mxu0 %v1362
        %v4435 = vpop.f32.mrf.mxu0
        %v4436 = vadd.f32 0.0, %v4435
        %v4437 = vpop.f32.mrf.mxu0
        %v4438 = vpop.f32.mrf.mxu0
        %v4439 = vadd.f32 0.0, %v4438
        %v4440 = vpop.f32.mrf.mxu0
        %4441 = vmatprep.mubr.bf16.mxu0 0
        %4442 = vmatmul.mubr.bf16.gmra.mxu0 %v1363
        %v4443 = vpop.f32.mrf.mxu0
        %v4444 = vadd.f32 0.0, %v4443
        %v4445 = vpop.f32.mrf.mxu0
        %v4446 = vpop.f32.mrf.mxu0
        %v4447 = vpop.f32.mrf.mxu0
        %4448 = vmatprep.mubr.bf16.mxu0 0
        %4449 = vmatmul.mubr.bf16.gmra.mxu0 %v1364
        %v4450 = vpop.f32.mrf.mxu0
        %v4451 = vadd.f32 0.0, %v4450
        %v4452 = vpop.f32.mrf.mxu0
        %v4453 = vpop.f32.mrf.mxu0
        %v4454 = vadd.f32 0.0, %v4453
        %v4455 = vpop.f32.mrf.mxu0
        %4456 = vmatprep.mubr.bf16.mxu0 0
        %4457 = vmatmul.mubr.bf16.gmra.mxu0 %v1365
        %v4458 = vpop.f32.mrf.mxu0
        %v4459 = vadd.f32 0.0, %v4458
        %v4460 = vpop.f32.mrf.mxu0
        %v4461 = vpop.f32.mrf.mxu0
        %v4462 = vpop.f32.mrf.mxu0
        %4463 = vmatprep.mubr.bf16.mxu0 0
        %4464 = vmatmul.mubr.bf16.gmra.mxu0 %v1366
        %v4465 = vpop.f32.mrf.mxu0
        %v4466 = vadd.f32 0.0, %v4465
        %v4467 = vpop.f32.mrf.mxu0
        %v4468 = vpop.f32.mrf.mxu0
        %v4469 = vadd.f32 0.0, %v4468
        %v4470 = vpop.f32.mrf.mxu0
        %4471 = vmatprep.mubr.bf16.mxu0 0
        %4472 = vmatmul.mubr.bf16.gmra.mxu0 %v1367
        %v4473 = vpop.f32.mrf.mxu0
        %v4474 = vadd.f32 0.0, %v4473
        %v4475 = vpop.f32.mrf.mxu0
        %v4476 = vpop.f32.mrf.mxu0
        %v4477 = vpop.f32.mrf.mxu0
        %4478 = vmatprep.mubr.bf16.mxu0 0
        %4479 = vmatmul.mubr.bf16.gmra.mxu0 %v1368
        %v4480 = vpop.f32.mrf.mxu0
        %v4481 = vadd.f32 0.0, %v4480
        %v4482 = vpop.f32.mrf.mxu0
        %v4483 = vpop.f32.mrf.mxu0
        %v4484 = vadd.f32 0.0, %v4483
        %v4485 = vpop.f32.mrf.mxu0
        %4486 = vmatprep.mubr.bf16.mxu0 0
        %4487 = vmatmul.mubr.bf16.gmra.mxu0 %v1369
        %v4488 = vpop.f32.mrf.mxu0
        %v4489 = vadd.f32 0.0, %v4488
        %v4490 = vpop.f32.mrf.mxu0
        %v4491 = vpop.f32.mrf.mxu0
        %v4492 = vpop.f32.mrf.mxu0
        %4493 = vmatprep.mubr.bf16.mxu0 0
        %4494 = vmatmul.mubr.bf16.gmra.mxu0 %v1370
        %v4495 = vpop.f32.mrf.mxu0
        %v4496 = vadd.f32 0.0, %v4495
        %v4497 = vpop.f32.mrf.mxu0
        %v4498 = vpop.f32.mrf.mxu0
        %v4499 = vadd.f32 0.0, %v4498
        %v4500 = vpop.f32.mrf.mxu0
        %4501 = vmatprep.mubr.bf16.mxu0 0
        %4502 = vmatmul.mubr.bf16.gmra.mxu0 %v1371
        %v4503 = vpop.f32.mrf.mxu0
        %v4504 = vadd.f32 0.0, %v4503
        %v4505 = vpop.f32.mrf.mxu0
        %v4506 = vpop.f32.mrf.mxu0
        %v4507 = vpop.f32.mrf.mxu0
        %4508 = vmatprep.mubr.bf16.mxu0 0
        %4509 = vmatmul.mubr.bf16.gmra.mxu0 %v1372
        %v4510 = vpop.f32.mrf.mxu0
        %v4511 = vadd.f32 0.0, %v4510
        %v4512 = vpop.f32.mrf.mxu0
        %v4513 = vpop.f32.mrf.mxu0
        %v4514 = vadd.f32 0.0, %v4513
        %v4515 = vpop.f32.mrf.mxu0
        %4516 = vmatprep.mubr.bf16.mxu0 0
        %4517 = vmatmul.mubr.bf16.gmra.mxu0 %v1373
        %v4518 = vpop.f32.mrf.mxu0
        %v4519 = vadd.f32 0.0, %v4518
        %v4520 = vpop.f32.mrf.mxu0
        %v4521 = vpop.f32.mrf.mxu0
        %v4522 = vpop.f32.mrf.mxu0
        %4523 = vmatprep.mubr.bf16.mxu0 0
        %4524 = vmatmul.mubr.bf16.gmra.mxu0 %v1374
        %v4525 = vpop.f32.mrf.mxu0
        %v4526 = vadd.f32 0.0, %v4525
        %v4527 = vpop.f32.mrf.mxu0
        %v4528 = vpop.f32.mrf.mxu0
        %v4529 = vadd.f32 0.0, %v4528
        %v4530 = vpop.f32.mrf.mxu0
        %4531 = vmatprep.mubr.bf16.mxu0 0
        %4532 = vmatmul.mubr.bf16.gmra.mxu0 %v1375
        %v4533 = vpop.f32.mrf.mxu0
        %v4534 = vadd.f32 0.0, %v4533
        %v4535 = vpop.f32.mrf.mxu0
        %v4536 = vpop.f32.mrf.mxu0
        %v4537 = vpop.f32.mrf.mxu0
        %4538 = vmatprep.mubr.bf16.mxu0 0
        %4539 = vmatmul.mubr.bf16.gmra.mxu0 %v1376
        %v4540 = vpop.f32.mrf.mxu0
        %v4541 = vadd.f32 0.0, %v4540
        %v4542 = vpop.f32.mrf.mxu0
        %v4543 = vpop.f32.mrf.mxu0
        %v4544 = vadd.f32 0.0, %v4543
        %v4545 = vpop.f32.mrf.mxu0
        %4546 = vmatprep.mubr.bf16.mxu0 0
        %4547 = vmatmul.mubr.bf16.gmra.mxu0 %v1377
        %v4548 = vpop.f32.mrf.mxu0
        %v4549 = vadd.f32 0.0, %v4548
        %v4550 = vpop.f32.mrf.mxu0
        %v4551 = vpop.f32.mrf.mxu0
        %v4552 = vpop.f32.mrf.mxu0
        %4553 = vmatprep.mubr.bf16.mxu0 0
        %4554 = vmatmul.mubr.bf16.gmra.mxu0 %v1378
        %v4555 = vpop.f32.mrf.mxu0
        %v4556 = vadd.f32 0.0, %v4555
        %v4557 = vpop.f32.mrf.mxu0
        %v4558 = vpop.f32.mrf.mxu0
        %v4559 = vadd.f32 0.0, %v4558
        %v4560 = vpop.f32.mrf.mxu0
        %4561 = vmatprep.mubr.bf16.mxu0 0
        %4562 = vmatmul.mubr.bf16.gmra.mxu0 %v1379
        %v4563 = vpop.f32.mrf.mxu0
        %v4564 = vadd.f32 0.0, %v4563
        %v4565 = vpop.f32.mrf.mxu0
        %v4566 = vpop.f32.mrf.mxu0
        %v4567 = vpop.f32.mrf.mxu0
        %4568 = vmatprep.mubr.bf16.mxu0 0
        %4569 = vmatmul.mubr.bf16.gmra.mxu0 %v1380
        %v4570 = vpop.f32.mrf.mxu0
        %v4571 = vadd.f32 0.0, %v4570
        %v4572 = vpop.f32.mrf.mxu0
        %v4573 = vpop.f32.mrf.mxu0
        %v4574 = vadd.f32 0.0, %v4573
        %v4575 = vpop.f32.mrf.mxu0
        %4576 = vmatprep.mubr.bf16.mxu0 0
        %4577 = vmatmul.mubr.bf16.gmra.mxu0 %v1381
        %v4578 = vpop.f32.mrf.mxu0
        %v4579 = vadd.f32 0.0, %v4578
        %v4580 = vpop.f32.mrf.mxu0
        %v4581 = vpop.f32.mrf.mxu0
        %v4582 = vpop.f32.mrf.mxu0
        %4583 = vmatprep.mubr.bf16.mxu0 0
        %4584 = vmatmul.mubr.bf16.gmra.mxu0 %v1382
        %v4585 = vpop.f32.mrf.mxu0
        %v4586 = vadd.f32 0.0, %v4585
        %v4587 = vpop.f32.mrf.mxu0
        %v4588 = vpop.f32.mrf.mxu0
        %v4589 = vadd.f32 0.0, %v4588
        %v4590 = vpop.f32.mrf.mxu0
        %4591 = vmatprep.mubr.bf16.mxu0 0
        %4592 = vmatmul.mubr.bf16.gmra.mxu0 %v1383
        %v4593 = vpop.f32.mrf.mxu0
        %v4594 = vadd.f32 0.0, %v4593
        %v4595 = vpop.f32.mrf.mxu0
        %v4596 = vpop.f32.mrf.mxu0
        %v4597 = vpop.f32.mrf.mxu0
        %4598 = vmatprep.mubr.bf16.mxu0 0
        %4599 = vmatmul.mubr.bf16.gmra.mxu0 %v1384
        %v4600 = vpop.f32.mrf.mxu0
        %v4601 = vadd.f32 0.0, %v4600
        %v4602 = vpop.f32.mrf.mxu0
        %v4603 = vpop.f32.mrf.mxu0
        %v4604 = vadd.f32 0.0, %v4603
        %v4605 = vpop.f32.mrf.mxu0
        %4606 = vmatprep.mubr.bf16.mxu0 0
        %4607 = vmatmul.mubr.bf16.gmra.mxu0 %v1385
        %v4608 = vpop.f32.mrf.mxu0
        %v4609 = vadd.f32 0.0, %v4608
        %v4610 = vpop.f32.mrf.mxu0
        %v4611 = vpop.f32.mrf.mxu0
        %v4612 = vpop.f32.mrf.mxu0
        %4613 = vmatprep.mubr.bf16.mxu0 0
        %4614 = vmatmul.mubr.bf16.gmra.mxu0 %v1386
        %v4615 = vpop.f32.mrf.mxu0
        %v4616 = vadd.f32 0.0, %v4615
        %v4617 = vpop.f32.mrf.mxu0
        %v4618 = vpop.f32.mrf.mxu0
        %v4619 = vadd.f32 0.0, %v4618
        %v4620 = vpop.f32.mrf.mxu0
        %4621 = vmatprep.mubr.bf16.mxu0 0
        %4622 = vmatmul.mubr.bf16.gmra.mxu0 %v1387
        %v4623 = vpop.f32.mrf.mxu0
        %v4624 = vadd.f32 0.0, %v4623
        %v4625 = vpop.f32.mrf.mxu0
        %v4626 = vpop.f32.mrf.mxu0
        %v4627 = vpop.f32.mrf.mxu0
        %4628 = vmatprep.mubr.bf16.mxu0 0
        %4629 = vmatmul.mubr.bf16.gmra.mxu0 %v1388
        %v4630 = vpop.f32.mrf.mxu0
        %v4631 = vadd.f32 0.0, %v4630
        %v4632 = vpop.f32.mrf.mxu0
        %v4633 = vpop.f32.mrf.mxu0
        %v4634 = vadd.f32 0.0, %v4633
        %v4635 = vpop.f32.mrf.mxu0
        %4636 = vmatprep.mubr.bf16.mxu0 0
        %4637 = vmatmul.mubr.bf16.gmra.mxu0 %v1389
        %v4638 = vpop.f32.mrf.mxu0
        %v4639 = vadd.f32 0.0, %v4638
        %v4640 = vpop.f32.mrf.mxu0
        %v4641 = vpop.f32.mrf.mxu0
        %v4642 = vpop.f32.mrf.mxu0
        %4643 = vmatprep.mubr.bf16.mxu0 0
        %4644 = vmatmul.mubr.bf16.gmra.mxu0 %v1390
        %v4645 = vpop.f32.mrf.mxu0
        %v4646 = vadd.f32 0.0, %v4645
        %v4647 = vpop.f32.mrf.mxu0
        %v4648 = vpop.f32.mrf.mxu0
        %v4649 = vadd.f32 0.0, %v4648
        %v4650 = vpop.f32.mrf.mxu0
        %4651 = vmatprep.mubr.bf16.mxu0 0
        %4652 = vmatmul.mubr.bf16.gmra.mxu0 %v1391
        %v4653 = vpop.f32.mrf.mxu0
        %v4654 = vadd.f32 0.0, %v4653
        %v4655 = vpop.f32.mrf.mxu0
        %v4656 = vpop.f32.mrf.mxu0
        %v4657 = vpop.f32.mrf.mxu0
        %4658 = vmatprep.mubr.bf16.mxu0 0
        %4659 = vmatmul.mubr.bf16.gmra.mxu0 %v2070
        %v4660 = vpop.f32.mrf.mxu0
        %v4661 = vadd.f32 0.0, %v4660
        %v4662 = vpop.f32.mrf.mxu0
        %v4663 = vpop.f32.mrf.mxu0
        %v4664 = vadd.f32 0.0, %v4663
        %v4665 = vpop.f32.mrf.mxu0
        %4666 = vmatprep.mubr.bf16.mxu0 0
        %4667 = vmatmul.mubr.bf16.gmra.mxu0 %v2071
        %v4668 = vpop.f32.mrf.mxu0
        %v4669 = vadd.f32 0.0, %v4668
        %v4670 = vpop.f32.mrf.mxu0
        %v4671 = vpop.f32.mrf.mxu0
        %v4672 = vpop.f32.mrf.mxu0
        %4673 = vdwg.mxu0
        %v4674 = vadd.f32 %v4099, %v4436
        %v4675 = vadd.f32 %v4102, %v4439
        %v4676 = vadd.f32 %v4107, %v4444
        %v4677 = vadd.f32 %v4114, %v4451
        %v4678 = vadd.f32 %v4117, %v4454
        %v4679 = vadd.f32 %v4122, %v4459
        %v4680 = vadd.f32 %v4129, %v4466
        %v4681 = vadd.f32 %v4132, %v4469
        %v4682 = vadd.f32 %v4137, %v4474
        %v4683 = vadd.f32 %v4144, %v4481
        %v4684 = vadd.f32 %v4147, %v4484
        %v4685 = vadd.f32 %v4152, %v4489
        %v4686 = vadd.f32 %v4159, %v4496
        %v4687 = vadd.f32 %v4162, %v4499
        %v4688 = vadd.f32 %v4167, %v4504
        %v4689 = vadd.f32 %v4174, %v4511
        %v4690 = vadd.f32 %v4177, %v4514
        %v4691 = vadd.f32 %v4182, %v4519
        %v4692 = vadd.f32 %v4189, %v4526
        %v4693 = vadd.f32 %v4192, %v4529
        %v4694 = vadd.f32 %v4197, %v4534
        %v4695 = vadd.f32 %v4204, %v4541
        %v4696 = vadd.f32 %v4207, %v4544
        %v4697 = vadd.f32 %v4212, %v4549
        %v4698 = vadd.f32 %v4219, %v4556
        %v4699 = vadd.f32 %v4222, %v4559
        %v4700 = vadd.f32 %v4227, %v4564
        %v4701 = vadd.f32 %v4234, %v4571
        %v4702 = vadd.f32 %v4237, %v4574
        %v4703 = vadd.f32 %v4242, %v4579
        %v4704 = vadd.f32 %v4249, %v4586
        %v4705 = vadd.f32 %v4252, %v4589
        %v4706 = vadd.f32 %v4257, %v4594
        %v4707 = vadd.f32 %v4264, %v4601
        %v4708 = vadd.f32 %v4267, %v4604
        %v4709 = vadd.f32 %v4272, %v4609
        %v4710 = vadd.f32 %v4279, %v4616
        %v4711 = vadd.f32 %v4282, %v4619
        %v4712 = vadd.f32 %v4287, %v4624
        %v4713 = vadd.f32 %v4294, %v4631
        %v4714 = vadd.f32 %v4297, %v4634
        %v4715 = vadd.f32 %v4302, %v4639
        %v4716 = vadd.f32 %v4309, %v4646
        %v4717 = vadd.f32 %v4312, %v4649
        %v4718 = vadd.f32 %v4317, %v4654
        %v4719 = vadd.f32 %v4324, %v4661
        %v4720 = vadd.f32 %v4327, %v4664
        %v4721 = vadd.f32 %v4332, %v4669
        %vm4770 = vcmask 1045504
        %v4771 = vrot.slane %v4674, 2
        %v4772 = vrot.slane %v4675, 2
        %v4773 = vsel %vm4770, %v4771, %v4772
        %v4774 = vrot.slane %v4676, 2
        %v4775 = vsel %vm4770, %v4772, %v4774
        %v4776 = vrot.slane %v4677, 2
        %v4777 = vrot.slane %v4678, 2
        %v4778 = vsel %vm4770, %v4776, %v4777
        %v4779 = vrot.slane %v4679, 2
        %v4780 = vsel %vm4770, %v4777, %v4779
        %v4781 = vrot.slane %v4680, 2
        %v4782 = vrot.slane %v4681, 2
        %v4783 = vsel %vm4770, %v4781, %v4782
        %v4784 = vrot.slane %v4682, 2
        %v4785 = vsel %vm4770, %v4782, %v4784
        %v4786 = vrot.slane %v4683, 2
        %v4787 = vrot.slane %v4684, 2
        %v4788 = vsel %vm4770, %v4786, %v4787
        %v4789 = vrot.slane %v4685, 2
        %v4790 = vsel %vm4770, %v4787, %v4789
        %v4791 = vrot.slane %v4686, 2
        %v4792 = vrot.slane %v4687, 2
        %v4793 = vsel %vm4770, %v4791, %v4792
        %v4794 = vrot.slane %v4688, 2
        %v4795 = vsel %vm4770, %v4792, %v4794
        %v4796 = vrot.slane %v4689, 2
        %v4797 = vrot.slane %v4690, 2
        %v4798 = vsel %vm4770, %v4796, %v4797
        %v4799 = vrot.slane %v4691, 2
        %v4800 = vsel %vm4770, %v4797, %v4799
        %v4801 = vrot.slane %v4692, 2
        %v4802 = vrot.slane %v4693, 2
        %v4803 = vsel %vm4770, %v4801, %v4802
        %v4804 = vrot.slane %v4694, 2
        %v4805 = vsel %vm4770, %v4802, %v4804
        %v4806 = vrot.slane %v4695, 2
        %v4807 = vrot.slane %v4696, 2
        %v4808 = vsel %vm4770, %v4806, %v4807
        %v4809 = vrot.slane %v4697, 2
        %v4810 = vsel %vm4770, %v4807, %v4809
        %v4811 = vrot.slane %v4698, 2
        %v4812 = vrot.slane %v4699, 2
        %v4813 = vsel %vm4770, %v4811, %v4812
        %v4814 = vrot.slane %v4700, 2
        %v4815 = vsel %vm4770, %v4812, %v4814
        %v4816 = vrot.slane %v4701, 2
        %v4817 = vrot.slane %v4702, 2
        %v4818 = vsel %vm4770, %v4816, %v4817
        %v4819 = vrot.slane %v4703, 2
        %v4820 = vsel %vm4770, %v4817, %v4819
        %v4821 = vrot.slane %v4704, 2
        %v4822 = vrot.slane %v4705, 2
        %v4823 = vsel %vm4770, %v4821, %v4822
        %v4824 = vrot.slane %v4706, 2
        %v4825 = vsel %vm4770, %v4822, %v4824
        %v4826 = vrot.slane %v4707, 2
        %v4827 = vrot.slane %v4708, 2
        %v4828 = vsel %vm4770, %v4826, %v4827
        %v4829 = vrot.slane %v4709, 2
        %v4830 = vsel %vm4770, %v4827, %v4829
        %v4831 = vrot.slane %v4710, 2
        %v4832 = vrot.slane %v4711, 2
        %v4833 = vsel %vm4770, %v4831, %v4832
        %v4834 = vrot.slane %v4712, 2
        %v4835 = vsel %vm4770, %v4832, %v4834
        %v4836 = vrot.slane %v4713, 2
        %v4837 = vrot.slane %v4714, 2
        %v4838 = vsel %vm4770, %v4836, %v4837
        %v4839 = vrot.slane %v4715, 2
        %v4840 = vsel %vm4770, %v4837, %v4839
        %v4841 = vrot.slane %v4716, 2
        %v4842 = vrot.slane %v4717, 2
        %v4843 = vsel %vm4770, %v4841, %v4842
        %v4844 = vrot.slane %v4718, 2
        %v4845 = vsel %vm4770, %v4842, %v4844
        %v4846 = vrot.slane %v4719, 2
        %v4847 = vrot.slane %v4720, 2
        %v4848 = vsel %vm4770, %v4846, %v4847
        %v4849 = vrot.slane %v4721, 2
        %v4850 = vsel %vm4770, %v4847, %v4849
        %v4883 = vadd.f32 %v3631, %v4773
        %v4884 = vadd.f32 %v3632, %v4775
        %v4885 = vadd.f32 %v3633, %v4778
        %v4886 = vadd.f32 %v3634, %v4780
        %v4887 = vadd.f32 %v3635, %v4783
        %v4888 = vadd.f32 %v3636, %v4785
        %v4889 = vadd.f32 %v3637, %v4788
        %v4890 = vadd.f32 %v3638, %v4790
        %v4891 = vadd.f32 %v3639, %v4793
        %v4892 = vadd.f32 %v3640, %v4795
        %v4893 = vadd.f32 %v3641, %v4798
        %v4894 = vadd.f32 %v3642, %v4800
        %v4895 = vadd.f32 %v3643, %v4803
        %v4896 = vadd.f32 %v3644, %v4805
        %v4897 = vadd.f32 %v3645, %v4808
        %v4898 = vadd.f32 %v3646, %v4810
        %v4899 = vadd.f32 %v3647, %v4813
        %v4900 = vadd.f32 %v3648, %v4815
        %v4901 = vadd.f32 %v3649, %v4818
        %v4902 = vadd.f32 %v3650, %v4820
        %v4903 = vadd.f32 %v3651, %v4823
        %v4904 = vadd.f32 %v3652, %v4825
        %v4905 = vadd.f32 %v3653, %v4828
        %v4906 = vadd.f32 %v3654, %v4830
        %v4907 = vadd.f32 %v3655, %v4833
        %v4908 = vadd.f32 %v3656, %v4835
        %v4909 = vadd.f32 %v3657, %v4838
        %v4910 = vadd.f32 %v3658, %v4840
        %v4911 = vadd.f32 %v3659, %v4843
        %v4912 = vadd.f32 %v3660, %v4845
        %v4913 = vadd.f32 %v3661, %v4848
        %v4914 = vadd.f32 %v3662, %v4850
        %v4915 = vadd.f32 %v4883, %v4884
        %v4916 = vadd.f32 %v4915, %v4885
        %v4917 = vadd.f32 %v4916, %v4886
        %v4918 = vadd.f32 %v4917, %v4887
        %v4919 = vadd.f32 %v4918, %v4888
        %v4920 = vadd.f32 %v4919, %v4889
        %v4921 = vadd.f32 %v4920, %v4890
        %v4922 = vadd.f32 %v4921, %v4891
        %v4923 = vadd.f32 %v4922, %v4892
        %v4924 = vadd.f32 %v4923, %v4893
        %v4925 = vadd.f32 %v4924, %v4894
        %v4926 = vadd.f32 %v4925, %v4895
        %v4927 = vadd.f32 %v4926, %v4896
        %v4928 = vadd.f32 %v4927, %v4897
        %v4929 = vadd.f32 %v4928, %v4898
        %v4930 = vadd.f32 %v4929, %v4899
        %v4931 = vadd.f32 %v4930, %v4900
        %v4932 = vadd.f32 %v4931, %v4901
        %v4933 = vadd.f32 %v4932, %v4902
        %v4934 = vadd.f32 %v4933, %v4903
        %v4935 = vadd.f32 %v4934, %v4904
        %v4936 = vadd.f32 %v4935, %v4905
        %v4937 = vadd.f32 %v4936, %v4906
        %v4938 = vadd.f32 %v4937, %v4907
        %v4939 = vadd.f32 %v4938, %v4908
        %v4940 = vadd.f32 %v4939, %v4909
        %v4941 = vadd.f32 %v4940, %v4910
        %v4942 = vadd.f32 %v4941, %v4911
        %v4943 = vadd.f32 %v4942, %v4912
        %v4944 = vadd.f32 %v4943, %v4913
        %v4945 = vadd.f32 %v4944, %v4914
        %v4946 = vrot.slane %v4945, 4
        %v4947 = vadd.f32 %v4945, %v4946
        %v4948 = vrot.slane %v4947, 2
        %v4949 = vadd.f32 %v4947, %v4948
        %v4950 = vrot.slane %v4949, 1
        %v4951 = vadd.f32 %v4949, %v4950
        %v4952 = vmul.f32 %v4951, 0.00390625
        %v4953 = vmul.f32 %v4883, %v4883
        %v4954 = vmul.f32 %v4884, %v4884
        %v4955 = vmul.f32 %v4885, %v4885
        %v4956 = vmul.f32 %v4886, %v4886
        %v4957 = vmul.f32 %v4887, %v4887
        %v4958 = vmul.f32 %v4888, %v4888
        %v4959 = vmul.f32 %v4889, %v4889
        %v4960 = vmul.f32 %v4890, %v4890
        %v4961 = vmul.f32 %v4891, %v4891
        %v4962 = vmul.f32 %v4892, %v4892
        %v4963 = vmul.f32 %v4893, %v4893
        %v4964 = vmul.f32 %v4894, %v4894
        %v4965 = vmul.f32 %v4895, %v4895
        %v4966 = vmul.f32 %v4896, %v4896
        %v4967 = vmul.f32 %v4897, %v4897
        %v4968 = vmul.f32 %v4898, %v4898
        %v4969 = vmul.f32 %v4899, %v4899
        %v4970 = vmul.f32 %v4900, %v4900
        %v4971 = vmul.f32 %v4901, %v4901
        %v4972 = vmul.f32 %v4902, %v4902
        %v4973 = vmul.f32 %v4903, %v4903
        %v4974 = vmul.f32 %v4904, %v4904
        %v4975 = vmul.f32 %v4905, %v4905
        %v4976 = vmul.f32 %v4906, %v4906
        %v4977 = vmul.f32 %v4907, %v4907
        %v4978 = vmul.f32 %v4908, %v4908
        %v4979 = vmul.f32 %v4909, %v4909
        %v4980 = vmul.f32 %v4910, %v4910
        %v4981 = vmul.f32 %v4911, %v4911
        %v4982 = vmul.f32 %v4912, %v4912
        %v4983 = vmul.f32 %v4913, %v4913
        %v4984 = vmul.f32 %v4914, %v4914
        %v4985 = vadd.f32 %v4953, %v4954
        %v4986 = vadd.f32 %v4985, %v4955
        %v4987 = vadd.f32 %v4986, %v4956
        %v4988 = vadd.f32 %v4987, %v4957
        %v4989 = vadd.f32 %v4988, %v4958
        %v4990 = vadd.f32 %v4989, %v4959
        %v4991 = vadd.f32 %v4990, %v4960
        %v4992 = vadd.f32 %v4991, %v4961
        %v4993 = vadd.f32 %v4992, %v4962
        %v4994 = vadd.f32 %v4993, %v4963
        %v4995 = vadd.f32 %v4994, %v4964
        %v4996 = vadd.f32 %v4995, %v4965
        %v4997 = vadd.f32 %v4996, %v4966
        %v4998 = vadd.f32 %v4997, %v4967
        %v4999 = vadd.f32 %v4998, %v4968
        %v5000 = vadd.f32 %v4999, %v4969
        %v5001 = vadd.f32 %v5000, %v4970
        %v5002 = vadd.f32 %v5001, %v4971
        %v5003 = vadd.f32 %v5002, %v4972
        %v5004 = vadd.f32 %v5003, %v4973
        %v5005 = vadd.f32 %v5004, %v4974
        %v5006 = vadd.f32 %v5005, %v4975
        %v5007 = vadd.f32 %v5006, %v4976
        %v5008 = vadd.f32 %v5007, %v4977
        %v5009 = vadd.f32 %v5008, %v4978
        %v5010 = vadd.f32 %v5009, %v4979
        %v5011 = vadd.f32 %v5010, %v4980
        %v5012 = vadd.f32 %v5011, %v4981
        %v5013 = vadd.f32 %v5012, %v4982
        %v5014 = vadd.f32 %v5013, %v4983
        %v5015 = vadd.f32 %v5014, %v4984
        %v5016 = vrot.slane %v5015, 4
        %v5017 = vadd.f32 %v5015, %v5016
        %v5018 = vrot.slane %v5017, 2
        %v5019 = vadd.f32 %v5017, %v5018
        %v5020 = vrot.slane %v5019, 1
        %v5021 = vadd.f32 %v5019, %v5020
        %v5022 = vmul.f32 %v5021, 0.00390625
        %v5023 = vmul.f32 %v4952, %v4952
        %v5024 = vsub.f32 %v5022, %v5023
        %v5025 = vadd.f32 %v5024, 1e-05
        %v5026 = vrsqrt.pop %v5025
        %v5027 = vsub.f32 0.0, %v4952
        %v5028 = vmul.f32 %v5027, %v5026
        %v5029 = vmul.f32 %v4883, %v5026
        %v5030 = vmul.f32 %v4884, %v5026
        %v5031 = vmul.f32 %v4885, %v5026
        %v5032 = vmul.f32 %v4886, %v5026
        %v5033 = vmul.f32 %v4887, %v5026
        %v5034 = vmul.f32 %v4888, %v5026
        %v5035 = vmul.f32 %v4889, %v5026
        %v5036 = vmul.f32 %v4890, %v5026
        %v5037 = vmul.f32 %v4891, %v5026
        %v5038 = vmul.f32 %v4892, %v5026
        %v5039 = vmul.f32 %v4893, %v5026
        %v5040 = vmul.f32 %v4894, %v5026
        %v5041 = vmul.f32 %v4895, %v5026
        %v5042 = vmul.f32 %v4896, %v5026
        %v5043 = vmul.f32 %v4897, %v5026
        %v5044 = vmul.f32 %v4898, %v5026
        %v5045 = vmul.f32 %v4899, %v5026
        %v5046 = vmul.f32 %v4900, %v5026
        %v5047 = vmul.f32 %v4901, %v5026
        %v5048 = vmul.f32 %v4902, %v5026
        %v5049 = vmul.f32 %v4903, %v5026
        %v5050 = vmul.f32 %v4904, %v5026
        %v5051 = vmul.f32 %v4905, %v5026
        %v5052 = vmul.f32 %v4906, %v5026
        %v5053 = vmul.f32 %v4907, %v5026
        %v5054 = vmul.f32 %v4908, %v5026
        %v5055 = vmul.f32 %v4909, %v5026
        %v5056 = vmul.f32 %v4910, %v5026
        %v5057 = vmul.f32 %v4911, %v5026
        %v5058 = vmul.f32 %v4912, %v5026
        %v5059 = vmul.f32 %v4913, %v5026
        %v5060 = vmul.f32 %v4914, %v5026
        %v5061 = vadd.f32 %v5029, %v5028
        %v5062 = vadd.f32 %v5030, %v5028
        %v5063 = vadd.f32 %v5031, %v5028
        %v5064 = vadd.f32 %v5032, %v5028
        %v5065 = vadd.f32 %v5033, %v5028
        %v5066 = vadd.f32 %v5034, %v5028
        %v5067 = vadd.f32 %v5035, %v5028
        %v5068 = vadd.f32 %v5036, %v5028
        %v5069 = vadd.f32 %v5037, %v5028
        %v5070 = vadd.f32 %v5038, %v5028
        %v5071 = vadd.f32 %v5039, %v5028
        %v5072 = vadd.f32 %v5040, %v5028
        %v5073 = vadd.f32 %v5041, %v5028
        %v5074 = vadd.f32 %v5042, %v5028
        %v5075 = vadd.f32 %v5043, %v5028
        %v5076 = vadd.f32 %v5044, %v5028
        %v5077 = vadd.f32 %v5045, %v5028
        %v5078 = vadd.f32 %v5046, %v5028
        %v5079 = vadd.f32 %v5047, %v5028
        %v5080 = vadd.f32 %v5048, %v5028
        %v5081 = vadd.f32 %v5049, %v5028
        %v5082 = vadd.f32 %v5050, %v5028
        %v5083 = vadd.f32 %v5051, %v5028
        %v5084 = vadd.f32 %v5052, %v5028
        %v5085 = vadd.f32 %v5053, %v5028
        %v5086 = vadd.f32 %v5054, %v5028
        %v5087 = vadd.f32 %v5055, %v5028
        %v5088 = vadd.f32 %v5056, %v5028
        %v5089 = vadd.f32 %v5057, %v5028
        %v5090 = vadd.f32 %v5058, %v5028
        %v5091 = vadd.f32 %v5059, %v5028
        %v5092 = vadd.f32 %v5060, %v5028
        %v5093 = vmax.f32 %v5061, 0.0
        %v5094 = vmax.f32 %v5062, 0.0
        %v5095 = vmax.f32 %v5063, 0.0
        %v5096 = vmax.f32 %v5064, 0.0
        %v5097 = vmax.f32 %v5065, 0.0
        %v5098 = vmax.f32 %v5066, 0.0
        %v5099 = vmax.f32 %v5067, 0.0
        %v5100 = vmax.f32 %v5068, 0.0
        %v5101 = vmax.f32 %v5069, 0.0
        %v5102 = vmax.f32 %v5070, 0.0
        %v5103 = vmax.f32 %v5071, 0.0
        %v5104 = vmax.f32 %v5072, 0.0
        %v5105 = vmax.f32 %v5073, 0.0
        %v5106 = vmax.f32 %v5074, 0.0
        %v5107 = vmax.f32 %v5075, 0.0
        %v5108 = vmax.f32 %v5076, 0.0
        %v5109 = vmax.f32 %v5077, 0.0
        %v5110 = vmax.f32 %v5078, 0.0
        %v5111 = vmax.f32 %v5079, 0.0
        %v5112 = vmax.f32 %v5080, 0.0
        %v5113 = vmax.f32 %v5081, 0.0
        %v5114 = vmax.f32 %v5082, 0.0
        %v5115 = vmax.f32 %v5083, 0.0
        %v5116 = vmax.f32 %v5084, 0.0
        %v5117 = vmax.f32 %v5085, 0.0
        %v5118 = vmax.f32 %v5086, 0.0
        %v5119 = vmax.f32 %v5087, 0.0
        %v5120 = vmax.f32 %v5088, 0.0
        %v5121 = vmax.f32 %v5089, 0.0
        %v5122 = vmax.f32 %v5090, 0.0
        %v5123 = vmax.f32 %v5091, 0.0
        %v5124 = vmax.f32 %v5092, 0.0
        %v5125 = vpack.c.bf16 %v5094, %v5093
        %v5126 = vpack.c.bf16 %v5096, %v5095
        %v5127 = vpack.c.bf16 %v5098, %v5097
        %v5128 = vpack.c.bf16 %v5100, %v5099
        %v5129 = vpack.c.bf16 %v5102, %v5101
        %v5130 = vpack.c.bf16 %v5104, %v5103
        %v5131 = vpack.c.bf16 %v5106, %v5105
        %v5132 = vpack.c.bf16 %v5108, %v5107
        %v5133 = vpack.c.bf16 %v5110, %v5109
        %v5134 = vpack.c.bf16 %v5112, %v5111
        %v5135 = vpack.c.bf16 %v5114, %v5113
        %v5136 = vpack.c.bf16 %v5116, %v5115
        %v5137 = vpack.c.bf16 %v5118, %v5117
        %v5138 = vpack.c.bf16 %v5120, %v5119
        %v5139 = vpack.c.bf16 %v5122, %v5121
        %v5140 = vpack.c.bf16 %v5124, %v5123
        %v5157 = vunpack.c.l.b16 %v5125
        %v5158 = vunpack.c.h.b16 %v5125
        %v5159 = vunpack.c.l.b16 %v5126
        %v5160 = vunpack.c.h.b16 %v5126
        %v5161 = vunpack.c.l.b16 %v5127
        %v5162 = vunpack.c.h.b16 %v5127
        %v5163 = vunpack.c.l.b16 %v5128
        %v5164 = vunpack.c.h.b16 %v5128
        %v5165 = vunpack.c.l.b16 %v5129
        %v5166 = vunpack.c.h.b16 %v5129
        %v5167 = vunpack.c.l.b16 %v5130
        %v5168 = vunpack.c.h.b16 %v5130
        %v5169 = vunpack.c.l.b16 %v5131
        %v5170 = vunpack.c.h.b16 %v5131
        %v5171 = vunpack.c.l.b16 %v5132
        %v5172 = vunpack.c.h.b16 %v5132
        %v5173 = vunpack.c.l.b16 %v5133
        %v5174 = vunpack.c.h.b16 %v5133
        %v5175 = vunpack.c.l.b16 %v5134
        %v5176 = vunpack.c.h.b16 %v5134
        %v5177 = vunpack.c.l.b16 %v5135
        %v5178 = vunpack.c.h.b16 %v5135
        %v5179 = vunpack.c.l.b16 %v5136
        %v5180 = vunpack.c.h.b16 %v5136
        %v5181 = vunpack.c.l.b16 %v5137
        %v5182 = vunpack.c.h.b16 %v5137
        %v5183 = vunpack.c.l.b16 %v5138
        %v5184 = vunpack.c.h.b16 %v5138
        %v5185 = vunpack.c.l.b16 %v5139
        %v5186 = vunpack.c.h.b16 %v5139
        %v5187 = vunpack.c.l.b16 %v5140
        %v5188 = vunpack.c.h.b16 %v5140
        %v5189 = vpack.c.b16 %v5157, %v5157
        %v5190 = vpack.c.b16 %v5158, %v5158
        %v5191 = vpack.c.b16 %v5159, %v5159
        %v5192 = vpack.c.b16 %v5160, %v5160
        %v5193 = vpack.c.b16 %v5161, %v5161
        %v5194 = vpack.c.b16 %v5162, %v5162
        %v5195 = vpack.c.b16 %v5163, %v5163
        %v5196 = vpack.c.b16 %v5164, %v5164
        %v5197 = vpack.c.b16 %v5165, %v5165
        %v5198 = vpack.c.b16 %v5166, %v5166
        %v5199 = vpack.c.b16 %v5167, %v5167
        %v5200 = vpack.c.b16 %v5168, %v5168
        %v5201 = vpack.c.b16 %v5169, %v5169
        %v5202 = vpack.c.b16 %v5170, %v5170
        %v5203 = vpack.c.b16 %v5171, %v5171
        %v5204 = vpack.c.b16 %v5172, %v5172
        %v5205 = vpack.c.b16 %v5173, %v5173
        %v5206 = vpack.c.b16 %v5174, %v5174
        %v5207 = vpack.c.b16 %v5175, %v5175
        %v5208 = vpack.c.b16 %v5176, %v5176
        %v5209 = vpack.c.b16 %v5177, %v5177
        %v5210 = vpack.c.b16 %v5178, %v5178
        %v5211 = vpack.c.b16 %v5179, %v5179
        %v5212 = vpack.c.b16 %v5180, %v5180
        %v5213 = vpack.c.b16 %v5181, %v5181
        %v5214 = vpack.c.b16 %v5182, %v5182
        %v5215 = vpack.c.b16 %v5183, %v5183
        %v5216 = vpack.c.b16 %v5184, %v5184
        %v5217 = vpack.c.b16 %v5185, %v5185
        %v5218 = vpack.c.b16 %v5186, %v5186
        %v5219 = vpack.c.b16 %v5187, %v5187
        %v5220 = vpack.c.b16 %v5188, %v5188
        %v5222 = vshrl.u32 %v5189, 16
        %v5224 = vrot.slane %v5222, 7
        %v5225 = vshll.u32 %v5189, 16
        %v5227 = vor.u32 %v5224, %v5225
        %v5228 = vrot.slane %v5224, 4
        %v5230 = vshrl.u32 %v5190, 16
        %v5232 = vrot.slane %v5230, 7
        %v5233 = vshll.u32 %v5190, 16
        %v5235 = vor.u32 %v5232, %v5233
        %v5236 = vsel %vm385, %v5228, %v5235
        %v5237 = vrot.slane %v5232, 4
        %v5239 = vshrl.u32 %v5191, 16
        %v5241 = vrot.slane %v5239, 7
        %v5242 = vshll.u32 %v5191, 16
        %v5244 = vor.u32 %v5241, %v5242
        %v5245 = vrot.slane %v5241, 4
        %v5247 = vshrl.u32 %v5192, 16
        %v5249 = vrot.slane %v5247, 7
        %v5250 = vshll.u32 %v5192, 16
        %v5252 = vor.u32 %v5249, %v5250
        %v5253 = vsel %vm385, %v5245, %v5252
        %v5254 = vrot.slane %v5249, 4
        %v5256 = vshrl.u32 %v5193, 16
        %v5258 = vrot.slane %v5256, 7
        %v5259 = vshll.u32 %v5193, 16
        %v5261 = vor.u32 %v5258, %v5259
        %v5262 = vrot.slane %v5258, 4
        %v5264 = vshrl.u32 %v5194, 16
        %v5266 = vrot.slane %v5264, 7
        %v5267 = vshll.u32 %v5194, 16
        %v5269 = vor.u32 %v5266, %v5267
        %v5270 = vsel %vm385, %v5262, %v5269
        %v5271 = vrot.slane %v5266, 4
        %v5273 = vshrl.u32 %v5195, 16
        %v5275 = vrot.slane %v5273, 7
        %v5276 = vshll.u32 %v5195, 16
        %v5278 = vor.u32 %v5275, %v5276
        %v5279 = vrot.slane %v5275, 4
        %v5281 = vshrl.u32 %v5196, 16
        %v5283 = vrot.slane %v5281, 7
        %v5284 = vshll.u32 %v5196, 16
        %v5286 = vor.u32 %v5283, %v5284
        %v5287 = vsel %vm385, %v5279, %v5286
        %v5288 = vrot.slane %v5283, 4
        %v5290 = vshrl.u32 %v5197, 16
        %v5292 = vrot.slane %v5290, 7
        %v5293 = vshll.u32 %v5197, 16
        %v5295 = vor.u32 %v5292, %v5293
        %v5296 = vrot.slane %v5292, 4
        %v5298 = vshrl.u32 %v5198, 16
        %v5300 = vrot.slane %v5298, 7
        %v5301 = vshll.u32 %v5198, 16
        %v5303 = vor.u32 %v5300, %v5301
        %v5304 = vsel %vm385, %v5296, %v5303
        %v5305 = vrot.slane %v5300, 4
        %v5307 = vshrl.u32 %v5199, 16
        %v5309 = vrot.slane %v5307, 7
        %v5310 = vshll.u32 %v5199, 16
        %v5312 = vor.u32 %v5309, %v5310
        %v5313 = vrot.slane %v5309, 4
        %v5315 = vshrl.u32 %v5200, 16
        %v5317 = vrot.slane %v5315, 7
        %v5318 = vshll.u32 %v5200, 16
        %v5320 = vor.u32 %v5317, %v5318
        %v5321 = vsel %vm385, %v5313, %v5320
        %v5322 = vrot.slane %v5317, 4
        %v5324 = vshrl.u32 %v5201, 16
        %v5326 = vrot.slane %v5324, 7
        %v5327 = vshll.u32 %v5201, 16
        %v5329 = vor.u32 %v5326, %v5327
        %v5330 = vrot.slane %v5326, 4
        %v5332 = vshrl.u32 %v5202, 16
        %v5334 = vrot.slane %v5332, 7
        %v5335 = vshll.u32 %v5202, 16
        %v5337 = vor.u32 %v5334, %v5335
        %v5338 = vsel %vm385, %v5330, %v5337
        %v5339 = vrot.slane %v5334, 4
        %v5341 = vshrl.u32 %v5203, 16
        %v5343 = vrot.slane %v5341, 7
        %v5344 = vshll.u32 %v5203, 16
        %v5346 = vor.u32 %v5343, %v5344
        %v5347 = vrot.slane %v5343, 4
        %v5349 = vshrl.u32 %v5204, 16
        %v5351 = vrot.slane %v5349, 7
        %v5352 = vshll.u32 %v5204, 16
        %v5354 = vor.u32 %v5351, %v5352
        %v5355 = vsel %vm385, %v5347, %v5354
        %v5356 = vrot.slane %v5351, 4
        %v5358 = vshrl.u32 %v5205, 16
        %v5360 = vrot.slane %v5358, 7
        %v5361 = vshll.u32 %v5205, 16
        %v5363 = vor.u32 %v5360, %v5361
        %v5364 = vrot.slane %v5360, 4
        %v5366 = vshrl.u32 %v5206, 16
        %v5368 = vrot.slane %v5366, 7
        %v5369 = vshll.u32 %v5206, 16
        %v5371 = vor.u32 %v5368, %v5369
        %v5372 = vsel %vm385, %v5364, %v5371
        %v5373 = vrot.slane %v5368, 4
        %v5375 = vshrl.u32 %v5207, 16
        %v5377 = vrot.slane %v5375, 7
        %v5378 = vshll.u32 %v5207, 16
        %v5380 = vor.u32 %v5377, %v5378
        %v5381 = vrot.slane %v5377, 4
        %v5383 = vshrl.u32 %v5208, 16
        %v5385 = vrot.slane %v5383, 7
        %v5386 = vshll.u32 %v5208, 16
        %v5388 = vor.u32 %v5385, %v5386
        %v5389 = vsel %vm385, %v5381, %v5388
        %v5390 = vrot.slane %v5385, 4
        %v5392 = vshrl.u32 %v5209, 16
        %v5394 = vrot.slane %v5392, 7
        %v5395 = vshll.u32 %v5209, 16
        %v5397 = vor.u32 %v5394, %v5395
        %v5398 = vrot.slane %v5394, 4
        %v5400 = vshrl.u32 %v5210, 16
        %v5402 = vrot.slane %v5400, 7
        %v5403 = vshll.u32 %v5210, 16
        %v5405 = vor.u32 %v5402, %v5403
        %v5406 = vsel %vm385, %v5398, %v5405
        %v5407 = vrot.slane %v5402, 4
        %v5409 = vshrl.u32 %v5211, 16
        %v5411 = vrot.slane %v5409, 7
        %v5412 = vshll.u32 %v5211, 16
        %v5414 = vor.u32 %v5411, %v5412
        %v5415 = vrot.slane %v5411, 4
        %v5417 = vshrl.u32 %v5212, 16
        %v5419 = vrot.slane %v5417, 7
        %v5420 = vshll.u32 %v5212, 16
        %v5422 = vor.u32 %v5419, %v5420
        %v5423 = vsel %vm385, %v5415, %v5422
        %v5424 = vrot.slane %v5419, 4
        %v5426 = vshrl.u32 %v5213, 16
        %v5428 = vrot.slane %v5426, 7
        %v5429 = vshll.u32 %v5213, 16
        %v5431 = vor.u32 %v5428, %v5429
        %v5432 = vrot.slane %v5428, 4
        %v5434 = vshrl.u32 %v5214, 16
        %v5436 = vrot.slane %v5434, 7
        %v5437 = vshll.u32 %v5214, 16
        %v5439 = vor.u32 %v5436, %v5437
        %v5440 = vsel %vm385, %v5432, %v5439
        %v5441 = vrot.slane %v5436, 4
        %v5443 = vshrl.u32 %v5215, 16
        %v5445 = vrot.slane %v5443, 7
        %v5446 = vshll.u32 %v5215, 16
        %v5448 = vor.u32 %v5445, %v5446
        %v5449 = vrot.slane %v5445, 4
        %v5451 = vshrl.u32 %v5216, 16
        %v5453 = vrot.slane %v5451, 7
        %v5454 = vshll.u32 %v5216, 16
        %v5456 = vor.u32 %v5453, %v5454
        %v5457 = vsel %vm385, %v5449, %v5456
        %v5458 = vrot.slane %v5453, 4
        %v5460 = vshrl.u32 %v5217, 16
        %v5462 = vrot.slane %v5460, 7
        %v5463 = vshll.u32 %v5217, 16
        %v5465 = vor.u32 %v5462, %v5463
        %v5466 = vrot.slane %v5462, 4
        %v5468 = vshrl.u32 %v5218, 16
        %v5470 = vrot.slane %v5468, 7
        %v5471 = vshll.u32 %v5218, 16
        %v5473 = vor.u32 %v5470, %v5471
        %v5474 = vsel %vm385, %v5466, %v5473
        %v5475 = vrot.slane %v5470, 4
        %v5477 = vshrl.u32 %v5219, 16
        %v5479 = vrot.slane %v5477, 7
        %v5480 = vshll.u32 %v5219, 16
        %v5482 = vor.u32 %v5479, %v5480
        %v5483 = vrot.slane %v5479, 4
        %v5485 = vshrl.u32 %v5220, 16
        %v5487 = vrot.slane %v5485, 7
        %v5488 = vshll.u32 %v5220, 16
        %v5490 = vor.u32 %v5487, %v5488
        %v5491 = vsel %vm385, %v5483, %v5490
        %v5492 = vrot.slane %v5487, 4
        %v5541 = vld [vmem:[%s706] sm:$0xf]
        %v5542 = vsel %vm709, %v5227, %v5541
        %5543 = vst [vmem:[%s706] sm:$0xf] %v5542
        %5544 = vst [vmem:[%s706 + $0x4] sm:$0xf] %v5236
        %v5545 = vld [vmem:[%s706 + $0x8] sm:$0x1]
        %v5546 = vsel %vm715, %v5237, %v5545
        %5547 = vst [vmem:[%s706 + $0x8] sm:$0x1] %v5546
        %v5548 = vld [vmem:[%s706 + $0x10] sm:$0xf]
        %v5549 = vsel %vm709, %v5244, %v5548
        %5550 = vst [vmem:[%s706 + $0x10] sm:$0xf] %v5549
        %5551 = vst [vmem:[%s706 + $0x14] sm:$0xf] %v5253
        %v5552 = vld [vmem:[%s706 + $0x18] sm:$0x1]
        %v5553 = vsel %vm715, %v5254, %v5552
        %5554 = vst [vmem:[%s706 + $0x18] sm:$0x1] %v5553
        %v5555 = vld [vmem:[%s706 + $0x20] sm:$0xf]
        %v5556 = vsel %vm709, %v5261, %v5555
        %5557 = vst [vmem:[%s706 + $0x20] sm:$0xf] %v5556
        %5558 = vst [vmem:[%s706 + $0x24] sm:$0xf] %v5270
        %v5559 = vld [vmem:[%s706 + $0x28] sm:$0x1]
        %v5560 = vsel %vm715, %v5271, %v5559
        %5561 = vst [vmem:[%s706 + $0x28] sm:$0x1] %v5560
        %v5562 = vld [vmem:[%s706 + $0x30] sm:$0xf]
        %v5563 = vsel %vm709, %v5278, %v5562
        %5564 = vst [vmem:[%s706 + $0x30] sm:$0xf] %v5563
        %5565 = vst [vmem:[%s706 + $0x34] sm:$0xf] %v5287
        %v5566 = vld [vmem:[%s706 + $0x38] sm:$0x1]
        %v5567 = vsel %vm715, %v5288, %v5566
        %5568 = vst [vmem:[%s706 + $0x38] sm:$0x1] %v5567
        %v5569 = vld [vmem:[%s706 + $0x40] sm:$0xf]
        %v5570 = vsel %vm709, %v5295, %v5569
        %5571 = vst [vmem:[%s706 + $0x40] sm:$0xf] %v5570
        %5572 = vst [vmem:[%s706 + $0x44] sm:$0xf] %v5304
        %v5573 = vld [vmem:[%s706 + $0x48] sm:$0x1]
        %v5574 = vsel %vm715, %v5305, %v5573
        %5575 = vst [vmem:[%s706 + $0x48] sm:$0x1] %v5574
        %v5576 = vld [vmem:[%s706 + $0x50] sm:$0xf]
        %v5577 = vsel %vm709, %v5312, %v5576
        %5578 = vst [vmem:[%s706 + $0x50] sm:$0xf] %v5577
        %5579 = vst [vmem:[%s706 + $0x54] sm:$0xf] %v5321
        %v5580 = vld [vmem:[%s706 + $0x58] sm:$0x1]
        %v5581 = vsel %vm715, %v5322, %v5580
        %5582 = vst [vmem:[%s706 + $0x58] sm:$0x1] %v5581
        %v5583 = vld [vmem:[%s706 + $0x60] sm:$0xf]
        %v5584 = vsel %vm709, %v5329, %v5583
        %5585 = vst [vmem:[%s706 + $0x60] sm:$0xf] %v5584
        %5586 = vst [vmem:[%s706 + $0x64] sm:$0xf] %v5338
        %v5587 = vld [vmem:[%s706 + $0x68] sm:$0x1]
        %v5588 = vsel %vm715, %v5339, %v5587
        %5589 = vst [vmem:[%s706 + $0x68] sm:$0x1] %v5588
        %v5590 = vld [vmem:[%s706 + $0x70] sm:$0xf]
        %v5591 = vsel %vm709, %v5346, %v5590
        %5592 = vst [vmem:[%s706 + $0x70] sm:$0xf] %v5591
        %5593 = vst [vmem:[%s706 + $0x74] sm:$0xf] %v5355
        %v5594 = vld [vmem:[%s706 + $0x78] sm:$0x1]
        %v5595 = vsel %vm715, %v5356, %v5594
        %5596 = vst [vmem:[%s706 + $0x78] sm:$0x1] %v5595
        %v5597 = vld [vmem:[%s706 + $0x80] sm:$0xf]
        %v5598 = vsel %vm709, %v5363, %v5597
        %5599 = vst [vmem:[%s706 + $0x80] sm:$0xf] %v5598
        %5600 = vst [vmem:[%s706 + $0x84] sm:$0xf] %v5372
        %v5601 = vld [vmem:[%s706 + $0x88] sm:$0x1]
        %v5602 = vsel %vm715, %v5373, %v5601
        %5603 = vst [vmem:[%s706 + $0x88] sm:$0x1] %v5602
        %v5604 = vld [vmem:[%s706 + $0x90] sm:$0xf]
        %v5605 = vsel %vm709, %v5380, %v5604
        %5606 = vst [vmem:[%s706 + $0x90] sm:$0xf] %v5605
        %5607 = vst [vmem:[%s706 + $0x94] sm:$0xf] %v5389
        %v5608 = vld [vmem:[%s706 + $0x98] sm:$0x1]
        %v5609 = vsel %vm715, %v5390, %v5608
        %5610 = vst [vmem:[%s706 + $0x98] sm:$0x1] %v5609
        %v5611 = vld [vmem:[%s706 + $0xa0] sm:$0xf]
        %v5612 = vsel %vm709, %v5397, %v5611
        %5613 = vst [vmem:[%s706 + $0xa0] sm:$0xf] %v5612
        %5614 = vst [vmem:[%s706 + $0xa4] sm:$0xf] %v5406
        %v5615 = vld [vmem:[%s706 + $0xa8] sm:$0x1]
        %v5616 = vsel %vm715, %v5407, %v5615
        %5617 = vst [vmem:[%s706 + $0xa8] sm:$0x1] %v5616
        %v5618 = vld [vmem:[%s706 + $0xb0] sm:$0xf]
        %v5619 = vsel %vm709, %v5414, %v5618
        %5620 = vst [vmem:[%s706 + $0xb0] sm:$0xf] %v5619
        %5621 = vst [vmem:[%s706 + $0xb4] sm:$0xf] %v5423
        %v5622 = vld [vmem:[%s706 + $0xb8] sm:$0x1]
        %v5623 = vsel %vm715, %v5424, %v5622
        %5624 = vst [vmem:[%s706 + $0xb8] sm:$0x1] %v5623
        %v5625 = vld [vmem:[%s706 + $0xc0] sm:$0xf]
        %v5626 = vsel %vm709, %v5431, %v5625
        %5627 = vst [vmem:[%s706 + $0xc0] sm:$0xf] %v5626
        %5628 = vst [vmem:[%s706 + $0xc4] sm:$0xf] %v5440
        %v5629 = vld [vmem:[%s706 + $0xc8] sm:$0x1]
        %v5630 = vsel %vm715, %v5441, %v5629
        %5631 = vst [vmem:[%s706 + $0xc8] sm:$0x1] %v5630
        %v5632 = vld [vmem:[%s706 + $0xd0] sm:$0xf]
        %v5633 = vsel %vm709, %v5448, %v5632
        %5634 = vst [vmem:[%s706 + $0xd0] sm:$0xf] %v5633
        %5635 = vst [vmem:[%s706 + $0xd4] sm:$0xf] %v5457
        %v5636 = vld [vmem:[%s706 + $0xd8] sm:$0x1]
        %v5637 = vsel %vm715, %v5458, %v5636
        %5638 = vst [vmem:[%s706 + $0xd8] sm:$0x1] %v5637
        %v5639 = vld [vmem:[%s706 + $0xe0] sm:$0xf]
        %v5640 = vsel %vm709, %v5465, %v5639
        %5641 = vst [vmem:[%s706 + $0xe0] sm:$0xf] %v5640
        %5642 = vst [vmem:[%s706 + $0xe4] sm:$0xf] %v5474
        %v5643 = vld [vmem:[%s706 + $0xe8] sm:$0x1]
        %v5644 = vsel %vm715, %v5475, %v5643
        %5645 = vst [vmem:[%s706 + $0xe8] sm:$0x1] %v5644
        %v5646 = vld [vmem:[%s706 + $0xf0] sm:$0xf]
        %v5647 = vsel %vm709, %v5482, %v5646
        %5648 = vst [vmem:[%s706 + $0xf0] sm:$0xf] %v5647
        %5649 = vst [vmem:[%s706 + $0xf4] sm:$0xf] %v5491
        %v5650 = vld [vmem:[%s706 + $0xf8] sm:$0x1]
        %v5651 = vsel %vm715, %v5492, %v5650
        %5652 = vst [vmem:[%s706 + $0xf8] sm:$0x1] %v5651
        %v5653 = vld [vmem:[#allocation2] sm:$0xf]
        %v5654 = vsel %vm709, %v5244, %v5653
        %5655 = vst [vmem:[#allocation2] sm:$0xf] %v5654
        %5656 = vst [vmem:[#allocation2 + $0x4] sm:$0xf] %v5253
        %v5657 = vld [vmem:[#allocation2 + $0x8] sm:$0x1]
        %v5658 = vsel %vm715, %v5254, %v5657
        %5659 = vst [vmem:[#allocation2 + $0x8] sm:$0x1] %v5658
        %v5660 = vld [vmem:[%s831] sm:$0xf]
        %v5661 = vsel %vm709, %v5465, %v5660
        %5662 = vst [vmem:[%s831] sm:$0xf] %v5661
        %5663 = vst [vmem:[%s831 + $0x4] sm:$0xf] %v5474
        %v5664 = vld [vmem:[%s831 + $0x8] sm:$0x1]
        %v5665 = vsel %vm715, %v5475, %v5664
        %5666 = vst [vmem:[%s831 + $0x8] sm:$0x1] %v5665
        %v5667 = vld [vmem:[#allocation2] sm:$0x2]
        %v5668 = vld [vmem:[#allocation2 + $0x10] sm:$0x2]
        %v5669 = vld [vmem:[#allocation2 + $0x20] sm:$0x2]
        %v5670 = vld [vmem:[#allocation2 + $0x30] sm:$0x2]
        %v5671 = vld [vmem:[#allocation2 + $0x40] sm:$0x2]
        %v5672 = vld [vmem:[#allocation2 + $0x50] sm:$0x2]
        %v5673 = vld [vmem:[#allocation2 + $0x60] sm:$0x2]
        %v5674 = vld [vmem:[#allocation2 + $0x70] sm:$0x2]
        %v5675 = vld [vmem:[#allocation2 + $0x80] sm:$0x2]
        %v5676 = vld [vmem:[#allocation2 + $0x90] sm:$0x2]
        %v5677 = vld [vmem:[#allocation2 + $0xa0] sm:$0x2]
        %v5678 = vld [vmem:[#allocation2 + $0xb0] sm:$0x2]
        %v5679 = vld [vmem:[#allocation2 + $0xc0] sm:$0x2]
        %v5680 = vld [vmem:[#allocation2 + $0xd0] sm:$0x2]
        %v5681 = vld [vmem:[#allocation2 + $0xe0] sm:$0x2]
        %v5682 = vld [vmem:[#allocation2 + $0xf0] sm:$0x2]
        %v5683 = vld [vmem:[#allocation2 + $0x100] sm:$0x2]
        %v5684 = vld [vmem:[#allocation2 + $0x110] sm:$0x2]
        %v5703 = vrot.slane %v5667, 5
        %v5704 = vrot.slane %v5703, 4
        %v5705 = vrot.slane %v5668, 5
        %v5706 = vrot.slane %v5705, 4
        %v5707 = vrot.slane %v5669, 5
        %v5708 = vrot.slane %v5707, 4
        %v5709 = vrot.slane %v5670, 5
        %v5710 = vrot.slane %v5709, 4
        %v5711 = vrot.slane %v5671, 5
        %v5712 = vrot.slane %v5711, 4
        %v5713 = vrot.slane %v5672, 5
        %v5714 = vrot.slane %v5713, 4
        %v5715 = vrot.slane %v5673, 5
        %v5716 = vrot.slane %v5715, 4
        %v5717 = vrot.slane %v5674, 5
        %v5718 = vrot.slane %v5717, 4
        %v5719 = vrot.slane %v5675, 5
        %v5720 = vrot.slane %v5719, 4
        %v5721 = vrot.slane %v5676, 5
        %v5722 = vrot.slane %v5721, 4
        %v5723 = vrot.slane %v5677, 5
        %v5724 = vrot.slane %v5723, 4
        %v5725 = vrot.slane %v5678, 5
        %v5726 = vrot.slane %v5725, 4
        %v5727 = vrot.slane %v5679, 5
        %v5728 = vrot.slane %v5727, 4
        %v5729 = vrot.slane %v5680, 5
        %v5730 = vrot.slane %v5729, 4
        %v5731 = vrot.slane %v5681, 5
        %v5732 = vrot.slane %v5731, 4
        %v5733 = vrot.slane %v5682, 5
        %v5734 = vrot.slane %v5733, 4
        %v5735 = vrot.slane %v5683, 5
        %v5736 = vrot.slane %v5735, 4
        %v5737 = vrot.slane %v5684, 5
        %v5738 = vrot.slane %v5737, 4
        %v5757 = vld [vmem:[#allocation2] sm:$0x1]
        %v5758 = vsel %vm715, %v5704, %v5757
        %5759 = vst [vmem:[#allocation2] sm:$0x1] %v5758
        %v5760 = vld [vmem:[#allocation2 + $0x10] sm:$0x1]
        %v5761 = vsel %vm715, %v5706, %v5760
        %5762 = vst [vmem:[#allocation2 + $0x10] sm:$0x1] %v5761
        %v5763 = vld [vmem:[#allocation2 + $0x20] sm:$0x1]
        %v5764 = vsel %vm715, %v5708, %v5763
        %5765 = vst [vmem:[#allocation2 + $0x20] sm:$0x1] %v5764
        %v5766 = vld [vmem:[#allocation2 + $0x30] sm:$0x1]
        %v5767 = vsel %vm715, %v5710, %v5766
        %5768 = vst [vmem:[#allocation2 + $0x30] sm:$0x1] %v5767
        %v5769 = vld [vmem:[#allocation2 + $0x40] sm:$0x1]
        %v5770 = vsel %vm715, %v5712, %v5769
        %5771 = vst [vmem:[#allocation2 + $0x40] sm:$0x1] %v5770
        %v5772 = vld [vmem:[#allocation2 + $0x50] sm:$0x1]
        %v5773 = vsel %vm715, %v5714, %v5772
        %5774 = vst [vmem:[#allocation2 + $0x50] sm:$0x1] %v5773
        %v5775 = vld [vmem:[#allocation2 + $0x60] sm:$0x1]
        %v5776 = vsel %vm715, %v5716, %v5775
        %5777 = vst [vmem:[#allocation2 + $0x60] sm:$0x1] %v5776
        %v5778 = vld [vmem:[#allocation2 + $0x70] sm:$0x1]
        %v5779 = vsel %vm715, %v5718, %v5778
        %5780 = vst [vmem:[#allocation2 + $0x70] sm:$0x1] %v5779
        %v5781 = vld [vmem:[#allocation2 + $0x80] sm:$0x1]
        %v5782 = vsel %vm715, %v5720, %v5781
        %5783 = vst [vmem:[#allocation2 + $0x80] sm:$0x1] %v5782
        %v5784 = vld [vmem:[#allocation2 + $0x90] sm:$0x1]
        %v5785 = vsel %vm715, %v5722, %v5784
        %5786 = vst [vmem:[#allocation2 + $0x90] sm:$0x1] %v5785
        %v5787 = vld [vmem:[#allocation2 + $0xa0] sm:$0x1]
        %v5788 = vsel %vm715, %v5724, %v5787
        %5789 = vst [vmem:[#allocation2 + $0xa0] sm:$0x1] %v5788
        %v5790 = vld [vmem:[#allocation2 + $0xb0] sm:$0x1]
        %v5791 = vsel %vm715, %v5726, %v5790
        %5792 = vst [vmem:[#allocation2 + $0xb0] sm:$0x1] %v5791
        %v5793 = vld [vmem:[#allocation2 + $0xc0] sm:$0x1]
        %v5794 = vsel %vm715, %v5728, %v5793
        %5795 = vst [vmem:[#allocation2 + $0xc0] sm:$0x1] %v5794
        %v5796 = vld [vmem:[#allocation2 + $0xd0] sm:$0x1]
        %v5797 = vsel %vm715, %v5730, %v5796
        %5798 = vst [vmem:[#allocation2 + $0xd0] sm:$0x1] %v5797
        %v5799 = vld [vmem:[#allocation2 + $0xe0] sm:$0x1]
        %v5800 = vsel %vm715, %v5732, %v5799
        %5801 = vst [vmem:[#allocation2 + $0xe0] sm:$0x1] %v5800
        %v5802 = vld [vmem:[#allocation2 + $0xf0] sm:$0x1]
        %v5803 = vsel %vm715, %v5734, %v5802
        %5804 = vst [vmem:[#allocation2 + $0xf0] sm:$0x1] %v5803
        %v5805 = vld [vmem:[#allocation2 + $0x100] sm:$0x1]
        %v5806 = vsel %vm715, %v5736, %v5805
        %5807 = vst [vmem:[#allocation2 + $0x100] sm:$0x1] %v5806
        %v5808 = vld [vmem:[#allocation2 + $0x110] sm:$0x1]
        %v5809 = vsel %vm715, %v5738, %v5808
        %5810 = vst [vmem:[#allocation2 + $0x110] sm:$0x1] %v5809
        %v5811 = vld [vmem:[#allocation2 + $0x4] sm:$0x8]
        %v5812 = vld [vmem:[#allocation2 + $0x14] sm:$0x8]
        %v5813 = vld [vmem:[#allocation2 + $0x24] sm:$0x8]
        %v5814 = vld [vmem:[#allocation2 + $0x34] sm:$0x8]
        %v5815 = vld [vmem:[#allocation2 + $0x44] sm:$0x8]
        %v5816 = vld [vmem:[#allocation2 + $0x54] sm:$0x8]
        %v5817 = vld [vmem:[#allocation2 + $0x64] sm:$0x8]
        %v5818 = vld [vmem:[#allocation2 + $0x74] sm:$0x8]
        %v5819 = vld [vmem:[#allocation2 + $0x84] sm:$0x8]
        %v5820 = vld [vmem:[#allocation2 + $0x94] sm:$0x8]
        %v5821 = vld [vmem:[#allocation2 + $0xa4] sm:$0x8]
        %v5822 = vld [vmem:[#allocation2 + $0xb4] sm:$0x8]
        %v5823 = vld [vmem:[#allocation2 + $0xc4] sm:$0x8]
        %v5824 = vld [vmem:[#allocation2 + $0xd4] sm:$0x8]
        %v5825 = vld [vmem:[#allocation2 + $0xe4] sm:$0x8]
        %v5826 = vld [vmem:[#allocation2 + $0xf4] sm:$0x8]
        %v5827 = vld [vmem:[#allocation2 + $0x104] sm:$0x8]
        %v5828 = vld [vmem:[#allocation2 + $0x114] sm:$0x8]
        %v5847 = vrot.slane %v5811, 7
        %v5848 = vrot.slane %v5847, 4
        %v5849 = vrot.slane %v5812, 7
        %v5850 = vrot.slane %v5849, 4
        %v5851 = vrot.slane %v5813, 7
        %v5852 = vrot.slane %v5851, 4
        %v5853 = vrot.slane %v5814, 7
        %v5854 = vrot.slane %v5853, 4
        %v5855 = vrot.slane %v5815, 7
        %v5856 = vrot.slane %v5855, 4
        %v5857 = vrot.slane %v5816, 7
        %v5858 = vrot.slane %v5857, 4
        %v5859 = vrot.slane %v5817, 7
        %v5860 = vrot.slane %v5859, 4
        %v5861 = vrot.slane %v5818, 7
        %v5862 = vrot.slane %v5861, 4
        %v5863 = vrot.slane %v5819, 7
        %v5864 = vrot.slane %v5863, 4
        %v5865 = vrot.slane %v5820, 7
        %v5866 = vrot.slane %v5865, 4
        %v5867 = vrot.slane %v5821, 7
        %v5868 = vrot.slane %v5867, 4
        %v5869 = vrot.slane %v5822, 7
        %v5870 = vrot.slane %v5869, 4
        %v5871 = vrot.slane %v5823, 7
        %v5872 = vrot.slane %v5871, 4
        %v5873 = vrot.slane %v5824, 7
        %v5874 = vrot.slane %v5873, 4
        %v5875 = vrot.slane %v5825, 7
        %v5876 = vrot.slane %v5875, 4
        %v5877 = vrot.slane %v5826, 7
        %v5878 = vrot.slane %v5877, 4
        %v5879 = vrot.slane %v5827, 7
        %v5880 = vrot.slane %v5879, 4
        %v5881 = vrot.slane %v5828, 7
        %v5882 = vrot.slane %v5881, 4
        %v5901 = vld [vmem:[#allocation2 + $0x8] sm:$0x1]
        %v5902 = vsel %vm1073, %v5848, %v5901
        %5903 = vst [vmem:[#allocation2 + $0x8] sm:$0x1] %v5902
        %v5904 = vld [vmem:[#allocation2 + $0x18] sm:$0x1]
        %v5905 = vsel %vm1073, %v5850, %v5904
        %5906 = vst [vmem:[#allocation2 + $0x18] sm:$0x1] %v5905
        %v5907 = vld [vmem:[#allocation2 + $0x28] sm:$0x1]
        %v5908 = vsel %vm1073, %v5852, %v5907
        %5909 = vst [vmem:[#allocation2 + $0x28] sm:$0x1] %v5908
        %v5910 = vld [vmem:[#allocation2 + $0x38] sm:$0x1]
        %v5911 = vsel %vm1073, %v5854, %v5910
        %5912 = vst [vmem:[#allocation2 + $0x38] sm:$0x1] %v5911
        %v5913 = vld [vmem:[#allocation2 + $0x48] sm:$0x1]
        %v5914 = vsel %vm1073, %v5856, %v5913
        %5915 = vst [vmem:[#allocation2 + $0x48] sm:$0x1] %v5914
        %v5916 = vld [vmem:[#allocation2 + $0x58] sm:$0x1]
        %v5917 = vsel %vm1073, %v5858, %v5916
        %5918 = vst [vmem:[#allocation2 + $0x58] sm:$0x1] %v5917
        %v5919 = vld [vmem:[#allocation2 + $0x68] sm:$0x1]
        %v5920 = vsel %vm1073, %v5860, %v5919
        %5921 = vst [vmem:[#allocation2 + $0x68] sm:$0x1] %v5920
        %v5922 = vld [vmem:[#allocation2 + $0x78] sm:$0x1]
        %v5923 = vsel %vm1073, %v5862, %v5922
        %5924 = vst [vmem:[#allocation2 + $0x78] sm:$0x1] %v5923
        %v5925 = vld [vmem:[#allocation2 + $0x88] sm:$0x1]
        %v5926 = vsel %vm1073, %v5864, %v5925
        %5927 = vst [vmem:[#allocation2 + $0x88] sm:$0x1] %v5926
        %v5928 = vld [vmem:[#allocation2 + $0x98] sm:$0x1]
        %v5929 = vsel %vm1073, %v5866, %v5928
        %5930 = vst [vmem:[#allocation2 + $0x98] sm:$0x1] %v5929
        %v5931 = vld [vmem:[#allocation2 + $0xa8] sm:$0x1]
        %v5932 = vsel %vm1073, %v5868, %v5931
        %5933 = vst [vmem:[#allocation2 + $0xa8] sm:$0x1] %v5932
        %v5934 = vld [vmem:[#allocation2 + $0xb8] sm:$0x1]
        %v5935 = vsel %vm1073, %v5870, %v5934
        %5936 = vst [vmem:[#allocation2 + $0xb8] sm:$0x1] %v5935
        %v5937 = vld [vmem:[#allocation2 + $0xc8] sm:$0x1]
        %v5938 = vsel %vm1073, %v5872, %v5937
        %5939 = vst [vmem:[#allocation2 + $0xc8] sm:$0x1] %v5938
        %v5940 = vld [vmem:[#allocation2 + $0xd8] sm:$0x1]
        %v5941 = vsel %vm1073, %v5874, %v5940
        %5942 = vst [vmem:[#allocation2 + $0xd8] sm:$0x1] %v5941
        %v5943 = vld [vmem:[#allocation2 + $0xe8] sm:$0x1]
        %v5944 = vsel %vm1073, %v5876, %v5943
        %5945 = vst [vmem:[#allocation2 + $0xe8] sm:$0x1] %v5944
        %v5946 = vld [vmem:[#allocation2 + $0xf8] sm:$0x1]
        %v5947 = vsel %vm1073, %v5878, %v5946
        %5948 = vst [vmem:[#allocation2 + $0xf8] sm:$0x1] %v5947
        %v5949 = vld [vmem:[#allocation2 + $0x108] sm:$0x1]
        %v5950 = vsel %vm1073, %v5880, %v5949
        %5951 = vst [vmem:[#allocation2 + $0x108] sm:$0x1] %v5950
        %v5952 = vld [vmem:[#allocation2 + $0x118] sm:$0x1]
        %v5953 = vsel %vm1073, %v5882, %v5952
        %5954 = vst [vmem:[#allocation2 + $0x118] sm:$0x1] %v5953
        %v5955 = vld [vmem:[#allocation2] sm:$0xf]
        %v5956 = vld [vmem:[#allocation2 + $0x4] sm:$0xf]
        %v5957 = vld [vmem:[#allocation2 + $0x8] sm:$0xf]
        %v5958 = vld [vmem:[#allocation2 + $0xc] sm:$0xf]
        %v5959 = vld [vmem:[#allocation2 + $0x10] sm:$0xf]
        %v5960 = vld [vmem:[#allocation2 + $0x14] sm:$0xf]
        %v5961 = vld [vmem:[#allocation2 + $0x18] sm:$0xf]
        %v5962 = vld [vmem:[#allocation2 + $0x1c] sm:$0xf]
        %v5963 = vld [vmem:[#allocation2 + $0x20] sm:$0xf]
        %v5964 = vld [vmem:[#allocation2 + $0x24] sm:$0xf]
        %v5965 = vld [vmem:[#allocation2 + $0x28] sm:$0xf]
        %v5966 = vld [vmem:[#allocation2 + $0x2c] sm:$0xf]
        %v5967 = vld [vmem:[#allocation2 + $0x30] sm:$0xf]
        %v5968 = vld [vmem:[#allocation2 + $0x34] sm:$0xf]
        %v5969 = vld [vmem:[#allocation2 + $0x38] sm:$0xf]
        %v5970 = vld [vmem:[#allocation2 + $0x3c] sm:$0xf]
        %v5971 = vld [vmem:[#allocation2 + $0x40] sm:$0xf]
        %v5972 = vld [vmem:[#allocation2 + $0x44] sm:$0xf]
        %v5973 = vld [vmem:[#allocation2 + $0x48] sm:$0xf]
        %v5974 = vld [vmem:[#allocation2 + $0x4c] sm:$0xf]
        %v5975 = vld [vmem:[#allocation2 + $0x50] sm:$0xf]
        %v5976 = vld [vmem:[#allocation2 + $0x54] sm:$0xf]
        %v5977 = vld [vmem:[#allocation2 + $0x58] sm:$0xf]
        %v5978 = vld [vmem:[#allocation2 + $0x5c] sm:$0xf]
        %v5979 = vld [vmem:[#allocation2 + $0x60] sm:$0xf]
        %v5980 = vld [vmem:[#allocation2 + $0x64] sm:$0xf]
        %v5981 = vld [vmem:[#allocation2 + $0x68] sm:$0xf]
        %v5982 = vld [vmem:[#allocation2 + $0x6c] sm:$0xf]
        %v5983 = vld [vmem:[#allocation2 + $0x70] sm:$0xf]
        %v5984 = vld [vmem:[#allocation2 + $0x74] sm:$0xf]
        %v5985 = vld [vmem:[#allocation2 + $0x78] sm:$0xf]
        %v5986 = vld [vmem:[#allocation2 + $0x7c] sm:$0xf]
        %v5987 = vld [vmem:[#allocation2 + $0x80] sm:$0xf]
        %v5988 = vld [vmem:[#allocation2 + $0x84] sm:$0xf]
        %v5989 = vld [vmem:[#allocation2 + $0x88] sm:$0xf]
        %v5990 = vld [vmem:[#allocation2 + $0x8c] sm:$0xf]
        %v5991 = vld [vmem:[#allocation2 + $0x90] sm:$0xf]
        %v5992 = vld [vmem:[#allocation2 + $0x94] sm:$0xf]
        %v5993 = vld [vmem:[#allocation2 + $0x98] sm:$0xf]
        %v5994 = vld [vmem:[#allocation2 + $0x9c] sm:$0xf]
        %v5995 = vld [vmem:[#allocation2 + $0xa0] sm:$0xf]
        %v5996 = vld [vmem:[#allocation2 + $0xa4] sm:$0xf]
        %v5997 = vld [vmem:[#allocation2 + $0xa8] sm:$0xf]
        %v5998 = vld [vmem:[#allocation2 + $0xac] sm:$0xf]
        %v5999 = vld [vmem:[#allocation2 + $0xb0] sm:$0xf]
        %v6000 = vld [vmem:[#allocation2 + $0xb4] sm:$0xf]
        %v6001 = vld [vmem:[#allocation2 + $0xb8] sm:$0xf]
        %v6002 = vld [vmem:[#allocation2 + $0xbc] sm:$0xf]
        %v6003 = vld [vmem:[#allocation2 + $0xc0] sm:$0xf]
        %v6004 = vld [vmem:[#allocation2 + $0xc4] sm:$0xf]
        %v6005 = vld [vmem:[#allocation2 + $0xc8] sm:$0xf]
        %v6006 = vld [vmem:[#allocation2 + $0xcc] sm:$0xf]
        %v6007 = vld [vmem:[#allocation2 + $0xd0] sm:$0xf]
        %v6008 = vld [vmem:[#allocation2 + $0xd4] sm:$0xf]
        %v6009 = vld [vmem:[#allocation2 + $0xd8] sm:$0xf]
        %v6010 = vld [vmem:[#allocation2 + $0xdc] sm:$0xf]
        %v6011 = vld [vmem:[#allocation2 + $0xe0] sm:$0xf]
        %v6012 = vld [vmem:[#allocation2 + $0xe4] sm:$0xf]
        %v6013 = vld [vmem:[#allocation2 + $0xe8] sm:$0xf]
        %v6014 = vld [vmem:[#allocation2 + $0xec] sm:$0xf]
        %v6015 = vld [vmem:[#allocation2 + $0xf0] sm:$0xf]
        %v6016 = vld [vmem:[#allocation2 + $0xf4] sm:$0xf]
        %v6017 = vld [vmem:[#allocation2 + $0xf8] sm:$0xf]
        %v6018 = vld [vmem:[#allocation2 + $0xfc] sm:$0xf]
        %v6019 = vld [vmem:[#allocation2 + $0x100] sm:$0xf]
        %v6020 = vld [vmem:[#allocation2 + $0x104] sm:$0xf]
        %v6021 = vld [vmem:[#allocation2 + $0x108] sm:$0xf]
        %v6022 = vld [vmem:[#allocation2 + $0x10c] sm:$0xf]
        %v6023 = vld [vmem:[#allocation2 + $0x110] sm:$0xf]
        %v6024 = vld [vmem:[#allocation2 + $0x114] sm:$0xf]
        %v6025 = vld [vmem:[#allocation2 + $0x118] sm:$0xf]
        %v6026 = vld [vmem:[#allocation2 + $0x11c] sm:$0xf]
        %v6027 = vld [vmem:[#allocation8] sm:$0xf]
        %v6028 = vld [vmem:[#allocation8 + $0x4] sm:$0xf]
        %v6029 = vld [vmem:[#allocation8 + $0x8] sm:$0xf]
        %v6030 = vld [vmem:[#allocation8 + $0xc] sm:$0xf]
        %v6031 = vld [vmem:[#allocation8 + $0x10] sm:$0xf]
        %v6032 = vld [vmem:[#allocation8 + $0x14] sm:$0xf]
        %v6033 = vld [vmem:[#allocation8 + $0x18] sm:$0xf]
        %v6034 = vld [vmem:[#allocation8 + $0x1c] sm:$0xf]
        %v6035 = vld [vmem:[#allocation8 + $0x20] sm:$0xf]
        %v6036 = vld [vmem:[#allocation8 + $0x24] sm:$0xf]
        %v6037 = vld [vmem:[#allocation8 + $0x28] sm:$0xf]
        %v6038 = vld [vmem:[#allocation8 + $0x2c] sm:$0xf]
        %v6039 = vld [vmem:[#allocation8 + $0x30] sm:$0xf]
        %v6040 = vld [vmem:[#allocation8 + $0x34] sm:$0xf]
        %v6041 = vld [vmem:[#allocation8 + $0x38] sm:$0xf]
        %v6042 = vld [vmem:[#allocation8 + $0x3c] sm:$0xf]
        %v6043 = vld [vmem:[#allocation8 + $0xc0] sm:$0xf]
        %v6044 = vld [vmem:[#allocation8 + $0xc4] sm:$0xf]
        %v6045 = vld [vmem:[#allocation8 + $0xc8] sm:$0xf]
        %v6046 = vld [vmem:[#allocation8 + $0xcc] sm:$0xf]
        %v6047 = vld [vmem:[#allocation8 + $0xd0] sm:$0xf]
        %v6048 = vld [vmem:[#allocation8 + $0xd4] sm:$0xf]
        %v6049 = vld [vmem:[#allocation8 + $0xd8] sm:$0xf]
        %v6050 = vld [vmem:[#allocation8 + $0xdc] sm:$0xf]
        %v6051 = vld [vmem:[#allocation8 + $0xe0] sm:$0xf]
        %v6052 = vld [vmem:[#allocation8 + $0xe4] sm:$0xf]
        %v6053 = vld [vmem:[#allocation8 + $0xe8] sm:$0xf]
        %v6054 = vld [vmem:[#allocation8 + $0xec] sm:$0xf]
        %v6055 = vld [vmem:[#allocation8 + $0xf0] sm:$0xf]
        %v6056 = vld [vmem:[#allocation8 + $0xf4] sm:$0xf]
        %v6057 = vld [vmem:[#allocation8 + $0xf8] sm:$0xf]
        %v6058 = vld [vmem:[#allocation8 + $0xfc] sm:$0xf]
        %v6123 = vunpack.c.l.b16 %v5959
        %v6124 = vunpack.c.l.b16 %v5960
        %v6125 = vunpack.c.l.b16 %v5961
        %v6126 = vunpack.c.l.b16 %v5962
        %v6127 = vunpack.c.l.b16 %v5963
        %v6128 = vunpack.c.l.b16 %v5964
        %v6129 = vunpack.c.l.b16 %v5965
        %v6130 = vunpack.c.l.b16 %v5966
        %v6131 = vunpack.c.l.b16 %v5967
        %v6132 = vunpack.c.l.b16 %v5968
        %v6133 = vunpack.c.l.b16 %v5969
        %v6134 = vunpack.c.l.b16 %v5970
        %v6135 = vunpack.c.l.b16 %v5971
        %v6136 = vunpack.c.l.b16 %v5972
        %v6137 = vunpack.c.l.b16 %v5973
        %v6138 = vunpack.c.l.b16 %v5974
        %v6139 = vunpack.c.l.b16 %v5975
        %v6140 = vunpack.c.l.b16 %v5976
        %v6141 = vunpack.c.l.b16 %v5977
        %v6142 = vunpack.c.l.b16 %v5978
        %v6143 = vunpack.c.l.b16 %v5979
        %v6144 = vunpack.c.l.b16 %v5980
        %v6145 = vunpack.c.l.b16 %v5981
        %v6146 = vunpack.c.l.b16 %v5982
        %v6147 = vunpack.c.l.b16 %v5983
        %v6148 = vunpack.c.l.b16 %v5984
        %v6149 = vunpack.c.l.b16 %v5985
        %v6150 = vunpack.c.l.b16 %v5986
        %v6151 = vunpack.c.l.b16 %v5987
        %v6152 = vunpack.c.l.b16 %v5988
        %v6153 = vunpack.c.l.b16 %v5989
        %v6154 = vunpack.c.l.b16 %v5990
        %v6155 = vunpack.c.l.b16 %v5991
        %v6156 = vunpack.c.l.b16 %v5992
        %v6157 = vunpack.c.l.b16 %v5993
        %v6158 = vunpack.c.l.b16 %v5994
        %v6159 = vunpack.c.l.b16 %v5995
        %v6160 = vunpack.c.l.b16 %v5996
        %v6161 = vunpack.c.l.b16 %v5997
        %v6162 = vunpack.c.l.b16 %v5998
        %v6163 = vunpack.c.l.b16 %v5999
        %v6164 = vunpack.c.l.b16 %v6000
        %v6165 = vunpack.c.l.b16 %v6001
        %v6166 = vunpack.c.l.b16 %v6002
        %v6167 = vunpack.c.l.b16 %v6003
        %v6168 = vunpack.c.l.b16 %v6004
        %v6169 = vunpack.c.l.b16 %v6005
        %v6170 = vunpack.c.l.b16 %v6006
        %v6171 = vunpack.c.l.b16 %v6007
        %v6172 = vunpack.c.l.b16 %v6008
        %v6173 = vunpack.c.l.b16 %v6009
        %v6174 = vunpack.c.l.b16 %v6010
        %v6175 = vunpack.c.l.b16 %v6011
        %v6176 = vunpack.c.l.b16 %v6012
        %v6177 = vunpack.c.l.b16 %v6013
        %v6178 = vunpack.c.l.b16 %v6014
        %v6179 = vunpack.c.l.b16 %v6015
        %v6180 = vunpack.c.l.b16 %v6016
        %v6181 = vunpack.c.l.b16 %v6017
        %v6182 = vunpack.c.l.b16 %v6018
        %v6183 = vunpack.c.l.b16 %v6019
        %v6184 = vunpack.c.l.b16 %v6020
        %v6185 = vunpack.c.l.b16 %v6021
        %v6186 = vunpack.c.l.b16 %v6022
        %v6187 = vpack.c.b16 %v6124, %v6123
        %v6188 = vpack.c.b16 %v6126, %v6125
        %v6189 = vpack.c.b16 %v6128, %v6127
        %v6190 = vpack.c.b16 %v6130, %v6129
        %v6191 = vpack.c.b16 %v6132, %v6131
        %v6192 = vpack.c.b16 %v6134, %v6133
        %v6193 = vpack.c.b16 %v6136, %v6135
        %v6194 = vpack.c.b16 %v6138, %v6137
        %v6195 = vpack.c.b16 %v6140, %v6139
        %v6196 = vpack.c.b16 %v6142, %v6141
        %v6197 = vpack.c.b16 %v6144, %v6143
        %v6198 = vpack.c.b16 %v6146, %v6145
        %v6199 = vpack.c.b16 %v6148, %v6147
        %v6200 = vpack.c.b16 %v6150, %v6149
        %v6201 = vpack.c.b16 %v6152, %v6151
        %v6202 = vpack.c.b16 %v6154, %v6153
        %v6203 = vpack.c.b16 %v6156, %v6155
        %v6204 = vpack.c.b16 %v6158, %v6157
        %v6205 = vpack.c.b16 %v6160, %v6159
        %v6206 = vpack.c.b16 %v6162, %v6161
        %v6207 = vpack.c.b16 %v6164, %v6163
        %v6208 = vpack.c.b16 %v6166, %v6165
        %v6209 = vpack.c.b16 %v6168, %v6167
        %v6210 = vpack.c.b16 %v6170, %v6169
        %v6211 = vpack.c.b16 %v6172, %v6171
        %v6212 = vpack.c.b16 %v6174, %v6173
        %v6213 = vpack.c.b16 %v6176, %v6175
        %v6214 = vpack.c.b16 %v6178, %v6177
        %v6215 = vpack.c.b16 %v6180, %v6179
        %v6216 = vpack.c.b16 %v6182, %v6181
        %v6217 = vpack.c.b16 %v6184, %v6183
        %v6218 = vpack.c.b16 %v6186, %v6185
        %v6267 = vunpack.c.l.b16 %v6043
        %v6268 = vunpack.c.l.b16 %v6044
        %v6269 = vunpack.c.l.b16 %v6045
        %v6270 = vunpack.c.l.b16 %v6046
        %v6271 = vunpack.c.l.b16 %v6047
        %v6272 = vunpack.c.l.b16 %v6048
        %v6273 = vunpack.c.l.b16 %v6049
        %v6274 = vunpack.c.l.b16 %v6050
        %v6275 = vunpack.c.l.b16 %v6051
        %v6276 = vunpack.c.l.b16 %v6052
        %v6277 = vunpack.c.l.b16 %v6053
        %v6278 = vunpack.c.l.b16 %v6054
        %v6279 = vunpack.c.l.b16 %v6055
        %v6280 = vunpack.c.l.b16 %v6056
        %v6281 = vunpack.c.l.b16 %v6057
        %v6282 = vunpack.c.l.b16 %v6058
        %v6283 = vpack.c.b16 %v6268, %v6267
        %v6284 = vpack.c.b16 %v6270, %v6269
        %v6285 = vpack.c.b16 %v6272, %v6271
        %v6286 = vpack.c.b16 %v6274, %v6273
        %v6287 = vpack.c.b16 %v6276, %v6275
        %v6288 = vpack.c.b16 %v6278, %v6277
        %v6289 = vpack.c.b16 %v6280, %v6279
        %v6290 = vpack.c.b16 %v6282, %v6281
        %6299 = vmatprep.subr.bf16.mxu0 0
        %6300 = vmatpush1.bf16.msra.mxu0 %v6290
        %6301 = vmatprep.subr.bf16.mxu0 0
        %6302 = vmatpush1.bf16.msra.mxu0 %v6289
        %6303 = vmatprep.subr.bf16.mxu0 0
        %6304 = vmatpush1.bf16.msra.mxu0 %v6288
        %6305 = vmatprep.subr.bf16.mxu0 0
        %6306 = vmatpush1.bf16.msra.mxu0 %v6287
        %6307 = vmatprep.subr.bf16.mxu0 0
        %6308 = vmatpush1.bf16.msra.mxu0 %v6286
        %6309 = vmatprep.subr.bf16.mxu0 0
        %6310 = vmatpush1.bf16.msra.mxu0 %v6285
        %6311 = vmatprep.subr.bf16.mxu0 0
        %6312 = vmatpush1.bf16.msra.mxu0 %v6284
        %6313 = vmatprep.subr.bf16.mxu0 0
        %6314 = vmatpush1.bf16.msra.mxu0 %v6283
        %6315 = vmatprep.subr.bf16.mxu0 0
        %6316 = vmatpush2.bf16.msra.mxu0 0
        %6317 = vmatprep.subr.bf16.mxu0 0
        %6318 = vmatpush2.bf16.msra.mxu0 0
        %6319 = vmatprep.subr.bf16.mxu0 0
        %6320 = vmatpush2.bf16.msra.mxu0 0
        %6321 = vmatprep.subr.bf16.mxu0 0
        %6322 = vmatpush2.bf16.msra.mxu0 0
        %6323 = vmatprep.subr.bf16.mxu0 0
        %6324 = vmatpush2.bf16.msra.mxu0 0
        %6325 = vmatprep.subr.bf16.mxu0 0
        %6326 = vmatpush2.bf16.msra.mxu0 0
        %6327 = vmatprep.subr.bf16.mxu0 0
        %6328 = vmatpush2.bf16.msra.mxu0 0
        %6329 = vmatprep.subr.bf16.mxu0 0
        %6330 = vmatpush2.bf16.msra.mxu0 0
        %6331 = vmatprep.mubr.bf16.mxu0 0
        %6332 = vmatmul.mubr.bf16.gmra.mxu0 %v6187
        %v6333 = vpop.f32.mrf.mxu0
        %v6334 = vadd.f32 0.0, %v6333
        %v6335 = vpop.f32.mrf.mxu0
        %v6336 = vpop.f32.mrf.mxu0
        %v6337 = vadd.f32 0.0, %v6336
        %v6338 = vpop.f32.mrf.mxu0
        %6339 = vmatprep.mubr.bf16.mxu0 0
        %6340 = vmatmul.mubr.bf16.gmra.mxu0 %v6188
        %v6341 = vpop.f32.mrf.mxu0
        %v6342 = vpop.f32.mrf.mxu0
        %v6343 = vpop.f32.mrf.mxu0
        %v6344 = vpop.f32.mrf.mxu0
        %6345 = vmatprep.mubr.bf16.mxu0 0
        %6346 = vmatmul.mubr.bf16.gmra.mxu0 %v6189
        %v6347 = vpop.f32.mrf.mxu0
        %v6348 = vadd.f32 0.0, %v6347
        %v6349 = vpop.f32.mrf.mxu0
        %v6350 = vpop.f32.mrf.mxu0
        %v6351 = vadd.f32 0.0, %v6350
        %v6352 = vpop.f32.mrf.mxu0
        %6353 = vmatprep.mubr.bf16.mxu0 0
        %6354 = vmatmul.mubr.bf16.gmra.mxu0 %v6190
        %v6355 = vpop.f32.mrf.mxu0
        %v6356 = vpop.f32.mrf.mxu0
        %v6357 = vpop.f32.mrf.mxu0
        %v6358 = vpop.f32.mrf.mxu0
        %6359 = vmatprep.mubr.bf16.mxu0 0
        %6360 = vmatmul.mubr.bf16.gmra.mxu0 %v6191
        %v6361 = vpop.f32.mrf.mxu0
        %v6362 = vadd.f32 0.0, %v6361
        %v6363 = vpop.f32.mrf.mxu0
        %v6364 = vpop.f32.mrf.mxu0
        %v6365 = vadd.f32 0.0, %v6364
        %v6366 = vpop.f32.mrf.mxu0
        %6367 = vmatprep.mubr.bf16.mxu0 0
        %6368 = vmatmul.mubr.bf16.gmra.mxu0 %v6192
        %v6369 = vpop.f32.mrf.mxu0
        %v6370 = vpop.f32.mrf.mxu0
        %v6371 = vpop.f32.mrf.mxu0
        %v6372 = vpop.f32.mrf.mxu0
        %6373 = vmatprep.mubr.bf16.mxu0 0
        %6374 = vmatmul.mubr.bf16.gmra.mxu0 %v6193
        %v6375 = vpop.f32.mrf.mxu0
        %v6376 = vadd.f32 0.0, %v6375
        %v6377 = vpop.f32.mrf.mxu0
        %v6378 = vpop.f32.mrf.mxu0
        %v6379 = vadd.f32 0.0, %v6378
        %v6380 = vpop.f32.mrf.mxu0
        %6381 = vmatprep.mubr.bf16.mxu0 0
        %6382 = vmatmul.mubr.bf16.gmra.mxu0 %v6194
        %v6383 = vpop.f32.mrf.mxu0
        %v6384 = vpop.f32.mrf.mxu0
        %v6385 = vpop.f32.mrf.mxu0
        %v6386 = vpop.f32.mrf.mxu0
        %6387 = vmatprep.mubr.bf16.mxu0 0
        %6388 = vmatmul.mubr.bf16.gmra.mxu0 %v6195
        %v6389 = vpop.f32.mrf.mxu0
        %v6390 = vadd.f32 0.0, %v6389
        %v6391 = vpop.f32.mrf.mxu0
        %v6392 = vpop.f32.mrf.mxu0
        %v6393 = vadd.f32 0.0, %v6392
        %v6394 = vpop.f32.mrf.mxu0
        %6395 = vmatprep.mubr.bf16.mxu0 0
        %6396 = vmatmul.mubr.bf16.gmra.mxu0 %v6196
        %v6397 = vpop.f32.mrf.mxu0
        %v6398 = vpop.f32.mrf.mxu0
        %v6399 = vpop.f32.mrf.mxu0
        %v6400 = vpop.f32.mrf.mxu0
        %6401 = vmatprep.mubr.bf16.mxu0 0
        %6402 = vmatmul.mubr.bf16.gmra.mxu0 %v6197
        %v6403 = vpop.f32.mrf.mxu0
        %v6404 = vadd.f32 0.0, %v6403
        %v6405 = vpop.f32.mrf.mxu0
        %v6406 = vpop.f32.mrf.mxu0
        %v6407 = vadd.f32 0.0, %v6406
        %v6408 = vpop.f32.mrf.mxu0
        %6409 = vmatprep.mubr.bf16.mxu0 0
        %6410 = vmatmul.mubr.bf16.gmra.mxu0 %v6198
        %v6411 = vpop.f32.mrf.mxu0
        %v6412 = vpop.f32.mrf.mxu0
        %v6413 = vpop.f32.mrf.mxu0
        %v6414 = vpop.f32.mrf.mxu0
        %6415 = vmatprep.mubr.bf16.mxu0 0
        %6416 = vmatmul.mubr.bf16.gmra.mxu0 %v6199
        %v6417 = vpop.f32.mrf.mxu0
        %v6418 = vadd.f32 0.0, %v6417
        %v6419 = vpop.f32.mrf.mxu0
        %v6420 = vpop.f32.mrf.mxu0
        %v6421 = vadd.f32 0.0, %v6420
        %v6422 = vpop.f32.mrf.mxu0
        %6423 = vmatprep.mubr.bf16.mxu0 0
        %6424 = vmatmul.mubr.bf16.gmra.mxu0 %v6200
        %v6425 = vpop.f32.mrf.mxu0
        %v6426 = vpop.f32.mrf.mxu0
        %v6427 = vpop.f32.mrf.mxu0
        %v6428 = vpop.f32.mrf.mxu0
        %6429 = vmatprep.mubr.bf16.mxu0 0
        %6430 = vmatmul.mubr.bf16.gmra.mxu0 %v6201
        %v6431 = vpop.f32.mrf.mxu0
        %v6432 = vadd.f32 0.0, %v6431
        %v6433 = vpop.f32.mrf.mxu0
        %v6434 = vpop.f32.mrf.mxu0
        %v6435 = vadd.f32 0.0, %v6434
        %v6436 = vpop.f32.mrf.mxu0
        %6437 = vmatprep.mubr.bf16.mxu0 0
        %6438 = vmatmul.mubr.bf16.gmra.mxu0 %v6202
        %v6439 = vpop.f32.mrf.mxu0
        %v6440 = vpop.f32.mrf.mxu0
        %v6441 = vpop.f32.mrf.mxu0
        %v6442 = vpop.f32.mrf.mxu0
        %6443 = vmatprep.mubr.bf16.mxu0 0
        %6444 = vmatmul.mubr.bf16.gmra.mxu0 %v6203
        %v6445 = vpop.f32.mrf.mxu0
        %v6446 = vadd.f32 0.0, %v6445
        %v6447 = vpop.f32.mrf.mxu0
        %v6448 = vpop.f32.mrf.mxu0
        %v6449 = vadd.f32 0.0, %v6448
        %v6450 = vpop.f32.mrf.mxu0
        %6451 = vmatprep.mubr.bf16.mxu0 0
        %6452 = vmatmul.mubr.bf16.gmra.mxu0 %v6204
        %v6453 = vpop.f32.mrf.mxu0
        %v6454 = vpop.f32.mrf.mxu0
        %v6455 = vpop.f32.mrf.mxu0
        %v6456 = vpop.f32.mrf.mxu0
        %6457 = vmatprep.mubr.bf16.mxu0 0
        %6458 = vmatmul.mubr.bf16.gmra.mxu0 %v6205
        %v6459 = vpop.f32.mrf.mxu0
        %v6460 = vadd.f32 0.0, %v6459
        %v6461 = vpop.f32.mrf.mxu0
        %v6462 = vpop.f32.mrf.mxu0
        %v6463 = vadd.f32 0.0, %v6462
        %v6464 = vpop.f32.mrf.mxu0
        %6465 = vmatprep.mubr.bf16.mxu0 0
        %6466 = vmatmul.mubr.bf16.gmra.mxu0 %v6206
        %v6467 = vpop.f32.mrf.mxu0
        %v6468 = vpop.f32.mrf.mxu0
        %v6469 = vpop.f32.mrf.mxu0
        %v6470 = vpop.f32.mrf.mxu0
        %6471 = vmatprep.mubr.bf16.mxu0 0
        %6472 = vmatmul.mubr.bf16.gmra.mxu0 %v6207
        %v6473 = vpop.f32.mrf.mxu0
        %v6474 = vadd.f32 0.0, %v6473
        %v6475 = vpop.f32.mrf.mxu0
        %v6476 = vpop.f32.mrf.mxu0
        %v6477 = vadd.f32 0.0, %v6476
        %v6478 = vpop.f32.mrf.mxu0
        %6479 = vmatprep.mubr.bf16.mxu0 0
        %6480 = vmatmul.mubr.bf16.gmra.mxu0 %v6208
        %v6481 = vpop.f32.mrf.mxu0
        %v6482 = vpop.f32.mrf.mxu0
        %v6483 = vpop.f32.mrf.mxu0
        %v6484 = vpop.f32.mrf.mxu0
        %6485 = vmatprep.mubr.bf16.mxu0 0
        %6486 = vmatmul.mubr.bf16.gmra.mxu0 %v6209
        %v6487 = vpop.f32.mrf.mxu0
        %v6488 = vadd.f32 0.0, %v6487
        %v6489 = vpop.f32.mrf.mxu0
        %v6490 = vpop.f32.mrf.mxu0
        %v6491 = vadd.f32 0.0, %v6490
        %v6492 = vpop.f32.mrf.mxu0
        %6493 = vmatprep.mubr.bf16.mxu0 0
        %6494 = vmatmul.mubr.bf16.gmra.mxu0 %v6210
        %v6495 = vpop.f32.mrf.mxu0
        %v6496 = vpop.f32.mrf.mxu0
        %v6497 = vpop.f32.mrf.mxu0
        %v6498 = vpop.f32.mrf.mxu0
        %6499 = vmatprep.mubr.bf16.mxu0 0
        %6500 = vmatmul.mubr.bf16.gmra.mxu0 %v6211
        %v6501 = vpop.f32.mrf.mxu0
        %v6502 = vadd.f32 0.0, %v6501
        %v6503 = vpop.f32.mrf.mxu0
        %v6504 = vpop.f32.mrf.mxu0
        %v6505 = vadd.f32 0.0, %v6504
        %v6506 = vpop.f32.mrf.mxu0
        %6507 = vmatprep.mubr.bf16.mxu0 0
        %6508 = vmatmul.mubr.bf16.gmra.mxu0 %v6212
        %v6509 = vpop.f32.mrf.mxu0
        %v6510 = vpop.f32.mrf.mxu0
        %v6511 = vpop.f32.mrf.mxu0
        %v6512 = vpop.f32.mrf.mxu0
        %6513 = vmatprep.mubr.bf16.mxu0 0
        %6514 = vmatmul.mubr.bf16.gmra.mxu0 %v6213
        %v6515 = vpop.f32.mrf.mxu0
        %v6516 = vadd.f32 0.0, %v6515
        %v6517 = vpop.f32.mrf.mxu0
        %v6518 = vpop.f32.mrf.mxu0
        %v6519 = vadd.f32 0.0, %v6518
        %v6520 = vpop.f32.mrf.mxu0
        %6521 = vmatprep.mubr.bf16.mxu0 0
        %6522 = vmatmul.mubr.bf16.gmra.mxu0 %v6214
        %v6523 = vpop.f32.mrf.mxu0
        %v6524 = vpop.f32.mrf.mxu0
        %v6525 = vpop.f32.mrf.mxu0
        %v6526 = vpop.f32.mrf.mxu0
        %6527 = vmatprep.mubr.bf16.mxu0 0
        %6528 = vmatmul.mubr.bf16.gmra.mxu0 %v6215
        %v6529 = vpop.f32.mrf.mxu0
        %v6530 = vadd.f32 0.0, %v6529
        %v6531 = vpop.f32.mrf.mxu0
        %v6532 = vpop.f32.mrf.mxu0
        %v6533 = vadd.f32 0.0, %v6532
        %v6534 = vpop.f32.mrf.mxu0
        %6535 = vmatprep.mubr.bf16.mxu0 0
        %6536 = vmatmul.mubr.bf16.gmra.mxu0 %v6216
        %v6537 = vpop.f32.mrf.mxu0
        %v6538 = vpop.f32.mrf.mxu0
        %v6539 = vpop.f32.mrf.mxu0
        %v6540 = vpop.f32.mrf.mxu0
        %6541 = vmatprep.mubr.bf16.mxu0 0
        %6542 = vmatmul.mubr.bf16.gmra.mxu0 %v6217
        %v6543 = vpop.f32.mrf.mxu0
        %v6544 = vadd.f32 0.0, %v6543
        %v6545 = vpop.f32.mrf.mxu0
        %v6546 = vpop.f32.mrf.mxu0
        %v6547 = vadd.f32 0.0, %v6546
        %v6548 = vpop.f32.mrf.mxu0
        %6549 = vmatprep.mubr.bf16.mxu0 0
        %6550 = vmatmul.mubr.bf16.gmra.mxu0 %v6218
        %v6551 = vpop.f32.mrf.mxu0
        %v6552 = vpop.f32.mrf.mxu0
        %v6553 = vpop.f32.mrf.mxu0
        %v6554 = vpop.f32.mrf.mxu0
        %6555 = vdwg.mxu0
        %v6560 = vunpack.c.l.b16 %v5955
        %v6561 = vunpack.c.l.b16 %v5956
        %v6562 = vunpack.c.l.b16 %v5957
        %v6563 = vunpack.c.l.b16 %v5958
        %v6564 = vpack.c.b16 %v6561, %v6560
        %v6565 = vpack.c.b16 %v6563, %v6562
        %v6584 = vunpack.c.l.b16 %v6027
        %v6585 = vunpack.c.l.b16 %v6028
        %v6586 = vunpack.c.l.b16 %v6029
        %v6587 = vunpack.c.l.b16 %v6030
        %v6588 = vunpack.c.l.b16 %v6031
        %v6589 = vunpack.c.l.b16 %v6032
        %v6590 = vunpack.c.l.b16 %v6033
        %v6591 = vunpack.c.l.b16 %v6034
        %v6592 = vunpack.c.l.b16 %v6035
        %v6593 = vunpack.c.l.b16 %v6036
        %v6594 = vunpack.c.l.b16 %v6037
        %v6595 = vunpack.c.l.b16 %v6038
        %v6596 = vunpack.c.l.b16 %v6039
        %v6597 = vunpack.c.l.b16 %v6040
        %v6598 = vunpack.c.l.b16 %v6041
        %v6599 = vunpack.c.l.b16 %v6042
        %v6600 = vpack.c.b16 %v6585, %v6584
        %v6601 = vpack.c.b16 %v6587, %v6586
        %v6602 = vpack.c.b16 %v6589, %v6588
        %v6603 = vpack.c.b16 %v6591, %v6590
        %v6604 = vpack.c.b16 %v6593, %v6592
        %v6605 = vpack.c.b16 %v6595, %v6594
        %v6606 = vpack.c.b16 %v6597, %v6596
        %v6607 = vpack.c.b16 %v6599, %v6598
        %6616 = vmatprep.subr.bf16.mxu0 0
        %6617 = vmatpush1.bf16.msra.mxu0 %v6607
        %6618 = vmatprep.subr.bf16.mxu0 0
        %6619 = vmatpush1.bf16.msra.mxu0 %v6606
        %6620 = vmatprep.subr.bf16.mxu0 0
        %6621 = vmatpush1.bf16.msra.mxu0 %v6605
        %6622 = vmatprep.subr.bf16.mxu0 0
        %6623 = vmatpush1.bf16.msra.mxu0 %v6604
        %6624 = vmatprep.subr.bf16.mxu0 0
        %6625 = vmatpush1.bf16.msra.mxu0 %v6603
        %6626 = vmatprep.subr.bf16.mxu0 0
        %6627 = vmatpush1.bf16.msra.mxu0 %v6602
        %6628 = vmatprep.subr.bf16.mxu0 0
        %6629 = vmatpush1.bf16.msra.mxu0 %v6601
        %6630 = vmatprep.subr.bf16.mxu0 0
        %6631 = vmatpush1.bf16.msra.mxu0 %v6600
        %6632 = vmatprep.subr.bf16.mxu0 0
        %6633 = vmatpush2.bf16.msra.mxu0 0
        %6634 = vmatprep.subr.bf16.mxu0 0
        %6635 = vmatpush2.bf16.msra.mxu0 0
        %6636 = vmatprep.subr.bf16.mxu0 0
        %6637 = vmatpush2.bf16.msra.mxu0 0
        %6638 = vmatprep.subr.bf16.mxu0 0
        %6639 = vmatpush2.bf16.msra.mxu0 0
        %6640 = vmatprep.subr.bf16.mxu0 0
        %6641 = vmatpush2.bf16.msra.mxu0 0
        %6642 = vmatprep.subr.bf16.mxu0 0
        %6643 = vmatpush2.bf16.msra.mxu0 0
        %6644 = vmatprep.subr.bf16.mxu0 0
        %6645 = vmatpush2.bf16.msra.mxu0 0
        %6646 = vmatprep.subr.bf16.mxu0 0
        %6647 = vmatpush2.bf16.msra.mxu0 0
        %6648 = vmatprep.mubr.bf16.mxu0 0
        %6649 = vmatmul.mubr.bf16.gmra.mxu0 %v6564
        %v6650 = vpop.f32.mrf.mxu0
        %v6651 = vadd.f32 %v6334, %v6650
        %v6652 = vpop.f32.mrf.mxu0
        %v6653 = vpop.f32.mrf.mxu0
        %v6654 = vadd.f32 %v6337, %v6653
        %v6655 = vpop.f32.mrf.mxu0
        %6656 = vmatprep.mubr.bf16.mxu0 0
        %6657 = vmatmul.mubr.bf16.gmra.mxu0 %v6565
        %v6658 = vpop.f32.mrf.mxu0
        %v6659 = vpop.f32.mrf.mxu0
        %v6660 = vpop.f32.mrf.mxu0
        %v6661 = vpop.f32.mrf.mxu0
        %6662 = vmatprep.mubr.bf16.mxu0 0
        %6663 = vmatmul.mubr.bf16.gmra.mxu0 %v6187
        %v6664 = vpop.f32.mrf.mxu0
        %v6665 = vadd.f32 %v6348, %v6664
        %v6666 = vpop.f32.mrf.mxu0
        %v6667 = vpop.f32.mrf.mxu0
        %v6668 = vadd.f32 %v6351, %v6667
        %v6669 = vpop.f32.mrf.mxu0
        %6670 = vmatprep.mubr.bf16.mxu0 0
        %6671 = vmatmul.mubr.bf16.gmra.mxu0 %v6188
        %v6672 = vpop.f32.mrf.mxu0
        %v6673 = vpop.f32.mrf.mxu0
        %v6674 = vpop.f32.mrf.mxu0
        %v6675 = vpop.f32.mrf.mxu0
        %6676 = vmatprep.mubr.bf16.mxu0 0
        %6677 = vmatmul.mubr.bf16.gmra.mxu0 %v6189
        %v6678 = vpop.f32.mrf.mxu0
        %v6679 = vadd.f32 %v6362, %v6678
        %v6680 = vpop.f32.mrf.mxu0
        %v6681 = vpop.f32.mrf.mxu0
        %v6682 = vadd.f32 %v6365, %v6681
        %v6683 = vpop.f32.mrf.mxu0
        %6684 = vmatprep.mubr.bf16.mxu0 0
        %6685 = vmatmul.mubr.bf16.gmra.mxu0 %v6190
        %v6686 = vpop.f32.mrf.mxu0
        %v6687 = vpop.f32.mrf.mxu0
        %v6688 = vpop.f32.mrf.mxu0
        %v6689 = vpop.f32.mrf.mxu0
        %6690 = vmatprep.mubr.bf16.mxu0 0
        %6691 = vmatmul.mubr.bf16.gmra.mxu0 %v6191
        %v6692 = vpop.f32.mrf.mxu0
        %v6693 = vadd.f32 %v6376, %v6692
        %v6694 = vpop.f32.mrf.mxu0
        %v6695 = vpop.f32.mrf.mxu0
        %v6696 = vadd.f32 %v6379, %v6695
        %v6697 = vpop.f32.mrf.mxu0
        %6698 = vmatprep.mubr.bf16.mxu0 0
        %6699 = vmatmul.mubr.bf16.gmra.mxu0 %v6192
        %v6700 = vpop.f32.mrf.mxu0
        %v6701 = vpop.f32.mrf.mxu0
        %v6702 = vpop.f32.mrf.mxu0
        %v6703 = vpop.f32.mrf.mxu0
        %6704 = vmatprep.mubr.bf16.mxu0 0
        %6705 = vmatmul.mubr.bf16.gmra.mxu0 %v6193
        %v6706 = vpop.f32.mrf.mxu0
        %v6707 = vadd.f32 %v6390, %v6706
        %v6708 = vpop.f32.mrf.mxu0
        %v6709 = vpop.f32.mrf.mxu0
        %v6710 = vadd.f32 %v6393, %v6709
        %v6711 = vpop.f32.mrf.mxu0
        %6712 = vmatprep.mubr.bf16.mxu0 0
        %6713 = vmatmul.mubr.bf16.gmra.mxu0 %v6194
        %v6714 = vpop.f32.mrf.mxu0
        %v6715 = vpop.f32.mrf.mxu0
        %v6716 = vpop.f32.mrf.mxu0
        %v6717 = vpop.f32.mrf.mxu0
        %6718 = vmatprep.mubr.bf16.mxu0 0
        %6719 = vmatmul.mubr.bf16.gmra.mxu0 %v6195
        %v6720 = vpop.f32.mrf.mxu0
        %v6721 = vadd.f32 %v6404, %v6720
        %v6722 = vpop.f32.mrf.mxu0
        %v6723 = vpop.f32.mrf.mxu0
        %v6724 = vadd.f32 %v6407, %v6723
        %v6725 = vpop.f32.mrf.mxu0
        %6726 = vmatprep.mubr.bf16.mxu0 0
        %6727 = vmatmul.mubr.bf16.gmra.mxu0 %v6196
        %v6728 = vpop.f32.mrf.mxu0
        %v6729 = vpop.f32.mrf.mxu0
        %v6730 = vpop.f32.mrf.mxu0
        %v6731 = vpop.f32.mrf.mxu0
        %6732 = vmatprep.mubr.bf16.mxu0 0
        %6733 = vmatmul.mubr.bf16.gmra.mxu0 %v6197
        %v6734 = vpop.f32.mrf.mxu0
        %v6735 = vadd.f32 %v6418, %v6734
        %v6736 = vpop.f32.mrf.mxu0
        %v6737 = vpop.f32.mrf.mxu0
        %v6738 = vadd.f32 %v6421, %v6737
        %v6739 = vpop.f32.mrf.mxu0
        %6740 = vmatprep.mubr.bf16.mxu0 0
        %6741 = vmatmul.mubr.bf16.gmra.mxu0 %v6198
        %v6742 = vpop.f32.mrf.mxu0
        %v6743 = vpop.f32.mrf.mxu0
        %v6744 = vpop.f32.mrf.mxu0
        %v6745 = vpop.f32.mrf.mxu0
        %6746 = vmatprep.mubr.bf16.mxu0 0
        %6747 = vmatmul.mubr.bf16.gmra.mxu0 %v6199
        %v6748 = vpop.f32.mrf.mxu0
        %v6749 = vadd.f32 %v6432, %v6748
        %v6750 = vpop.f32.mrf.mxu0
        %v6751 = vpop.f32.mrf.mxu0
        %v6752 = vadd.f32 %v6435, %v6751
        %v6753 = vpop.f32.mrf.mxu0
        %6754 = vmatprep.mubr.bf16.mxu0 0
        %6755 = vmatmul.mubr.bf16.gmra.mxu0 %v6200
        %v6756 = vpop.f32.mrf.mxu0
        %v6757 = vpop.f32.mrf.mxu0
        %v6758 = vpop.f32.mrf.mxu0
        %v6759 = vpop.f32.mrf.mxu0
        %6760 = vmatprep.mubr.bf16.mxu0 0
        %6761 = vmatmul.mubr.bf16.gmra.mxu0 %v6201
        %v6762 = vpop.f32.mrf.mxu0
        %v6763 = vadd.f32 %v6446, %v6762
        %v6764 = vpop.f32.mrf.mxu0
        %v6765 = vpop.f32.mrf.mxu0
        %v6766 = vadd.f32 %v6449, %v6765
        %v6767 = vpop.f32.mrf.mxu0
        %6768 = vmatprep.mubr.bf16.mxu0 0
        %6769 = vmatmul.mubr.bf16.gmra.mxu0 %v6202
        %v6770 = vpop.f32.mrf.mxu0
        %v6771 = vpop.f32.mrf.mxu0
        %v6772 = vpop.f32.mrf.mxu0
        %v6773 = vpop.f32.mrf.mxu0
        %6774 = vmatprep.mubr.bf16.mxu0 0
        %6775 = vmatmul.mubr.bf16.gmra.mxu0 %v6203
        %v6776 = vpop.f32.mrf.mxu0
        %v6777 = vadd.f32 %v6460, %v6776
        %v6778 = vpop.f32.mrf.mxu0
        %v6779 = vpop.f32.mrf.mxu0
        %v6780 = vadd.f32 %v6463, %v6779
        %v6781 = vpop.f32.mrf.mxu0
        %6782 = vmatprep.mubr.bf16.mxu0 0
        %6783 = vmatmul.mubr.bf16.gmra.mxu0 %v6204
        %v6784 = vpop.f32.mrf.mxu0
        %v6785 = vpop.f32.mrf.mxu0
        %v6786 = vpop.f32.mrf.mxu0
        %v6787 = vpop.f32.mrf.mxu0
        %6788 = vmatprep.mubr.bf16.mxu0 0
        %6789 = vmatmul.mubr.bf16.gmra.mxu0 %v6205
        %v6790 = vpop.f32.mrf.mxu0
        %v6791 = vadd.f32 %v6474, %v6790
        %v6792 = vpop.f32.mrf.mxu0
        %v6793 = vpop.f32.mrf.mxu0
        %v6794 = vadd.f32 %v6477, %v6793
        %v6795 = vpop.f32.mrf.mxu0
        %6796 = vmatprep.mubr.bf16.mxu0 0
        %6797 = vmatmul.mubr.bf16.gmra.mxu0 %v6206
        %v6798 = vpop.f32.mrf.mxu0
        %v6799 = vpop.f32.mrf.mxu0
        %v6800 = vpop.f32.mrf.mxu0
        %v6801 = vpop.f32.mrf.mxu0
        %6802 = vmatprep.mubr.bf16.mxu0 0
        %6803 = vmatmul.mubr.bf16.gmra.mxu0 %v6207
        %v6804 = vpop.f32.mrf.mxu0
        %v6805 = vadd.f32 %v6488, %v6804
        %v6806 = vpop.f32.mrf.mxu0
        %v6807 = vpop.f32.mrf.mxu0
        %v6808 = vadd.f32 %v6491, %v6807
        %v6809 = vpop.f32.mrf.mxu0
        %6810 = vmatprep.mubr.bf16.mxu0 0
        %6811 = vmatmul.mubr.bf16.gmra.mxu0 %v6208
        %v6812 = vpop.f32.mrf.mxu0
        %v6813 = vpop.f32.mrf.mxu0
        %v6814 = vpop.f32.mrf.mxu0
        %v6815 = vpop.f32.mrf.mxu0
        %6816 = vmatprep.mubr.bf16.mxu0 0
        %6817 = vmatmul.mubr.bf16.gmra.mxu0 %v6209
        %v6818 = vpop.f32.mrf.mxu0
        %v6819 = vadd.f32 %v6502, %v6818
        %v6820 = vpop.f32.mrf.mxu0
        %v6821 = vpop.f32.mrf.mxu0
        %v6822 = vadd.f32 %v6505, %v6821
        %v6823 = vpop.f32.mrf.mxu0
        %6824 = vmatprep.mubr.bf16.mxu0 0
        %6825 = vmatmul.mubr.bf16.gmra.mxu0 %v6210
        %v6826 = vpop.f32.mrf.mxu0
        %v6827 = vpop.f32.mrf.mxu0
        %v6828 = vpop.f32.mrf.mxu0
        %v6829 = vpop.f32.mrf.mxu0
        %6830 = vmatprep.mubr.bf16.mxu0 0
        %6831 = vmatmul.mubr.bf16.gmra.mxu0 %v6211
        %v6832 = vpop.f32.mrf.mxu0
        %v6833 = vadd.f32 %v6516, %v6832
        %v6834 = vpop.f32.mrf.mxu0
        %v6835 = vpop.f32.mrf.mxu0
        %v6836 = vadd.f32 %v6519, %v6835
        %v6837 = vpop.f32.mrf.mxu0
        %6838 = vmatprep.mubr.bf16.mxu0 0
        %6839 = vmatmul.mubr.bf16.gmra.mxu0 %v6212
        %v6840 = vpop.f32.mrf.mxu0
        %v6841 = vpop.f32.mrf.mxu0
        %v6842 = vpop.f32.mrf.mxu0
        %v6843 = vpop.f32.mrf.mxu0
        %6844 = vmatprep.mubr.bf16.mxu0 0
        %6845 = vmatmul.mubr.bf16.gmra.mxu0 %v6213
        %v6846 = vpop.f32.mrf.mxu0
        %v6847 = vadd.f32 %v6530, %v6846
        %v6848 = vpop.f32.mrf.mxu0
        %v6849 = vpop.f32.mrf.mxu0
        %v6850 = vadd.f32 %v6533, %v6849
        %v6851 = vpop.f32.mrf.mxu0
        %6852 = vmatprep.mubr.bf16.mxu0 0
        %6853 = vmatmul.mubr.bf16.gmra.mxu0 %v6214
        %v6854 = vpop.f32.mrf.mxu0
        %v6855 = vpop.f32.mrf.mxu0
        %v6856 = vpop.f32.mrf.mxu0
        %v6857 = vpop.f32.mrf.mxu0
        %6858 = vmatprep.mubr.bf16.mxu0 0
        %6859 = vmatmul.mubr.bf16.gmra.mxu0 %v6215
        %v6860 = vpop.f32.mrf.mxu0
        %v6861 = vadd.f32 %v6544, %v6860
        %v6862 = vpop.f32.mrf.mxu0
        %v6863 = vpop.f32.mrf.mxu0
        %v6864 = vadd.f32 %v6547, %v6863
        %v6865 = vpop.f32.mrf.mxu0
        %6866 = vmatprep.mubr.bf16.mxu0 0
        %6867 = vmatmul.mubr.bf16.gmra.mxu0 %v6216
        %v6868 = vpop.f32.mrf.mxu0
        %v6869 = vpop.f32.mrf.mxu0
        %v6870 = vpop.f32.mrf.mxu0
        %v6871 = vpop.f32.mrf.mxu0
        %6872 = vdwg.mxu0
        %v6873 = vld [vmem:[#allocation8 + $0x180] sm:$0xf]
        %v6874 = vld [vmem:[#allocation8 + $0x184] sm:$0xf]
        %v6875 = vld [vmem:[#allocation8 + $0x188] sm:$0xf]
        %v6876 = vld [vmem:[#allocation8 + $0x18c] sm:$0xf]
        %v6877 = vld [vmem:[#allocation8 + $0x190] sm:$0xf]
        %v6878 = vld [vmem:[#allocation8 + $0x194] sm:$0xf]
        %v6879 = vld [vmem:[#allocation8 + $0x198] sm:$0xf]
        %v6880 = vld [vmem:[#allocation8 + $0x19c] sm:$0xf]
        %v6881 = vld [vmem:[#allocation8 + $0x1a0] sm:$0xf]
        %v6882 = vld [vmem:[#allocation8 + $0x1a4] sm:$0xf]
        %v6883 = vld [vmem:[#allocation8 + $0x1a8] sm:$0xf]
        %v6884 = vld [vmem:[#allocation8 + $0x1ac] sm:$0xf]
        %v6885 = vld [vmem:[#allocation8 + $0x1b0] sm:$0xf]
        %v6886 = vld [vmem:[#allocation8 + $0x1b4] sm:$0xf]
        %v6887 = vld [vmem:[#allocation8 + $0x1b8] sm:$0xf]
        %v6888 = vld [vmem:[#allocation8 + $0x1bc] sm:$0xf]
        %v6893 = vunpack.c.l.b16 %v6023
        %v6894 = vunpack.c.l.b16 %v6024
        %v6895 = vunpack.c.l.b16 %v6025
        %v6896 = vunpack.c.l.b16 %v6026
        %v6897 = vpack.c.b16 %v6894, %v6893
        %v6898 = vpack.c.b16 %v6896, %v6895
        %v6917 = vunpack.c.l.b16 %v6873
        %v6918 = vunpack.c.l.b16 %v6874
        %v6919 = vunpack.c.l.b16 %v6875
        %v6920 = vunpack.c.l.b16 %v6876
        %v6921 = vunpack.c.l.b16 %v6877
        %v6922 = vunpack.c.l.b16 %v6878
        %v6923 = vunpack.c.l.b16 %v6879
        %v6924 = vunpack.c.l.b16 %v6880
        %v6925 = vunpack.c.l.b16 %v6881
        %v6926 = vunpack.c.l.b16 %v6882
        %v6927 = vunpack.c.l.b16 %v6883
        %v6928 = vunpack.c.l.b16 %v6884
        %v6929 = vunpack.c.l.b16 %v6885
        %v6930 = vunpack.c.l.b16 %v6886
        %v6931 = vunpack.c.l.b16 %v6887
        %v6932 = vunpack.c.l.b16 %v6888
        %v6933 = vpack.c.b16 %v6918, %v6917
        %v6934 = vpack.c.b16 %v6920, %v6919
        %v6935 = vpack.c.b16 %v6922, %v6921
        %v6936 = vpack.c.b16 %v6924, %v6923
        %v6937 = vpack.c.b16 %v6926, %v6925
        %v6938 = vpack.c.b16 %v6928, %v6927
        %v6939 = vpack.c.b16 %v6930, %v6929
        %v6940 = vpack.c.b16 %v6932, %v6931
        %6949 = vmatprep.subr.bf16.mxu0 0
        %6950 = vmatpush1.bf16.msra.mxu0 %v6940
        %6951 = vmatprep.subr.bf16.mxu0 0
        %6952 = vmatpush1.bf16.msra.mxu0 %v6939
        %6953 = vmatprep.subr.bf16.mxu0 0
        %6954 = vmatpush1.bf16.msra.mxu0 %v6938
        %6955 = vmatprep.subr.bf16.mxu0 0
        %6956 = vmatpush1.bf16.msra.mxu0 %v6937
        %6957 = vmatprep.subr.bf16.mxu0 0
        %6958 = vmatpush1.bf16.msra.mxu0 %v6936
        %6959 = vmatprep.subr.bf16.mxu0 0
        %6960 = vmatpush1.bf16.msra.mxu0 %v6935
        %6961 = vmatprep.subr.bf16.mxu0 0
        %6962 = vmatpush1.bf16.msra.mxu0 %v6934
        %6963 = vmatprep.subr.bf16.mxu0 0
        %6964 = vmatpush1.bf16.msra.mxu0 %v6933
        %6965 = vmatprep.subr.bf16.mxu0 0
        %6966 = vmatpush2.bf16.msra.mxu0 0
        %6967 = vmatprep.subr.bf16.mxu0 0
        %6968 = vmatpush2.bf16.msra.mxu0 0
        %6969 = vmatprep.subr.bf16.mxu0 0
        %6970 = vmatpush2.bf16.msra.mxu0 0
        %6971 = vmatprep.subr.bf16.mxu0 0
        %6972 = vmatpush2.bf16.msra.mxu0 0
        %6973 = vmatprep.subr.bf16.mxu0 0
        %6974 = vmatpush2.bf16.msra.mxu0 0
        %6975 = vmatprep.subr.bf16.mxu0 0
        %6976 = vmatpush2.bf16.msra.mxu0 0
        %6977 = vmatprep.subr.bf16.mxu0 0
        %6978 = vmatpush2.bf16.msra.mxu0 0
        %6979 = vmatprep.subr.bf16.mxu0 0
        %6980 = vmatpush2.bf16.msra.mxu0 0
        %6981 = vmatprep.mubr.bf16.mxu0 0
        %6982 = vmatmul.mubr.bf16.gmra.mxu0 %v6189
        %v6983 = vpop.f32.mrf.mxu0
        %v6984 = vadd.f32 0.0, %v6983
        %v6985 = vpop.f32.mrf.mxu0
        %v6986 = vpop.f32.mrf.mxu0
        %v6987 = vadd.f32 0.0, %v6986
        %v6988 = vpop.f32.mrf.mxu0
        %6989 = vmatprep.mubr.bf16.mxu0 0
        %6990 = vmatmul.mubr.bf16.gmra.mxu0 %v6190
        %v6991 = vpop.f32.mrf.mxu0
        %v6992 = vpop.f32.mrf.mxu0
        %v6993 = vpop.f32.mrf.mxu0
        %v6994 = vpop.f32.mrf.mxu0
        %6995 = vmatprep.mubr.bf16.mxu0 0
        %6996 = vmatmul.mubr.bf16.gmra.mxu0 %v6191
        %v6997 = vpop.f32.mrf.mxu0
        %v6998 = vadd.f32 0.0, %v6997
        %v6999 = vpop.f32.mrf.mxu0
        %v7000 = vpop.f32.mrf.mxu0
        %v7001 = vadd.f32 0.0, %v7000
        %v7002 = vpop.f32.mrf.mxu0
        %7003 = vmatprep.mubr.bf16.mxu0 0
        %7004 = vmatmul.mubr.bf16.gmra.mxu0 %v6192
        %v7005 = vpop.f32.mrf.mxu0
        %v7006 = vpop.f32.mrf.mxu0
        %v7007 = vpop.f32.mrf.mxu0
        %v7008 = vpop.f32.mrf.mxu0
        %7009 = vmatprep.mubr.bf16.mxu0 0
        %7010 = vmatmul.mubr.bf16.gmra.mxu0 %v6193
        %v7011 = vpop.f32.mrf.mxu0
        %v7012 = vadd.f32 0.0, %v7011
        %v7013 = vpop.f32.mrf.mxu0
        %v7014 = vpop.f32.mrf.mxu0
        %v7015 = vadd.f32 0.0, %v7014
        %v7016 = vpop.f32.mrf.mxu0
        %7017 = vmatprep.mubr.bf16.mxu0 0
        %7018 = vmatmul.mubr.bf16.gmra.mxu0 %v6194
        %v7019 = vpop.f32.mrf.mxu0
        %v7020 = vpop.f32.mrf.mxu0
        %v7021 = vpop.f32.mrf.mxu0
        %v7022 = vpop.f32.mrf.mxu0
        %7023 = vmatprep.mubr.bf16.mxu0 0
        %7024 = vmatmul.mubr.bf16.gmra.mxu0 %v6195
        %v7025 = vpop.f32.mrf.mxu0
        %v7026 = vadd.f32 0.0, %v7025
        %v7027 = vpop.f32.mrf.mxu0
        %v7028 = vpop.f32.mrf.mxu0
        %v7029 = vadd.f32 0.0, %v7028
        %v7030 = vpop.f32.mrf.mxu0
        %7031 = vmatprep.mubr.bf16.mxu0 0
        %7032 = vmatmul.mubr.bf16.gmra.mxu0 %v6196
        %v7033 = vpop.f32.mrf.mxu0
        %v7034 = vpop.f32.mrf.mxu0
        %v7035 = vpop.f32.mrf.mxu0
        %v7036 = vpop.f32.mrf.mxu0
        %7037 = vmatprep.mubr.bf16.mxu0 0
        %7038 = vmatmul.mubr.bf16.gmra.mxu0 %v6197
        %v7039 = vpop.f32.mrf.mxu0
        %v7040 = vadd.f32 0.0, %v7039
        %v7041 = vpop.f32.mrf.mxu0
        %v7042 = vpop.f32.mrf.mxu0
        %v7043 = vadd.f32 0.0, %v7042
        %v7044 = vpop.f32.mrf.mxu0
        %7045 = vmatprep.mubr.bf16.mxu0 0
        %7046 = vmatmul.mubr.bf16.gmra.mxu0 %v6198
        %v7047 = vpop.f32.mrf.mxu0
        %v7048 = vpop.f32.mrf.mxu0
        %v7049 = vpop.f32.mrf.mxu0
        %v7050 = vpop.f32.mrf.mxu0
        %7051 = vmatprep.mubr.bf16.mxu0 0
        %7052 = vmatmul.mubr.bf16.gmra.mxu0 %v6199
        %v7053 = vpop.f32.mrf.mxu0
        %v7054 = vadd.f32 0.0, %v7053
        %v7055 = vpop.f32.mrf.mxu0
        %v7056 = vpop.f32.mrf.mxu0
        %v7057 = vadd.f32 0.0, %v7056
        %v7058 = vpop.f32.mrf.mxu0
        %7059 = vmatprep.mubr.bf16.mxu0 0
        %7060 = vmatmul.mubr.bf16.gmra.mxu0 %v6200
        %v7061 = vpop.f32.mrf.mxu0
        %v7062 = vpop.f32.mrf.mxu0
        %v7063 = vpop.f32.mrf.mxu0
        %v7064 = vpop.f32.mrf.mxu0
        %7065 = vmatprep.mubr.bf16.mxu0 0
        %7066 = vmatmul.mubr.bf16.gmra.mxu0 %v6201
        %v7067 = vpop.f32.mrf.mxu0
        %v7068 = vadd.f32 0.0, %v7067
        %v7069 = vpop.f32.mrf.mxu0
        %v7070 = vpop.f32.mrf.mxu0
        %v7071 = vadd.f32 0.0, %v7070
        %v7072 = vpop.f32.mrf.mxu0
        %7073 = vmatprep.mubr.bf16.mxu0 0
        %7074 = vmatmul.mubr.bf16.gmra.mxu0 %v6202
        %v7075 = vpop.f32.mrf.mxu0
        %v7076 = vpop.f32.mrf.mxu0
        %v7077 = vpop.f32.mrf.mxu0
        %v7078 = vpop.f32.mrf.mxu0
        %7079 = vmatprep.mubr.bf16.mxu0 0
        %7080 = vmatmul.mubr.bf16.gmra.mxu0 %v6203
        %v7081 = vpop.f32.mrf.mxu0
        %v7082 = vadd.f32 0.0, %v7081
        %v7083 = vpop.f32.mrf.mxu0
        %v7084 = vpop.f32.mrf.mxu0
        %v7085 = vadd.f32 0.0, %v7084
        %v7086 = vpop.f32.mrf.mxu0
        %7087 = vmatprep.mubr.bf16.mxu0 0
        %7088 = vmatmul.mubr.bf16.gmra.mxu0 %v6204
        %v7089 = vpop.f32.mrf.mxu0
        %v7090 = vpop.f32.mrf.mxu0
        %v7091 = vpop.f32.mrf.mxu0
        %v7092 = vpop.f32.mrf.mxu0
        %7093 = vmatprep.mubr.bf16.mxu0 0
        %7094 = vmatmul.mubr.bf16.gmra.mxu0 %v6205
        %v7095 = vpop.f32.mrf.mxu0
        %v7096 = vadd.f32 0.0, %v7095
        %v7097 = vpop.f32.mrf.mxu0
        %v7098 = vpop.f32.mrf.mxu0
        %v7099 = vadd.f32 0.0, %v7098
        %v7100 = vpop.f32.mrf.mxu0
        %7101 = vmatprep.mubr.bf16.mxu0 0
        %7102 = vmatmul.mubr.bf16.gmra.mxu0 %v6206
        %v7103 = vpop.f32.mrf.mxu0
        %v7104 = vpop.f32.mrf.mxu0
        %v7105 = vpop.f32.mrf.mxu0
        %v7106 = vpop.f32.mrf.mxu0
        %7107 = vmatprep.mubr.bf16.mxu0 0
        %7108 = vmatmul.mubr.bf16.gmra.mxu0 %v6207
        %v7109 = vpop.f32.mrf.mxu0
        %v7110 = vadd.f32 0.0, %v7109
        %v7111 = vpop.f32.mrf.mxu0
        %v7112 = vpop.f32.mrf.mxu0
        %v7113 = vadd.f32 0.0, %v7112
        %v7114 = vpop.f32.mrf.mxu0
        %7115 = vmatprep.mubr.bf16.mxu0 0
        %7116 = vmatmul.mubr.bf16.gmra.mxu0 %v6208
        %v7117 = vpop.f32.mrf.mxu0
        %v7118 = vpop.f32.mrf.mxu0
        %v7119 = vpop.f32.mrf.mxu0
        %v7120 = vpop.f32.mrf.mxu0
        %7121 = vmatprep.mubr.bf16.mxu0 0
        %7122 = vmatmul.mubr.bf16.gmra.mxu0 %v6209
        %v7123 = vpop.f32.mrf.mxu0
        %v7124 = vadd.f32 0.0, %v7123
        %v7125 = vpop.f32.mrf.mxu0
        %v7126 = vpop.f32.mrf.mxu0
        %v7127 = vadd.f32 0.0, %v7126
        %v7128 = vpop.f32.mrf.mxu0
        %7129 = vmatprep.mubr.bf16.mxu0 0
        %7130 = vmatmul.mubr.bf16.gmra.mxu0 %v6210
        %v7131 = vpop.f32.mrf.mxu0
        %v7132 = vpop.f32.mrf.mxu0
        %v7133 = vpop.f32.mrf.mxu0
        %v7134 = vpop.f32.mrf.mxu0
        %7135 = vmatprep.mubr.bf16.mxu0 0
        %7136 = vmatmul.mubr.bf16.gmra.mxu0 %v6211
        %v7137 = vpop.f32.mrf.mxu0
        %v7138 = vadd.f32 0.0, %v7137
        %v7139 = vpop.f32.mrf.mxu0
        %v7140 = vpop.f32.mrf.mxu0
        %v7141 = vadd.f32 0.0, %v7140
        %v7142 = vpop.f32.mrf.mxu0
        %7143 = vmatprep.mubr.bf16.mxu0 0
        %7144 = vmatmul.mubr.bf16.gmra.mxu0 %v6212
        %v7145 = vpop.f32.mrf.mxu0
        %v7146 = vpop.f32.mrf.mxu0
        %v7147 = vpop.f32.mrf.mxu0
        %v7148 = vpop.f32.mrf.mxu0
        %7149 = vmatprep.mubr.bf16.mxu0 0
        %7150 = vmatmul.mubr.bf16.gmra.mxu0 %v6213
        %v7151 = vpop.f32.mrf.mxu0
        %v7152 = vadd.f32 0.0, %v7151
        %v7153 = vpop.f32.mrf.mxu0
        %v7154 = vpop.f32.mrf.mxu0
        %v7155 = vadd.f32 0.0, %v7154
        %v7156 = vpop.f32.mrf.mxu0
        %7157 = vmatprep.mubr.bf16.mxu0 0
        %7158 = vmatmul.mubr.bf16.gmra.mxu0 %v6214
        %v7159 = vpop.f32.mrf.mxu0
        %v7160 = vpop.f32.mrf.mxu0
        %v7161 = vpop.f32.mrf.mxu0
        %v7162 = vpop.f32.mrf.mxu0
        %7163 = vmatprep.mubr.bf16.mxu0 0
        %7164 = vmatmul.mubr.bf16.gmra.mxu0 %v6215
        %v7165 = vpop.f32.mrf.mxu0
        %v7166 = vadd.f32 0.0, %v7165
        %v7167 = vpop.f32.mrf.mxu0
        %v7168 = vpop.f32.mrf.mxu0
        %v7169 = vadd.f32 0.0, %v7168
        %v7170 = vpop.f32.mrf.mxu0
        %7171 = vmatprep.mubr.bf16.mxu0 0
        %7172 = vmatmul.mubr.bf16.gmra.mxu0 %v6216
        %v7173 = vpop.f32.mrf.mxu0
        %v7174 = vpop.f32.mrf.mxu0
        %v7175 = vpop.f32.mrf.mxu0
        %v7176 = vpop.f32.mrf.mxu0
        %7177 = vmatprep.mubr.bf16.mxu0 0
        %7178 = vmatmul.mubr.bf16.gmra.mxu0 %v6217
        %v7179 = vpop.f32.mrf.mxu0
        %v7180 = vadd.f32 0.0, %v7179
        %v7181 = vpop.f32.mrf.mxu0
        %v7182 = vpop.f32.mrf.mxu0
        %v7183 = vadd.f32 0.0, %v7182
        %v7184 = vpop.f32.mrf.mxu0
        %7185 = vmatprep.mubr.bf16.mxu0 0
        %7186 = vmatmul.mubr.bf16.gmra.mxu0 %v6218
        %v7187 = vpop.f32.mrf.mxu0
        %v7188 = vpop.f32.mrf.mxu0
        %v7189 = vpop.f32.mrf.mxu0
        %v7190 = vpop.f32.mrf.mxu0
        %7191 = vmatprep.mubr.bf16.mxu0 0
        %7192 = vmatmul.mubr.bf16.gmra.mxu0 %v6897
        %v7193 = vpop.f32.mrf.mxu0
        %v7194 = vadd.f32 0.0, %v7193
        %v7195 = vpop.f32.mrf.mxu0
        %v7196 = vpop.f32.mrf.mxu0
        %v7197 = vadd.f32 0.0, %v7196
        %v7198 = vpop.f32.mrf.mxu0
        %7199 = vmatprep.mubr.bf16.mxu0 0
        %7200 = vmatmul.mubr.bf16.gmra.mxu0 %v6898
        %v7201 = vpop.f32.mrf.mxu0
        %v7202 = vpop.f32.mrf.mxu0
        %v7203 = vpop.f32.mrf.mxu0
        %v7204 = vpop.f32.mrf.mxu0
        %7205 = vdwg.mxu0
        %v7206 = vadd.f32 %v6651, %v6984
        %v7207 = vadd.f32 %v6654, %v6987
        %v7208 = vadd.f32 %v6665, %v6998
        %v7209 = vadd.f32 %v6668, %v7001
        %v7210 = vadd.f32 %v6679, %v7012
        %v7211 = vadd.f32 %v6682, %v7015
        %v7212 = vadd.f32 %v6693, %v7026
        %v7213 = vadd.f32 %v6696, %v7029
        %v7214 = vadd.f32 %v6707, %v7040
        %v7215 = vadd.f32 %v6710, %v7043
        %v7216 = vadd.f32 %v6721, %v7054
        %v7217 = vadd.f32 %v6724, %v7057
        %v7218 = vadd.f32 %v6735, %v7068
        %v7219 = vadd.f32 %v6738, %v7071
        %v7220 = vadd.f32 %v6749, %v7082
        %v7221 = vadd.f32 %v6752, %v7085
        %v7222 = vadd.f32 %v6763, %v7096
        %v7223 = vadd.f32 %v6766, %v7099
        %v7224 = vadd.f32 %v6777, %v7110
        %v7225 = vadd.f32 %v6780, %v7113
        %v7226 = vadd.f32 %v6791, %v7124
        %v7227 = vadd.f32 %v6794, %v7127
        %v7228 = vadd.f32 %v6805, %v7138
        %v7229 = vadd.f32 %v6808, %v7141
        %v7230 = vadd.f32 %v6819, %v7152
        %v7231 = vadd.f32 %v6822, %v7155
        %v7232 = vadd.f32 %v6833, %v7166
        %v7233 = vadd.f32 %v6836, %v7169
        %v7234 = vadd.f32 %v6847, %v7180
        %v7235 = vadd.f32 %v6850, %v7183
        %v7236 = vadd.f32 %v6861, %v7194
        %v7237 = vadd.f32 %v6864, %v7197
        %v7238 = vld [vmem:[#allocation8 + $0x40] sm:$0xf]
        %v7239 = vld [vmem:[#allocation8 + $0x44] sm:$0xf]
        %v7240 = vld [vmem:[#allocation8 + $0x48] sm:$0xf]
        %v7241 = vld [vmem:[#allocation8 + $0x4c] sm:$0xf]
        %v7242 = vld [vmem:[#allocation8 + $0x50] sm:$0xf]
        %v7243 = vld [vmem:[#allocation8 + $0x54] sm:$0xf]
        %v7244 = vld [vmem:[#allocation8 + $0x58] sm:$0xf]
        %v7245 = vld [vmem:[#allocation8 + $0x5c] sm:$0xf]
        %v7246 = vld [vmem:[#allocation8 + $0x60] sm:$0xf]
        %v7247 = vld [vmem:[#allocation8 + $0x64] sm:$0xf]
        %v7248 = vld [vmem:[#allocation8 + $0x68] sm:$0xf]
        %v7249 = vld [vmem:[#allocation8 + $0x6c] sm:$0xf]
        %v7250 = vld [vmem:[#allocation8 + $0x70] sm:$0xf]
        %v7251 = vld [vmem:[#allocation8 + $0x74] sm:$0xf]
        %v7252 = vld [vmem:[#allocation8 + $0x78] sm:$0xf]
        %v7253 = vld [vmem:[#allocation8 + $0x7c] sm:$0xf]
        %v7254 = vld [vmem:[#allocation8 + $0x100] sm:$0xf]
        %v7255 = vld [vmem:[#allocation8 + $0x104] sm:$0xf]
        %v7256 = vld [vmem:[#allocation8 + $0x108] sm:$0xf]
        %v7257 = vld [vmem:[#allocation8 + $0x10c] sm:$0xf]
        %v7258 = vld [vmem:[#allocation8 + $0x110] sm:$0xf]
        %v7259 = vld [vmem:[#allocation8 + $0x114] sm:$0xf]
        %v7260 = vld [vmem:[#allocation8 + $0x118] sm:$0xf]
        %v7261 = vld [vmem:[#allocation8 + $0x11c] sm:$0xf]
        %v7262 = vld [vmem:[#allocation8 + $0x120] sm:$0xf]
        %v7263 = vld [vmem:[#allocation8 + $0x124] sm:$0xf]
        %v7264 = vld [vmem:[#allocation8 + $0x128] sm:$0xf]
        %v7265 = vld [vmem:[#allocation8 + $0x12c] sm:$0xf]
        %v7266 = vld [vmem:[#allocation8 + $0x130] sm:$0xf]
        %v7267 = vld [vmem:[#allocation8 + $0x134] sm:$0xf]
        %v7268 = vld [vmem:[#allocation8 + $0x138] sm:$0xf]
        %v7269 = vld [vmem:[#allocation8 + $0x13c] sm:$0xf]
        %v7286 = vunpack.c.l.b16 %v7254
        %v7287 = vunpack.c.l.b16 %v7255
        %v7288 = vunpack.c.l.b16 %v7256
        %v7289 = vunpack.c.l.b16 %v7257
        %v7290 = vunpack.c.l.b16 %v7258
        %v7291 = vunpack.c.l.b16 %v7259
        %v7292 = vunpack.c.l.b16 %v7260
        %v7293 = vunpack.c.l.b16 %v7261
        %v7294 = vunpack.c.l.b16 %v7262
        %v7295 = vunpack.c.l.b16 %v7263
        %v7296 = vunpack.c.l.b16 %v7264
        %v7297 = vunpack.c.l.b16 %v7265
        %v7298 = vunpack.c.l.b16 %v7266
        %v7299 = vunpack.c.l.b16 %v7267
        %v7300 = vunpack.c.l.b16 %v7268
        %v7301 = vunpack.c.l.b16 %v7269
        %v7302 = vpack.c.b16 %v7287, %v7286
        %v7303 = vpack.c.b16 %v7289, %v7288
        %v7304 = vpack.c.b16 %v7291, %v7290
        %v7305 = vpack.c.b16 %v7293, %v7292
        %v7306 = vpack.c.b16 %v7295, %v7294
        %v7307 = vpack.c.b16 %v7297, %v7296
        %v7308 = vpack.c.b16 %v7299, %v7298
        %v7309 = vpack.c.b16 %v7301, %v7300
        %7318 = vmatprep.subr.bf16.mxu0 0
        %7319 = vmatpush1.bf16.msra.mxu0 %v7309
        %7320 = vmatprep.subr.bf16.mxu0 0
        %7321 = vmatpush1.bf16.msra.mxu0 %v7308
        %7322 = vmatprep.subr.bf16.mxu0 0
        %7323 = vmatpush1.bf16.msra.mxu0 %v7307
        %7324 = vmatprep.subr.bf16.mxu0 0
        %7325 = vmatpush1.bf16.msra.mxu0 %v7306
        %7326 = vmatprep.subr.bf16.mxu0 0
        %7327 = vmatpush1.bf16.msra.mxu0 %v7305
        %7328 = vmatprep.subr.bf16.mxu0 0
        %7329 = vmatpush1.bf16.msra.mxu0 %v7304
        %7330 = vmatprep.subr.bf16.mxu0 0
        %7331 = vmatpush1.bf16.msra.mxu0 %v7303
        %7332 = vmatprep.subr.bf16.mxu0 0
        %7333 = vmatpush1.bf16.msra.mxu0 %v7302
        %7334 = vmatprep.subr.bf16.mxu0 0
        %7335 = vmatpush2.bf16.msra.mxu0 0
        %7336 = vmatprep.subr.bf16.mxu0 0
        %7337 = vmatpush2.bf16.msra.mxu0 0
        %7338 = vmatprep.subr.bf16.mxu0 0
        %7339 = vmatpush2.bf16.msra.mxu0 0
        %7340 = vmatprep.subr.bf16.mxu0 0
        %7341 = vmatpush2.bf16.msra.mxu0 0
        %7342 = vmatprep.subr.bf16.mxu0 0
        %7343 = vmatpush2.bf16.msra.mxu0 0
        %7344 = vmatprep.subr.bf16.mxu0 0
        %7345 = vmatpush2.bf16.msra.mxu0 0
        %7346 = vmatprep.subr.bf16.mxu0 0
        %7347 = vmatpush2.bf16.msra.mxu0 0
        %7348 = vmatprep.subr.bf16.mxu0 0
        %7349 = vmatpush2.bf16.msra.mxu0 0
        %7350 = vmatprep.mubr.bf16.mxu0 0
        %7351 = vmatmul.mubr.bf16.gmra.mxu0 %v6187
        %v7352 = vpop.f32.mrf.mxu0
        %v7353 = vadd.f32 0.0, %v7352
        %v7354 = vpop.f32.mrf.mxu0
        %v7355 = vpop.f32.mrf.mxu0
        %v7356 = vadd.f32 0.0, %v7355
        %v7357 = vpop.f32.mrf.mxu0
        %7358 = vmatprep.mubr.bf16.mxu0 0
        %7359 = vmatmul.mubr.bf16.gmra.mxu0 %v6188
        %v7360 = vpop.f32.mrf.mxu0
        %v7361 = vadd.f32 0.0, %v7360
        %v7362 = vpop.f32.mrf.mxu0
        %v7363 = vpop.f32.mrf.mxu0
        %v7364 = vpop.f32.mrf.mxu0
        %7365 = vmatprep.mubr.bf16.mxu0 0
        %7366 = vmatmul.mubr.bf16.gmra.mxu0 %v6189
        %v7367 = vpop.f32.mrf.mxu0
        %v7368 = vadd.f32 0.0, %v7367
        %v7369 = vpop.f32.mrf.mxu0
        %v7370 = vpop.f32.mrf.mxu0
        %v7371 = vadd.f32 0.0, %v7370
        %v7372 = vpop.f32.mrf.mxu0
        %7373 = vmatprep.mubr.bf16.mxu0 0
        %7374 = vmatmul.mubr.bf16.gmra.mxu0 %v6190
        %v7375 = vpop.f32.mrf.mxu0
        %v7376 = vadd.f32 0.0, %v7375
        %v7377 = vpop.f32.mrf.mxu0
        %v7378 = vpop.f32.mrf.mxu0
        %v7379 = vpop.f32.mrf.mxu0
        %7380 = vmatprep.mubr.bf16.mxu0 0
        %7381 = vmatmul.mubr.bf16.gmra.mxu0 %v6191
        %v7382 = vpop.f32.mrf.mxu0
        %v7383 = vadd.f32 0.0, %v7382
        %v7384 = vpop.f32.mrf.mxu0
        %v7385 = vpop.f32.mrf.mxu0
        %v7386 = vadd.f32 0.0, %v7385
        %v7387 = vpop.f32.mrf.mxu0
        %7388 = vmatprep.mubr.bf16.mxu0 0
        %7389 = vmatmul.mubr.bf16.gmra.mxu0 %v6192
        %v7390 = vpop.f32.mrf.mxu0
        %v7391 = vadd.f32 0.0, %v7390
        %v7392 = vpop.f32.mrf.mxu0
        %v7393 = vpop.f32.mrf.mxu0
        %v7394 = vpop.f32.mrf.mxu0
        %7395 = vmatprep.mubr.bf16.mxu0 0
        %7396 = vmatmul.mubr.bf16.gmra.mxu0 %v6193
        %v7397 = vpop.f32.mrf.mxu0
        %v7398 = vadd.f32 0.0, %v7397
        %v7399 = vpop.f32.mrf.mxu0
        %v7400 = vpop.f32.mrf.mxu0
        %v7401 = vadd.f32 0.0, %v7400
        %v7402 = vpop.f32.mrf.mxu0
        %7403 = vmatprep.mubr.bf16.mxu0 0
        %7404 = vmatmul.mubr.bf16.gmra.mxu0 %v6194
        %v7405 = vpop.f32.mrf.mxu0
        %v7406 = vadd.f32 0.0, %v7405
        %v7407 = vpop.f32.mrf.mxu0
        %v7408 = vpop.f32.mrf.mxu0
        %v7409 = vpop.f32.mrf.mxu0
        %7410 = vmatprep.mubr.bf16.mxu0 0
        %7411 = vmatmul.mubr.bf16.gmra.mxu0 %v6195
        %v7412 = vpop.f32.mrf.mxu0
        %v7413 = vadd.f32 0.0, %v7412
        %v7414 = vpop.f32.mrf.mxu0
        %v7415 = vpop.f32.mrf.mxu0
        %v7416 = vadd.f32 0.0, %v7415
        %v7417 = vpop.f32.mrf.mxu0
        %7418 = vmatprep.mubr.bf16.mxu0 0
        %7419 = vmatmul.mubr.bf16.gmra.mxu0 %v6196
        %v7420 = vpop.f32.mrf.mxu0
        %v7421 = vadd.f32 0.0, %v7420
        %v7422 = vpop.f32.mrf.mxu0
        %v7423 = vpop.f32.mrf.mxu0
        %v7424 = vpop.f32.mrf.mxu0
        %7425 = vmatprep.mubr.bf16.mxu0 0
        %7426 = vmatmul.mubr.bf16.gmra.mxu0 %v6197
        %v7427 = vpop.f32.mrf.mxu0
        %v7428 = vadd.f32 0.0, %v7427
        %v7429 = vpop.f32.mrf.mxu0
        %v7430 = vpop.f32.mrf.mxu0
        %v7431 = vadd.f32 0.0, %v7430
        %v7432 = vpop.f32.mrf.mxu0
        %7433 = vmatprep.mubr.bf16.mxu0 0
        %7434 = vmatmul.mubr.bf16.gmra.mxu0 %v6198
        %v7435 = vpop.f32.mrf.mxu0
        %v7436 = vadd.f32 0.0, %v7435
        %v7437 = vpop.f32.mrf.mxu0
        %v7438 = vpop.f32.mrf.mxu0
        %v7439 = vpop.f32.mrf.mxu0
        %7440 = vmatprep.mubr.bf16.mxu0 0
        %7441 = vmatmul.mubr.bf16.gmra.mxu0 %v6199
        %v7442 = vpop.f32.mrf.mxu0
        %v7443 = vadd.f32 0.0, %v7442
        %v7444 = vpop.f32.mrf.mxu0
        %v7445 = vpop.f32.mrf.mxu0
        %v7446 = vadd.f32 0.0, %v7445
        %v7447 = vpop.f32.mrf.mxu0
        %7448 = vmatprep.mubr.bf16.mxu0 0
        %7449 = vmatmul.mubr.bf16.gmra.mxu0 %v6200
        %v7450 = vpop.f32.mrf.mxu0
        %v7451 = vadd.f32 0.0, %v7450
        %v7452 = vpop.f32.mrf.mxu0
        %v7453 = vpop.f32.mrf.mxu0
        %v7454 = vpop.f32.mrf.mxu0
        %7455 = vmatprep.mubr.bf16.mxu0 0
        %7456 = vmatmul.mubr.bf16.gmra.mxu0 %v6201
        %v7457 = vpop.f32.mrf.mxu0
        %v7458 = vadd.f32 0.0, %v7457
        %v7459 = vpop.f32.mrf.mxu0
        %v7460 = vpop.f32.mrf.mxu0
        %v7461 = vadd.f32 0.0, %v7460
        %v7462 = vpop.f32.mrf.mxu0
        %7463 = vmatprep.mubr.bf16.mxu0 0
        %7464 = vmatmul.mubr.bf16.gmra.mxu0 %v6202
        %v7465 = vpop.f32.mrf.mxu0
        %v7466 = vadd.f32 0.0, %v7465
        %v7467 = vpop.f32.mrf.mxu0
        %v7468 = vpop.f32.mrf.mxu0
        %v7469 = vpop.f32.mrf.mxu0
        %7470 = vmatprep.mubr.bf16.mxu0 0
        %7471 = vmatmul.mubr.bf16.gmra.mxu0 %v6203
        %v7472 = vpop.f32.mrf.mxu0
        %v7473 = vadd.f32 0.0, %v7472
        %v7474 = vpop.f32.mrf.mxu0
        %v7475 = vpop.f32.mrf.mxu0
        %v7476 = vadd.f32 0.0, %v7475
        %v7477 = vpop.f32.mrf.mxu0
        %7478 = vmatprep.mubr.bf16.mxu0 0
        %7479 = vmatmul.mubr.bf16.gmra.mxu0 %v6204
        %v7480 = vpop.f32.mrf.mxu0
        %v7481 = vadd.f32 0.0, %v7480
        %v7482 = vpop.f32.mrf.mxu0
        %v7483 = vpop.f32.mrf.mxu0
        %v7484 = vpop.f32.mrf.mxu0
        %7485 = vmatprep.mubr.bf16.mxu0 0
        %7486 = vmatmul.mubr.bf16.gmra.mxu0 %v6205
        %v7487 = vpop.f32.mrf.mxu0
        %v7488 = vadd.f32 0.0, %v7487
        %v7489 = vpop.f32.mrf.mxu0
        %v7490 = vpop.f32.mrf.mxu0
        %v7491 = vadd.f32 0.0, %v7490
        %v7492 = vpop.f32.mrf.mxu0
        %7493 = vmatprep.mubr.bf16.mxu0 0
        %7494 = vmatmul.mubr.bf16.gmra.mxu0 %v6206
        %v7495 = vpop.f32.mrf.mxu0
        %v7496 = vadd.f32 0.0, %v7495
        %v7497 = vpop.f32.mrf.mxu0
        %v7498 = vpop.f32.mrf.mxu0
        %v7499 = vpop.f32.mrf.mxu0
        %7500 = vmatprep.mubr.bf16.mxu0 0
        %7501 = vmatmul.mubr.bf16.gmra.mxu0 %v6207
        %v7502 = vpop.f32.mrf.mxu0
        %v7503 = vadd.f32 0.0, %v7502
        %v7504 = vpop.f32.mrf.mxu0
        %v7505 = vpop.f32.mrf.mxu0
        %v7506 = vadd.f32 0.0, %v7505
        %v7507 = vpop.f32.mrf.mxu0
        %7508 = vmatprep.mubr.bf16.mxu0 0
        %7509 = vmatmul.mubr.bf16.gmra.mxu0 %v6208
        %v7510 = vpop.f32.mrf.mxu0
        %v7511 = vadd.f32 0.0, %v7510
        %v7512 = vpop.f32.mrf.mxu0
        %v7513 = vpop.f32.mrf.mxu0
        %v7514 = vpop.f32.mrf.mxu0
        %7515 = vmatprep.mubr.bf16.mxu0 0
        %7516 = vmatmul.mubr.bf16.gmra.mxu0 %v6209
        %v7517 = vpop.f32.mrf.mxu0
        %v7518 = vadd.f32 0.0, %v7517
        %v7519 = vpop.f32.mrf.mxu0
        %v7520 = vpop.f32.mrf.mxu0
        %v7521 = vadd.f32 0.0, %v7520
        %v7522 = vpop.f32.mrf.mxu0
        %7523 = vmatprep.mubr.bf16.mxu0 0
        %7524 = vmatmul.mubr.bf16.gmra.mxu0 %v6210
        %v7525 = vpop.f32.mrf.mxu0
        %v7526 = vadd.f32 0.0, %v7525
        %v7527 = vpop.f32.mrf.mxu0
        %v7528 = vpop.f32.mrf.mxu0
        %v7529 = vpop.f32.mrf.mxu0
        %7530 = vmatprep.mubr.bf16.mxu0 0
        %7531 = vmatmul.mubr.bf16.gmra.mxu0 %v6211
        %v7532 = vpop.f32.mrf.mxu0
        %v7533 = vadd.f32 0.0, %v7532
        %v7534 = vpop.f32.mrf.mxu0
        %v7535 = vpop.f32.mrf.mxu0
        %v7536 = vadd.f32 0.0, %v7535
        %v7537 = vpop.f32.mrf.mxu0
        %7538 = vmatprep.mubr.bf16.mxu0 0
        %7539 = vmatmul.mubr.bf16.gmra.mxu0 %v6212
        %v7540 = vpop.f32.mrf.mxu0
        %v7541 = vadd.f32 0.0, %v7540
        %v7542 = vpop.f32.mrf.mxu0
        %v7543 = vpop.f32.mrf.mxu0
        %v7544 = vpop.f32.mrf.mxu0
        %7545 = vmatprep.mubr.bf16.mxu0 0
        %7546 = vmatmul.mubr.bf16.gmra.mxu0 %v6213
        %v7547 = vpop.f32.mrf.mxu0
        %v7548 = vadd.f32 0.0, %v7547
        %v7549 = vpop.f32.mrf.mxu0
        %v7550 = vpop.f32.mrf.mxu0
        %v7551 = vadd.f32 0.0, %v7550
        %v7552 = vpop.f32.mrf.mxu0
        %7553 = vmatprep.mubr.bf16.mxu0 0
        %7554 = vmatmul.mubr.bf16.gmra.mxu0 %v6214
        %v7555 = vpop.f32.mrf.mxu0
        %v7556 = vadd.f32 0.0, %v7555
        %v7557 = vpop.f32.mrf.mxu0
        %v7558 = vpop.f32.mrf.mxu0
        %v7559 = vpop.f32.mrf.mxu0
        %7560 = vmatprep.mubr.bf16.mxu0 0
        %7561 = vmatmul.mubr.bf16.gmra.mxu0 %v6215
        %v7562 = vpop.f32.mrf.mxu0
        %v7563 = vadd.f32 0.0, %v7562
        %v7564 = vpop.f32.mrf.mxu0
        %v7565 = vpop.f32.mrf.mxu0
        %v7566 = vadd.f32 0.0, %v7565
        %v7567 = vpop.f32.mrf.mxu0
        %7568 = vmatprep.mubr.bf16.mxu0 0
        %7569 = vmatmul.mubr.bf16.gmra.mxu0 %v6216
        %v7570 = vpop.f32.mrf.mxu0
        %v7571 = vadd.f32 0.0, %v7570
        %v7572 = vpop.f32.mrf.mxu0
        %v7573 = vpop.f32.mrf.mxu0
        %v7574 = vpop.f32.mrf.mxu0
        %7575 = vmatprep.mubr.bf16.mxu0 0
        %7576 = vmatmul.mubr.bf16.gmra.mxu0 %v6217
        %v7577 = vpop.f32.mrf.mxu0
        %v7578 = vadd.f32 0.0, %v7577
        %v7579 = vpop.f32.mrf.mxu0
        %v7580 = vpop.f32.mrf.mxu0
        %v7581 = vadd.f32 0.0, %v7580
        %v7582 = vpop.f32.mrf.mxu0
        %7583 = vmatprep.mubr.bf16.mxu0 0
        %7584 = vmatmul.mubr.bf16.gmra.mxu0 %v6218
        %v7585 = vpop.f32.mrf.mxu0
        %v7586 = vadd.f32 0.0, %v7585
        %v7587 = vpop.f32.mrf.mxu0
        %v7588 = vpop.f32.mrf.mxu0
        %v7589 = vpop.f32.mrf.mxu0
        %7590 = vdwg.mxu0
        %v7607 = vunpack.c.l.b16 %v7238
        %v7608 = vunpack.c.l.b16 %v7239
        %v7609 = vunpack.c.l.b16 %v7240
        %v7610 = vunpack.c.l.b16 %v7241
        %v7611 = vunpack.c.l.b16 %v7242
        %v7612 = vunpack.c.l.b16 %v7243
        %v7613 = vunpack.c.l.b16 %v7244
        %v7614 = vunpack.c.l.b16 %v7245
        %v7615 = vunpack.c.l.b16 %v7246
        %v7616 = vunpack.c.l.b16 %v7247
        %v7617 = vunpack.c.l.b16 %v7248
        %v7618 = vunpack.c.l.b16 %v7249
        %v7619 = vunpack.c.l.b16 %v7250
        %v7620 = vunpack.c.l.b16 %v7251
        %v7621 = vunpack.c.l.b16 %v7252
        %v7622 = vunpack.c.l.b16 %v7253
        %v7623 = vpack.c.b16 %v7608, %v7607
        %v7624 = vpack.c.b16 %v7610, %v7609
        %v7625 = vpack.c.b16 %v7612, %v7611
        %v7626 = vpack.c.b16 %v7614, %v7613
        %v7627 = vpack.c.b16 %v7616, %v7615
        %v7628 = vpack.c.b16 %v7618, %v7617
        %v7629 = vpack.c.b16 %v7620, %v7619
        %v7630 = vpack.c.b16 %v7622, %v7621
        %7639 = vmatprep.subr.bf16.mxu0 0
        %7640 = vmatpush1.bf16.msra.mxu0 %v7630
        %7641 = vmatprep.subr.bf16.mxu0 0
        %7642 = vmatpush1.bf16.msra.mxu0 %v7629
        %7643 = vmatprep.subr.bf16.mxu0 0
        %7644 = vmatpush1.bf16.msra.mxu0 %v7628
        %7645 = vmatprep.subr.bf16.mxu0 0
        %7646 = vmatpush1.bf16.msra.mxu0 %v7627
        %7647 = vmatprep.subr.bf16.mxu0 0
        %7648 = vmatpush1.bf16.msra.mxu0 %v7626
        %7649 = vmatprep.subr.bf16.mxu0 0
        %7650 = vmatpush1.bf16.msra.mxu0 %v7625
        %7651 = vmatprep.subr.bf16.mxu0 0
        %7652 = vmatpush1.bf16.msra.mxu0 %v7624
        %7653 = vmatprep.subr.bf16.mxu0 0
        %7654 = vmatpush1.bf16.msra.mxu0 %v7623
        %7655 = vmatprep.subr.bf16.mxu0 0
        %7656 = vmatpush2.bf16.msra.mxu0 0
        %7657 = vmatprep.subr.bf16.mxu0 0
        %7658 = vmatpush2.bf16.msra.mxu0 0
        %7659 = vmatprep.subr.bf16.mxu0 0
        %7660 = vmatpush2.bf16.msra.mxu0 0
        %7661 = vmatprep.subr.bf16.mxu0 0
        %7662 = vmatpush2.bf16.msra.mxu0 0
        %7663 = vmatprep.subr.bf16.mxu0 0
        %7664 = vmatpush2.bf16.msra.mxu0 0
        %7665 = vmatprep.subr.bf16.mxu0 0
        %7666 = vmatpush2.bf16.msra.mxu0 0
        %7667 = vmatprep.subr.bf16.mxu0 0
        %7668 = vmatpush2.bf16.msra.mxu0 0
        %7669 = vmatprep.subr.bf16.mxu0 0
        %7670 = vmatpush2.bf16.msra.mxu0 0
        %7671 = vmatprep.mubr.bf16.mxu0 0
        %7672 = vmatmul.mubr.bf16.gmra.mxu0 %v6564
        %v7673 = vpop.f32.mrf.mxu0
        %v7674 = vadd.f32 %v7353, %v7673
        %v7675 = vpop.f32.mrf.mxu0
        %v7676 = vpop.f32.mrf.mxu0
        %v7677 = vadd.f32 %v7356, %v7676
        %v7678 = vpop.f32.mrf.mxu0
        %7679 = vmatprep.mubr.bf16.mxu0 0
        %7680 = vmatmul.mubr.bf16.gmra.mxu0 %v6565
        %v7681 = vpop.f32.mrf.mxu0
        %v7682 = vadd.f32 %v7361, %v7681
        %v7683 = vpop.f32.mrf.mxu0
        %v7684 = vpop.f32.mrf.mxu0
        %v7685 = vpop.f32.mrf.mxu0
        %7686 = vmatprep.mubr.bf16.mxu0 0
        %7687 = vmatmul.mubr.bf16.gmra.mxu0 %v6187
        %v7688 = vpop.f32.mrf.mxu0
        %v7689 = vadd.f32 %v7368, %v7688
        %v7690 = vpop.f32.mrf.mxu0
        %v7691 = vpop.f32.mrf.mxu0
        %v7692 = vadd.f32 %v7371, %v7691
        %v7693 = vpop.f32.mrf.mxu0
        %7694 = vmatprep.mubr.bf16.mxu0 0
        %7695 = vmatmul.mubr.bf16.gmra.mxu0 %v6188
        %v7696 = vpop.f32.mrf.mxu0
        %v7697 = vadd.f32 %v7376, %v7696
        %v7698 = vpop.f32.mrf.mxu0
        %v7699 = vpop.f32.mrf.mxu0
        %v7700 = vpop.f32.mrf.mxu0
        %7701 = vmatprep.mubr.bf16.mxu0 0
        %7702 = vmatmul.mubr.bf16.gmra.mxu0 %v6189
        %v7703 = vpop.f32.mrf.mxu0
        %v7704 = vadd.f32 %v7383, %v7703
        %v7705 = vpop.f32.mrf.mxu0
        %v7706 = vpop.f32.mrf.mxu0
        %v7707 = vadd.f32 %v7386, %v7706
        %v7708 = vpop.f32.mrf.mxu0
        %7709 = vmatprep.mubr.bf16.mxu0 0
        %7710 = vmatmul.mubr.bf16.gmra.mxu0 %v6190
        %v7711 = vpop.f32.mrf.mxu0
        %v7712 = vadd.f32 %v7391, %v7711
        %v7713 = vpop.f32.mrf.mxu0
        %v7714 = vpop.f32.mrf.mxu0
        %v7715 = vpop.f32.mrf.mxu0
        %7716 = vmatprep.mubr.bf16.mxu0 0
        %7717 = vmatmul.mubr.bf16.gmra.mxu0 %v6191
        %v7718 = vpop.f32.mrf.mxu0
        %v7719 = vadd.f32 %v7398, %v7718
        %v7720 = vpop.f32.mrf.mxu0
        %v7721 = vpop.f32.mrf.mxu0
        %v7722 = vadd.f32 %v7401, %v7721
        %v7723 = vpop.f32.mrf.mxu0
        %7724 = vmatprep.mubr.bf16.mxu0 0
        %7725 = vmatmul.mubr.bf16.gmra.mxu0 %v6192
        %v7726 = vpop.f32.mrf.mxu0
        %v7727 = vadd.f32 %v7406, %v7726
        %v7728 = vpop.f32.mrf.mxu0
        %v7729 = vpop.f32.mrf.mxu0
        %v7730 = vpop.f32.mrf.mxu0
        %7731 = vmatprep.mubr.bf16.mxu0 0
        %7732 = vmatmul.mubr.bf16.gmra.mxu0 %v6193
        %v7733 = vpop.f32.mrf.mxu0
        %v7734 = vadd.f32 %v7413, %v7733
        %v7735 = vpop.f32.mrf.mxu0
        %v7736 = vpop.f32.mrf.mxu0
        %v7737 = vadd.f32 %v7416, %v7736
        %v7738 = vpop.f32.mrf.mxu0
        %7739 = vmatprep.mubr.bf16.mxu0 0
        %7740 = vmatmul.mubr.bf16.gmra.mxu0 %v6194
        %v7741 = vpop.f32.mrf.mxu0
        %v7742 = vadd.f32 %v7421, %v7741
        %v7743 = vpop.f32.mrf.mxu0
        %v7744 = vpop.f32.mrf.mxu0
        %v7745 = vpop.f32.mrf.mxu0
        %7746 = vmatprep.mubr.bf16.mxu0 0
        %7747 = vmatmul.mubr.bf16.gmra.mxu0 %v6195
        %v7748 = vpop.f32.mrf.mxu0
        %v7749 = vadd.f32 %v7428, %v7748
        %v7750 = vpop.f32.mrf.mxu0
        %v7751 = vpop.f32.mrf.mxu0
        %v7752 = vadd.f32 %v7431, %v7751
        %v7753 = vpop.f32.mrf.mxu0
        %7754 = vmatprep.mubr.bf16.mxu0 0
        %7755 = vmatmul.mubr.bf16.gmra.mxu0 %v6196
        %v7756 = vpop.f32.mrf.mxu0
        %v7757 = vadd.f32 %v7436, %v7756
        %v7758 = vpop.f32.mrf.mxu0
        %v7759 = vpop.f32.mrf.mxu0
        %v7760 = vpop.f32.mrf.mxu0
        %7761 = vmatprep.mubr.bf16.mxu0 0
        %7762 = vmatmul.mubr.bf16.gmra.mxu0 %v6197
        %v7763 = vpop.f32.mrf.mxu0
        %v7764 = vadd.f32 %v7443, %v7763
        %v7765 = vpop.f32.mrf.mxu0
        %v7766 = vpop.f32.mrf.mxu0
        %v7767 = vadd.f32 %v7446, %v7766
        %v7768 = vpop.f32.mrf.mxu0
        %7769 = vmatprep.mubr.bf16.mxu0 0
        %7770 = vmatmul.mubr.bf16.gmra.mxu0 %v6198
        %v7771 = vpop.f32.mrf.mxu0
        %v7772 = vadd.f32 %v7451, %v7771
        %v7773 = vpop.f32.mrf.mxu0
        %v7774 = vpop.f32.mrf.mxu0
        %v7775 = vpop.f32.mrf.mxu0
        %7776 = vmatprep.mubr.bf16.mxu0 0
        %7777 = vmatmul.mubr.bf16.gmra.mxu0 %v6199
        %v7778 = vpop.f32.mrf.mxu0
        %v7779 = vadd.f32 %v7458, %v7778
        %v7780 = vpop.f32.mrf.mxu0
        %v7781 = vpop.f32.mrf.mxu0
        %v7782 = vadd.f32 %v7461, %v7781
        %v7783 = vpop.f32.mrf.mxu0
        %7784 = vmatprep.mubr.bf16.mxu0 0
        %7785 = vmatmul.mubr.bf16.gmra.mxu0 %v6200
        %v7786 = vpop.f32.mrf.mxu0
        %v7787 = vadd.f32 %v7466, %v7786
        %v7788 = vpop.f32.mrf.mxu0
        %v7789 = vpop.f32.mrf.mxu0
        %v7790 = vpop.f32.mrf.mxu0
        %7791 = vmatprep.mubr.bf16.mxu0 0
        %7792 = vmatmul.mubr.bf16.gmra.mxu0 %v6201
        %v7793 = vpop.f32.mrf.mxu0
        %v7794 = vadd.f32 %v7473, %v7793
        %v7795 = vpop.f32.mrf.mxu0
        %v7796 = vpop.f32.mrf.mxu0
        %v7797 = vadd.f32 %v7476, %v7796
        %v7798 = vpop.f32.mrf.mxu0
        %7799 = vmatprep.mubr.bf16.mxu0 0
        %7800 = vmatmul.mubr.bf16.gmra.mxu0 %v6202
        %v7801 = vpop.f32.mrf.mxu0
        %v7802 = vadd.f32 %v7481, %v7801
        %v7803 = vpop.f32.mrf.mxu0
        %v7804 = vpop.f32.mrf.mxu0
        %v7805 = vpop.f32.mrf.mxu0
        %7806 = vmatprep.mubr.bf16.mxu0 0
        %7807 = vmatmul.mubr.bf16.gmra.mxu0 %v6203
        %v7808 = vpop.f32.mrf.mxu0
        %v7809 = vadd.f32 %v7488, %v7808
        %v7810 = vpop.f32.mrf.mxu0
        %v7811 = vpop.f32.mrf.mxu0
        %v7812 = vadd.f32 %v7491, %v7811
        %v7813 = vpop.f32.mrf.mxu0
        %7814 = vmatprep.mubr.bf16.mxu0 0
        %7815 = vmatmul.mubr.bf16.gmra.mxu0 %v6204
        %v7816 = vpop.f32.mrf.mxu0
        %v7817 = vadd.f32 %v7496, %v7816
        %v7818 = vpop.f32.mrf.mxu0
        %v7819 = vpop.f32.mrf.mxu0
        %v7820 = vpop.f32.mrf.mxu0
        %7821 = vmatprep.mubr.bf16.mxu0 0
        %7822 = vmatmul.mubr.bf16.gmra.mxu0 %v6205
        %v7823 = vpop.f32.mrf.mxu0
        %v7824 = vadd.f32 %v7503, %v7823
        %v7825 = vpop.f32.mrf.mxu0
        %v7826 = vpop.f32.mrf.mxu0
        %v7827 = vadd.f32 %v7506, %v7826
        %v7828 = vpop.f32.mrf.mxu0
        %7829 = vmatprep.mubr.bf16.mxu0 0
        %7830 = vmatmul.mubr.bf16.gmra.mxu0 %v6206
        %v7831 = vpop.f32.mrf.mxu0
        %v7832 = vadd.f32 %v7511, %v7831
        %v7833 = vpop.f32.mrf.mxu0
        %v7834 = vpop.f32.mrf.mxu0
        %v7835 = vpop.f32.mrf.mxu0
        %7836 = vmatprep.mubr.bf16.mxu0 0
        %7837 = vmatmul.mubr.bf16.gmra.mxu0 %v6207
        %v7838 = vpop.f32.mrf.mxu0
        %v7839 = vadd.f32 %v7518, %v7838
        %v7840 = vpop.f32.mrf.mxu0
        %v7841 = vpop.f32.mrf.mxu0
        %v7842 = vadd.f32 %v7521, %v7841
        %v7843 = vpop.f32.mrf.mxu0
        %7844 = vmatprep.mubr.bf16.mxu0 0
        %7845 = vmatmul.mubr.bf16.gmra.mxu0 %v6208
        %v7846 = vpop.f32.mrf.mxu0
        %v7847 = vadd.f32 %v7526, %v7846
        %v7848 = vpop.f32.mrf.mxu0
        %v7849 = vpop.f32.mrf.mxu0
        %v7850 = vpop.f32.mrf.mxu0
        %7851 = vmatprep.mubr.bf16.mxu0 0
        %7852 = vmatmul.mubr.bf16.gmra.mxu0 %v6209
        %v7853 = vpop.f32.mrf.mxu0
        %v7854 = vadd.f32 %v7533, %v7853
        %v7855 = vpop.f32.mrf.mxu0
        %v7856 = vpop.f32.mrf.mxu0
        %v7857 = vadd.f32 %v7536, %v7856
        %v7858 = vpop.f32.mrf.mxu0
        %7859 = vmatprep.mubr.bf16.mxu0 0
        %7860 = vmatmul.mubr.bf16.gmra.mxu0 %v6210
        %v7861 = vpop.f32.mrf.mxu0
        %v7862 = vadd.f32 %v7541, %v7861
        %v7863 = vpop.f32.mrf.mxu0
        %v7864 = vpop.f32.mrf.mxu0
        %v7865 = vpop.f32.mrf.mxu0
        %7866 = vmatprep.mubr.bf16.mxu0 0
        %7867 = vmatmul.mubr.bf16.gmra.mxu0 %v6211
        %v7868 = vpop.f32.mrf.mxu0
        %v7869 = vadd.f32 %v7548, %v7868
        %v7870 = vpop.f32.mrf.mxu0
        %v7871 = vpop.f32.mrf.mxu0
        %v7872 = vadd.f32 %v7551, %v7871
        %v7873 = vpop.f32.mrf.mxu0
        %7874 = vmatprep.mubr.bf16.mxu0 0
        %7875 = vmatmul.mubr.bf16.gmra.mxu0 %v6212
        %v7876 = vpop.f32.mrf.mxu0
        %v7877 = vadd.f32 %v7556, %v7876
        %v7878 = vpop.f32.mrf.mxu0
        %v7879 = vpop.f32.mrf.mxu0
        %v7880 = vpop.f32.mrf.mxu0
        %7881 = vmatprep.mubr.bf16.mxu0 0
        %7882 = vmatmul.mubr.bf16.gmra.mxu0 %v6213
        %v7883 = vpop.f32.mrf.mxu0
        %v7884 = vadd.f32 %v7563, %v7883
        %v7885 = vpop.f32.mrf.mxu0
        %v7886 = vpop.f32.mrf.mxu0
        %v7887 = vadd.f32 %v7566, %v7886
        %v7888 = vpop.f32.mrf.mxu0
        %7889 = vmatprep.mubr.bf16.mxu0 0
        %7890 = vmatmul.mubr.bf16.gmra.mxu0 %v6214
        %v7891 = vpop.f32.mrf.mxu0
        %v7892 = vadd.f32 %v7571, %v7891
        %v7893 = vpop.f32.mrf.mxu0
        %v7894 = vpop.f32.mrf.mxu0
        %v7895 = vpop.f32.mrf.mxu0
        %7896 = vmatprep.mubr.bf16.mxu0 0
        %7897 = vmatmul.mubr.bf16.gmra.mxu0 %v6215
        %v7898 = vpop.f32.mrf.mxu0
        %v7899 = vadd.f32 %v7578, %v7898
        %v7900 = vpop.f32.mrf.mxu0
        %v7901 = vpop.f32.mrf.mxu0
        %v7902 = vadd.f32 %v7581, %v7901
        %v7903 = vpop.f32.mrf.mxu0
        %7904 = vmatprep.mubr.bf16.mxu0 0
        %7905 = vmatmul.mubr.bf16.gmra.mxu0 %v6216
        %v7906 = vpop.f32.mrf.mxu0
        %v7907 = vadd.f32 %v7586, %v7906
        %v7908 = vpop.f32.mrf.mxu0
        %v7909 = vpop.f32.mrf.mxu0
        %v7910 = vpop.f32.mrf.mxu0
        %7911 = vdwg.mxu0
        %v7912 = vld [vmem:[#allocation8 + $0x1c0] sm:$0xf]
        %v7913 = vld [vmem:[#allocation8 + $0x1c4] sm:$0xf]
        %v7914 = vld [vmem:[#allocation8 + $0x1c8] sm:$0xf]
        %v7915 = vld [vmem:[#allocation8 + $0x1cc] sm:$0xf]
        %v7916 = vld [vmem:[#allocation8 + $0x1d0] sm:$0xf]
        %v7917 = vld [vmem:[#allocation8 + $0x1d4] sm:$0xf]
        %v7918 = vld [vmem:[#allocation8 + $0x1d8] sm:$0xf]
        %v7919 = vld [vmem:[#allocation8 + $0x1dc] sm:$0xf]
        %v7920 = vld [vmem:[#allocation8 + $0x1e0] sm:$0xf]
        %v7921 = vld [vmem:[#allocation8 + $0x1e4] sm:$0xf]
        %v7922 = vld [vmem:[#allocation8 + $0x1e8] sm:$0xf]
        %v7923 = vld [vmem:[#allocation8 + $0x1ec] sm:$0xf]
        %v7924 = vld [vmem:[#allocation8 + $0x1f0] sm:$0xf]
        %v7925 = vld [vmem:[#allocation8 + $0x1f4] sm:$0xf]
        %v7926 = vld [vmem:[#allocation8 + $0x1f8] sm:$0xf]
        %v7927 = vld [vmem:[#allocation8 + $0x1fc] sm:$0xf]
        %v7944 = vunpack.c.l.b16 %v7912
        %v7945 = vunpack.c.l.b16 %v7913
        %v7946 = vunpack.c.l.b16 %v7914
        %v7947 = vunpack.c.l.b16 %v7915
        %v7948 = vunpack.c.l.b16 %v7916
        %v7949 = vunpack.c.l.b16 %v7917
        %v7950 = vunpack.c.l.b16 %v7918
        %v7951 = vunpack.c.l.b16 %v7919
        %v7952 = vunpack.c.l.b16 %v7920
        %v7953 = vunpack.c.l.b16 %v7921
        %v7954 = vunpack.c.l.b16 %v7922
        %v7955 = vunpack.c.l.b16 %v7923
        %v7956 = vunpack.c.l.b16 %v7924
        %v7957 = vunpack.c.l.b16 %v7925
        %v7958 = vunpack.c.l.b16 %v7926
        %v7959 = vunpack.c.l.b16 %v7927
        %v7960 = vpack.c.b16 %v7945, %v7944
        %v7961 = vpack.c.b16 %v7947, %v7946
        %v7962 = vpack.c.b16 %v7949, %v7948
        %v7963 = vpack.c.b16 %v7951, %v7950
        %v7964 = vpack.c.b16 %v7953, %v7952
        %v7965 = vpack.c.b16 %v7955, %v7954
        %v7966 = vpack.c.b16 %v7957, %v7956
        %v7967 = vpack.c.b16 %v7959, %v7958
        %7976 = vmatprep.subr.bf16.mxu0 0
        %7977 = vmatpush1.bf16.msra.mxu0 %v7967
        %7978 = vmatprep.subr.bf16.mxu0 0
        %7979 = vmatpush1.bf16.msra.mxu0 %v7966
        %7980 = vmatprep.subr.bf16.mxu0 0
        %7981 = vmatpush1.bf16.msra.mxu0 %v7965
        %7982 = vmatprep.subr.bf16.mxu0 0
        %7983 = vmatpush1.bf16.msra.mxu0 %v7964
        %7984 = vmatprep.subr.bf16.mxu0 0
        %7985 = vmatpush1.bf16.msra.mxu0 %v7963
        %7986 = vmatprep.subr.bf16.mxu0 0
        %7987 = vmatpush1.bf16.msra.mxu0 %v7962
        %7988 = vmatprep.subr.bf16.mxu0 0
        %7989 = vmatpush1.bf16.msra.mxu0 %v7961
        %7990 = vmatprep.subr.bf16.mxu0 0
        %7991 = vmatpush1.bf16.msra.mxu0 %v7960
        %7992 = vmatprep.subr.bf16.mxu0 0
        %7993 = vmatpush2.bf16.msra.mxu0 0
        %7994 = vmatprep.subr.bf16.mxu0 0
        %7995 = vmatpush2.bf16.msra.mxu0 0
        %7996 = vmatprep.subr.bf16.mxu0 0
        %7997 = vmatpush2.bf16.msra.mxu0 0
        %7998 = vmatprep.subr.bf16.mxu0 0
        %7999 = vmatpush2.bf16.msra.mxu0 0
        %8000 = vmatprep.subr.bf16.mxu0 0
        %8001 = vmatpush2.bf16.msra.mxu0 0
        %8002 = vmatprep.subr.bf16.mxu0 0
        %8003 = vmatpush2.bf16.msra.mxu0 0
        %8004 = vmatprep.subr.bf16.mxu0 0
        %8005 = vmatpush2.bf16.msra.mxu0 0
        %8006 = vmatprep.subr.bf16.mxu0 0
        %8007 = vmatpush2.bf16.msra.mxu0 0
        %8008 = vmatprep.mubr.bf16.mxu0 0
        %8009 = vmatmul.mubr.bf16.gmra.mxu0 %v6189
        %v8010 = vpop.f32.mrf.mxu0
        %v8011 = vadd.f32 0.0, %v8010
        %v8012 = vpop.f32.mrf.mxu0
        %v8013 = vpop.f32.mrf.mxu0
        %v8014 = vadd.f32 0.0, %v8013
        %v8015 = vpop.f32.mrf.mxu0
        %8016 = vmatprep.mubr.bf16.mxu0 0
        %8017 = vmatmul.mubr.bf16.gmra.mxu0 %v6190
        %v8018 = vpop.f32.mrf.mxu0
        %v8019 = vadd.f32 0.0, %v8018
        %v8020 = vpop.f32.mrf.mxu0
        %v8021 = vpop.f32.mrf.mxu0
        %v8022 = vpop.f32.mrf.mxu0
        %8023 = vmatprep.mubr.bf16.mxu0 0
        %8024 = vmatmul.mubr.bf16.gmra.mxu0 %v6191
        %v8025 = vpop.f32.mrf.mxu0
        %v8026 = vadd.f32 0.0, %v8025
        %v8027 = vpop.f32.mrf.mxu0
        %v8028 = vpop.f32.mrf.mxu0
        %v8029 = vadd.f32 0.0, %v8028
        %v8030 = vpop.f32.mrf.mxu0
        %8031 = vmatprep.mubr.bf16.mxu0 0
        %8032 = vmatmul.mubr.bf16.gmra.mxu0 %v6192
        %v8033 = vpop.f32.mrf.mxu0
        %v8034 = vadd.f32 0.0, %v8033
        %v8035 = vpop.f32.mrf.mxu0
        %v8036 = vpop.f32.mrf.mxu0
        %v8037 = vpop.f32.mrf.mxu0
        %8038 = vmatprep.mubr.bf16.mxu0 0
        %8039 = vmatmul.mubr.bf16.gmra.mxu0 %v6193
        %v8040 = vpop.f32.mrf.mxu0
        %v8041 = vadd.f32 0.0, %v8040
        %v8042 = vpop.f32.mrf.mxu0
        %v8043 = vpop.f32.mrf.mxu0
        %v8044 = vadd.f32 0.0, %v8043
        %v8045 = vpop.f32.mrf.mxu0
        %8046 = vmatprep.mubr.bf16.mxu0 0
        %8047 = vmatmul.mubr.bf16.gmra.mxu0 %v6194
        %v8048 = vpop.f32.mrf.mxu0
        %v8049 = vadd.f32 0.0, %v8048
        %v8050 = vpop.f32.mrf.mxu0
        %v8051 = vpop.f32.mrf.mxu0
        %v8052 = vpop.f32.mrf.mxu0
        %8053 = vmatprep.mubr.bf16.mxu0 0
        %8054 = vmatmul.mubr.bf16.gmra.mxu0 %v6195
        %v8055 = vpop.f32.mrf.mxu0
        %v8056 = vadd.f32 0.0, %v8055
        %v8057 = vpop.f32.mrf.mxu0
        %v8058 = vpop.f32.mrf.mxu0
        %v8059 = vadd.f32 0.0, %v8058
        %v8060 = vpop.f32.mrf.mxu0
        %8061 = vmatprep.mubr.bf16.mxu0 0
        %8062 = vmatmul.mubr.bf16.gmra.mxu0 %v6196
        %v8063 = vpop.f32.mrf.mxu0
        %v8064 = vadd.f32 0.0, %v8063
        %v8065 = vpop.f32.mrf.mxu0
        %v8066 = vpop.f32.mrf.mxu0
        %v8067 = vpop.f32.mrf.mxu0
        %8068 = vmatprep.mubr.bf16.mxu0 0
        %8069 = vmatmul.mubr.bf16.gmra.mxu0 %v6197
        %v8070 = vpop.f32.mrf.mxu0
        %v8071 = vadd.f32 0.0, %v8070
        %v8072 = vpop.f32.mrf.mxu0
        %v8073 = vpop.f32.mrf.mxu0
        %v8074 = vadd.f32 0.0, %v8073
        %v8075 = vpop.f32.mrf.mxu0
        %8076 = vmatprep.mubr.bf16.mxu0 0
        %8077 = vmatmul.mubr.bf16.gmra.mxu0 %v6198
        %v8078 = vpop.f32.mrf.mxu0
        %v8079 = vadd.f32 0.0, %v8078
        %v8080 = vpop.f32.mrf.mxu0
        %v8081 = vpop.f32.mrf.mxu0
        %v8082 = vpop.f32.mrf.mxu0
        %8083 = vmatprep.mubr.bf16.mxu0 0
        %8084 = vmatmul.mubr.bf16.gmra.mxu0 %v6199
        %v8085 = vpop.f32.mrf.mxu0
        %v8086 = vadd.f32 0.0, %v8085
        %v8087 = vpop.f32.mrf.mxu0
        %v8088 = vpop.f32.mrf.mxu0
        %v8089 = vadd.f32 0.0, %v8088
        %v8090 = vpop.f32.mrf.mxu0
        %8091 = vmatprep.mubr.bf16.mxu0 0
        %8092 = vmatmul.mubr.bf16.gmra.mxu0 %v6200
        %v8093 = vpop.f32.mrf.mxu0
        %v8094 = vadd.f32 0.0, %v8093
        %v8095 = vpop.f32.mrf.mxu0
        %v8096 = vpop.f32.mrf.mxu0
        %v8097 = vpop.f32.mrf.mxu0
        %8098 = vmatprep.mubr.bf16.mxu0 0
        %8099 = vmatmul.mubr.bf16.gmra.mxu0 %v6201
        %v8100 = vpop.f32.mrf.mxu0
        %v8101 = vadd.f32 0.0, %v8100
        %v8102 = vpop.f32.mrf.mxu0
        %v8103 = vpop.f32.mrf.mxu0
        %v8104 = vadd.f32 0.0, %v8103
        %v8105 = vpop.f32.mrf.mxu0
        %8106 = vmatprep.mubr.bf16.mxu0 0
        %8107 = vmatmul.mubr.bf16.gmra.mxu0 %v6202
        %v8108 = vpop.f32.mrf.mxu0
        %v8109 = vadd.f32 0.0, %v8108
        %v8110 = vpop.f32.mrf.mxu0
        %v8111 = vpop.f32.mrf.mxu0
        %v8112 = vpop.f32.mrf.mxu0
        %8113 = vmatprep.mubr.bf16.mxu0 0
        %8114 = vmatmul.mubr.bf16.gmra.mxu0 %v6203
        %v8115 = vpop.f32.mrf.mxu0
        %v8116 = vadd.f32 0.0, %v8115
        %v8117 = vpop.f32.mrf.mxu0
        %v8118 = vpop.f32.mrf.mxu0
        %v8119 = vadd.f32 0.0, %v8118
        %v8120 = vpop.f32.mrf.mxu0
        %8121 = vmatprep.mubr.bf16.mxu0 0
        %8122 = vmatmul.mubr.bf16.gmra.mxu0 %v6204
        %v8123 = vpop.f32.mrf.mxu0
        %v8124 = vadd.f32 0.0, %v8123
        %v8125 = vpop.f32.mrf.mxu0
        %v8126 = vpop.f32.mrf.mxu0
        %v8127 = vpop.f32.mrf.mxu0
        %8128 = vmatprep.mubr.bf16.mxu0 0
        %8129 = vmatmul.mubr.bf16.gmra.mxu0 %v6205
        %v8130 = vpop.f32.mrf.mxu0
        %v8131 = vadd.f32 0.0, %v8130
        %v8132 = vpop.f32.mrf.mxu0
        %v8133 = vpop.f32.mrf.mxu0
        %v8134 = vadd.f32 0.0, %v8133
        %v8135 = vpop.f32.mrf.mxu0
        %8136 = vmatprep.mubr.bf16.mxu0 0
        %8137 = vmatmul.mubr.bf16.gmra.mxu0 %v6206
        %v8138 = vpop.f32.mrf.mxu0
        %v8139 = vadd.f32 0.0, %v8138
        %v8140 = vpop.f32.mrf.mxu0
        %v8141 = vpop.f32.mrf.mxu0
        %v8142 = vpop.f32.mrf.mxu0
        %8143 = vmatprep.mubr.bf16.mxu0 0
        %8144 = vmatmul.mubr.bf16.gmra.mxu0 %v6207
        %v8145 = vpop.f32.mrf.mxu0
        %v8146 = vadd.f32 0.0, %v8145
        %v8147 = vpop.f32.mrf.mxu0
        %v8148 = vpop.f32.mrf.mxu0
        %v8149 = vadd.f32 0.0, %v8148
        %v8150 = vpop.f32.mrf.mxu0
        %8151 = vmatprep.mubr.bf16.mxu0 0
        %8152 = vmatmul.mubr.bf16.gmra.mxu0 %v6208
        %v8153 = vpop.f32.mrf.mxu0
        %v8154 = vadd.f32 0.0, %v8153
        %v8155 = vpop.f32.mrf.mxu0
        %v8156 = vpop.f32.mrf.mxu0
        %v8157 = vpop.f32.mrf.mxu0
        %8158 = vmatprep.mubr.bf16.mxu0 0
        %8159 = vmatmul.mubr.bf16.gmra.mxu0 %v6209
        %v8160 = vpop.f32.mrf.mxu0
        %v8161 = vadd.f32 0.0, %v8160
        %v8162 = vpop.f32.mrf.mxu0
        %v8163 = vpop.f32.mrf.mxu0
        %v8164 = vadd.f32 0.0, %v8163
        %v8165 = vpop.f32.mrf.mxu0
        %8166 = vmatprep.mubr.bf16.mxu0 0
        %8167 = vmatmul.mubr.bf16.gmra.mxu0 %v6210
        %v8168 = vpop.f32.mrf.mxu0
        %v8169 = vadd.f32 0.0, %v8168
        %v8170 = vpop.f32.mrf.mxu0
        %v8171 = vpop.f32.mrf.mxu0
        %v8172 = vpop.f32.mrf.mxu0
        %8173 = vmatprep.mubr.bf16.mxu0 0
        %8174 = vmatmul.mubr.bf16.gmra.mxu0 %v6211
        %v8175 = vpop.f32.mrf.mxu0
        %v8176 = vadd.f32 0.0, %v8175
        %v8177 = vpop.f32.mrf.mxu0
        %v8178 = vpop.f32.mrf.mxu0
        %v8179 = vadd.f32 0.0, %v8178
        %v8180 = vpop.f32.mrf.mxu0
        %8181 = vmatprep.mubr.bf16.mxu0 0
        %8182 = vmatmul.mubr.bf16.gmra.mxu0 %v6212
        %v8183 = vpop.f32.mrf.mxu0
        %v8184 = vadd.f32 0.0, %v8183
        %v8185 = vpop.f32.mrf.mxu0
        %v8186 = vpop.f32.mrf.mxu0
        %v8187 = vpop.f32.mrf.mxu0
        %8188 = vmatprep.mubr.bf16.mxu0 0
        %8189 = vmatmul.mubr.bf16.gmra.mxu0 %v6213
        %v8190 = vpop.f32.mrf.mxu0
        %v8191 = vadd.f32 0.0, %v8190
        %v8192 = vpop.f32.mrf.mxu0
        %v8193 = vpop.f32.mrf.mxu0
        %v8194 = vadd.f32 0.0, %v8193
        %v8195 = vpop.f32.mrf.mxu0
        %8196 = vmatprep.mubr.bf16.mxu0 0
        %8197 = vmatmul.mubr.bf16.gmra.mxu0 %v6214
        %v8198 = vpop.f32.mrf.mxu0
        %v8199 = vadd.f32 0.0, %v8198
        %v8200 = vpop.f32.mrf.mxu0
        %v8201 = vpop.f32.mrf.mxu0
        %v8202 = vpop.f32.mrf.mxu0
        %8203 = vmatprep.mubr.bf16.mxu0 0
        %8204 = vmatmul.mubr.bf16.gmra.mxu0 %v6215
        %v8205 = vpop.f32.mrf.mxu0
        %v8206 = vadd.f32 0.0, %v8205
        %v8207 = vpop.f32.mrf.mxu0
        %v8208 = vpop.f32.mrf.mxu0
        %v8209 = vadd.f32 0.0, %v8208
        %v8210 = vpop.f32.mrf.mxu0
        %8211 = vmatprep.mubr.bf16.mxu0 0
        %8212 = vmatmul.mubr.bf16.gmra.mxu0 %v6216
        %v8213 = vpop.f32.mrf.mxu0
        %v8214 = vadd.f32 0.0, %v8213
        %v8215 = vpop.f32.mrf.mxu0
        %v8216 = vpop.f32.mrf.mxu0
        %v8217 = vpop.f32.mrf.mxu0
        %8218 = vmatprep.mubr.bf16.mxu0 0
        %8219 = vmatmul.mubr.bf16.gmra.mxu0 %v6217
        %v8220 = vpop.f32.mrf.mxu0
        %v8221 = vadd.f32 0.0, %v8220
        %v8222 = vpop.f32.mrf.mxu0
        %v8223 = vpop.f32.mrf.mxu0
        %v8224 = vadd.f32 0.0, %v8223
        %v8225 = vpop.f32.mrf.mxu0
        %8226 = vmatprep.mubr.bf16.mxu0 0
        %8227 = vmatmul.mubr.bf16.gmra.mxu0 %v6218
        %v8228 = vpop.f32.mrf.mxu0
        %v8229 = vadd.f32 0.0, %v8228
        %v8230 = vpop.f32.mrf.mxu0
        %v8231 = vpop.f32.mrf.mxu0
        %v8232 = vpop.f32.mrf.mxu0
        %8233 = vmatprep.mubr.bf16.mxu0 0
        %8234 = vmatmul.mubr.bf16.gmra.mxu0 %v6897
        %v8235 = vpop.f32.mrf.mxu0
        %v8236 = vadd.f32 0.0, %v8235
        %v8237 = vpop.f32.mrf.mxu0
        %v8238 = vpop.f32.mrf.mxu0
        %v8239 = vadd.f32 0.0, %v8238
        %v8240 = vpop.f32.mrf.mxu0
        %8241 = vmatprep.mubr.bf16.mxu0 0
        %8242 = vmatmul.mubr.bf16.gmra.mxu0 %v6898
        %v8243 = vpop.f32.mrf.mxu0
        %v8244 = vadd.f32 0.0, %v8243
        %v8245 = vpop.f32.mrf.mxu0
        %v8246 = vpop.f32.mrf.mxu0
        %v8247 = vpop.f32.mrf.mxu0
        %8248 = vdwg.mxu0
        %v8249 = vadd.f32 %v7674, %v8011
        %v8250 = vadd.f32 %v7677, %v8014
        %v8251 = vadd.f32 %v7682, %v8019
        %v8252 = vadd.f32 %v7689, %v8026
        %v8253 = vadd.f32 %v7692, %v8029
        %v8254 = vadd.f32 %v7697, %v8034
        %v8255 = vadd.f32 %v7704, %v8041
        %v8256 = vadd.f32 %v7707, %v8044
        %v8257 = vadd.f32 %v7712, %v8049
        %v8258 = vadd.f32 %v7719, %v8056
        %v8259 = vadd.f32 %v7722, %v8059
        %v8260 = vadd.f32 %v7727, %v8064
        %v8261 = vadd.f32 %v7734, %v8071
        %v8262 = vadd.f32 %v7737, %v8074
        %v8263 = vadd.f32 %v7742, %v8079
        %v8264 = vadd.f32 %v7749, %v8086
        %v8265 = vadd.f32 %v7752, %v8089
        %v8266 = vadd.f32 %v7757, %v8094
        %v8267 = vadd.f32 %v7764, %v8101
        %v8268 = vadd.f32 %v7767, %v8104
        %v8269 = vadd.f32 %v7772, %v8109
        %v8270 = vadd.f32 %v7779, %v8116
        %v8271 = vadd.f32 %v7782, %v8119
        %v8272 = vadd.f32 %v7787, %v8124
        %v8273 = vadd.f32 %v7794, %v8131
        %v8274 = vadd.f32 %v7797, %v8134
        %v8275 = vadd.f32 %v7802, %v8139
        %v8276 = vadd.f32 %v7809, %v8146
        %v8277 = vadd.f32 %v7812, %v8149
        %v8278 = vadd.f32 %v7817, %v8154
        %v8279 = vadd.f32 %v7824, %v8161
        %v8280 = vadd.f32 %v7827, %v8164
        %v8281 = vadd.f32 %v7832, %v8169
        %v8282 = vadd.f32 %v7839, %v8176
        %v8283 = vadd.f32 %v7842, %v8179
        %v8284 = vadd.f32 %v7847, %v8184
        %v8285 = vadd.f32 %v7854, %v8191
        %v8286 = vadd.f32 %v7857, %v8194
        %v8287 = vadd.f32 %v7862, %v8199
        %v8288 = vadd.f32 %v7869, %v8206
        %v8289 = vadd.f32 %v7872, %v8209
        %v8290 = vadd.f32 %v7877, %v8214
        %v8291 = vadd.f32 %v7884, %v8221
        %v8292 = vadd.f32 %v7887, %v8224
        %v8293 = vadd.f32 %v7892, %v8229
        %v8294 = vadd.f32 %v7899, %v8236
        %v8295 = vadd.f32 %v7902, %v8239
        %v8296 = vadd.f32 %v7907, %v8244
        %v8345 = vrot.slane %v8249, 1
        %v8346 = vrot.slane %v8250, 1
        %v8347 = vsel %vm3518, %v8345, %v8346
        %v8348 = vrot.slane %v8251, 1
        %v8349 = vsel %vm3518, %v8346, %v8348
        %v8350 = vrot.slane %v8252, 1
        %v8351 = vrot.slane %v8253, 1
        %v8352 = vsel %vm3518, %v8350, %v8351
        %v8353 = vrot.slane %v8254, 1
        %v8354 = vsel %vm3518, %v8351, %v8353
        %v8355 = vrot.slane %v8255, 1
        %v8356 = vrot.slane %v8256, 1
        %v8357 = vsel %vm3518, %v8355, %v8356
        %v8358 = vrot.slane %v8257, 1
        %v8359 = vsel %vm3518, %v8356, %v8358
        %v8360 = vrot.slane %v8258, 1
        %v8361 = vrot.slane %v8259, 1
        %v8362 = vsel %vm3518, %v8360, %v8361
        %v8363 = vrot.slane %v8260, 1
        %v8364 = vsel %vm3518, %v8361, %v8363
        %v8365 = vrot.slane %v8261, 1
        %v8366 = vrot.slane %v8262, 1
        %v8367 = vsel %vm3518, %v8365, %v8366
        %v8368 = vrot.slane %v8263, 1
        %v8369 = vsel %vm3518, %v8366, %v8368
        %v8370 = vrot.slane %v8264, 1
        %v8371 = vrot.slane %v8265, 1
        %v8372 = vsel %vm3518, %v8370, %v8371
        %v8373 = vrot.slane %v8266, 1
        %v8374 = vsel %vm3518, %v8371, %v8373
        %v8375 = vrot.slane %v8267, 1
        %v8376 = vrot.slane %v8268, 1
        %v8377 = vsel %vm3518, %v8375, %v8376
        %v8378 = vrot.slane %v8269, 1
        %v8379 = vsel %vm3518, %v8376, %v8378
        %v8380 = vrot.slane %v8270, 1
        %v8381 = vrot.slane %v8271, 1
        %v8382 = vsel %vm3518, %v8380, %v8381
        %v8383 = vrot.slane %v8272, 1
        %v8384 = vsel %vm3518, %v8381, %v8383
        %v8385 = vrot.slane %v8273, 1
        %v8386 = vrot.slane %v8274, 1
        %v8387 = vsel %vm3518, %v8385, %v8386
        %v8388 = vrot.slane %v8275, 1
        %v8389 = vsel %vm3518, %v8386, %v8388
        %v8390 = vrot.slane %v8276, 1
        %v8391 = vrot.slane %v8277, 1
        %v8392 = vsel %vm3518, %v8390, %v8391
        %v8393 = vrot.slane %v8278, 1
        %v8394 = vsel %vm3518, %v8391, %v8393
        %v8395 = vrot.slane %v8279, 1
        %v8396 = vrot.slane %v8280, 1
        %v8397 = vsel %vm3518, %v8395, %v8396
        %v8398 = vrot.slane %v8281, 1
        %v8399 = vsel %vm3518, %v8396, %v8398
        %v8400 = vrot.slane %v8282, 1
        %v8401 = vrot.slane %v8283, 1
        %v8402 = vsel %vm3518, %v8400, %v8401
        %v8403 = vrot.slane %v8284, 1
        %v8404 = vsel %vm3518, %v8401, %v8403
        %v8405 = vrot.slane %v8285, 1
        %v8406 = vrot.slane %v8286, 1
        %v8407 = vsel %vm3518, %v8405, %v8406
        %v8408 = vrot.slane %v8287, 1
        %v8409 = vsel %vm3518, %v8406, %v8408
        %v8410 = vrot.slane %v8288, 1
        %v8411 = vrot.slane %v8289, 1
        %v8412 = vsel %vm3518, %v8410, %v8411
        %v8413 = vrot.slane %v8290, 1
        %v8414 = vsel %vm3518, %v8411, %v8413
        %v8415 = vrot.slane %v8291, 1
        %v8416 = vrot.slane %v8292, 1
        %v8417 = vsel %vm3518, %v8415, %v8416
        %v8418 = vrot.slane %v8293, 1
        %v8419 = vsel %vm3518, %v8416, %v8418
        %v8420 = vrot.slane %v8294, 1
        %v8421 = vrot.slane %v8295, 1
        %v8422 = vsel %vm3518, %v8420, %v8421
        %v8423 = vrot.slane %v8296, 1
        %v8424 = vsel %vm3518, %v8421, %v8423
        %v8457 = vadd.f32 %v7206, %v8347
        %v8458 = vadd.f32 %v7207, %v8349
        %v8459 = vadd.f32 %v7208, %v8352
        %v8460 = vadd.f32 %v7209, %v8354
        %v8461 = vadd.f32 %v7210, %v8357
        %v8462 = vadd.f32 %v7211, %v8359
        %v8463 = vadd.f32 %v7212, %v8362
        %v8464 = vadd.f32 %v7213, %v8364
        %v8465 = vadd.f32 %v7214, %v8367
        %v8466 = vadd.f32 %v7215, %v8369
        %v8467 = vadd.f32 %v7216, %v8372
        %v8468 = vadd.f32 %v7217, %v8374
        %v8469 = vadd.f32 %v7218, %v8377
        %v8470 = vadd.f32 %v7219, %v8379
        %v8471 = vadd.f32 %v7220, %v8382
        %v8472 = vadd.f32 %v7221, %v8384
        %v8473 = vadd.f32 %v7222, %v8387
        %v8474 = vadd.f32 %v7223, %v8389
        %v8475 = vadd.f32 %v7224, %v8392
        %v8476 = vadd.f32 %v7225, %v8394
        %v8477 = vadd.f32 %v7226, %v8397
        %v8478 = vadd.f32 %v7227, %v8399
        %v8479 = vadd.f32 %v7228, %v8402
        %v8480 = vadd.f32 %v7229, %v8404
        %v8481 = vadd.f32 %v7230, %v8407
        %v8482 = vadd.f32 %v7231, %v8409
        %v8483 = vadd.f32 %v7232, %v8412
        %v8484 = vadd.f32 %v7233, %v8414
        %v8485 = vadd.f32 %v7234, %v8417
        %v8486 = vadd.f32 %v7235, %v8419
        %v8487 = vadd.f32 %v7236, %v8422
        %v8488 = vadd.f32 %v7237, %v8424
        %v8489 = vld [vmem:[#allocation8 + $0x80] sm:$0xf]
        %v8490 = vld [vmem:[#allocation8 + $0x84] sm:$0xf]
        %v8491 = vld [vmem:[#allocation8 + $0x88] sm:$0xf]
        %v8492 = vld [vmem:[#allocation8 + $0x8c] sm:$0xf]
        %v8493 = vld [vmem:[#allocation8 + $0x90] sm:$0xf]
        %v8494 = vld [vmem:[#allocation8 + $0x94] sm:$0xf]
        %v8495 = vld [vmem:[#allocation8 + $0x98] sm:$0xf]
        %v8496 = vld [vmem:[#allocation8 + $0x9c] sm:$0xf]
        %v8497 = vld [vmem:[#allocation8 + $0xa0] sm:$0xf]
        %v8498 = vld [vmem:[#allocation8 + $0xa4] sm:$0xf]
        %v8499 = vld [vmem:[#allocation8 + $0xa8] sm:$0xf]
        %v8500 = vld [vmem:[#allocation8 + $0xac] sm:$0xf]
        %v8501 = vld [vmem:[#allocation8 + $0xb0] sm:$0xf]
        %v8502 = vld [vmem:[#allocation8 + $0xb4] sm:$0xf]
        %v8503 = vld [vmem:[#allocation8 + $0xb8] sm:$0xf]
        %v8504 = vld [vmem:[#allocation8 + $0xbc] sm:$0xf]
        %v8505 = vld [vmem:[#allocation8 + $0x140] sm:$0xf]
        %v8506 = vld [vmem:[#allocation8 + $0x144] sm:$0xf]
        %v8507 = vld [vmem:[#allocation8 + $0x148] sm:$0xf]
        %v8508 = vld [vmem:[#allocation8 + $0x14c] sm:$0xf]
        %v8509 = vld [vmem:[#allocation8 + $0x150] sm:$0xf]
        %v8510 = vld [vmem:[#allocation8 + $0x154] sm:$0xf]
        %v8511 = vld [vmem:[#allocation8 + $0x158] sm:$0xf]
        %v8512 = vld [vmem:[#allocation8 + $0x15c] sm:$0xf]
        %v8513 = vld [vmem:[#allocation8 + $0x160] sm:$0xf]
        %v8514 = vld [vmem:[#allocation8 + $0x164] sm:$0xf]
        %v8515 = vld [vmem:[#allocation8 + $0x168] sm:$0xf]
        %v8516 = vld [vmem:[#allocation8 + $0x16c] sm:$0xf]
        %v8517 = vld [vmem:[#allocation8 + $0x170] sm:$0xf]
        %v8518 = vld [vmem:[#allocation8 + $0x174] sm:$0xf]
        %v8519 = vld [vmem:[#allocation8 + $0x178] sm:$0xf]
        %v8520 = vld [vmem:[#allocation8 + $0x17c] sm:$0xf]
        %v8537 = vunpack.c.l.b16 %v8505
        %v8538 = vunpack.c.l.b16 %v8506
        %v8539 = vunpack.c.l.b16 %v8507
        %v8540 = vunpack.c.l.b16 %v8508
        %v8541 = vunpack.c.l.b16 %v8509
        %v8542 = vunpack.c.l.b16 %v8510
        %v8543 = vunpack.c.l.b16 %v8511
        %v8544 = vunpack.c.l.b16 %v8512
        %v8545 = vunpack.c.l.b16 %v8513
        %v8546 = vunpack.c.l.b16 %v8514
        %v8547 = vunpack.c.l.b16 %v8515
        %v8548 = vunpack.c.l.b16 %v8516
        %v8549 = vunpack.c.l.b16 %v8517
        %v8550 = vunpack.c.l.b16 %v8518
        %v8551 = vunpack.c.l.b16 %v8519
        %v8552 = vunpack.c.l.b16 %v8520
        %v8553 = vpack.c.b16 %v8538, %v8537
        %v8554 = vpack.c.b16 %v8540, %v8539
        %v8555 = vpack.c.b16 %v8542, %v8541
        %v8556 = vpack.c.b16 %v8544, %v8543
        %v8557 = vpack.c.b16 %v8546, %v8545
        %v8558 = vpack.c.b16 %v8548, %v8547
        %v8559 = vpack.c.b16 %v8550, %v8549
        %v8560 = vpack.c.b16 %v8552, %v8551
        %8569 = vmatprep.subr.bf16.mxu0 0
        %8570 = vmatpush1.bf16.msra.mxu0 %v8560
        %8571 = vmatprep.subr.bf16.mxu0 0
        %8572 = vmatpush1.bf16.msra.mxu0 %v8559
        %8573 = vmatprep.subr.bf16.mxu0 0
        %8574 = vmatpush1.bf16.msra.mxu0 %v8558
        %8575 = vmatprep.subr.bf16.mxu0 0
        %8576 = vmatpush1.bf16.msra.mxu0 %v8557
        %8577 = vmatprep.subr.bf16.mxu0 0
        %8578 = vmatpush1.bf16.msra.mxu0 %v8556
        %8579 = vmatprep.subr.bf16.mxu0 0
        %8580 = vmatpush1.bf16.msra.mxu0 %v8555
        %8581 = vmatprep.subr.bf16.mxu0 0
        %8582 = vmatpush1.bf16.msra.mxu0 %v8554
        %8583 = vmatprep.subr.bf16.mxu0 0
        %8584 = vmatpush1.bf16.msra.mxu0 %v8553
        %8585 = vmatprep.subr.bf16.mxu0 0
        %8586 = vmatpush2.bf16.msra.mxu0 0
        %8587 = vmatprep.subr.bf16.mxu0 0
        %8588 = vmatpush2.bf16.msra.mxu0 0
        %8589 = vmatprep.subr.bf16.mxu0 0
        %8590 = vmatpush2.bf16.msra.mxu0 0
        %8591 = vmatprep.subr.bf16.mxu0 0
        %8592 = vmatpush2.bf16.msra.mxu0 0
        %8593 = vmatprep.subr.bf16.mxu0 0
        %8594 = vmatpush2.bf16.msra.mxu0 0
        %8595 = vmatprep.subr.bf16.mxu0 0
        %8596 = vmatpush2.bf16.msra.mxu0 0
        %8597 = vmatprep.subr.bf16.mxu0 0
        %8598 = vmatpush2.bf16.msra.mxu0 0
        %8599 = vmatprep.subr.bf16.mxu0 0
        %8600 = vmatpush2.bf16.msra.mxu0 0
        %8601 = vmatprep.mubr.bf16.mxu0 0
        %8602 = vmatmul.mubr.bf16.gmra.mxu0 %v6187
        %v8603 = vpop.f32.mrf.mxu0
        %v8604 = vadd.f32 0.0, %v8603
        %v8605 = vpop.f32.mrf.mxu0
        %v8606 = vpop.f32.mrf.mxu0
        %v8607 = vadd.f32 0.0, %v8606
        %v8608 = vpop.f32.mrf.mxu0
        %8609 = vmatprep.mubr.bf16.mxu0 0
        %8610 = vmatmul.mubr.bf16.gmra.mxu0 %v6188
        %v8611 = vpop.f32.mrf.mxu0
        %v8612 = vadd.f32 0.0, %v8611
        %v8613 = vpop.f32.mrf.mxu0
        %v8614 = vpop.f32.mrf.mxu0
        %v8615 = vpop.f32.mrf.mxu0
        %8616 = vmatprep.mubr.bf16.mxu0 0
        %8617 = vmatmul.mubr.bf16.gmra.mxu0 %v6189
        %v8618 = vpop.f32.mrf.mxu0
        %v8619 = vadd.f32 0.0, %v8618
        %v8620 = vpop.f32.mrf.mxu0
        %v8621 = vpop.f32.mrf.mxu0
        %v8622 = vadd.f32 0.0, %v8621
        %v8623 = vpop.f32.mrf.mxu0
        %8624 = vmatprep.mubr.bf16.mxu0 0
        %8625 = vmatmul.mubr.bf16.gmra.mxu0 %v6190
        %v8626 = vpop.f32.mrf.mxu0
        %v8627 = vadd.f32 0.0, %v8626
        %v8628 = vpop.f32.mrf.mxu0
        %v8629 = vpop.f32.mrf.mxu0
        %v8630 = vpop.f32.mrf.mxu0
        %8631 = vmatprep.mubr.bf16.mxu0 0
        %8632 = vmatmul.mubr.bf16.gmra.mxu0 %v6191
        %v8633 = vpop.f32.mrf.mxu0
        %v8634 = vadd.f32 0.0, %v8633
        %v8635 = vpop.f32.mrf.mxu0
        %v8636 = vpop.f32.mrf.mxu0
        %v8637 = vadd.f32 0.0, %v8636
        %v8638 = vpop.f32.mrf.mxu0
        %8639 = vmatprep.mubr.bf16.mxu0 0
        %8640 = vmatmul.mubr.bf16.gmra.mxu0 %v6192
        %v8641 = vpop.f32.mrf.mxu0
        %v8642 = vadd.f32 0.0, %v8641
        %v8643 = vpop.f32.mrf.mxu0
        %v8644 = vpop.f32.mrf.mxu0
        %v8645 = vpop.f32.mrf.mxu0
        %8646 = vmatprep.mubr.bf16.mxu0 0
        %8647 = vmatmul.mubr.bf16.gmra.mxu0 %v6193
        %v8648 = vpop.f32.mrf.mxu0
        %v8649 = vadd.f32 0.0, %v8648
        %v8650 = vpop.f32.mrf.mxu0
        %v8651 = vpop.f32.mrf.mxu0
        %v8652 = vadd.f32 0.0, %v8651
        %v8653 = vpop.f32.mrf.mxu0
        %8654 = vmatprep.mubr.bf16.mxu0 0
        %8655 = vmatmul.mubr.bf16.gmra.mxu0 %v6194
        %v8656 = vpop.f32.mrf.mxu0
        %v8657 = vadd.f32 0.0, %v8656
        %v8658 = vpop.f32.mrf.mxu0
        %v8659 = vpop.f32.mrf.mxu0
        %v8660 = vpop.f32.mrf.mxu0
        %8661 = vmatprep.mubr.bf16.mxu0 0
        %8662 = vmatmul.mubr.bf16.gmra.mxu0 %v6195
        %v8663 = vpop.f32.mrf.mxu0
        %v8664 = vadd.f32 0.0, %v8663
        %v8665 = vpop.f32.mrf.mxu0
        %v8666 = vpop.f32.mrf.mxu0
        %v8667 = vadd.f32 0.0, %v8666
        %v8668 = vpop.f32.mrf.mxu0
        %8669 = vmatprep.mubr.bf16.mxu0 0
        %8670 = vmatmul.mubr.bf16.gmra.mxu0 %v6196
        %v8671 = vpop.f32.mrf.mxu0
        %v8672 = vadd.f32 0.0, %v8671
        %v8673 = vpop.f32.mrf.mxu0
        %v8674 = vpop.f32.mrf.mxu0
        %v8675 = vpop.f32.mrf.mxu0
        %8676 = vmatprep.mubr.bf16.mxu0 0
        %8677 = vmatmul.mubr.bf16.gmra.mxu0 %v6197
        %v8678 = vpop.f32.mrf.mxu0
        %v8679 = vadd.f32 0.0, %v8678
        %v8680 = vpop.f32.mrf.mxu0
        %v8681 = vpop.f32.mrf.mxu0
        %v8682 = vadd.f32 0.0, %v8681
        %v8683 = vpop.f32.mrf.mxu0
        %8684 = vmatprep.mubr.bf16.mxu0 0
        %8685 = vmatmul.mubr.bf16.gmra.mxu0 %v6198
        %v8686 = vpop.f32.mrf.mxu0
        %v8687 = vadd.f32 0.0, %v8686
        %v8688 = vpop.f32.mrf.mxu0
        %v8689 = vpop.f32.mrf.mxu0
        %v8690 = vpop.f32.mrf.mxu0
        %8691 = vmatprep.mubr.bf16.mxu0 0
        %8692 = vmatmul.mubr.bf16.gmra.mxu0 %v6199
        %v8693 = vpop.f32.mrf.mxu0
        %v8694 = vadd.f32 0.0, %v8693
        %v8695 = vpop.f32.mrf.mxu0
        %v8696 = vpop.f32.mrf.mxu0
        %v8697 = vadd.f32 0.0, %v8696
        %v8698 = vpop.f32.mrf.mxu0
        %8699 = vmatprep.mubr.bf16.mxu0 0
        %8700 = vmatmul.mubr.bf16.gmra.mxu0 %v6200
        %v8701 = vpop.f32.mrf.mxu0
        %v8702 = vadd.f32 0.0, %v8701
        %v8703 = vpop.f32.mrf.mxu0
        %v8704 = vpop.f32.mrf.mxu0
        %v8705 = vpop.f32.mrf.mxu0
        %8706 = vmatprep.mubr.bf16.mxu0 0
        %8707 = vmatmul.mubr.bf16.gmra.mxu0 %v6201
        %v8708 = vpop.f32.mrf.mxu0
        %v8709 = vadd.f32 0.0, %v8708
        %v8710 = vpop.f32.mrf.mxu0
        %v8711 = vpop.f32.mrf.mxu0
        %v8712 = vadd.f32 0.0, %v8711
        %v8713 = vpop.f32.mrf.mxu0
        %8714 = vmatprep.mubr.bf16.mxu0 0
        %8715 = vmatmul.mubr.bf16.gmra.mxu0 %v6202
        %v8716 = vpop.f32.mrf.mxu0
        %v8717 = vadd.f32 0.0, %v8716
        %v8718 = vpop.f32.mrf.mxu0
        %v8719 = vpop.f32.mrf.mxu0
        %v8720 = vpop.f32.mrf.mxu0
        %8721 = vmatprep.mubr.bf16.mxu0 0
        %8722 = vmatmul.mubr.bf16.gmra.mxu0 %v6203
        %v8723 = vpop.f32.mrf.mxu0
        %v8724 = vadd.f32 0.0, %v8723
        %v8725 = vpop.f32.mrf.mxu0
        %v8726 = vpop.f32.mrf.mxu0
        %v8727 = vadd.f32 0.0, %v8726
        %v8728 = vpop.f32.mrf.mxu0
        %8729 = vmatprep.mubr.bf16.mxu0 0
        %8730 = vmatmul.mubr.bf16.gmra.mxu0 %v6204
        %v8731 = vpop.f32.mrf.mxu0
        %v8732 = vadd.f32 0.0, %v8731
        %v8733 = vpop.f32.mrf.mxu0
        %v8734 = vpop.f32.mrf.mxu0
        %v8735 = vpop.f32.mrf.mxu0
        %8736 = vmatprep.mubr.bf16.mxu0 0
        %8737 = vmatmul.mubr.bf16.gmra.mxu0 %v6205
        %v8738 = vpop.f32.mrf.mxu0
        %v8739 = vadd.f32 0.0, %v8738
        %v8740 = vpop.f32.mrf.mxu0
        %v8741 = vpop.f32.mrf.mxu0
        %v8742 = vadd.f32 0.0, %v8741
        %v8743 = vpop.f32.mrf.mxu0
        %8744 = vmatprep.mubr.bf16.mxu0 0
        %8745 = vmatmul.mubr.bf16.gmra.mxu0 %v6206
        %v8746 = vpop.f32.mrf.mxu0
        %v8747 = vadd.f32 0.0, %v8746
        %v8748 = vpop.f32.mrf.mxu0
        %v8749 = vpop.f32.mrf.mxu0
        %v8750 = vpop.f32.mrf.mxu0
        %8751 = vmatprep.mubr.bf16.mxu0 0
        %8752 = vmatmul.mubr.bf16.gmra.mxu0 %v6207
        %v8753 = vpop.f32.mrf.mxu0
        %v8754 = vadd.f32 0.0, %v8753
        %v8755 = vpop.f32.mrf.mxu0
        %v8756 = vpop.f32.mrf.mxu0
        %v8757 = vadd.f32 0.0, %v8756
        %v8758 = vpop.f32.mrf.mxu0
        %8759 = vmatprep.mubr.bf16.mxu0 0
        %8760 = vmatmul.mubr.bf16.gmra.mxu0 %v6208
        %v8761 = vpop.f32.mrf.mxu0
        %v8762 = vadd.f32 0.0, %v8761
        %v8763 = vpop.f32.mrf.mxu0
        %v8764 = vpop.f32.mrf.mxu0
        %v8765 = vpop.f32.mrf.mxu0
        %8766 = vmatprep.mubr.bf16.mxu0 0
        %8767 = vmatmul.mubr.bf16.gmra.mxu0 %v6209
        %v8768 = vpop.f32.mrf.mxu0
        %v8769 = vadd.f32 0.0, %v8768
        %v8770 = vpop.f32.mrf.mxu0
        %v8771 = vpop.f32.mrf.mxu0
        %v8772 = vadd.f32 0.0, %v8771
        %v8773 = vpop.f32.mrf.mxu0
        %8774 = vmatprep.mubr.bf16.mxu0 0
        %8775 = vmatmul.mubr.bf16.gmra.mxu0 %v6210
        %v8776 = vpop.f32.mrf.mxu0
        %v8777 = vadd.f32 0.0, %v8776
        %v8778 = vpop.f32.mrf.mxu0
        %v8779 = vpop.f32.mrf.mxu0
        %v8780 = vpop.f32.mrf.mxu0
        %8781 = vmatprep.mubr.bf16.mxu0 0
        %8782 = vmatmul.mubr.bf16.gmra.mxu0 %v6211
        %v8783 = vpop.f32.mrf.mxu0
        %v8784 = vadd.f32 0.0, %v8783
        %v8785 = vpop.f32.mrf.mxu0
        %v8786 = vpop.f32.mrf.mxu0
        %v8787 = vadd.f32 0.0, %v8786
        %v8788 = vpop.f32.mrf.mxu0
        %8789 = vmatprep.mubr.bf16.mxu0 0
        %8790 = vmatmul.mubr.bf16.gmra.mxu0 %v6212
        %v8791 = vpop.f32.mrf.mxu0
        %v8792 = vadd.f32 0.0, %v8791
        %v8793 = vpop.f32.mrf.mxu0
        %v8794 = vpop.f32.mrf.mxu0
        %v8795 = vpop.f32.mrf.mxu0
        %8796 = vmatprep.mubr.bf16.mxu0 0
        %8797 = vmatmul.mubr.bf16.gmra.mxu0 %v6213
        %v8798 = vpop.f32.mrf.mxu0
        %v8799 = vadd.f32 0.0, %v8798
        %v8800 = vpop.f32.mrf.mxu0
        %v8801 = vpop.f32.mrf.mxu0
        %v8802 = vadd.f32 0.0, %v8801
        %v8803 = vpop.f32.mrf.mxu0
        %8804 = vmatprep.mubr.bf16.mxu0 0
        %8805 = vmatmul.mubr.bf16.gmra.mxu0 %v6214
        %v8806 = vpop.f32.mrf.mxu0
        %v8807 = vadd.f32 0.0, %v8806
        %v8808 = vpop.f32.mrf.mxu0
        %v8809 = vpop.f32.mrf.mxu0
        %v8810 = vpop.f32.mrf.mxu0
        %8811 = vmatprep.mubr.bf16.mxu0 0
        %8812 = vmatmul.mubr.bf16.gmra.mxu0 %v6215
        %v8813 = vpop.f32.mrf.mxu0
        %v8814 = vadd.f32 0.0, %v8813
        %v8815 = vpop.f32.mrf.mxu0
        %v8816 = vpop.f32.mrf.mxu0
        %v8817 = vadd.f32 0.0, %v8816
        %v8818 = vpop.f32.mrf.mxu0
        %8819 = vmatprep.mubr.bf16.mxu0 0
        %8820 = vmatmul.mubr.bf16.gmra.mxu0 %v6216
        %v8821 = vpop.f32.mrf.mxu0
        %v8822 = vadd.f32 0.0, %v8821
        %v8823 = vpop.f32.mrf.mxu0
        %v8824 = vpop.f32.mrf.mxu0
        %v8825 = vpop.f32.mrf.mxu0
        %8826 = vmatprep.mubr.bf16.mxu0 0
        %8827 = vmatmul.mubr.bf16.gmra.mxu0 %v6217
        %v8828 = vpop.f32.mrf.mxu0
        %v8829 = vadd.f32 0.0, %v8828
        %v8830 = vpop.f32.mrf.mxu0
        %v8831 = vpop.f32.mrf.mxu0
        %v8832 = vadd.f32 0.0, %v8831
        %v8833 = vpop.f32.mrf.mxu0
        %8834 = vmatprep.mubr.bf16.mxu0 0
        %8835 = vmatmul.mubr.bf16.gmra.mxu0 %v6218
        %v8836 = vpop.f32.mrf.mxu0
        %v8837 = vadd.f32 0.0, %v8836
        %v8838 = vpop.f32.mrf.mxu0
        %v8839 = vpop.f32.mrf.mxu0
        %v8840 = vpop.f32.mrf.mxu0
        %8841 = vdwg.mxu0
        %v8858 = vunpack.c.l.b16 %v8489
        %v8859 = vunpack.c.l.b16 %v8490
        %v8860 = vunpack.c.l.b16 %v8491
        %v8861 = vunpack.c.l.b16 %v8492
        %v8862 = vunpack.c.l.b16 %v8493
        %v8863 = vunpack.c.l.b16 %v8494
        %v8864 = vunpack.c.l.b16 %v8495
        %v8865 = vunpack.c.l.b16 %v8496
        %v8866 = vunpack.c.l.b16 %v8497
        %v8867 = vunpack.c.l.b16 %v8498
        %v8868 = vunpack.c.l.b16 %v8499
        %v8869 = vunpack.c.l.b16 %v8500
        %v8870 = vunpack.c.l.b16 %v8501
        %v8871 = vunpack.c.l.b16 %v8502
        %v8872 = vunpack.c.l.b16 %v8503
        %v8873 = vunpack.c.l.b16 %v8504
        %v8874 = vpack.c.b16 %v8859, %v8858
        %v8875 = vpack.c.b16 %v8861, %v8860
        %v8876 = vpack.c.b16 %v8863, %v8862
        %v8877 = vpack.c.b16 %v8865, %v8864
        %v8878 = vpack.c.b16 %v8867, %v8866
        %v8879 = vpack.c.b16 %v8869, %v8868
        %v8880 = vpack.c.b16 %v8871, %v8870
        %v8881 = vpack.c.b16 %v8873, %v8872
        %8890 = vmatprep.subr.bf16.mxu0 0
        %8891 = vmatpush1.bf16.msra.mxu0 %v8881
        %8892 = vmatprep.subr.bf16.mxu0 0
        %8893 = vmatpush1.bf16.msra.mxu0 %v8880
        %8894 = vmatprep.subr.bf16.mxu0 0
        %8895 = vmatpush1.bf16.msra.mxu0 %v8879
        %8896 = vmatprep.subr.bf16.mxu0 0
        %8897 = vmatpush1.bf16.msra.mxu0 %v8878
        %8898 = vmatprep.subr.bf16.mxu0 0
        %8899 = vmatpush1.bf16.msra.mxu0 %v8877
        %8900 = vmatprep.subr.bf16.mxu0 0
        %8901 = vmatpush1.bf16.msra.mxu0 %v8876
        %8902 = vmatprep.subr.bf16.mxu0 0
        %8903 = vmatpush1.bf16.msra.mxu0 %v8875
        %8904 = vmatprep.subr.bf16.mxu0 0
        %8905 = vmatpush1.bf16.msra.mxu0 %v8874
        %8906 = vmatprep.subr.bf16.mxu0 0
        %8907 = vmatpush2.bf16.msra.mxu0 0
        %8908 = vmatprep.subr.bf16.mxu0 0
        %8909 = vmatpush2.bf16.msra.mxu0 0
        %8910 = vmatprep.subr.bf16.mxu0 0
        %8911 = vmatpush2.bf16.msra.mxu0 0
        %8912 = vmatprep.subr.bf16.mxu0 0
        %8913 = vmatpush2.bf16.msra.mxu0 0
        %8914 = vmatprep.subr.bf16.mxu0 0
        %8915 = vmatpush2.bf16.msra.mxu0 0
        %8916 = vmatprep.subr.bf16.mxu0 0
        %8917 = vmatpush2.bf16.msra.mxu0 0
        %8918 = vmatprep.subr.bf16.mxu0 0
        %8919 = vmatpush2.bf16.msra.mxu0 0
        %8920 = vmatprep.subr.bf16.mxu0 0
        %8921 = vmatpush2.bf16.msra.mxu0 0
        %8922 = vmatprep.mubr.bf16.mxu0 0
        %8923 = vmatmul.mubr.bf16.gmra.mxu0 %v6564
        %v8924 = vpop.f32.mrf.mxu0
        %v8925 = vadd.f32 %v8604, %v8924
        %v8926 = vpop.f32.mrf.mxu0
        %v8927 = vpop.f32.mrf.mxu0
        %v8928 = vadd.f32 %v8607, %v8927
        %v8929 = vpop.f32.mrf.mxu0
        %8930 = vmatprep.mubr.bf16.mxu0 0
        %8931 = vmatmul.mubr.bf16.gmra.mxu0 %v6565
        %v8932 = vpop.f32.mrf.mxu0
        %v8933 = vadd.f32 %v8612, %v8932
        %v8934 = vpop.f32.mrf.mxu0
        %v8935 = vpop.f32.mrf.mxu0
        %v8936 = vpop.f32.mrf.mxu0
        %8937 = vmatprep.mubr.bf16.mxu0 0
        %8938 = vmatmul.mubr.bf16.gmra.mxu0 %v6187
        %v8939 = vpop.f32.mrf.mxu0
        %v8940 = vadd.f32 %v8619, %v8939
        %v8941 = vpop.f32.mrf.mxu0
        %v8942 = vpop.f32.mrf.mxu0
        %v8943 = vadd.f32 %v8622, %v8942
        %v8944 = vpop.f32.mrf.mxu0
        %8945 = vmatprep.mubr.bf16.mxu0 0
        %8946 = vmatmul.mubr.bf16.gmra.mxu0 %v6188
        %v8947 = vpop.f32.mrf.mxu0
        %v8948 = vadd.f32 %v8627, %v8947
        %v8949 = vpop.f32.mrf.mxu0
        %v8950 = vpop.f32.mrf.mxu0
        %v8951 = vpop.f32.mrf.mxu0
        %8952 = vmatprep.mubr.bf16.mxu0 0
        %8953 = vmatmul.mubr.bf16.gmra.mxu0 %v6189
        %v8954 = vpop.f32.mrf.mxu0
        %v8955 = vadd.f32 %v8634, %v8954
        %v8956 = vpop.f32.mrf.mxu0
        %v8957 = vpop.f32.mrf.mxu0
        %v8958 = vadd.f32 %v8637, %v8957
        %v8959 = vpop.f32.mrf.mxu0
        %8960 = vmatprep.mubr.bf16.mxu0 0
        %8961 = vmatmul.mubr.bf16.gmra.mxu0 %v6190
        %v8962 = vpop.f32.mrf.mxu0
        %v8963 = vadd.f32 %v8642, %v8962
        %v8964 = vpop.f32.mrf.mxu0
        %v8965 = vpop.f32.mrf.mxu0
        %v8966 = vpop.f32.mrf.mxu0
        %8967 = vmatprep.mubr.bf16.mxu0 0
        %8968 = vmatmul.mubr.bf16.gmra.mxu0 %v6191
        %v8969 = vpop.f32.mrf.mxu0
        %v8970 = vadd.f32 %v8649, %v8969
        %v8971 = vpop.f32.mrf.mxu0
        %v8972 = vpop.f32.mrf.mxu0
        %v8973 = vadd.f32 %v8652, %v8972
        %v8974 = vpop.f32.mrf.mxu0
        %8975 = vmatprep.mubr.bf16.mxu0 0
        %8976 = vmatmul.mubr.bf16.gmra.mxu0 %v6192
        %v8977 = vpop.f32.mrf.mxu0
        %v8978 = vadd.f32 %v8657, %v8977
        %v8979 = vpop.f32.mrf.mxu0
        %v8980 = vpop.f32.mrf.mxu0
        %v8981 = vpop.f32.mrf.mxu0
        %8982 = vmatprep.mubr.bf16.mxu0 0
        %8983 = vmatmul.mubr.bf16.gmra.mxu0 %v6193
        %v8984 = vpop.f32.mrf.mxu0
        %v8985 = vadd.f32 %v8664, %v8984
        %v8986 = vpop.f32.mrf.mxu0
        %v8987 = vpop.f32.mrf.mxu0
        %v8988 = vadd.f32 %v8667, %v8987
        %v8989 = vpop.f32.mrf.mxu0
        %8990 = vmatprep.mubr.bf16.mxu0 0
        %8991 = vmatmul.mubr.bf16.gmra.mxu0 %v6194
        %v8992 = vpop.f32.mrf.mxu0
        %v8993 = vadd.f32 %v8672, %v8992
        %v8994 = vpop.f32.mrf.mxu0
        %v8995 = vpop.f32.mrf.mxu0
        %v8996 = vpop.f32.mrf.mxu0
        %8997 = vmatprep.mubr.bf16.mxu0 0
        %8998 = vmatmul.mubr.bf16.gmra.mxu0 %v6195
        %v8999 = vpop.f32.mrf.mxu0
        %v9000 = vadd.f32 %v8679, %v8999
        %v9001 = vpop.f32.mrf.mxu0
        %v9002 = vpop.f32.mrf.mxu0
        %v9003 = vadd.f32 %v8682, %v9002
        %v9004 = vpop.f32.mrf.mxu0
        %9005 = vmatprep.mubr.bf16.mxu0 0
        %9006 = vmatmul.mubr.bf16.gmra.mxu0 %v6196
        %v9007 = vpop.f32.mrf.mxu0
        %v9008 = vadd.f32 %v8687, %v9007
        %v9009 = vpop.f32.mrf.mxu0
        %v9010 = vpop.f32.mrf.mxu0
        %v9011 = vpop.f32.mrf.mxu0
        %9012 = vmatprep.mubr.bf16.mxu0 0
        %9013 = vmatmul.mubr.bf16.gmra.mxu0 %v6197
        %v9014 = vpop.f32.mrf.mxu0
        %v9015 = vadd.f32 %v8694, %v9014
        %v9016 = vpop.f32.mrf.mxu0
        %v9017 = vpop.f32.mrf.mxu0
        %v9018 = vadd.f32 %v8697, %v9017
        %v9019 = vpop.f32.mrf.mxu0
        %9020 = vmatprep.mubr.bf16.mxu0 0
        %9021 = vmatmul.mubr.bf16.gmra.mxu0 %v6198
        %v9022 = vpop.f32.mrf.mxu0
        %v9023 = vadd.f32 %v8702, %v9022
        %v9024 = vpop.f32.mrf.mxu0
        %v9025 = vpop.f32.mrf.mxu0
        %v9026 = vpop.f32.mrf.mxu0
        %9027 = vmatprep.mubr.bf16.mxu0 0
        %9028 = vmatmul.mubr.bf16.gmra.mxu0 %v6199
        %v9029 = vpop.f32.mrf.mxu0
        %v9030 = vadd.f32 %v8709, %v9029
        %v9031 = vpop.f32.mrf.mxu0
        %v9032 = vpop.f32.mrf.mxu0
        %v9033 = vadd.f32 %v8712, %v9032
        %v9034 = vpop.f32.mrf.mxu0
        %9035 = vmatprep.mubr.bf16.mxu0 0
        %9036 = vmatmul.mubr.bf16.gmra.mxu0 %v6200
        %v9037 = vpop.f32.mrf.mxu0
        %v9038 = vadd.f32 %v8717, %v9037
        %v9039 = vpop.f32.mrf.mxu0
        %v9040 = vpop.f32.mrf.mxu0
        %v9041 = vpop.f32.mrf.mxu0
        %9042 = vmatprep.mubr.bf16.mxu0 0
        %9043 = vmatmul.mubr.bf16.gmra.mxu0 %v6201
        %v9044 = vpop.f32.mrf.mxu0
        %v9045 = vadd.f32 %v8724, %v9044
        %v9046 = vpop.f32.mrf.mxu0
        %v9047 = vpop.f32.mrf.mxu0
        %v9048 = vadd.f32 %v8727, %v9047
        %v9049 = vpop.f32.mrf.mxu0
        %9050 = vmatprep.mubr.bf16.mxu0 0
        %9051 = vmatmul.mubr.bf16.gmra.mxu0 %v6202
        %v9052 = vpop.f32.mrf.mxu0
        %v9053 = vadd.f32 %v8732, %v9052
        %v9054 = vpop.f32.mrf.mxu0
        %v9055 = vpop.f32.mrf.mxu0
        %v9056 = vpop.f32.mrf.mxu0
        %9057 = vmatprep.mubr.bf16.mxu0 0
        %9058 = vmatmul.mubr.bf16.gmra.mxu0 %v6203
        %v9059 = vpop.f32.mrf.mxu0
        %v9060 = vadd.f32 %v8739, %v9059
        %v9061 = vpop.f32.mrf.mxu0
        %v9062 = vpop.f32.mrf.mxu0
        %v9063 = vadd.f32 %v8742, %v9062
        %v9064 = vpop.f32.mrf.mxu0
        %9065 = vmatprep.mubr.bf16.mxu0 0
        %9066 = vmatmul.mubr.bf16.gmra.mxu0 %v6204
        %v9067 = vpop.f32.mrf.mxu0
        %v9068 = vadd.f32 %v8747, %v9067
        %v9069 = vpop.f32.mrf.mxu0
        %v9070 = vpop.f32.mrf.mxu0
        %v9071 = vpop.f32.mrf.mxu0
        %9072 = vmatprep.mubr.bf16.mxu0 0
        %9073 = vmatmul.mubr.bf16.gmra.mxu0 %v6205
        %v9074 = vpop.f32.mrf.mxu0
        %v9075 = vadd.f32 %v8754, %v9074
        %v9076 = vpop.f32.mrf.mxu0
        %v9077 = vpop.f32.mrf.mxu0
        %v9078 = vadd.f32 %v8757, %v9077
        %v9079 = vpop.f32.mrf.mxu0
        %9080 = vmatprep.mubr.bf16.mxu0 0
        %9081 = vmatmul.mubr.bf16.gmra.mxu0 %v6206
        %v9082 = vpop.f32.mrf.mxu0
        %v9083 = vadd.f32 %v8762, %v9082
        %v9084 = vpop.f32.mrf.mxu0
        %v9085 = vpop.f32.mrf.mxu0
        %v9086 = vpop.f32.mrf.mxu0
        %9087 = vmatprep.mubr.bf16.mxu0 0
        %9088 = vmatmul.mubr.bf16.gmra.mxu0 %v6207
        %v9089 = vpop.f32.mrf.mxu0
        %v9090 = vadd.f32 %v8769, %v9089
        %v9091 = vpop.f32.mrf.mxu0
        %v9092 = vpop.f32.mrf.mxu0
        %v9093 = vadd.f32 %v8772, %v9092
        %v9094 = vpop.f32.mrf.mxu0
        %9095 = vmatprep.mubr.bf16.mxu0 0
        %9096 = vmatmul.mubr.bf16.gmra.mxu0 %v6208
        %v9097 = vpop.f32.mrf.mxu0
        %v9098 = vadd.f32 %v8777, %v9097
        %v9099 = vpop.f32.mrf.mxu0
        %v9100 = vpop.f32.mrf.mxu0
        %v9101 = vpop.f32.mrf.mxu0
        %9102 = vmatprep.mubr.bf16.mxu0 0
        %9103 = vmatmul.mubr.bf16.gmra.mxu0 %v6209
        %v9104 = vpop.f32.mrf.mxu0
        %v9105 = vadd.f32 %v8784, %v9104
        %v9106 = vpop.f32.mrf.mxu0
        %v9107 = vpop.f32.mrf.mxu0
        %v9108 = vadd.f32 %v8787, %v9107
        %v9109 = vpop.f32.mrf.mxu0
        %9110 = vmatprep.mubr.bf16.mxu0 0
        %9111 = vmatmul.mubr.bf16.gmra.mxu0 %v6210
        %v9112 = vpop.f32.mrf.mxu0
        %v9113 = vadd.f32 %v8792, %v9112
        %v9114 = vpop.f32.mrf.mxu0
        %v9115 = vpop.f32.mrf.mxu0
        %v9116 = vpop.f32.mrf.mxu0
        %9117 = vmatprep.mubr.bf16.mxu0 0
        %9118 = vmatmul.mubr.bf16.gmra.mxu0 %v6211
        %v9119 = vpop.f32.mrf.mxu0
        %v9120 = vadd.f32 %v8799, %v9119
        %v9121 = vpop.f32.mrf.mxu0
        %v9122 = vpop.f32.mrf.mxu0
        %v9123 = vadd.f32 %v8802, %v9122
        %v9124 = vpop.f32.mrf.mxu0
        %9125 = vmatprep.mubr.bf16.mxu0 0
        %9126 = vmatmul.mubr.bf16.gmra.mxu0 %v6212
        %v9127 = vpop.f32.mrf.mxu0
        %v9128 = vadd.f32 %v8807, %v9127
        %v9129 = vpop.f32.mrf.mxu0
        %v9130 = vpop.f32.mrf.mxu0
        %v9131 = vpop.f32.mrf.mxu0
        %9132 = vmatprep.mubr.bf16.mxu0 0
        %9133 = vmatmul.mubr.bf16.gmra.mxu0 %v6213
        %v9134 = vpop.f32.mrf.mxu0
        %v9135 = vadd.f32 %v8814, %v9134
        %v9136 = vpop.f32.mrf.mxu0
        %v9137 = vpop.f32.mrf.mxu0
        %v9138 = vadd.f32 %v8817, %v9137
        %v9139 = vpop.f32.mrf.mxu0
        %9140 = vmatprep.mubr.bf16.mxu0 0
        %9141 = vmatmul.mubr.bf16.gmra.mxu0 %v6214
        %v9142 = vpop.f32.mrf.mxu0
        %v9143 = vadd.f32 %v8822, %v9142
        %v9144 = vpop.f32.mrf.mxu0
        %v9145 = vpop.f32.mrf.mxu0
        %v9146 = vpop.f32.mrf.mxu0
        %9147 = vmatprep.mubr.bf16.mxu0 0
        %9148 = vmatmul.mubr.bf16.gmra.mxu0 %v6215
        %v9149 = vpop.f32.mrf.mxu0
        %v9150 = vadd.f32 %v8829, %v9149
        %v9151 = vpop.f32.mrf.mxu0
        %v9152 = vpop.f32.mrf.mxu0
        %v9153 = vadd.f32 %v8832, %v9152
        %v9154 = vpop.f32.mrf.mxu0
        %9155 = vmatprep.mubr.bf16.mxu0 0
        %9156 = vmatmul.mubr.bf16.gmra.mxu0 %v6216
        %v9157 = vpop.f32.mrf.mxu0
        %v9158 = vadd.f32 %v8837, %v9157
        %v9159 = vpop.f32.mrf.mxu0
        %v9160 = vpop.f32.mrf.mxu0
        %v9161 = vpop.f32.mrf.mxu0
        %9162 = vdwg.mxu0
        %v9163 = vld [vmem:[#allocation8 + $0x200] sm:$0xf]
        %v9164 = vld [vmem:[#allocation8 + $0x204] sm:$0xf]
        %v9165 = vld [vmem:[#allocation8 + $0x208] sm:$0xf]
        %v9166 = vld [vmem:[#allocation8 + $0x20c] sm:$0xf]
        %v9167 = vld [vmem:[#allocation8 + $0x210] sm:$0xf]
        %v9168 = vld [vmem:[#allocation8 + $0x214] sm:$0xf]
        %v9169 = vld [vmem:[#allocation8 + $0x218] sm:$0xf]
        %v9170 = vld [vmem:[#allocation8 + $0x21c] sm:$0xf]
        %v9171 = vld [vmem:[#allocation8 + $0x220] sm:$0xf]
        %v9172 = vld [vmem:[#allocation8 + $0x224] sm:$0xf]
        %v9173 = vld [vmem:[#allocation8 + $0x228] sm:$0xf]
        %v9174 = vld [vmem:[#allocation8 + $0x22c] sm:$0xf]
        %v9175 = vld [vmem:[#allocation8 + $0x230] sm:$0xf]
        %v9176 = vld [vmem:[#allocation8 + $0x234] sm:$0xf]
        %v9177 = vld [vmem:[#allocation8 + $0x238] sm:$0xf]
        %v9178 = vld [vmem:[#allocation8 + $0x23c] sm:$0xf]
        %v9195 = vunpack.c.l.b16 %v9163
        %v9196 = vunpack.c.l.b16 %v9164
        %v9197 = vunpack.c.l.b16 %v9165
        %v9198 = vunpack.c.l.b16 %v9166
        %v9199 = vunpack.c.l.b16 %v9167
        %v9200 = vunpack.c.l.b16 %v9168
        %v9201 = vunpack.c.l.b16 %v9169
        %v9202 = vunpack.c.l.b16 %v9170
        %v9203 = vunpack.c.l.b16 %v9171
        %v9204 = vunpack.c.l.b16 %v9172
        %v9205 = vunpack.c.l.b16 %v9173
        %v9206 = vunpack.c.l.b16 %v9174
        %v9207 = vunpack.c.l.b16 %v9175
        %v9208 = vunpack.c.l.b16 %v9176
        %v9209 = vunpack.c.l.b16 %v9177
        %v9210 = vunpack.c.l.b16 %v9178
        %v9211 = vpack.c.b16 %v9196, %v9195
        %v9212 = vpack.c.b16 %v9198, %v9197
        %v9213 = vpack.c.b16 %v9200, %v9199
        %v9214 = vpack.c.b16 %v9202, %v9201
        %v9215 = vpack.c.b16 %v9204, %v9203
        %v9216 = vpack.c.b16 %v9206, %v9205
        %v9217 = vpack.c.b16 %v9208, %v9207
        %v9218 = vpack.c.b16 %v9210, %v9209
        %9227 = vmatprep.subr.bf16.mxu0 0
        %9228 = vmatpush1.bf16.msra.mxu0 %v9218
        %9229 = vmatprep.subr.bf16.mxu0 0
        %9230 = vmatpush1.bf16.msra.mxu0 %v9217
        %9231 = vmatprep.subr.bf16.mxu0 0
        %9232 = vmatpush1.bf16.msra.mxu0 %v9216
        %9233 = vmatprep.subr.bf16.mxu0 0
        %9234 = vmatpush1.bf16.msra.mxu0 %v9215
        %9235 = vmatprep.subr.bf16.mxu0 0
        %9236 = vmatpush1.bf16.msra.mxu0 %v9214
        %9237 = vmatprep.subr.bf16.mxu0 0
        %9238 = vmatpush1.bf16.msra.mxu0 %v9213
        %9239 = vmatprep.subr.bf16.mxu0 0
        %9240 = vmatpush1.bf16.msra.mxu0 %v9212
        %9241 = vmatprep.subr.bf16.mxu0 0
        %9242 = vmatpush1.bf16.msra.mxu0 %v9211
        %9243 = vmatprep.subr.bf16.mxu0 0
        %9244 = vmatpush2.bf16.msra.mxu0 0
        %9245 = vmatprep.subr.bf16.mxu0 0
        %9246 = vmatpush2.bf16.msra.mxu0 0
        %9247 = vmatprep.subr.bf16.mxu0 0
        %9248 = vmatpush2.bf16.msra.mxu0 0
        %9249 = vmatprep.subr.bf16.mxu0 0
        %9250 = vmatpush2.bf16.msra.mxu0 0
        %9251 = vmatprep.subr.bf16.mxu0 0
        %9252 = vmatpush2.bf16.msra.mxu0 0
        %9253 = vmatprep.subr.bf16.mxu0 0
        %9254 = vmatpush2.bf16.msra.mxu0 0
        %9255 = vmatprep.subr.bf16.mxu0 0
        %9256 = vmatpush2.bf16.msra.mxu0 0
        %9257 = vmatprep.subr.bf16.mxu0 0
        %9258 = vmatpush2.bf16.msra.mxu0 0
        %9259 = vmatprep.mubr.bf16.mxu0 0
        %9260 = vmatmul.mubr.bf16.gmra.mxu0 %v6189
        %v9261 = vpop.f32.mrf.mxu0
        %v9262 = vadd.f32 0.0, %v9261
        %v9263 = vpop.f32.mrf.mxu0
        %v9264 = vpop.f32.mrf.mxu0
        %v9265 = vadd.f32 0.0, %v9264
        %v9266 = vpop.f32.mrf.mxu0
        %9267 = vmatprep.mubr.bf16.mxu0 0
        %9268 = vmatmul.mubr.bf16.gmra.mxu0 %v6190
        %v9269 = vpop.f32.mrf.mxu0
        %v9270 = vadd.f32 0.0, %v9269
        %v9271 = vpop.f32.mrf.mxu0
        %v9272 = vpop.f32.mrf.mxu0
        %v9273 = vpop.f32.mrf.mxu0
        %9274 = vmatprep.mubr.bf16.mxu0 0
        %9275 = vmatmul.mubr.bf16.gmra.mxu0 %v6191
        %v9276 = vpop.f32.mrf.mxu0
        %v9277 = vadd.f32 0.0, %v9276
        %v9278 = vpop.f32.mrf.mxu0
        %v9279 = vpop.f32.mrf.mxu0
        %v9280 = vadd.f32 0.0, %v9279
        %v9281 = vpop.f32.mrf.mxu0
        %9282 = vmatprep.mubr.bf16.mxu0 0
        %9283 = vmatmul.mubr.bf16.gmra.mxu0 %v6192
        %v9284 = vpop.f32.mrf.mxu0
        %v9285 = vadd.f32 0.0, %v9284
        %v9286 = vpop.f32.mrf.mxu0
        %v9287 = vpop.f32.mrf.mxu0
        %v9288 = vpop.f32.mrf.mxu0
        %9289 = vmatprep.mubr.bf16.mxu0 0
        %9290 = vmatmul.mubr.bf16.gmra.mxu0 %v6193
        %v9291 = vpop.f32.mrf.mxu0
        %v9292 = vadd.f32 0.0, %v9291
        %v9293 = vpop.f32.mrf.mxu0
        %v9294 = vpop.f32.mrf.mxu0
        %v9295 = vadd.f32 0.0, %v9294
        %v9296 = vpop.f32.mrf.mxu0
        %9297 = vmatprep.mubr.bf16.mxu0 0
        %9298 = vmatmul.mubr.bf16.gmra.mxu0 %v6194
        %v9299 = vpop.f32.mrf.mxu0
        %v9300 = vadd.f32 0.0, %v9299
        %v9301 = vpop.f32.mrf.mxu0
        %v9302 = vpop.f32.mrf.mxu0
        %v9303 = vpop.f32.mrf.mxu0
        %9304 = vmatprep.mubr.bf16.mxu0 0
        %9305 = vmatmul.mubr.bf16.gmra.mxu0 %v6195
        %v9306 = vpop.f32.mrf.mxu0
        %v9307 = vadd.f32 0.0, %v9306
        %v9308 = vpop.f32.mrf.mxu0
        %v9309 = vpop.f32.mrf.mxu0
        %v9310 = vadd.f32 0.0, %v9309
        %v9311 = vpop.f32.mrf.mxu0
        %9312 = vmatprep.mubr.bf16.mxu0 0
        %9313 = vmatmul.mubr.bf16.gmra.mxu0 %v6196
        %v9314 = vpop.f32.mrf.mxu0
        %v9315 = vadd.f32 0.0, %v9314
        %v9316 = vpop.f32.mrf.mxu0
        %v9317 = vpop.f32.mrf.mxu0
        %v9318 = vpop.f32.mrf.mxu0
        %9319 = vmatprep.mubr.bf16.mxu0 0
        %9320 = vmatmul.mubr.bf16.gmra.mxu0 %v6197
        %v9321 = vpop.f32.mrf.mxu0
        %v9322 = vadd.f32 0.0, %v9321
        %v9323 = vpop.f32.mrf.mxu0
        %v9324 = vpop.f32.mrf.mxu0
        %v9325 = vadd.f32 0.0, %v9324
        %v9326 = vpop.f32.mrf.mxu0
        %9327 = vmatprep.mubr.bf16.mxu0 0
        %9328 = vmatmul.mubr.bf16.gmra.mxu0 %v6198
        %v9329 = vpop.f32.mrf.mxu0
        %v9330 = vadd.f32 0.0, %v9329
        %v9331 = vpop.f32.mrf.mxu0
        %v9332 = vpop.f32.mrf.mxu0
        %v9333 = vpop.f32.mrf.mxu0
        %9334 = vmatprep.mubr.bf16.mxu0 0
        %9335 = vmatmul.mubr.bf16.gmra.mxu0 %v6199
        %v9336 = vpop.f32.mrf.mxu0
        %v9337 = vadd.f32 0.0, %v9336
        %v9338 = vpop.f32.mrf.mxu0
        %v9339 = vpop.f32.mrf.mxu0
        %v9340 = vadd.f32 0.0, %v9339
        %v9341 = vpop.f32.mrf.mxu0
        %9342 = vmatprep.mubr.bf16.mxu0 0
        %9343 = vmatmul.mubr.bf16.gmra.mxu0 %v6200
        %v9344 = vpop.f32.mrf.mxu0
        %v9345 = vadd.f32 0.0, %v9344
        %v9346 = vpop.f32.mrf.mxu0
        %v9347 = vpop.f32.mrf.mxu0
        %v9348 = vpop.f32.mrf.mxu0
        %9349 = vmatprep.mubr.bf16.mxu0 0
        %9350 = vmatmul.mubr.bf16.gmra.mxu0 %v6201
        %v9351 = vpop.f32.mrf.mxu0
        %v9352 = vadd.f32 0.0, %v9351
        %v9353 = vpop.f32.mrf.mxu0
        %v9354 = vpop.f32.mrf.mxu0
        %v9355 = vadd.f32 0.0, %v9354
        %v9356 = vpop.f32.mrf.mxu0
        %9357 = vmatprep.mubr.bf16.mxu0 0
        %9358 = vmatmul.mubr.bf16.gmra.mxu0 %v6202
        %v9359 = vpop.f32.mrf.mxu0
        %v9360 = vadd.f32 0.0, %v9359
        %v9361 = vpop.f32.mrf.mxu0
        %v9362 = vpop.f32.mrf.mxu0
        %v9363 = vpop.f32.mrf.mxu0
        %9364 = vmatprep.mubr.bf16.mxu0 0
        %9365 = vmatmul.mubr.bf16.gmra.mxu0 %v6203
        %v9366 = vpop.f32.mrf.mxu0
        %v9367 = vadd.f32 0.0, %v9366
        %v9368 = vpop.f32.mrf.mxu0
        %v9369 = vpop.f32.mrf.mxu0
        %v9370 = vadd.f32 0.0, %v9369
        %v9371 = vpop.f32.mrf.mxu0
        %9372 = vmatprep.mubr.bf16.mxu0 0
        %9373 = vmatmul.mubr.bf16.gmra.mxu0 %v6204
        %v9374 = vpop.f32.mrf.mxu0
        %v9375 = vadd.f32 0.0, %v9374
        %v9376 = vpop.f32.mrf.mxu0
        %v9377 = vpop.f32.mrf.mxu0
        %v9378 = vpop.f32.mrf.mxu0
        %9379 = vmatprep.mubr.bf16.mxu0 0
        %9380 = vmatmul.mubr.bf16.gmra.mxu0 %v6205
        %v9381 = vpop.f32.mrf.mxu0
        %v9382 = vadd.f32 0.0, %v9381
        %v9383 = vpop.f32.mrf.mxu0
        %v9384 = vpop.f32.mrf.mxu0
        %v9385 = vadd.f32 0.0, %v9384
        %v9386 = vpop.f32.mrf.mxu0
        %9387 = vmatprep.mubr.bf16.mxu0 0
        %9388 = vmatmul.mubr.bf16.gmra.mxu0 %v6206
        %v9389 = vpop.f32.mrf.mxu0
        %v9390 = vadd.f32 0.0, %v9389
        %v9391 = vpop.f32.mrf.mxu0
        %v9392 = vpop.f32.mrf.mxu0
        %v9393 = vpop.f32.mrf.mxu0
        %9394 = vmatprep.mubr.bf16.mxu0 0
        %9395 = vmatmul.mubr.bf16.gmra.mxu0 %v6207
        %v9396 = vpop.f32.mrf.mxu0
        %v9397 = vadd.f32 0.0, %v9396
        %v9398 = vpop.f32.mrf.mxu0
        %v9399 = vpop.f32.mrf.mxu0
        %v9400 = vadd.f32 0.0, %v9399
        %v9401 = vpop.f32.mrf.mxu0
        %9402 = vmatprep.mubr.bf16.mxu0 0
        %9403 = vmatmul.mubr.bf16.gmra.mxu0 %v6208
        %v9404 = vpop.f32.mrf.mxu0
        %v9405 = vadd.f32 0.0, %v9404
        %v9406 = vpop.f32.mrf.mxu0
        %v9407 = vpop.f32.mrf.mxu0
        %v9408 = vpop.f32.mrf.mxu0
        %9409 = vmatprep.mubr.bf16.mxu0 0
        %9410 = vmatmul.mubr.bf16.gmra.mxu0 %v6209
        %v9411 = vpop.f32.mrf.mxu0
        %v9412 = vadd.f32 0.0, %v9411
        %v9413 = vpop.f32.mrf.mxu0
        %v9414 = vpop.f32.mrf.mxu0
        %v9415 = vadd.f32 0.0, %v9414
        %v9416 = vpop.f32.mrf.mxu0
        %9417 = vmatprep.mubr.bf16.mxu0 0
        %9418 = vmatmul.mubr.bf16.gmra.mxu0 %v6210
        %v9419 = vpop.f32.mrf.mxu0
        %v9420 = vadd.f32 0.0, %v9419
        %v9421 = vpop.f32.mrf.mxu0
        %v9422 = vpop.f32.mrf.mxu0
        %v9423 = vpop.f32.mrf.mxu0
        %9424 = vmatprep.mubr.bf16.mxu0 0
        %9425 = vmatmul.mubr.bf16.gmra.mxu0 %v6211
        %v9426 = vpop.f32.mrf.mxu0
        %v9427 = vadd.f32 0.0, %v9426
        %v9428 = vpop.f32.mrf.mxu0
        %v9429 = vpop.f32.mrf.mxu0
        %v9430 = vadd.f32 0.0, %v9429
        %v9431 = vpop.f32.mrf.mxu0
        %9432 = vmatprep.mubr.bf16.mxu0 0
        %9433 = vmatmul.mubr.bf16.gmra.mxu0 %v6212
        %v9434 = vpop.f32.mrf.mxu0
        %v9435 = vadd.f32 0.0, %v9434
        %v9436 = vpop.f32.mrf.mxu0
        %v9437 = vpop.f32.mrf.mxu0
        %v9438 = vpop.f32.mrf.mxu0
        %9439 = vmatprep.mubr.bf16.mxu0 0
        %9440 = vmatmul.mubr.bf16.gmra.mxu0 %v6213
        %v9441 = vpop.f32.mrf.mxu0
        %v9442 = vadd.f32 0.0, %v9441
        %v9443 = vpop.f32.mrf.mxu0
        %v9444 = vpop.f32.mrf.mxu0
        %v9445 = vadd.f32 0.0, %v9444
        %v9446 = vpop.f32.mrf.mxu0
        %9447 = vmatprep.mubr.bf16.mxu0 0
        %9448 = vmatmul.mubr.bf16.gmra.mxu0 %v6214
        %v9449 = vpop.f32.mrf.mxu0
        %v9450 = vadd.f32 0.0, %v9449
        %v9451 = vpop.f32.mrf.mxu0
        %v9452 = vpop.f32.mrf.mxu0
        %v9453 = vpop.f32.mrf.mxu0
        %9454 = vmatprep.mubr.bf16.mxu0 0
        %9455 = vmatmul.mubr.bf16.gmra.mxu0 %v6215
        %v9456 = vpop.f32.mrf.mxu0
        %v9457 = vadd.f32 0.0, %v9456
        %v9458 = vpop.f32.mrf.mxu0
        %v9459 = vpop.f32.mrf.mxu0
        %v9460 = vadd.f32 0.0, %v9459
        %v9461 = vpop.f32.mrf.mxu0
        %9462 = vmatprep.mubr.bf16.mxu0 0
        %9463 = vmatmul.mubr.bf16.gmra.mxu0 %v6216
        %v9464 = vpop.f32.mrf.mxu0
        %v9465 = vadd.f32 0.0, %v9464
        %v9466 = vpop.f32.mrf.mxu0
        %v9467 = vpop.f32.mrf.mxu0
        %v9468 = vpop.f32.mrf.mxu0
        %9469 = vmatprep.mubr.bf16.mxu0 0
        %9470 = vmatmul.mubr.bf16.gmra.mxu0 %v6217
        %v9471 = vpop.f32.mrf.mxu0
        %v9472 = vadd.f32 0.0, %v9471
        %v9473 = vpop.f32.mrf.mxu0
        %v9474 = vpop.f32.mrf.mxu0
        %v9475 = vadd.f32 0.0, %v9474
        %v9476 = vpop.f32.mrf.mxu0
        %9477 = vmatprep.mubr.bf16.mxu0 0
        %9478 = vmatmul.mubr.bf16.gmra.mxu0 %v6218
        %v9479 = vpop.f32.mrf.mxu0
        %v9480 = vadd.f32 0.0, %v9479
        %v9481 = vpop.f32.mrf.mxu0
        %v9482 = vpop.f32.mrf.mxu0
        %v9483 = vpop.f32.mrf.mxu0
        %9484 = vmatprep.mubr.bf16.mxu0 0
        %9485 = vmatmul.mubr.bf16.gmra.mxu0 %v6897
        %v9486 = vpop.f32.mrf.mxu0
        %v9487 = vadd.f32 0.0, %v9486
        %v9488 = vpop.f32.mrf.mxu0
        %v9489 = vpop.f32.mrf.mxu0
        %v9490 = vadd.f32 0.0, %v9489
        %v9491 = vpop.f32.mrf.mxu0
        %9492 = vmatprep.mubr.bf16.mxu0 0
        %9493 = vmatmul.mubr.bf16.gmra.mxu0 %v6898
        %v9494 = vpop.f32.mrf.mxu0
        %v9495 = vadd.f32 0.0, %v9494
        %v9496 = vpop.f32.mrf.mxu0
        %v9497 = vpop.f32.mrf.mxu0
        %v9498 = vpop.f32.mrf.mxu0
        %9499 = vdwg.mxu0
        %v9500 = vadd.f32 %v8925, %v9262
        %v9501 = vadd.f32 %v8928, %v9265
        %v9502 = vadd.f32 %v8933, %v9270
        %v9503 = vadd.f32 %v8940, %v9277
        %v9504 = vadd.f32 %v8943, %v9280
        %v9505 = vadd.f32 %v8948, %v9285
        %v9506 = vadd.f32 %v8955, %v9292
        %v9507 = vadd.f32 %v8958, %v9295
        %v9508 = vadd.f32 %v8963, %v9300
        %v9509 = vadd.f32 %v8970, %v9307
        %v9510 = vadd.f32 %v8973, %v9310
        %v9511 = vadd.f32 %v8978, %v9315
        %v9512 = vadd.f32 %v8985, %v9322
        %v9513 = vadd.f32 %v8988, %v9325
        %v9514 = vadd.f32 %v8993, %v9330
        %v9515 = vadd.f32 %v9000, %v9337
        %v9516 = vadd.f32 %v9003, %v9340
        %v9517 = vadd.f32 %v9008, %v9345
        %v9518 = vadd.f32 %v9015, %v9352
        %v9519 = vadd.f32 %v9018, %v9355
        %v9520 = vadd.f32 %v9023, %v9360
        %v9521 = vadd.f32 %v9030, %v9367
        %v9522 = vadd.f32 %v9033, %v9370
        %v9523 = vadd.f32 %v9038, %v9375
        %v9524 = vadd.f32 %v9045, %v9382
        %v9525 = vadd.f32 %v9048, %v9385
        %v9526 = vadd.f32 %v9053, %v9390
        %v9527 = vadd.f32 %v9060, %v9397
        %v9528 = vadd.f32 %v9063, %v9400
        %v9529 = vadd.f32 %v9068, %v9405
        %v9530 = vadd.f32 %v9075, %v9412
        %v9531 = vadd.f32 %v9078, %v9415
        %v9532 = vadd.f32 %v9083, %v9420
        %v9533 = vadd.f32 %v9090, %v9427
        %v9534 = vadd.f32 %v9093, %v9430
        %v9535 = vadd.f32 %v9098, %v9435
        %v9536 = vadd.f32 %v9105, %v9442
        %v9537 = vadd.f32 %v9108, %v9445
        %v9538 = vadd.f32 %v9113, %v9450
        %v9539 = vadd.f32 %v9120, %v9457
        %v9540 = vadd.f32 %v9123, %v9460
        %v9541 = vadd.f32 %v9128, %v9465
        %v9542 = vadd.f32 %v9135, %v9472
        %v9543 = vadd.f32 %v9138, %v9475
        %v9544 = vadd.f32 %v9143, %v9480
        %v9545 = vadd.f32 %v9150, %v9487
        %v9546 = vadd.f32 %v9153, %v9490
        %v9547 = vadd.f32 %v9158, %v9495
        %v9596 = vrot.slane %v9500, 2
        %v9597 = vrot.slane %v9501, 2
        %v9598 = vsel %vm4770, %v9596, %v9597
        %v9599 = vrot.slane %v9502, 2
        %v9600 = vsel %vm4770, %v9597, %v9599
        %v9601 = vrot.slane %v9503, 2
        %v9602 = vrot.slane %v9504, 2
        %v9603 = vsel %vm4770, %v9601, %v9602
        %v9604 = vrot.slane %v9505, 2
        %v9605 = vsel %vm4770, %v9602, %v9604
        %v9606 = vrot.slane %v9506, 2
        %v9607 = vrot.slane %v9507, 2
        %v9608 = vsel %vm4770, %v9606, %v9607
        %v9609 = vrot.slane %v9508, 2
        %v9610 = vsel %vm4770, %v9607, %v9609
        %v9611 = vrot.slane %v9509, 2
        %v9612 = vrot.slane %v9510, 2
        %v9613 = vsel %vm4770, %v9611, %v9612
        %v9614 = vrot.slane %v9511, 2
        %v9615 = vsel %vm4770, %v9612, %v9614
        %v9616 = vrot.slane %v9512, 2
        %v9617 = vrot.slane %v9513, 2
        %v9618 = vsel %vm4770, %v9616, %v9617
        %v9619 = vrot.slane %v9514, 2
        %v9620 = vsel %vm4770, %v9617, %v9619
        %v9621 = vrot.slane %v9515, 2
        %v9622 = vrot.slane %v9516, 2
        %v9623 = vsel %vm4770, %v9621, %v9622
        %v9624 = vrot.slane %v9517, 2
        %v9625 = vsel %vm4770, %v9622, %v9624
        %v9626 = vrot.slane %v9518, 2
        %v9627 = vrot.slane %v9519, 2
        %v9628 = vsel %vm4770, %v9626, %v9627
        %v9629 = vrot.slane %v9520, 2
        %v9630 = vsel %vm4770, %v9627, %v9629
        %v9631 = vrot.slane %v9521, 2
        %v9632 = vrot.slane %v9522, 2
        %v9633 = vsel %vm4770, %v9631, %v9632
        %v9634 = vrot.slane %v9523, 2
        %v9635 = vsel %vm4770, %v9632, %v9634
        %v9636 = vrot.slane %v9524, 2
        %v9637 = vrot.slane %v9525, 2
        %v9638 = vsel %vm4770, %v9636, %v9637
        %v9639 = vrot.slane %v9526, 2
        %v9640 = vsel %vm4770, %v9637, %v9639
        %v9641 = vrot.slane %v9527, 2
        %v9642 = vrot.slane %v9528, 2
        %v9643 = vsel %vm4770, %v9641, %v9642
        %v9644 = vrot.slane %v9529, 2
        %v9645 = vsel %vm4770, %v9642, %v9644
        %v9646 = vrot.slane %v9530, 2
        %v9647 = vrot.slane %v9531, 2
        %v9648 = vsel %vm4770, %v9646, %v9647
        %v9649 = vrot.slane %v9532, 2
        %v9650 = vsel %vm4770, %v9647, %v9649
        %v9651 = vrot.slane %v9533, 2
        %v9652 = vrot.slane %v9534, 2
        %v9653 = vsel %vm4770, %v9651, %v9652
        %v9654 = vrot.slane %v9535, 2
        %v9655 = vsel %vm4770, %v9652, %v9654
        %v9656 = vrot.slane %v9536, 2
        %v9657 = vrot.slane %v9537, 2
        %v9658 = vsel %vm4770, %v9656, %v9657
        %v9659 = vrot.slane %v9538, 2
        %v9660 = vsel %vm4770, %v9657, %v9659
        %v9661 = vrot.slane %v9539, 2
        %v9662 = vrot.slane %v9540, 2
        %v9663 = vsel %vm4770, %v9661, %v9662
        %v9664 = vrot.slane %v9541, 2
        %v9665 = vsel %vm4770, %v9662, %v9664
        %v9666 = vrot.slane %v9542, 2
        %v9667 = vrot.slane %v9543, 2
        %v9668 = vsel %vm4770, %v9666, %v9667
        %v9669 = vrot.slane %v9544, 2
        %v9670 = vsel %vm4770, %v9667, %v9669
        %v9671 = vrot.slane %v9545, 2
        %v9672 = vrot.slane %v9546, 2
        %v9673 = vsel %vm4770, %v9671, %v9672
        %v9674 = vrot.slane %v9547, 2
        %v9675 = vsel %vm4770, %v9672, %v9674
        %v9708 = vadd.f32 %v8457, %v9598
        %v9709 = vadd.f32 %v8458, %v9600
        %v9710 = vadd.f32 %v8459, %v9603
        %v9711 = vadd.f32 %v8460, %v9605
        %v9712 = vadd.f32 %v8461, %v9608
        %v9713 = vadd.f32 %v8462, %v9610
        %v9714 = vadd.f32 %v8463, %v9613
        %v9715 = vadd.f32 %v8464, %v9615
        %v9716 = vadd.f32 %v8465, %v9618
        %v9717 = vadd.f32 %v8466, %v9620
        %v9718 = vadd.f32 %v8467, %v9623
        %v9719 = vadd.f32 %v8468, %v9625
        %v9720 = vadd.f32 %v8469, %v9628
        %v9721 = vadd.f32 %v8470, %v9630
        %v9722 = vadd.f32 %v8471, %v9633
        %v9723 = vadd.f32 %v8472, %v9635
        %v9724 = vadd.f32 %v8473, %v9638
        %v9725 = vadd.f32 %v8474, %v9640
        %v9726 = vadd.f32 %v8475, %v9643
        %v9727 = vadd.f32 %v8476, %v9645
        %v9728 = vadd.f32 %v8477, %v9648
        %v9729 = vadd.f32 %v8478, %v9650
        %v9730 = vadd.f32 %v8479, %v9653
        %v9731 = vadd.f32 %v8480, %v9655
        %v9732 = vadd.f32 %v8481, %v9658
        %v9733 = vadd.f32 %v8482, %v9660
        %v9734 = vadd.f32 %v8483, %v9663
        %v9735 = vadd.f32 %v8484, %v9665
        %v9736 = vadd.f32 %v8485, %v9668
        %v9737 = vadd.f32 %v8486, %v9670
        %v9738 = vadd.f32 %v8487, %v9673
        %v9739 = vadd.f32 %v8488, %v9675
        %v9740 = vadd.f32 %v9708, %v9709
        %v9741 = vadd.f32 %v9740, %v9710
        %v9742 = vadd.f32 %v9741, %v9711
        %v9743 = vadd.f32 %v9742, %v9712
        %v9744 = vadd.f32 %v9743, %v9713
        %v9745 = vadd.f32 %v9744, %v9714
        %v9746 = vadd.f32 %v9745, %v9715
        %v9747 = vadd.f32 %v9746, %v9716
        %v9748 = vadd.f32 %v9747, %v9717
        %v9749 = vadd.f32 %v9748, %v9718
        %v9750 = vadd.f32 %v9749, %v9719
        %v9751 = vadd.f32 %v9750, %v9720
        %v9752 = vadd.f32 %v9751, %v9721
        %v9753 = vadd.f32 %v9752, %v9722
        %v9754 = vadd.f32 %v9753, %v9723
        %v9755 = vadd.f32 %v9754, %v9724
        %v9756 = vadd.f32 %v9755, %v9725
        %v9757 = vadd.f32 %v9756, %v9726
        %v9758 = vadd.f32 %v9757, %v9727
        %v9759 = vadd.f32 %v9758, %v9728
        %v9760 = vadd.f32 %v9759, %v9729
        %v9761 = vadd.f32 %v9760, %v9730
        %v9762 = vadd.f32 %v9761, %v9731
        %v9763 = vadd.f32 %v9762, %v9732
        %v9764 = vadd.f32 %v9763, %v9733
        %v9765 = vadd.f32 %v9764, %v9734
        %v9766 = vadd.f32 %v9765, %v9735
        %v9767 = vadd.f32 %v9766, %v9736
        %v9768 = vadd.f32 %v9767, %v9737
        %v9769 = vadd.f32 %v9768, %v9738
        %v9770 = vadd.f32 %v9769, %v9739
        %v9771 = vrot.slane %v9770, 4
        %v9772 = vadd.f32 %v9770, %v9771
        %v9773 = vrot.slane %v9772, 2
        %v9774 = vadd.f32 %v9772, %v9773
        %v9775 = vrot.slane %v9774, 1
        %v9776 = vadd.f32 %v9774, %v9775
        %v9777 = vmul.f32 %v9776, 0.00390625
        %v9778 = vmul.f32 %v9708, %v9708
        %v9779 = vmul.f32 %v9709, %v9709
        %v9780 = vmul.f32 %v9710, %v9710
        %v9781 = vmul.f32 %v9711, %v9711
        %v9782 = vmul.f32 %v9712, %v9712
        %v9783 = vmul.f32 %v9713, %v9713
        %v9784 = vmul.f32 %v9714, %v9714
        %v9785 = vmul.f32 %v9715, %v9715
        %v9786 = vmul.f32 %v9716, %v9716
        %v9787 = vmul.f32 %v9717, %v9717
        %v9788 = vmul.f32 %v9718, %v9718
        %v9789 = vmul.f32 %v9719, %v9719
        %v9790 = vmul.f32 %v9720, %v9720
        %v9791 = vmul.f32 %v9721, %v9721
        %v9792 = vmul.f32 %v9722, %v9722
        %v9793 = vmul.f32 %v9723, %v9723
        %v9794 = vmul.f32 %v9724, %v9724
        %v9795 = vmul.f32 %v9725, %v9725
        %v9796 = vmul.f32 %v9726, %v9726
        %v9797 = vmul.f32 %v9727, %v9727
        %v9798 = vmul.f32 %v9728, %v9728
        %v9799 = vmul.f32 %v9729, %v9729
        %v9800 = vmul.f32 %v9730, %v9730
        %v9801 = vmul.f32 %v9731, %v9731
        %v9802 = vmul.f32 %v9732, %v9732
        %v9803 = vmul.f32 %v9733, %v9733
        %v9804 = vmul.f32 %v9734, %v9734
        %v9805 = vmul.f32 %v9735, %v9735
        %v9806 = vmul.f32 %v9736, %v9736
        %v9807 = vmul.f32 %v9737, %v9737
        %v9808 = vmul.f32 %v9738, %v9738
        %v9809 = vmul.f32 %v9739, %v9739
        %v9810 = vadd.f32 %v9778, %v9779
        %v9811 = vadd.f32 %v9810, %v9780
        %v9812 = vadd.f32 %v9811, %v9781
        %v9813 = vadd.f32 %v9812, %v9782
        %v9814 = vadd.f32 %v9813, %v9783
        %v9815 = vadd.f32 %v9814, %v9784
        %v9816 = vadd.f32 %v9815, %v9785
        %v9817 = vadd.f32 %v9816, %v9786
        %v9818 = vadd.f32 %v9817, %v9787
        %v9819 = vadd.f32 %v9818, %v9788
        %v9820 = vadd.f32 %v9819, %v9789
        %v9821 = vadd.f32 %v9820, %v9790
        %v9822 = vadd.f32 %v9821, %v9791
        %v9823 = vadd.f32 %v9822, %v9792
        %v9824 = vadd.f32 %v9823, %v9793
        %v9825 = vadd.f32 %v9824, %v9794
        %v9826 = vadd.f32 %v9825, %v9795
        %v9827 = vadd.f32 %v9826, %v9796
        %v9828 = vadd.f32 %v9827, %v9797
        %v9829 = vadd.f32 %v9828, %v9798
        %v9830 = vadd.f32 %v9829, %v9799
        %v9831 = vadd.f32 %v9830, %v9800
        %v9832 = vadd.f32 %v9831, %v9801
        %v9833 = vadd.f32 %v9832, %v9802
        %v9834 = vadd.f32 %v9833, %v9803
        %v9835 = vadd.f32 %v9834, %v9804
        %v9836 = vadd.f32 %v9835, %v9805
        %v9837 = vadd.f32 %v9836, %v9806
        %v9838 = vadd.f32 %v9837, %v9807
        %v9839 = vadd.f32 %v9838, %v9808
        %v9840 = vadd.f32 %v9839, %v9809
        %v9841 = vrot.slane %v9840, 4
        %v9842 = vadd.f32 %v9840, %v9841
        %v9843 = vrot.slane %v9842, 2
        %v9844 = vadd.f32 %v9842, %v9843
        %v9845 = vrot.slane %v9844, 1
        %v9846 = vadd.f32 %v9844, %v9845
        %v9847 = vmul.f32 %v9846, 0.00390625
        %v9848 = vmul.f32 %v9777, %v9777
        %v9849 = vsub.f32 %v9847, %v9848
        %v9850 = vadd.f32 %v9849, 1e-05
        %v9851 = vrsqrt.pop %v9850
        %v9852 = vsub.f32 0.0, %v9777
        %v9853 = vmul.f32 %v9852, %v9851
        %v9854 = vmul.f32 %v9708, %v9851
        %v9855 = vmul.f32 %v9709, %v9851
        %v9856 = vmul.f32 %v9710, %v9851
        %v9857 = vmul.f32 %v9711, %v9851
        %v9858 = vmul.f32 %v9712, %v9851
        %v9859 = vmul.f32 %v9713, %v9851
        %v9860 = vmul.f32 %v9714, %v9851
        %v9861 = vmul.f32 %v9715, %v9851
        %v9862 = vmul.f32 %v9716, %v9851
        %v9863 = vmul.f32 %v9717, %v9851
        %v9864 = vmul.f32 %v9718, %v9851
        %v9865 = vmul.f32 %v9719, %v9851
        %v9866 = vmul.f32 %v9720, %v9851
        %v9867 = vmul.f32 %v9721, %v9851
        %v9868 = vmul.f32 %v9722, %v9851
        %v9869 = vmul.f32 %v9723, %v9851
        %v9870 = vmul.f32 %v9724, %v9851
        %v9871 = vmul.f32 %v9725, %v9851
        %v9872 = vmul.f32 %v9726, %v9851
        %v9873 = vmul.f32 %v9727, %v9851
        %v9874 = vmul.f32 %v9728, %v9851
        %v9875 = vmul.f32 %v9729, %v9851
        %v9876 = vmul.f32 %v9730, %v9851
        %v9877 = vmul.f32 %v9731, %v9851
        %v9878 = vmul.f32 %v9732, %v9851
        %v9879 = vmul.f32 %v9733, %v9851
        %v9880 = vmul.f32 %v9734, %v9851
        %v9881 = vmul.f32 %v9735, %v9851
        %v9882 = vmul.f32 %v9736, %v9851
        %v9883 = vmul.f32 %v9737, %v9851
        %v9884 = vmul.f32 %v9738, %v9851
        %v9885 = vmul.f32 %v9739, %v9851
        %v9886 = vadd.f32 %v9854, %v9853
        %v9887 = vadd.f32 %v9855, %v9853
        %v9888 = vadd.f32 %v9856, %v9853
        %v9889 = vadd.f32 %v9857, %v9853
        %v9890 = vadd.f32 %v9858, %v9853
        %v9891 = vadd.f32 %v9859, %v9853
        %v9892 = vadd.f32 %v9860, %v9853
        %v9893 = vadd.f32 %v9861, %v9853
        %v9894 = vadd.f32 %v9862, %v9853
        %v9895 = vadd.f32 %v9863, %v9853
        %v9896 = vadd.f32 %v9864, %v9853
        %v9897 = vadd.f32 %v9865, %v9853
        %v9898 = vadd.f32 %v9866, %v9853
        %v9899 = vadd.f32 %v9867, %v9853
        %v9900 = vadd.f32 %v9868, %v9853
        %v9901 = vadd.f32 %v9869, %v9853
        %v9902 = vadd.f32 %v9870, %v9853
        %v9903 = vadd.f32 %v9871, %v9853
        %v9904 = vadd.f32 %v9872, %v9853
        %v9905 = vadd.f32 %v9873, %v9853
        %v9906 = vadd.f32 %v9874, %v9853
        %v9907 = vadd.f32 %v9875, %v9853
        %v9908 = vadd.f32 %v9876, %v9853
        %v9909 = vadd.f32 %v9877, %v9853
        %v9910 = vadd.f32 %v9878, %v9853
        %v9911 = vadd.f32 %v9879, %v9853
        %v9912 = vadd.f32 %v9880, %v9853
        %v9913 = vadd.f32 %v9881, %v9853
        %v9914 = vadd.f32 %v9882, %v9853
        %v9915 = vadd.f32 %v9883, %v9853
        %v9916 = vadd.f32 %v9884, %v9853
        %v9917 = vadd.f32 %v9885, %v9853
        %v9918 = vld [vmem:[%s187] sm:$0xff]
        %v9919 = vld [vmem:[%s187 + $0x8] sm:$0xff]
        %v9920 = vld [vmem:[%s187 + $0x10] sm:$0xff]
        %v9921 = vld [vmem:[%s187 + $0x18] sm:$0xff]
        %v9922 = vld [vmem:[%s187 + $0x20] sm:$0xff]
        %v9923 = vld [vmem:[%s187 + $0x28] sm:$0xff]
        %v9924 = vld [vmem:[%s187 + $0x30] sm:$0xff]
        %v9925 = vld [vmem:[%s187 + $0x38] sm:$0xff]
        %v9926 = vld [vmem:[%s187 + $0x40] sm:$0xff]
        %v9927 = vld [vmem:[%s187 + $0x48] sm:$0xff]
        %v9928 = vld [vmem:[%s187 + $0x50] sm:$0xff]
        %v9929 = vld [vmem:[%s187 + $0x58] sm:$0xff]
        %v9930 = vld [vmem:[%s187 + $0x60] sm:$0xff]
        %v9931 = vld [vmem:[%s187 + $0x68] sm:$0xff]
        %v9932 = vld [vmem:[%s187 + $0x70] sm:$0xff]
        %v9933 = vld [vmem:[%s187 + $0x78] sm:$0xff]
        %v9934 = vld [vmem:[%s187 + $0x80] sm:$0xff]
        %v9935 = vld [vmem:[%s187 + $0x88] sm:$0xff]
        %v9936 = vld [vmem:[%s187 + $0x90] sm:$0xff]
        %v9937 = vld [vmem:[%s187 + $0x98] sm:$0xff]
        %v9938 = vld [vmem:[%s187 + $0xa0] sm:$0xff]
        %v9939 = vld [vmem:[%s187 + $0xa8] sm:$0xff]
        %v9940 = vld [vmem:[%s187 + $0xb0] sm:$0xff]
        %v9941 = vld [vmem:[%s187 + $0xb8] sm:$0xff]
        %v9942 = vld [vmem:[%s187 + $0xc0] sm:$0xff]
        %v9943 = vld [vmem:[%s187 + $0xc8] sm:$0xff]
        %v9944 = vld [vmem:[%s187 + $0xd0] sm:$0xff]
        %v9945 = vld [vmem:[%s187 + $0xd8] sm:$0xff]
        %v9946 = vld [vmem:[%s187 + $0xe0] sm:$0xff]
        %v9947 = vld [vmem:[%s187 + $0xe8] sm:$0xff]
        %v9948 = vld [vmem:[%s187 + $0xf0] sm:$0xff]
        %v9949 = vld [vmem:[%s187 + $0xf8] sm:$0xff]
        %v9950 = vadd.f32 %v9918, %v9886
        %v9951 = vadd.f32 %v9919, %v9887
        %v9952 = vadd.f32 %v9920, %v9888
        %v9953 = vadd.f32 %v9921, %v9889
        %v9954 = vadd.f32 %v9922, %v9890
        %v9955 = vadd.f32 %v9923, %v9891
        %v9956 = vadd.f32 %v9924, %v9892
        %v9957 = vadd.f32 %v9925, %v9893
        %v9958 = vadd.f32 %v9926, %v9894
        %v9959 = vadd.f32 %v9927, %v9895
        %v9960 = vadd.f32 %v9928, %v9896
        %v9961 = vadd.f32 %v9929, %v9897
        %v9962 = vadd.f32 %v9930, %v9898
        %v9963 = vadd.f32 %v9931, %v9899
        %v9964 = vadd.f32 %v9932, %v9900
        %v9965 = vadd.f32 %v9933, %v9901
        %v9966 = vadd.f32 %v9934, %v9902
        %v9967 = vadd.f32 %v9935, %v9903
        %v9968 = vadd.f32 %v9936, %v9904
        %v9969 = vadd.f32 %v9937, %v9905
        %v9970 = vadd.f32 %v9938, %v9906
        %v9971 = vadd.f32 %v9939, %v9907
        %v9972 = vadd.f32 %v9940, %v9908
        %v9973 = vadd.f32 %v9941, %v9909
        %v9974 = vadd.f32 %v9942, %v9910
        %v9975 = vadd.f32 %v9943, %v9911
        %v9976 = vadd.f32 %v9944, %v9912
        %v9977 = vadd.f32 %v9945, %v9913
        %v9978 = vadd.f32 %v9946, %v9914
        %v9979 = vadd.f32 %v9947, %v9915
        %v9980 = vadd.f32 %v9948, %v9916
        %v9981 = vadd.f32 %v9949, %v9917
        %9982 = vst [vmem:[%s217] sm:$0xff] %v9950
        %9983 = vst [vmem:[%s217 + $0x8] sm:$0xff] %v9951
        %9984 = vst [vmem:[%s217 + $0x10] sm:$0xff] %v9952
        %9985 = vst [vmem:[%s217 + $0x18] sm:$0xff] %v9953
        %9986 = vst [vmem:[%s217 + $0x20] sm:$0xff] %v9954
        %9987 = vst [vmem:[%s217 + $0x28] sm:$0xff] %v9955
        %9988 = vst [vmem:[%s217 + $0x30] sm:$0xff] %v9956
        %9989 = vst [vmem:[%s217 + $0x38] sm:$0xff] %v9957
        %9990 = vst [vmem:[%s217 + $0x40] sm:$0xff] %v9958
        %9991 = vst [vmem:[%s217 + $0x48] sm:$0xff] %v9959
        %9992 = vst [vmem:[%s217 + $0x50] sm:$0xff] %v9960
        %9993 = vst [vmem:[%s217 + $0x58] sm:$0xff] %v9961
        %9994 = vst [vmem:[%s217 + $0x60] sm:$0xff] %v9962
        %9995 = vst [vmem:[%s217 + $0x68] sm:$0xff] %v9963
        %9996 = vst [vmem:[%s217 + $0x70] sm:$0xff] %v9964
        %9997 = vst [vmem:[%s217 + $0x78] sm:$0xff] %v9965
        %9998 = vst [vmem:[%s217 + $0x80] sm:$0xff] %v9966
        %9999 = vst [vmem:[%s217 + $0x88] sm:$0xff] %v9967
        %10000 = vst [vmem:[%s217 + $0x90] sm:$0xff] %v9968
        %10001 = vst [vmem:[%s217 + $0x98] sm:$0xff] %v9969
        %10002 = vst [vmem:[%s217 + $0xa0] sm:$0xff] %v9970
        %10003 = vst [vmem:[%s217 + $0xa8] sm:$0xff] %v9971
        %10004 = vst [vmem:[%s217 + $0xb0] sm:$0xff] %v9972
        %10005 = vst [vmem:[%s217 + $0xb8] sm:$0xff] %v9973
        %10006 = vst [vmem:[%s217 + $0xc0] sm:$0xff] %v9974
        %10007 = vst [vmem:[%s217 + $0xc8] sm:$0xff] %v9975
        %10008 = vst [vmem:[%s217 + $0xd0] sm:$0xff] %v9976
        %10009 = vst [vmem:[%s217 + $0xd8] sm:$0xff] %v9977
        %10010 = vst [vmem:[%s217 + $0xe0] sm:$0xff] %v9978
        %10011 = vst [vmem:[%s217 + $0xe8] sm:$0xff] %v9979
        %10012 = vst [vmem:[%s217 + $0xf0] sm:$0xff] %v9980
        %10013 = vst [vmem:[%s217 + $0xf8] sm:$0xff] %v9981
        %s10014 = sand.u32 %s97, 1
        %s10015 = scalar_lea.sflag [#allocation5], %s10014
        %s10016 = sand.u32 %s97, 1
        %s10017 = smul.addr %s10016, 256
        %s10018 = scalar_lea.vmem [#allocation9], %s10017
        // Predicated region
        $region45: #{tpu_custom_call.1} parent=31 // pred_check
          %p10019 = pneg %p107
        $region46: #{tpu_custom_call.1} parent=31 // pred_check_branch
          %10021 = sbr.rel (%p10019) target = $region48
        $region47: #{tpu_custom_call.1} parent=31 // pred_region
          %s10023 = ssub.s32 4096, 4096
          %10024 = vsyncadd %s10015, %s10023
          %s10025 = smul.addr %s21, 32
          %s10026 = smul.addr %s10025, 128
          %s10027 = scalar_lea.hbm %s3, %s10026
          %s10028 = sshll.u32 %s10018, 4
          %s10029 = int_to_ptr.vmem [resolvable:$true] %s10028
          %10034 = dma.vmem_to_hbm [thread:$0]  %s10029, 4096, %s10027, %s10015, 128, 128, 8
        $region48: #{tpu_custom_call.1} parent=31 // pred_fallthru
          _
      $region32: #{tpu_custom_call.1} parent=5 // pred_fallthru
        _
      %p10035 = scmp.le.s32.totalorder 2, %s16
      // Predicated region
      $region49: #{tpu_custom_call.1} parent=5 // pred_check
        %p10036 = pneg %p10035
      $region50: #{tpu_custom_call.1} parent=5 // pred_check_branch
        %10038 = sbr.rel (%p10036) target = $region52
      $region51: #{tpu_custom_call.1} parent=5 // pred_region
        %s10039 = ssub.s32 %s16, 2
        // Predicated region
        $region53: #{tpu_custom_call.1} parent=51 // pred_check
          %p10040 = pneg %p113
        $region54: #{tpu_custom_call.1} parent=51 // pred_check_branch
          %10042 = sbr.rel (%p10040) target = $region56
        $region55: #{tpu_custom_call.1} parent=51 // pred_region
          %s10043 = sand.u32 %s98, 1
          %s10044 = scalar_lea.sflag [#allocation5], %s10043
          %s10045 = sand.u32 %s98, 1
          %s10046 = smul.addr %s10045, 256
          %s10047 = scalar_lea.vmem [#allocation9], %s10046
          %10048 = dma.done %s10044, 4096
        $region56: #{tpu_custom_call.1} parent=51 // pred_fallthru
          _
      $region52: #{tpu_custom_call.1} parent=5 // pred_fallthru
        _
    $region6: #{tpu_custom_call.1} parent=1 // loop_footer
      %s20 = sadd.s32 1, %s16
    $region7: #{tpu_custom_call.1} parent=1 // loop_footer_branch
      %15 = sbr.rel target = $region3
    $region8: #{tpu_custom_call.1} parent=1 // loop_exit
      _
    %10049 = vsyncpa [#allocation4], 1
    %s10050 = scalar_lea.sflag [#allocation4], 1
    %10051 = vsyncpa %s10050, 1
    %10052 = vsyncpa [#allocation7], 1
    %10053 = vsyncpa [#allocation5], 1
    %s10054 = scalar_lea.sflag [#allocation5], 1
    %10055 = vsyncpa %s10054, 1

</llo_original>
